<compile_context>
chip_gen: v6e
topology: v6e:2x2x1
jax: 0.10.0
libtpu: 0.0.40
codegen_flags: <defaults>
</compile_context>

<pallas_src>
import numpy as np
import jax
import jax.numpy as jnp
from jax import lax
from jax.experimental import pallas as pl
from jax.experimental.pallas import tpu as pltpu


def _round_up(x, m):
    return ((x + m - 1) // m) * m


def _device_vmem_bytes():
    """Physical VMEM of the attached TPU (64 MiB on v7x, 128 MiB on v5e/v6e)."""
    try:
        return int(pltpu.get_tpu_info().vmem_capacity_bytes)
    except Exception:
        return 64 << 20  # conservative default (v7x)


def _pick_batch_block(B, S_pad, H, itemsize, target_block_bytes, min_steps=4):
    """Batch tile: multiple of 8 (sublane rule for the 2-D per-batch outputs), sized so one
    hidden block stays under the per-generation byte target, and capped so the grid keeps
    >= min_steps steps (v7x: 2 TensorCores + double-buffer prologue/epilogue)."""
    per_row = max(S_pad * H * itemsize, 1)
    bB = max(8, (target_block_bytes // per_row) // 8 * 8)
    cap = max(8, ((B + min_steps - 1) // min_steps) // 8 * 8)
    bB = min(bB, cap, _round_up(B, 8))
    return int(bB)


def _vmem_estimate(bB, S_pad, H, itemsize, A_pad, F_pad, NL, weight_bytes):
    """Conservative per-step VMEM bytes: double-buffered hidden block + outputs, (up to)
    double-buffered weights, evidence intermediate, lane-padded [*,1] attention temps,
    small per-row intermediates, fixed headroom."""
    hid = bB * S_pad * H * itemsize
    ev = bB * S_pad * A_pad * 4
    attn_tmp = 4 * bB * S_pad * 128 * 4          # [*,1] temps are 128x lane-padded in VMEM
    outs = bB * (NL + S_pad) * 4
    small = bB * (2 * H + 2 * F_pad + 256) * 4
    return 2 * (hid + outs) + 2 * weight_bytes + ev + attn_tmp + small + (2 << 20)


def _make_kernel(mxu_pooling):
    def kernel(hidden_ref, counts_ref, we_w_ref, we_b_ref, ww_w_ref, ww_b_ref,
               wf_w_ref, wf_b_ref, wr_w_ref, wr_b_ref, scores_ref, attn_out_ref):
        h = hidden_ref[...]                                    # [bB, S, H] (S padded to 8k)
        bB, S, H = h.shape
        # S is a sublane multiple (wrapper pads it), so this reshape is a layout-trivial
        # view of the big block (no VMEM relayout).
        h2 = h.reshape(bB * S, H)

        # --- attention evidence: MXU matmul, f32 accumulation (bf16 inputs supported) ---
        ev = jnp.tanh(
            jnp.dot(h2, we_w_ref[...], preferred_element_type=jnp.float32)
            + we_b_ref[...])                                   # [bB*S, A_pad] f32

        # --- attention logits: VPU multiply + lane reduce (avoid an N=1 MXU matmul) ---
        logits = jnp.sum(ev * ww_w_ref[...], axis=-1, keepdims=True) + ww_b_ref[...]
        aw = jax.nn.sigmoid(logits).reshape(bB, S, 1)          # 'soft' activation

        # --- mask [CLS] (pos 0) and padding (pos >= counts); counts=0 rows (batch pad)
        #     mask everything -> denom 0 -> NaN, matching PyTorch for empty rows ---
        counts = counts_ref[...].reshape(bB, 1, 1)
        pos = lax.broadcasted_iota(jnp.int32, (bB, S, 1), 1)
        aw_u = jnp.where((pos >= 1) & (pos < counts), aw, 0.0)  # [bB, S, 1] unnormalised

        # attention writeback (small tile; col 0 already zero via the mask).
        attn_out_ref[...] = aw_u.reshape(bB, S)

        # --- square_attention=True, fused normalisation: p = sum(a^2 h) / sum(a^2) ---
        if mxu_pooling:
            # Explicit lane-major relayout of the small attention tile, then pooling on the
            # MXU (batched matvec): no f32 copy of the hidden block is materialised and the
            # VALU slot stays free (v7x with bf16 activations is VALU-limited otherwise).
            aw_sq_t = jnp.transpose(aw_u * aw_u, (0, 2, 1))    # [bB, 1, S] f32
            denom = jnp.sum(aw_sq_t, axis=-1)                  # [bB, 1]
            prec = lax.Precision.HIGHEST if h.dtype == jnp.float32 else None
            proc3 = jnp.einsum("bqs,bsh->bqh", aw_sq_t.astype(h.dtype), h,
                               preferred_element_type=jnp.float32, precision=prec)
            proc = proc3.reshape(bB, H) * pl.reciprocal(denom, approx=False)
        else:
            # Fallback: VPU pooling with the f32 cast fused into the multiply
            # (no stored full-size f32 copy of the hidden block).
            aw_sq = aw_u * aw_u
            denom = jnp.sum(aw_sq, axis=1)                     # [bB, 1]
            proc = (jnp.sum(h.astype(jnp.float32) * aw_sq, axis=1)
                    * pl.reciprocal(denom, approx=False))      # [bB, H]

        # --- final hidden + result layers (small MXU matmuls, weights resident) ---
        ph = jnp.tanh(
            jnp.dot(proc, wf_w_ref[...], preferred_element_type=jnp.float32)
            + wf_b_ref[...])                                   # [bB, F_pad]
        scores_ref[...] = jax.nn.sigmoid(
            jnp.dot(ph, wr_w_ref[...], preferred_element_type=jnp.float32)
            + wr_b_ref[...])                                   # [bB, NL]
    return kernel


def _build_call(grid, bB, S_pad, H, A_pad, F_pad, NL, B_pad, vmem_limit,
                single_buffer_weights, mxu_pooling):
    const2 = lambda i: (0, 0)

    def wspec(shape):
        # Constant-index weight blocks: single-buffer them to reclaim VMEM when supported.
        if single_buffer_weights:
            return pl.BlockSpec(shape, const2, pipeline_mode=pl.Buffered(1))
        return pl.BlockSpec(shape, const2)

    in_specs = [
        pl.BlockSpec((bB, S_pad, H), lambda i: (i, 0, 0)),     # hidden, batch-tiled
        pl.BlockSpec((bB, 1), lambda i: (i, 0)),               # counts
        wspec((H, A_pad)), wspec((1, A_pad)), wspec((1, A_pad)), wspec((1, 1)),
        wspec((H, F_pad)), wspec((1, F_pad)), wspec((F_pad, NL)), wspec((1, NL)),
    ]
    out_specs = (pl.BlockSpec((bB, NL), lambda i: (i, 0)),
                 pl.BlockSpec((bB, S_pad), lambda i: (i, 0)))
    out_shape = (jax.ShapeDtypeStruct((B_pad, NL), jnp.float32),      # sentence_scores
                 jax.ShapeDtypeStruct((B_pad, S_pad), jnp.float32))   # [0 | unnorm attn]
    return pl.pallas_call(
        _make_kernel(mxu_pooling),
        grid=grid, in_specs=in_specs, out_specs=out_specs, out_shape=out_shape,
        compiler_params=pltpu.CompilerParams(
            dimension_semantics=("parallel",),   # batch axis over both TCs on v7x
            vmem_limit_bytes=vmem_limit),
    )


def soft_attention_forward(last_hidden_state, attention_mask, params,
                           *, batch_block=None, target_block_bytes=None):
    """Runs the kernel on the FULL [B, S, H] hidden state (no [:,1:] copy; [CLS] and
    padding positions are masked in one pass inside the kernel).

    Pass bf16 activations for best throughput on every generation (the kernel is
    HBM-bound on v5e/v6e); all matmuls accumulate in f32.

    NOTE: rows with <= 1 valid tokens have a zero attention denominator and yield NaN
    scores, exactly like the PyTorch module.
    """
    B, S, H = last_hidden_state.shape
    act_dtype = last_hidden_state.dtype
    itemsize = jnp.dtype(act_dtype).itemsize
    A = params["we_w"].shape[1]
    F = params["wf_w"].shape[1]
    NL = params["wr_w"].shape[1]
    A_pad = _round_up(A, 128)   # keep at 128 even on v6e/v7x (evidence matmul not the bottleneck)
    F_pad = _round_up(F, 128)

    # Zero-pad evidence / final-hidden widths to lane multiples (mathematically inert).
    we_w = jnp.pad(params["we_w"], ((0, 0), (0, A_pad - A))).astype(act_dtype)
    we_b = jnp.pad(params["we_b"], ((0, 0), (0, A_pad - A)))
    ww_w_t = jnp.pad(params["ww_w"], ((0, A_pad - A), (0, 0))).T       # [1, A_pad]
    ww_b = params["ww_b"]
    wf_w = jnp.pad(params["wf_w"], ((0, 0), (0, F_pad - F)))
    wf_b = jnp.pad(params["wf_b"], ((0, 0), (0, F_pad - F)))
    wr_w = jnp.pad(params["wr_w"], ((0, F_pad - F), (0, 0)))
    wr_b = params["wr_b"]
    weight_bytes = sum(int(w.size) * jnp.dtype(w.dtype).itemsize
                       for w in (we_w, we_b, ww_w_t, ww_b, wf_w, wf_b, wr_w, wr_b))

    # Number of non-zero mask entries per row (== inp_lengths + 1), computed once here.
    counts = jnp.sum((attention_mask != 0).astype(jnp.int32), axis=1, keepdims=True)

    # Pad S to a sublane multiple so the in-kernel (bB*S, H) reshape of the big block is a
    # layout no-op; padded rows are masked by pos < counts.
    S_pad = _round_up(S, 8)
    hidden = last_hidden_state
    if S_pad != S:
        hidden = jnp.pad(hidden, ((0, 0), (0, S_pad - S), (0, 0)))

    # Per-generation tile target: big tiles on 128-MiB v5e/v6e, smaller on 64-MiB v7x.
    vmem_cap = _device_vmem_bytes()
    if target_block_bytes is None:
        target_block_bytes = (28 << 20) if vmem_cap >= (100 << 20) else (10 << 20)

    bB = batch_block if batch_block is not None else _pick_batch_block(
        B, S_pad, H, itemsize, target_block_bytes)
    assert bB % 8 == 0, "batch tile must be a sublane multiple"
    # Shrink the tile until the whole working set fits the physical VMEM budget.
    while bB > 8 and _vmem_estimate(bB, S_pad, H, itemsize, A_pad, F_pad, NL,
                                    weight_bytes) > vmem_cap - (8 << 20):
        bB -= 8

    # Decouple tile size from batch divisibility: pad B, padded rows carry counts=0.
    B_pad = ((B + bB - 1) // bB) * bB
    if B_pad != B:
        hidden = jnp.pad(hidden, ((0, B_pad - B), (0, 0), (0, 0)))
        counts = jnp.pad(counts, ((0, B_pad - B), (0, 0)))
    grid = (B_pad // bB,)

    est = _vmem_estimate(bB, S_pad, H, itemsize, A_pad, F_pad, NL, weight_bytes)
    vmem_limit = int(min(vmem_cap - (4 << 20), max(32 << 20, est)))

    args = (hidden, counts, we_w, we_b, ww_w_t, ww_b, wf_w, wf_b, wr_w, wr_b)

    def call(single_buffer_weights, mxu_pooling):
        return _build_call(grid, bB, S_pad, H, A_pad, F_pad, NL, B_pad, vmem_limit,
                           single_buffer_weights, mxu_pooling)(*args)

    try:
        # Primary config: single-buffered weights (pl.Buffered(1)) + MXU pooling.
        out = call(True, True)
        jax.block_until_ready(out)
    except Exception:
        # Conservative fallback (previous known-good lowering): default double-buffered
        # weights + fused-cast VPU pooling.  Results are identical.
        out = call(False, False)
    scores, attn = out
    return scores[:B], attn[:B, :S]


def _xavier_uniform(key, fan_in, fan_out):
    limit = float(np.sqrt(6.0 / (fan_in + fan_out)))
    return jax.random.uniform(key, (fan_in, fan_out), jnp.float32, -limit, limit)


def init_params(key, bert_out_size, attn_evidence_size, final_hidden_size, num_labels):
    """initializer_name='xavier' (xavier_uniform on weights, zeros on biases)."""
    k1, k2, k3, k4 = jax.random.split(key, 4)
    return {
        "we_w": _xavier_uniform(k1, bert_out_size, attn_evidence_size),
        "we_b": jnp.zeros((1, attn_evidence_size), jnp.float32),
        "ww_w": _xavier_uniform(k2, attn_evidence_size, 1),
        "ww_b": jnp.zeros((1, 1), jnp.float32),
        "wf_w": _xavier_uniform(k3, bert_out_size, final_hidden_size),
        "wf_b": jnp.zeros((1, final_hidden_size), jnp.float32),
        "wr_w": _xavier_uniform(k4, final_hidden_size, num_labels),
        "wr_b": jnp.zeros((1, num_labels), jnp.float32),
    }


def reference_forward(last_hidden_state, attention_mask, params):
    """Pure-JAX reference mirroring the PyTorch forward (for sanity checking)."""
    h = last_hidden_state[:, 1:]
    B, L, H = h.shape
    lengths = jnp.sum((attention_mask != 0).astype(jnp.int32), axis=1) - 1
    ev = jnp.tanh(h @ params["we_w"] + params["we_b"][0])
    aw = jax.nn.sigmoid((ev @ params["ww_w"] + params["ww_b"][0])[..., 0])
    mask = jnp.arange(L)[None, :] < lengths[:, None]
    aw_u = jnp.where(mask, aw, 0.0)
    aw_sq = aw_u ** 2
    aw_n = aw_sq / jnp.sum(aw_sq, axis=1, keepdims=True)
    proc = jnp.einsum("bl,blh->bh", aw_n, h)
    ph = jnp.tanh(proc @ params["wf_w"] + params["wf_b"][0])
    scores = jax.nn.sigmoid(ph @ params["wr_w"] + params["wr_b"][0])
    attn_out = jnp.concatenate([jnp.zeros((B, 1)), aw_u], axis=1)
    return scores, attn_out


if __name__ == "__main__":
    # Small synthetic shapes consistent with the module's forward:
    B, S, H = 2, 9, 32          # batch, full seq (incl. [CLS]), bert_out_size
    A, F, NL = 16, 32, 3        # attention_evidence_size, final_hidden_layer_size, num_labels

    key = jax.random.PRNGKey(0)
    k_h, k_p = jax.random.split(key)

    last_hidden_state = jax.random.normal(k_h, (B, S, H), jnp.float32)
    # attention_mask: first example uses 7 tokens, second uses all 9
    attention_mask = jnp.array(
        [[1, 1, 1, 1, 1, 1, 1, 0, 0],
         [1, 1, 1, 1, 1, 1, 1, 1, 1]], dtype=jnp.int32)

    params = init_params(k_p, H, A, F, NL)

    ref_scores, ref_attn = reference_forward(last_hidden_state, attention_mask, params)

    # f32 activation path: strict tolerance.
    scores, attn_out = soft_attention_forward(last_hidden_state, attention_mask, params)
    jax.block_until_ready((scores, attn_out))
    np.testing.assert_allclose(np.asarray(scores), np.asarray(ref_scores), rtol=1e-5, atol=1e-5)
    np.testing.assert_allclose(np.asarray(attn_out), np.asarray(ref_attn), rtol=1e-5, atol=1e-5)

    # bf16 activation path (recommended deployment dtype: kernel is HBM-bound on v5e/v6e);
    # tolerance loosened accordingly (bf16 matmul inputs).
    scores_bf, attn_bf = soft_attention_forward(
        last_hidden_state.astype(jnp.bfloat16), attention_mask, params)
    jax.block_until_ready((scores_bf, attn_bf))
    np.testing.assert_allclose(np.asarray(scores_bf), np.asarray(ref_scores), rtol=5e-2, atol=5e-2)
    np.testing.assert_allclose(np.asarray(attn_bf), np.asarray(ref_attn), rtol=5e-2, atol=5e-2)

    # TODO(synk): loss terms (CrossEntropy/MSE, alpha/gamma/token-supervision regularisers),
    # the data-dependent _apply_subword_method grouping, and the multi-head-attention branch
    # are training/host-side logic and are not implemented in the kernel.
    print("KERNEL_OK")
</pallas_src>

<mosaic_0001>
module attributes {stable_mosaic.version = 11 : i64} {
  func.func @kernel(%arg0: i32, %arg1: memref<8x16x32xf32, #tpu.memory_space<vmem>>, %arg2: memref<8x1xi32, #tpu.memory_space<vmem>>, %arg3: memref<32x128xf32, #tpu.memory_space<vmem>>, %arg4: memref<1x128xf32, #tpu.memory_space<vmem>>, %arg5: memref<1x128xf32, #tpu.memory_space<vmem>>, %arg6: memref<1x1xf32, #tpu.memory_space<vmem>>, %arg7: memref<32x128xf32, #tpu.memory_space<vmem>>, %arg8: memref<1x128xf32, #tpu.memory_space<vmem>>, %arg9: memref<128x3xf32, #tpu.memory_space<vmem>>, %arg10: memref<1x3xf32, #tpu.memory_space<vmem>>, %arg11: memref<8x3xf32, #tpu.memory_space<vmem>>, %arg12: memref<8x16xf32, #tpu.memory_space<vmem>>) attributes {dimension_semantics = [#tpu.dimension_semantics<parallel>], iteration_bounds = array<i64: 1>, scalar_prefetch = 0 : i64, scratch_operands = 0 : i64, tpu.core_type = #tpu.core_type<tc>, window_params = [{transform_indices = @transform_0, window_bounds = array<i64: 8, 16, 32>}, {transform_indices = @transform_1, window_bounds = array<i64: 8, 1>}, {pipeline_mode = #tpu.pipeline_mode<synchronous>, transform_indices = @transform_2, window_bounds = array<i64: 32, 128>}, {pipeline_mode = #tpu.pipeline_mode<synchronous>, transform_indices = @transform_3, window_bounds = array<i64: 1, 128>}, {pipeline_mode = #tpu.pipeline_mode<synchronous>, transform_indices = @transform_4, window_bounds = array<i64: 1, 128>}, {pipeline_mode = #tpu.pipeline_mode<synchronous>, transform_indices = @transform_5, window_bounds = array<i64: 1, 1>}, {pipeline_mode = #tpu.pipeline_mode<synchronous>, transform_indices = @transform_6, window_bounds = array<i64: 32, 128>}, {pipeline_mode = #tpu.pipeline_mode<synchronous>, transform_indices = @transform_7, window_bounds = array<i64: 1, 128>}, {pipeline_mode = #tpu.pipeline_mode<synchronous>, transform_indices = @transform_8, window_bounds = array<i64: 128, 3>}, {pipeline_mode = #tpu.pipeline_mode<synchronous>, transform_indices = @transform_9, window_bounds = array<i64: 1, 3>}, {transform_indices = @transform_10, window_bounds = array<i64: 8, 3>}, {transform_indices = @transform_11, window_bounds = array<i64: 8, 16>}]} {
    %c0 = arith.constant 0 : index
    %c0_0 = arith.constant 0 : index
    %c0_1 = arith.constant 0 : index
    %0 = vector.load %arg1[%c0, %c0_0, %c0_1] : memref<8x16x32xf32, #tpu.memory_space<vmem>>, vector<8x16x32xf32>
    %1 = vector.shape_cast %0 : vector<8x16x32xf32> to vector<128x32xf32>
    %c0_2 = arith.constant 0 : index
    %c0_3 = arith.constant 0 : index
    %2 = vector.load %arg3[%c0_2, %c0_3] : memref<32x128xf32, #tpu.memory_space<vmem>>, vector<32x128xf32>
    %cst = arith.constant dense<0.000000e+00> : vector<128x128xf32>
    %3 = tpu.matmul %1, %2, %cst {dimension_numbers = #tpu.dot_dimension_numbers<[1], [0], [0], [1], [0, 0, 1, 1], [], []>} : vector<128x32xf32>, vector<32x128xf32>, vector<128x128xf32> -> vector<128x128xf32>
    %c0_4 = arith.constant 0 : index
    %c0_5 = arith.constant 0 : index
    %4 = vector.load %arg4[%c0_4, %c0_5] : memref<1x128xf32, #tpu.memory_space<vmem>>, vector<1x128xf32>
    %5 = vector.broadcast %4 : vector<1x128xf32> to vector<128x128xf32>
    %6 = arith.addf %3, %5 : vector<128x128xf32>
    %7 = math.tanh %6 : vector<128x128xf32>
    %c0_6 = arith.constant 0 : index
    %c0_7 = arith.constant 0 : index
    %8 = vector.load %arg5[%c0_6, %c0_7] : memref<1x128xf32, #tpu.memory_space<vmem>>, vector<1x128xf32>
    %9 = vector.broadcast %8 : vector<1x128xf32> to vector<128x128xf32>
    %10 = arith.mulf %7, %9 : vector<128x128xf32>
    %cst_8 = arith.constant dense<0.000000e+00> : vector<128xf32>
    %11 = vector.multi_reduction <add>, %10, %cst_8 [1] : vector<128x128xf32> to vector<128xf32>
    %12 = vector.shape_cast %11 : vector<128xf32> to vector<128x1xf32>
    %c0_9 = arith.constant 0 : index
    %c0_10 = arith.constant 0 : index
    %13 = vector.load %arg6[%c0_9, %c0_10] : memref<1x1xf32, #tpu.memory_space<vmem>>, vector<1x1xf32>
    %14 = vector.broadcast %13 : vector<1x1xf32> to vector<128x1xf32>
    %15 = arith.addf %12, %14 : vector<128x1xf32>
    %16 = arith.negf %15 : vector<128x1xf32>
    %17 = math.exp %16 : vector<128x1xf32>
    %cst_11 = arith.constant 1.000000e+00 : f32
    %18 = vector.broadcast %cst_11 : f32 to vector<128x1xf32>
    %19 = arith.addf %18, %17 : vector<128x1xf32>
    %20 = arith.divf %18, %19 : vector<128x1xf32>
    %21 = vector.shape_cast %20 : vector<128x1xf32> to vector<8x16x1xf32>
    %c0_12 = arith.constant 0 : index
    %c0_13 = arith.constant 0 : index
    %22 = vector.load %arg2[%c0_12, %c0_13] : memref<8x1xi32, #tpu.memory_space<vmem>>, vector<8x1xi32>
    %23 = vector.shape_cast %22 : vector<8x1xi32> to vector<8x1x1xi32>
    %24 = tpu.iota {dimensions = array<i32: 1>} : vector<8x16x1xi32>
    %c1_i32 = arith.constant 1 : i32
    %25 = vector.broadcast %c1_i32 : i32 to vector<8x16x1xi32>
    %26 = arith.cmpi sge, %24, %25 : vector<8x16x1xi32>
    %27 = vector.broadcast %23 : vector<8x1x1xi32> to vector<8x16x1xi32>
    %28 = arith.cmpi slt, %24, %27 : vector<8x16x1xi32>
    %29 = arith.andi %26, %28 : vector<8x16x1xi1>
    %cst_14 = arith.constant 0.000000e+00 : f32
    %30 = vector.broadcast %cst_14 : f32 to vector<8x16x1xf32>
    %31 = arith.select %29, %21, %30 : vector<8x16x1xi1>, vector<8x16x1xf32>
    %32 = vector.shape_cast %31 : vector<8x16x1xf32> to vector<8x16xf32>
    %c0_15 = arith.constant 0 : index
    %c0_16 = arith.constant 0 : index
    %33 = vector.load %arg12[%c0_15, %c0_16] : memref<8x16xf32, #tpu.memory_space<vmem>>, vector<8x16xf32>
    tpu.vector_store %arg12[%c0_15, %c0_16], %32 {strides = array<i32>} : memref<8x16xf32, #tpu.memory_space<vmem>>, vector<8x16xf32>,
    %34 = arith.mulf %31, %31 : vector<8x16x1xf32>
    %35 = tpu.transpose %34, [0, 2, 1] : vector<8x16x1xf32> -> vector<8x1x16xf32>
    %cst_17 = arith.constant dense<0.000000e+00> : vector<8x1xf32>
    %36 = vector.multi_reduction <add>, %35, %cst_17 [2] : vector<8x1x16xf32> to vector<8x1xf32>
    "tpu.trace_start"() <{level = 10 : i32, message = "bqs,bsh->bqh"}> : () -> ()
    %cst_18 = arith.constant dense<0.000000e+00> : vector<8x1x32xf32>
    %37 = tpu.matmul %35, %0, %cst_18 {dimension_numbers = #tpu.dot_dimension_numbers<[2], [1], [1], [2], [0, 0, 0, 1, 1, 2], [0], [0]>, precision = #tpu.contract_precision<fp32>} : vector<8x1x16xf32>, vector<8x16x32xf32>, vector<8x1x32xf32> -> vector<8x1x32xf32>
    "tpu.trace_stop"() : () -> ()
    %38 = vector.shape_cast %37 : vector<8x1x32xf32> to vector<8x32xf32>
    %39 = tpu.reciprocal %36 : vector<8x1xf32> -> vector<8x1xf32>
    %40 = vector.broadcast %39 : vector<8x1xf32> to vector<8x32xf32>
    %41 = arith.mulf %38, %40 : vector<8x32xf32>
    %c0_19 = arith.constant 0 : index
    %c0_20 = arith.constant 0 : index
    %42 = vector.load %arg7[%c0_19, %c0_20] : memref<32x128xf32, #tpu.memory_space<vmem>>, vector<32x128xf32>
    %cst_21 = arith.constant dense<0.000000e+00> : vector<8x128xf32>
    %43 = tpu.matmul %41, %42, %cst_21 {dimension_numbers = #tpu.dot_dimension_numbers<[1], [0], [0], [1], [0, 0, 1, 1], [], []>} : vector<8x32xf32>, vector<32x128xf32>, vector<8x128xf32> -> vector<8x128xf32>
    %c0_22 = arith.constant 0 : index
    %c0_23 = arith.constant 0 : index
    %44 = vector.load %arg8[%c0_22, %c0_23] : memref<1x128xf32, #tpu.memory_space<vmem>>, vector<1x128xf32>
    %45 = vector.broadcast %44 : vector<1x128xf32> to vector<8x128xf32>
    %46 = arith.addf %43, %45 : vector<8x128xf32>
    %47 = math.tanh %46 : vector<8x128xf32>
    %c0_24 = arith.constant 0 : index
    %c0_25 = arith.constant 0 : index
    %48 = vector.load %arg9[%c0_24, %c0_25] : memref<128x3xf32, #tpu.memory_space<vmem>>, vector<128x3xf32>
    %cst_26 = arith.constant dense<0.000000e+00> : vector<8x3xf32>
    %49 = tpu.matmul %47, %48, %cst_26 {dimension_numbers = #tpu.dot_dimension_numbers<[1], [0], [0], [1], [0, 0, 1, 1], [], []>} : vector<8x128xf32>, vector<128x3xf32>, vector<8x3xf32> -> vector<8x3xf32>
    %c0_27 = arith.constant 0 : index
    %c0_28 = arith.constant 0 : index
    %50 = vector.load %arg10[%c0_27, %c0_28] : memref<1x3xf32, #tpu.memory_space<vmem>>, vector<1x3xf32>
    %51 = vector.broadcast %50 : vector<1x3xf32> to vector<8x3xf32>
    %52 = arith.addf %49, %51 : vector<8x3xf32>
    %53 = arith.negf %52 : vector<8x3xf32>
    %54 = math.exp %53 : vector<8x3xf32>
    %cst_29 = arith.constant 1.000000e+00 : f32
    %55 = vector.broadcast %cst_29 : f32 to vector<8x3xf32>
    %56 = arith.addf %55, %54 : vector<8x3xf32>
    %57 = arith.divf %55, %56 : vector<8x3xf32>
    %c0_30 = arith.constant 0 : index
    %c0_31 = arith.constant 0 : index
    %58 = vector.load %arg11[%c0_30, %c0_31] : memref<8x3xf32, #tpu.memory_space<vmem>>, vector<8x3xf32>
    tpu.vector_store %arg11[%c0_30, %c0_31], %57 {strides = array<i32>} : memref<8x3xf32, #tpu.memory_space<vmem>>, vector<8x3xf32>,
    return
  }
  func.func @transform_0(%arg0: i32) -> (i32, i32, i32) {
    %c0_i32 = arith.constant 0 : i32
    %c0_i32_0 = arith.constant 0 : i32
    %c0_i32_1 = arith.constant 0 : i32
    return %arg0, %c0_i32, %c0_i32_0 : i32, i32, i32
  }
  func.func @transform_1(%arg0: i32) -> (i32, i32) {
    %c0_i32 = arith.constant 0 : i32
    %c0_i32_0 = arith.constant 0 : i32
    return %arg0, %c0_i32 : i32, i32
  }
  func.func @transform_2(%arg0: i32) -> (i32, i32) {
    %c0_i32 = arith.constant 0 : i32
    %c0_i32_0 = arith.constant 0 : i32
    %c0_i32_1 = arith.constant 0 : i32
    return %c0_i32, %c0_i32_0 : i32, i32
  }
  func.func @transform_3(%arg0: i32) -> (i32, i32) {
    %c0_i32 = arith.constant 0 : i32
    %c0_i32_0 = arith.constant 0 : i32
    %c0_i32_1 = arith.constant 0 : i32
    return %c0_i32, %c0_i32_0 : i32, i32
  }
  func.func @transform_4(%arg0: i32) -> (i32, i32) {
    %c0_i32 = arith.constant 0 : i32
    %c0_i32_0 = arith.constant 0 : i32
    %c0_i32_1 = arith.constant 0 : i32
    return %c0_i32, %c0_i32_0 : i32, i32
  }
  func.func @transform_5(%arg0: i32) -> (i32, i32) {
    %c0_i32 = arith.constant 0 : i32
    %c0_i32_0 = arith.constant 0 : i32
    %c0_i32_1 = arith.constant 0 : i32
    return %c0_i32, %c0_i32_0 : i32, i32
  }
  func.func @transform_6(%arg0: i32) -> (i32, i32) {
    %c0_i32 = arith.constant 0 : i32
    %c0_i32_0 = arith.constant 0 : i32
    %c0_i32_1 = arith.constant 0 : i32
    return %c0_i32, %c0_i32_0 : i32, i32
  }
  func.func @transform_7(%arg0: i32) -> (i32, i32) {
    %c0_i32 = arith.constant 0 : i32
    %c0_i32_0 = arith.constant 0 : i32
    %c0_i32_1 = arith.constant 0 : i32
    return %c0_i32, %c0_i32_0 : i32, i32
  }
  func.func @transform_8(%arg0: i32) -> (i32, i32) {
    %c0_i32 = arith.constant 0 : i32
    %c0_i32_0 = arith.constant 0 : i32
    %c0_i32_1 = arith.constant 0 : i32
    return %c0_i32, %c0_i32_0 : i32, i32
  }
  func.func @transform_9(%arg0: i32) -> (i32, i32) {
    %c0_i32 = arith.constant 0 : i32
    %c0_i32_0 = arith.constant 0 : i32
    %c0_i32_1 = arith.constant 0 : i32
    return %c0_i32, %c0_i32_0 : i32, i32
  }
  func.func @transform_10(%arg0: i32) -> (i32, i32) {
    %c0_i32 = arith.constant 0 : i32
    %c0_i32_0 = arith.constant 0 : i32
    return %arg0, %c0_i32 : i32, i32
  }
  func.func @transform_11(%arg0: i32) -> (i32, i32) {
    %c0_i32 = arith.constant 0 : i32
    %c0_i32_0 = arith.constant 0 : i32
    return %arg0, %c0_i32 : i32, i32
  }
}

module attributes {stable_mosaic.version = 11 : i64} {
  func.func @kernel(%arg0: i32, %arg1: memref<8x16x32xf32, #tpu.memory_space<vmem>>, %arg2: memref<8x1xi32, #tpu.memory_space<vmem>>, %arg3: memref<32x128xf32, #tpu.memory_space<vmem>>, %arg4: memref<1x128xf32, #tpu.memory_space<vmem>>, %arg5: memref<1x128xf32, #tpu.memory_space<vmem>>, %arg6: memref<1x1xf32, #tpu.memory_space<vmem>>, %arg7: memref<32x128xf32, #tpu.memory_space<vmem>>, %arg8: memref<1x128xf32, #tpu.memory_space<vmem>>, %arg9: memref<128x3xf32, #tpu.memory_space<vmem>>, %arg10: memref<1x3xf32, #tpu.memory_space<vmem>>, %arg11: memref<8x3xf32, #tpu.memory_space<vmem>>, %arg12: memref<8x16xf32, #tpu.memory_space<vmem>>) attributes {dimension_semantics = [#tpu.dimension_semantics<parallel>], iteration_bounds = array<i64: 1>, scalar_prefetch = 0 : i64, scratch_operands = 0 : i64, tpu.core_type = #tpu.core_type<tc>, window_params = [{transform_indices = @transform_0, window_bounds = array<i64: 8, 16, 32>}, {transform_indices = @transform_1, window_bounds = array<i64: 8, 1>}, {pipeline_mode = #tpu.pipeline_mode<synchronous>, transform_indices = @transform_2, window_bounds = array<i64: 32, 128>}, {pipeline_mode = #tpu.pipeline_mode<synchronous>, transform_indices = @transform_3, window_bounds = array<i64: 1, 128>}, {pipeline_mode = #tpu.pipeline_mode<synchronous>, transform_indices = @transform_4, window_bounds = array<i64: 1, 128>}, {pipeline_mode = #tpu.pipeline_mode<synchronous>, transform_indices = @transform_5, window_bounds = array<i64: 1, 1>}, {pipeline_mode = #tpu.pipeline_mode<synchronous>, transform_indices = @transform_6, window_bounds = array<i64: 32, 128>}, {pipeline_mode = #tpu.pipeline_mode<synchronous>, transform_indices = @transform_7, window_bounds = array<i64: 1, 128>}, {pipeline_mode = #tpu.pipeline_mode<synchronous>, transform_indices = @transform_8, window_bounds = array<i64: 128, 3>}, {pipeline_mode = #tpu.pipeline_mode<synchronous>, transform_indices = @transform_9, window_bounds = array<i64: 1, 3>}, {transform_indices = @transform_10, window_bounds = array<i64: 8, 3>}, {transform_indices = @transform_11, window_bounds = array<i64: 8, 16>}]} {
    %c0 = arith.constant 0 : index
    %c0_0 = arith.constant 0 : index
    %c0_1 = arith.constant 0 : index
    %0 = vector.load %arg1[%c0, %c0_0, %c0_1] : memref<8x16x32xf32, #tpu.memory_space<vmem>>, vector<8x16x32xf32>
    %1 = vector.shape_cast %0 : vector<8x16x32xf32> to vector<128x32xf32>
    %c0_2 = arith.constant 0 : index
    %c0_3 = arith.constant 0 : index
    %2 = vector.load %arg3[%c0_2, %c0_3] : memref<32x128xf32, #tpu.memory_space<vmem>>, vector<32x128xf32>
    %cst = arith.constant dense<0.000000e+00> : vector<128x128xf32>
    %3 = tpu.matmul %1, %2, %cst {dimension_numbers = #tpu.dot_dimension_numbers<[1], [0], [0], [1], [0, 0, 1, 1], [], []>} : vector<128x32xf32>, vector<32x128xf32>, vector<128x128xf32> -> vector<128x128xf32>
    %c0_4 = arith.constant 0 : index
    %c0_5 = arith.constant 0 : index
    %4 = vector.load %arg4[%c0_4, %c0_5] : memref<1x128xf32, #tpu.memory_space<vmem>>, vector<1x128xf32>
    %5 = vector.broadcast %4 : vector<1x128xf32> to vector<128x128xf32>
    %6 = arith.addf %3, %5 : vector<128x128xf32>
    %7 = math.tanh %6 : vector<128x128xf32>
    %c0_6 = arith.constant 0 : index
    %c0_7 = arith.constant 0 : index
    %8 = vector.load %arg5[%c0_6, %c0_7] : memref<1x128xf32, #tpu.memory_space<vmem>>, vector<1x128xf32>
    %9 = vector.broadcast %8 : vector<1x128xf32> to vector<128x128xf32>
    %10 = arith.mulf %7, %9 : vector<128x128xf32>
    %cst_8 = arith.constant dense<0.000000e+00> : vector<128xf32>
    %11 = vector.multi_reduction <add>, %10, %cst_8 [1] : vector<128x128xf32> to vector<128xf32>
    %12 = vector.shape_cast %11 : vector<128xf32> to vector<128x1xf32>
    %c0_9 = arith.constant 0 : index
    %c0_10 = arith.constant 0 : index
    %13 = vector.load %arg6[%c0_9, %c0_10] : memref<1x1xf32, #tpu.memory_space<vmem>>, vector<1x1xf32>
    %14 = vector.broadcast %13 : vector<1x1xf32> to vector<128x1xf32>
    %15 = arith.addf %12, %14 : vector<128x1xf32>
    %16 = arith.negf %15 : vector<128x1xf32>
    %17 = math.exp %16 : vector<128x1xf32>
    %cst_11 = arith.constant 1.000000e+00 : f32
    %18 = vector.broadcast %cst_11 : f32 to vector<128x1xf32>
    %19 = arith.addf %18, %17 : vector<128x1xf32>
    %20 = arith.divf %18, %19 : vector<128x1xf32>
    %21 = vector.shape_cast %20 : vector<128x1xf32> to vector<8x16x1xf32>
    %c0_12 = arith.constant 0 : index
    %c0_13 = arith.constant 0 : index
    %22 = vector.load %arg2[%c0_12, %c0_13] : memref<8x1xi32, #tpu.memory_space<vmem>>, vector<8x1xi32>
    %23 = vector.shape_cast %22 : vector<8x1xi32> to vector<8x1x1xi32>
    %24 = tpu.iota {dimensions = array<i32: 1>} : vector<8x16x1xi32>
    %c1_i32 = arith.constant 1 : i32
    %25 = vector.broadcast %c1_i32 : i32 to vector<8x16x1xi32>
    %26 = arith.cmpi sge, %24, %25 : vector<8x16x1xi32>
    %27 = vector.broadcast %23 : vector<8x1x1xi32> to vector<8x16x1xi32>
    %28 = arith.cmpi slt, %24, %27 : vector<8x16x1xi32>
    %29 = arith.andi %26, %28 : vector<8x16x1xi1>
    %cst_14 = arith.constant 0.000000e+00 : f32
    %30 = vector.broadcast %cst_14 : f32 to vector<8x16x1xf32>
    %31 = arith.select %29, %21, %30 : vector<8x16x1xi1>, vector<8x16x1xf32>
    %32 = vector.shape_cast %31 : vector<8x16x1xf32> to vector<8x16xf32>
    %c0_15 = arith.constant 0 : index
    %c0_16 = arith.constant 0 : index
    %33 = vector.load %arg12[%c0_15, %c0_16] : memref<8x16xf32, #tpu.memory_space<vmem>>, vector<8x16xf32>
    tpu.vector_store %arg12[%c0_15, %c0_16], %32 {strides = array<i32>} : memref<8x16xf32, #tpu.memory_space<vmem>>, vector<8x16xf32>,
    %34 = arith.mulf %31, %31 : vector<8x16x1xf32>
    %cst_17 = arith.constant dense<0.000000e+00> : vector<8x1xf32>
    %35 = vector.multi_reduction <add>, %34, %cst_17 [1] : vector<8x16x1xf32> to vector<8x1xf32>
    %36 = vector.broadcast %34 : vector<8x16x1xf32> to vector<8x16x32xf32>
    %37 = arith.mulf %0, %36 : vector<8x16x32xf32>
    %cst_18 = arith.constant dense<0.000000e+00> : vector<8x32xf32>
    %38 = vector.multi_reduction <add>, %37, %cst_18 [1] : vector<8x16x32xf32> to vector<8x32xf32>
    %39 = tpu.reciprocal %35 : vector<8x1xf32> -> vector<8x1xf32>
    %40 = vector.broadcast %39 : vector<8x1xf32> to vector<8x32xf32>
    %41 = arith.mulf %38, %40 : vector<8x32xf32>
    %c0_19 = arith.constant 0 : index
    %c0_20 = arith.constant 0 : index
    %42 = vector.load %arg7[%c0_19, %c0_20] : memref<32x128xf32, #tpu.memory_space<vmem>>, vector<32x128xf32>
    %cst_21 = arith.constant dense<0.000000e+00> : vector<8x128xf32>
    %43 = tpu.matmul %41, %42, %cst_21 {dimension_numbers = #tpu.dot_dimension_numbers<[1], [0], [0], [1], [0, 0, 1, 1], [], []>} : vector<8x32xf32>, vector<32x128xf32>, vector<8x128xf32> -> vector<8x128xf32>
    %c0_22 = arith.constant 0 : index
    %c0_23 = arith.constant 0 : index
    %44 = vector.load %arg8[%c0_22, %c0_23] : memref<1x128xf32, #tpu.memory_space<vmem>>, vector<1x128xf32>
    %45 = vector.broadcast %44 : vector<1x128xf32> to vector<8x128xf32>
    %46 = arith.addf %43, %45 : vector<8x128xf32>
    %47 = math.tanh %46 : vector<8x128xf32>
    %c0_24 = arith.constant 0 : index
    %c0_25 = arith.constant 0 : index
    %48 = vector.load %arg9[%c0_24, %c0_25] : memref<128x3xf32, #tpu.memory_space<vmem>>, vector<128x3xf32>
    %cst_26 = arith.constant dense<0.000000e+00> : vector<8x3xf32>
    %49 = tpu.matmul %47, %48, %cst_26 {dimension_numbers = #tpu.dot_dimension_numbers<[1], [0], [0], [1], [0, 0, 1, 1], [], []>} : vector<8x128xf32>, vector<128x3xf32>, vector<8x3xf32> -> vector<8x3xf32>
    %c0_27 = arith.constant 0 : index
    %c0_28 = arith.constant 0 : index
    %50 = vector.load %arg10[%c0_27, %c0_28] : memref<1x3xf32, #tpu.memory_space<vmem>>, vector<1x3xf32>
    %51 = vector.broadcast %50 : vector<1x3xf32> to vector<8x3xf32>
    %52 = arith.addf %49, %51 : vector<8x3xf32>
    %53 = arith.negf %52 : vector<8x3xf32>
    %54 = math.exp %53 : vector<8x3xf32>
    %cst_29 = arith.constant 1.000000e+00 : f32
    %55 = vector.broadcast %cst_29 : f32 to vector<8x3xf32>
    %56 = arith.addf %55, %54 : vector<8x3xf32>
    %57 = arith.divf %55, %56 : vector<8x3xf32>
    %c0_30 = arith.constant 0 : index
    %c0_31 = arith.constant 0 : index
    %58 = vector.load %arg11[%c0_30, %c0_31] : memref<8x3xf32, #tpu.memory_space<vmem>>, vector<8x3xf32>
    tpu.vector_store %arg11[%c0_30, %c0_31], %57 {strides = array<i32>} : memref<8x3xf32, #tpu.memory_space<vmem>>, vector<8x3xf32>,
    return
  }
  func.func @transform_0(%arg0: i32) -> (i32, i32, i32) {
    %c0_i32 = arith.constant 0 : i32
    %c0_i32_0 = arith.constant 0 : i32
    %c0_i32_1 = arith.constant 0 : i32
    return %arg0, %c0_i32, %c0_i32_0 : i32, i32, i32
  }
  func.func @transform_1(%arg0: i32) -> (i32, i32) {
    %c0_i32 = arith.constant 0 : i32
    %c0_i32_0 = arith.constant 0 : i32
    return %arg0, %c0_i32 : i32, i32
  }
  func.func @transform_2(%arg0: i32) -> (i32, i32) {
    %c0_i32 = arith.constant 0 : i32
    %c0_i32_0 = arith.constant 0 : i32
    %c0_i32_1 = arith.constant 0 : i32
    return %c0_i32, %c0_i32_0 : i32, i32
  }
  func.func @transform_3(%arg0: i32) -> (i32, i32) {
    %c0_i32 = arith.constant 0 : i32
    %c0_i32_0 = arith.constant 0 : i32
    %c0_i32_1 = arith.constant 0 : i32
    return %c0_i32, %c0_i32_0 : i32, i32
  }
  func.func @transform_4(%arg0: i32) -> (i32, i32) {
    %c0_i32 = arith.constant 0 : i32
    %c0_i32_0 = arith.constant 0 : i32
    %c0_i32_1 = arith.constant 0 : i32
    return %c0_i32, %c0_i32_0 : i32, i32
  }
  func.func @transform_5(%arg0: i32) -> (i32, i32) {
    %c0_i32 = arith.constant 0 : i32
    %c0_i32_0 = arith.constant 0 : i32
    %c0_i32_1 = arith.constant 0 : i32
    return %c0_i32, %c0_i32_0 : i32, i32
  }
  func.func @transform_6(%arg0: i32) -> (i32, i32) {
    %c0_i32 = arith.constant 0 : i32
    %c0_i32_0 = arith.constant 0 : i32
    %c0_i32_1 = arith.constant 0 : i32
    return %c0_i32, %c0_i32_0 : i32, i32
  }
  func.func @transform_7(%arg0: i32) -> (i32, i32) {
    %c0_i32 = arith.constant 0 : i32
    %c0_i32_0 = arith.constant 0 : i32
    %c0_i32_1 = arith.constant 0 : i32
    return %c0_i32, %c0_i32_0 : i32, i32
  }
  func.func @transform_8(%arg0: i32) -> (i32, i32) {
    %c0_i32 = arith.constant 0 : i32
    %c0_i32_0 = arith.constant 0 : i32
    %c0_i32_1 = arith.constant 0 : i32
    return %c0_i32, %c0_i32_0 : i32, i32
  }
  func.func @transform_9(%arg0: i32) -> (i32, i32) {
    %c0_i32 = arith.constant 0 : i32
    %c0_i32_0 = arith.constant 0 : i32
    %c0_i32_1 = arith.constant 0 : i32
    return %c0_i32, %c0_i32_0 : i32, i32
  }
  func.func @transform_10(%arg0: i32) -> (i32, i32) {
    %c0_i32 = arith.constant 0 : i32
    %c0_i32_0 = arith.constant 0 : i32
    return %arg0, %c0_i32 : i32, i32
  }
  func.func @transform_11(%arg0: i32) -> (i32, i32) {
    %c0_i32 = arith.constant 0 : i32
    %c0_i32_0 = arith.constant 0 : i32
    return %arg0, %c0_i32 : i32, i32
  }
}

</mosaic_0001>

<llo_original>
// kernel: tpu_custom_call.1
$region0: #{tpu_custom_call.1}
  #allocation0 [shape = 'u32[]', space=smem, size = 0x4, offset = 0x4, fixed_abs, tag = 'smem constant byte address 0x4 - core index']
  #allocation1 [shape = 'u32[144,128]{1,0:T(1,128)}', space=vmem, size = 0x12000, scoped, tag = 'internal scratch']
  #allocation2 [shape = 'f32[1,1]{1,0:T(1,128)S(1)}', space=vmem, size = 0x200, scoped, tag = 'scoped memory for tpu_custom_call.1']
  %s0 = inlined_call_operand.vmem [shape: f32[8,16,32], index: 0, kind: input, shape index: {}]
  %s1 = inlined_call_operand.vmem [shape: s32[8,1], index: 1, kind: input, shape index: {}]
  %s2 = inlined_call_operand.hbm [shape: f32[32,128], index: 2, kind: input, shape index: {}]
  %s3 = inlined_call_operand.vmem [shape: f32[1,128], index: 3, kind: input, shape index: {}]
  %s4 = inlined_call_operand.vmem [shape: f32[1,128], index: 4, kind: input, shape index: {}]
  %s5 = inlined_call_operand.<no memory space> [shape: f32[1,1], index: 5, kind: input, shape index: {}]
  %s6 = inlined_call_operand.hbm [shape: f32[32,128], index: 6, kind: input, shape index: {}]
  %s7 = inlined_call_operand.vmem [shape: f32[1,128], index: 7, kind: input, shape index: {}]
  %s8 = inlined_call_operand.vmem [shape: f32[128,3], index: 8, kind: input, shape index: {}]
  %s9 = inlined_call_operand.vmem [shape: f32[1,3], index: 9, kind: input, shape index: {}]
  %s10 = inlined_call_operand.vmem [shape: f32[8,3], index: 10, kind: output, shape index: {0}]
  %s11 = inlined_call_operand.hbm [shape: f32[8,16], index: 11, kind: output, shape index: {1}]
  %12 = xla_tuple %s10, %s11
  %s13 = sld [smem:[#allocation0]]
  $region66: #{tpu_custom_call.1} parent=0
    _
  %s15 = ssub.s32 1, %s13
  %s16 = scalar_select 0, %s15, %s13
  %v17 = vstv %s5
  %18 = vst [vmem:[#allocation2] sm:$0x1] %v17
  $region1: #{tpu_custom_call.1} parent=0
    #allocation3 [shape = 'u8[16384]{0}', space=vmem, size = 0x4000, scoped, tag = 'input window, operand 2, single buffered']
    #allocation4 [shape = 's32[1]{0}', space=sflag, size = 0x4, scoped, tag = 'scoped memory for tpu_custom_call.1']
    #allocation5 [shape = 's32[1]{0}', space=sflag, size = 0x4, scoped, tag = 'scoped memory for tpu_custom_call.1']
    #allocation6 [shape = 'u8[16384]{0}', space=vmem, size = 0x4000, scoped, tag = 'input window, operand 6, single buffered']
    #allocation7 [shape = 's32[1]{0}', space=sflag, size = 0x4, scoped, tag = 'scoped memory for tpu_custom_call.1']
    #allocation8 [shape = 'u8[4096]{0}', space=vmem, size = 0x1000, scoped, tag = 'output window, operand 1, single buffered']
    %19 = vsyncpa [#allocation4], 0
    %20 = vsyncpa [#allocation7], 0
    %21 = vsyncpa [#allocation5], 0
    // Predicated region
    $region2: #{tpu_custom_call.1} parent=1 // pred_check
      _
    $region3: #{tpu_custom_call.1} parent=1 // pred_check_branch
      %23 = sbr.rel (0) target = $region5
    $region4: #{tpu_custom_call.1} parent=1 // pred_region
      _
    $region5: #{tpu_custom_call.1} parent=1 // pred_fallthru
      _
    // Predicated region
    $region6: #{tpu_custom_call.1} parent=1 // pred_check
      _
    $region7: #{tpu_custom_call.1} parent=1 // pred_check_branch
      %25 = sbr.rel (0) target = $region9
    $region8: #{tpu_custom_call.1} parent=1 // pred_region
      _
    $region9: #{tpu_custom_call.1} parent=1 // pred_fallthru
      _
    // Predicated region
    $region10: #{tpu_custom_call.1} parent=1 // pred_check
      _
    $region11: #{tpu_custom_call.1} parent=1 // pred_check_branch
      %27 = sbr.rel (0) target = $region13
    $region12: #{tpu_custom_call.1} parent=1 // pred_region
      %s29 = ssub.s32 512, 512
      %30 = vsyncadd [#allocation4], %s29
      %s31 = sshll.u32 [#allocation3], 4
      %s32 = int_to_ptr.vmem [resolvable:$true] %s31
      %37 = dma.hbm_to_vmem [thread:$0]  %s2, 512, %s32, [#allocation4], 128, 128, 8
    $region13: #{tpu_custom_call.1} parent=1 // pred_fallthru
      _
    // Predicated region
    $region14: #{tpu_custom_call.1} parent=1 // pred_check
      _
    $region15: #{tpu_custom_call.1} parent=1 // pred_check_branch
      %39 = sbr.rel (0) target = $region17
    $region16: #{tpu_custom_call.1} parent=1 // pred_region
      _
    $region17: #{tpu_custom_call.1} parent=1 // pred_fallthru
      _
    // Predicated region
    $region18: #{tpu_custom_call.1} parent=1 // pred_check
      _
    $region19: #{tpu_custom_call.1} parent=1 // pred_check_branch
      %41 = sbr.rel (0) target = $region21
    $region20: #{tpu_custom_call.1} parent=1 // pred_region
      _
    $region21: #{tpu_custom_call.1} parent=1 // pred_fallthru
      _
    // Predicated region
    $region22: #{tpu_custom_call.1} parent=1 // pred_check
      _
    $region23: #{tpu_custom_call.1} parent=1 // pred_check_branch
      %43 = sbr.rel (0) target = $region25
    $region24: #{tpu_custom_call.1} parent=1 // pred_region
      _
    $region25: #{tpu_custom_call.1} parent=1 // pred_fallthru
      _
    // Predicated region
    $region26: #{tpu_custom_call.1} parent=1 // pred_check
      _
    $region27: #{tpu_custom_call.1} parent=1 // pred_check_branch
      %45 = sbr.rel (0) target = $region29
    $region28: #{tpu_custom_call.1} parent=1 // pred_region
      %s47 = ssub.s32 512, 512
      %48 = vsyncadd [#allocation7], %s47
      %s49 = sshll.u32 [#allocation6], 4
      %s50 = int_to_ptr.vmem [resolvable:$true] %s49
      %55 = dma.hbm_to_vmem [thread:$0]  %s6, 512, %s50, [#allocation7], 128, 128, 8
    $region29: #{tpu_custom_call.1} parent=1 // pred_fallthru
      _
    // Predicated region
    $region30: #{tpu_custom_call.1} parent=1 // pred_check
      _
    $region31: #{tpu_custom_call.1} parent=1 // pred_check_branch
      %57 = sbr.rel (0) target = $region33
    $region32: #{tpu_custom_call.1} parent=1 // pred_region
      _
    $region33: #{tpu_custom_call.1} parent=1 // pred_fallthru
      _
    // Predicated region
    $region34: #{tpu_custom_call.1} parent=1 // pred_check
      _
    $region35: #{tpu_custom_call.1} parent=1 // pred_check_branch
      %59 = sbr.rel (0) target = $region37
    $region36: #{tpu_custom_call.1} parent=1 // pred_region
      _
    $region37: #{tpu_custom_call.1} parent=1 // pred_fallthru
      _
    // Predicated region
    $region38: #{tpu_custom_call.1} parent=1 // pred_check
      _
    $region39: #{tpu_custom_call.1} parent=1 // pred_check_branch
      %61 = sbr.rel (0) target = $region41
    $region40: #{tpu_custom_call.1} parent=1 // pred_region
      _
    $region41: #{tpu_custom_call.1} parent=1 // pred_fallthru
      _
    // Predicated region
    $region42: #{tpu_custom_call.1} parent=1 // pred_check
      _
    $region43: #{tpu_custom_call.1} parent=1 // pred_check_branch
      %63 = sbr.rel (0) target = $region45
    $region44: #{tpu_custom_call.1} parent=1 // pred_region
      %64 = dma.done [#allocation4], 512
    $region45: #{tpu_custom_call.1} parent=1 // pred_fallthru
      _
    // Predicated region
    $region46: #{tpu_custom_call.1} parent=1 // pred_check
      _
    $region47: #{tpu_custom_call.1} parent=1 // pred_check_branch
      %66 = sbr.rel (0) target = $region49
    $region48: #{tpu_custom_call.1} parent=1 // pred_region
      %67 = dma.done [#allocation7], 512
    $region49: #{tpu_custom_call.1} parent=1 // pred_fallthru
      _
    %v68 = vld [vmem:[%s0] sm:$0xff]
    %v69 = vld [vmem:[%s0 + $0x8] sm:$0xff]
    %v70 = vld [vmem:[%s0 + $0x10] sm:$0xff]
    %v71 = vld [vmem:[%s0 + $0x18] sm:$0xff]
    %v72 = vld [vmem:[%s0 + $0x20] sm:$0xff]
    %v73 = vld [vmem:[%s0 + $0x28] sm:$0xff]
    %v74 = vld [vmem:[%s0 + $0x30] sm:$0xff]
    %v75 = vld [vmem:[%s0 + $0x38] sm:$0xff]
    %v76 = vld [vmem:[%s0 + $0x40] sm:$0xff]
    %v77 = vld [vmem:[%s0 + $0x48] sm:$0xff]
    %v78 = vld [vmem:[%s0 + $0x50] sm:$0xff]
    %v79 = vld [vmem:[%s0 + $0x58] sm:$0xff]
    %v80 = vld [vmem:[%s0 + $0x60] sm:$0xff]
    %v81 = vld [vmem:[%s0 + $0x68] sm:$0xff]
    %v82 = vld [vmem:[%s0 + $0x70] sm:$0xff]
    %v83 = vld [vmem:[%s0 + $0x78] sm:$0xff]
    %v84 = vld [vmem:[#allocation3] sm:$0xff]
    %v85 = vld [vmem:[#allocation3 + $0x8] sm:$0xff]
    %v86 = vld [vmem:[#allocation3 + $0x10] sm:$0xff]
    %v87 = vld [vmem:[#allocation3 + $0x18] sm:$0xff]
    %v88 = vld [vmem:[%s3] sm:$0x1]
    %v90 = vlaneseq
    %v91 = vshrl.u32 %v90, 7
    %v92 = vsub.s32 0, %v91
    %v93 = vrot.slane %v88, %v92
    %vm95 = vcmask 261120
    %v97 = vsel %vm95, %v68, 0
    %v100 = vsel %vm95, %v69, 0
    %v103 = vsel %vm95, %v70, 0
    %v106 = vsel %vm95, %v71, 0
    %v109 = vsel %vm95, %v72, 0
    %v112 = vsel %vm95, %v73, 0
    %v115 = vsel %vm95, %v74, 0
    %v118 = vsel %vm95, %v75, 0
    %v121 = vsel %vm95, %v76, 0
    %v124 = vsel %vm95, %v77, 0
    %v127 = vsel %vm95, %v78, 0
    %v130 = vsel %vm95, %v79, 0
    %v133 = vsel %vm95, %v80, 0
    %v136 = vsel %vm95, %v81, 0
    %v139 = vsel %vm95, %v82, 0
    %v142 = vsel %vm95, %v83, 0
    %144 = vmatprep.subr.mxu0 0.0
    %145 = vmatpush1.msra.mxu0 0.0
    %146 = vmatprep.subr.mxu0 0.0
    %147 = vmatpush1.msra.mxu0 0.0
    %148 = vmatprep.subr.mxu0 0.0
    %149 = vmatpush1.msra.mxu0 0.0
    %150 = vmatprep.subr.mxu0 0.0
    %151 = vmatpush1.msra.mxu0 0.0
    %152 = vmatprep.subr.mxu0 0.0
    %153 = vmatpush1.msra.mxu0 0.0
    %154 = vmatprep.subr.mxu0 0.0
    %155 = vmatpush1.msra.mxu0 0.0
    %156 = vmatprep.subr.mxu0 0.0
    %157 = vmatpush1.msra.mxu0 0.0
    %158 = vmatprep.subr.mxu0 0.0
    %159 = vmatpush1.msra.mxu0 0.0
    %160 = vmatprep.subr.mxu0 0.0
    %161 = vmatpush1.msra.mxu0 0.0
    %162 = vmatprep.subr.mxu0 0.0
    %163 = vmatpush1.msra.mxu0 0.0
    %164 = vmatprep.subr.mxu0 0.0
    %165 = vmatpush1.msra.mxu0 0.0
    %166 = vmatprep.subr.mxu0 0.0
    %167 = vmatpush1.msra.mxu0 0.0
    %168 = vmatprep.subr.mxu0 0.0
    %169 = vmatpush1.msra.mxu0 %v87
    %170 = vmatprep.subr.mxu0 0.0
    %171 = vmatpush1.msra.mxu0 %v86
    %172 = vmatprep.subr.mxu0 0.0
    %173 = vmatpush1.msra.mxu0 %v85
    %174 = vmatprep.subr.mxu0 0.0
    %175 = vmatpush1.msra.mxu0 %v84
    %176 = vmatprep.subr.mxu0 0.0
    %177 = vmatpush2.msra.mxu0 0.0
    %178 = vmatprep.subr.mxu0 0.0
    %179 = vmatpush2.msra.mxu0 0.0
    %180 = vmatprep.subr.mxu0 0.0
    %181 = vmatpush2.msra.mxu0 0.0
    %182 = vmatprep.subr.mxu0 0.0
    %183 = vmatpush2.msra.mxu0 0.0
    %184 = vmatprep.subr.mxu0 0.0
    %185 = vmatpush2.msra.mxu0 0.0
    %186 = vmatprep.subr.mxu0 0.0
    %187 = vmatpush2.msra.mxu0 0.0
    %188 = vmatprep.subr.mxu0 0.0
    %189 = vmatpush2.msra.mxu0 0.0
    %190 = vmatprep.subr.mxu0 0.0
    %191 = vmatpush2.msra.mxu0 0.0
    %192 = vmatprep.subr.mxu0 0.0
    %193 = vmatpush2.msra.mxu0 0.0
    %194 = vmatprep.subr.mxu0 0.0
    %195 = vmatpush2.msra.mxu0 0.0
    %196 = vmatprep.subr.mxu0 0.0
    %197 = vmatpush2.msra.mxu0 0.0
    %198 = vmatprep.subr.mxu0 0.0
    %199 = vmatpush2.msra.mxu0 0.0
    %200 = vmatprep.subr.mxu0 0.0
    %201 = vmatpush2.msra.mxu0 0.0
    %202 = vmatprep.subr.mxu0 0.0
    %203 = vmatpush2.msra.mxu0 0.0
    %204 = vmatprep.subr.mxu0 0.0
    %205 = vmatpush2.msra.mxu0 0.0
    %206 = vmatprep.subr.mxu0 0.0
    %207 = vmatpush2.msra.mxu0 0.0
    %208 = vmatprep.mubr.f32.mxu0 0.0
    %209 = vmatmul.mubr.f32.gmra.mxu0 %v97
    %v210 = vpop.f32.mrf.mxu0
    %v211 = vadd.f32 %v93, %v210
    %v212 = vpop.f32.mrf.mxu0
    %213 = vmatprep.mubr.f32.mxu0 0.0
    %214 = vmatmul.mubr.f32.gmra.mxu0 %v100
    %v215 = vpop.f32.mrf.mxu0
    %v216 = vadd.f32 %v93, %v215
    %v217 = vpop.f32.mrf.mxu0
    %218 = vmatprep.mubr.f32.mxu0 0.0
    %219 = vmatmul.mubr.f32.gmra.mxu0 %v103
    %v220 = vpop.f32.mrf.mxu0
    %v221 = vadd.f32 %v93, %v220
    %v222 = vpop.f32.mrf.mxu0
    %223 = vmatprep.mubr.f32.mxu0 0.0
    %224 = vmatmul.mubr.f32.gmra.mxu0 %v106
    %v225 = vpop.f32.mrf.mxu0
    %v226 = vadd.f32 %v93, %v225
    %v227 = vpop.f32.mrf.mxu0
    %228 = vmatprep.mubr.f32.mxu0 0.0
    %229 = vmatmul.mubr.f32.gmra.mxu0 %v109
    %v230 = vpop.f32.mrf.mxu0
    %v231 = vadd.f32 %v93, %v230
    %v232 = vpop.f32.mrf.mxu0
    %233 = vmatprep.mubr.f32.mxu0 0.0
    %234 = vmatmul.mubr.f32.gmra.mxu0 %v112
    %v235 = vpop.f32.mrf.mxu0
    %v236 = vadd.f32 %v93, %v235
    %v237 = vpop.f32.mrf.mxu0
    %238 = vmatprep.mubr.f32.mxu0 0.0
    %239 = vmatmul.mubr.f32.gmra.mxu0 %v115
    %v240 = vpop.f32.mrf.mxu0
    %v241 = vadd.f32 %v93, %v240
    %v242 = vpop.f32.mrf.mxu0
    %243 = vmatprep.mubr.f32.mxu0 0.0
    %244 = vmatmul.mubr.f32.gmra.mxu0 %v118
    %v245 = vpop.f32.mrf.mxu0
    %v246 = vadd.f32 %v93, %v245
    %v247 = vpop.f32.mrf.mxu0
    %248 = vmatprep.mubr.f32.mxu0 0.0
    %249 = vmatmul.mubr.f32.gmra.mxu0 %v121
    %v250 = vpop.f32.mrf.mxu0
    %v251 = vadd.f32 %v93, %v250
    %v252 = vpop.f32.mrf.mxu0
    %253 = vmatprep.mubr.f32.mxu0 0.0
    %254 = vmatmul.mubr.f32.gmra.mxu0 %v124
    %v255 = vpop.f32.mrf.mxu0
    %v256 = vadd.f32 %v93, %v255
    %v257 = vpop.f32.mrf.mxu0
    %258 = vmatprep.mubr.f32.mxu0 0.0
    %259 = vmatmul.mubr.f32.gmra.mxu0 %v127
    %v260 = vpop.f32.mrf.mxu0
    %v261 = vadd.f32 %v93, %v260
    %v262 = vpop.f32.mrf.mxu0
    %263 = vmatprep.mubr.f32.mxu0 0.0
    %264 = vmatmul.mubr.f32.gmra.mxu0 %v130
    %v265 = vpop.f32.mrf.mxu0
    %v266 = vadd.f32 %v93, %v265
    %v267 = vpop.f32.mrf.mxu0
    %268 = vmatprep.mubr.f32.mxu0 0.0
    %269 = vmatmul.mubr.f32.gmra.mxu0 %v133
    %v270 = vpop.f32.mrf.mxu0
    %v271 = vadd.f32 %v93, %v270
    %v272 = vpop.f32.mrf.mxu0
    %273 = vmatprep.mubr.f32.mxu0 0.0
    %274 = vmatmul.mubr.f32.gmra.mxu0 %v136
    %v275 = vpop.f32.mrf.mxu0
    %v276 = vadd.f32 %v93, %v275
    %v277 = vpop.f32.mrf.mxu0
    %278 = vmatprep.mubr.f32.mxu0 0.0
    %279 = vmatmul.mubr.f32.gmra.mxu0 %v139
    %v280 = vpop.f32.mrf.mxu0
    %v281 = vadd.f32 %v93, %v280
    %v282 = vpop.f32.mrf.mxu0
    %283 = vmatprep.mubr.f32.mxu0 0.0
    %284 = vmatmul.mubr.f32.gmra.mxu0 %v142
    %v285 = vpop.f32.mrf.mxu0
    %v286 = vadd.f32 %v93, %v285
    %v287 = vpop.f32.mrf.mxu0
    %288 = vdwg.mxu0
    %v289 = vtanh.pop %v211
    %v290 = vtanh.pop %v216
    %v291 = vtanh.pop %v221
    %v292 = vtanh.pop %v226
    %v293 = vtanh.pop %v231
    %v294 = vtanh.pop %v236
    %v295 = vtanh.pop %v241
    %v296 = vtanh.pop %v246
    %v297 = vtanh.pop %v251
    %v298 = vtanh.pop %v256
    %v299 = vtanh.pop %v261
    %v300 = vtanh.pop %v266
    %v301 = vtanh.pop %v271
    %v302 = vtanh.pop %v276
    %v303 = vtanh.pop %v281
    %v304 = vtanh.pop %v286
    %v305 = vld [vmem:[%s4] sm:$0x1]
    %v307 = vlaneseq
    %v308 = vshrl.u32 %v307, 7
    %v309 = vsub.s32 0, %v308
    %v310 = vrot.slane %v305, %v309
    %v312 = vmul.f32 %v289, %v310
    %v313 = vmul.f32 %v290, %v310
    %v314 = vmul.f32 %v291, %v310
    %v315 = vmul.f32 %v292, %v310
    %v316 = vmul.f32 %v293, %v310
    %v317 = vmul.f32 %v294, %v310
    %v318 = vmul.f32 %v295, %v310
    %v319 = vmul.f32 %v296, %v310
    %v320 = vmul.f32 %v297, %v310
    %v321 = vmul.f32 %v298, %v310
    %v322 = vmul.f32 %v299, %v310
    %v323 = vmul.f32 %v300, %v310
    %v324 = vmul.f32 %v301, %v310
    %v325 = vmul.f32 %v302, %v310
    %v326 = vmul.f32 %v303, %v310
    %v327 = vmul.f32 %v304, %v310
    %328 = vadd.xlane.f32.xlu0 %v312
    %v329 = vpop.xlane.xlu0 %328
    %330 = vadd.xlane.f32.xlu0 %v313
    %v331 = vpop.xlane.xlu0 %330
    %332 = vadd.xlane.f32.xlu0 %v314
    %v333 = vpop.xlane.xlu0 %332
    %334 = vadd.xlane.f32.xlu0 %v315
    %v335 = vpop.xlane.xlu0 %334
    %336 = vadd.xlane.f32.xlu0 %v316
    %v337 = vpop.xlane.xlu0 %336
    %338 = vadd.xlane.f32.xlu0 %v317
    %v339 = vpop.xlane.xlu0 %338
    %340 = vadd.xlane.f32.xlu0 %v318
    %v341 = vpop.xlane.xlu0 %340
    %342 = vadd.xlane.f32.xlu0 %v319
    %v343 = vpop.xlane.xlu0 %342
    %344 = vadd.xlane.f32.xlu0 %v320
    %v345 = vpop.xlane.xlu0 %344
    %346 = vadd.xlane.f32.xlu0 %v321
    %v347 = vpop.xlane.xlu0 %346
    %348 = vadd.xlane.f32.xlu0 %v322
    %v349 = vpop.xlane.xlu0 %348
    %350 = vadd.xlane.f32.xlu0 %v323
    %v351 = vpop.xlane.xlu0 %350
    %352 = vadd.xlane.f32.xlu0 %v324
    %v353 = vpop.xlane.xlu0 %352
    %354 = vadd.xlane.f32.xlu0 %v325
    %v355 = vpop.xlane.xlu0 %354
    %356 = vadd.xlane.f32.xlu0 %v326
    %v357 = vpop.xlane.xlu0 %356
    %358 = vadd.xlane.f32.xlu0 %v327
    %v359 = vpop.xlane.xlu0 %358
    %v360 = vld [vmem:[#allocation2] sm:$0x1]
    %v362 = vlaneseq
    %v363 = vshrl.u32 %v362, 7
    %v364 = vsub.s32 0, %v363
    %v365 = vrot.slane %v360, %v364
    %v367 = vadd.f32 %v329, %v365
    %v368 = vadd.f32 %v331, %v365
    %v369 = vadd.f32 %v333, %v365
    %v370 = vadd.f32 %v335, %v365
    %v371 = vadd.f32 %v337, %v365
    %v372 = vadd.f32 %v339, %v365
    %v373 = vadd.f32 %v341, %v365
    %v374 = vadd.f32 %v343, %v365
    %v375 = vadd.f32 %v345, %v365
    %v376 = vadd.f32 %v347, %v365
    %v377 = vadd.f32 %v349, %v365
    %v378 = vadd.f32 %v351, %v365
    %v379 = vadd.f32 %v353, %v365
    %v380 = vadd.f32 %v355, %v365
    %v381 = vadd.f32 %v357, %v365
    %v382 = vadd.f32 %v359, %v365
    %v383 = vxor.u32 %v367, 2147483648
    %v384 = vxor.u32 %v368, 2147483648
    %v385 = vxor.u32 %v369, 2147483648
    %v386 = vxor.u32 %v370, 2147483648
    %v387 = vxor.u32 %v371, 2147483648
    %v388 = vxor.u32 %v372, 2147483648
    %v389 = vxor.u32 %v373, 2147483648
    %v390 = vxor.u32 %v374, 2147483648
    %v391 = vxor.u32 %v375, 2147483648
    %v392 = vxor.u32 %v376, 2147483648
    %v393 = vxor.u32 %v377, 2147483648
    %v394 = vxor.u32 %v378, 2147483648
    %v395 = vxor.u32 %v379, 2147483648
    %v396 = vxor.u32 %v380, 2147483648
    %v397 = vxor.u32 %v381, 2147483648
    %v398 = vxor.u32 %v382, 2147483648
    %v399 = vmul.f32 %v383, 1.442695
    %v400 = vpow.pop %v399
    %v401 = vmul.f32 %v384, 1.442695
    %v402 = vpow.pop %v401
    %v403 = vmul.f32 %v385, 1.442695
    %v404 = vpow.pop %v403
    %v405 = vmul.f32 %v386, 1.442695
    %v406 = vpow.pop %v405
    %v407 = vmul.f32 %v387, 1.442695
    %v408 = vpow.pop %v407
    %v409 = vmul.f32 %v388, 1.442695
    %v410 = vpow.pop %v409
    %v411 = vmul.f32 %v389, 1.442695
    %v412 = vpow.pop %v411
    %v413 = vmul.f32 %v390, 1.442695
    %v414 = vpow.pop %v413
    %v415 = vmul.f32 %v391, 1.442695
    %v416 = vpow.pop %v415
    %v417 = vmul.f32 %v392, 1.442695
    %v418 = vpow.pop %v417
    %v419 = vmul.f32 %v393, 1.442695
    %v420 = vpow.pop %v419
    %v421 = vmul.f32 %v394, 1.442695
    %v422 = vpow.pop %v421
    %v423 = vmul.f32 %v395, 1.442695
    %v424 = vpow.pop %v423
    %v425 = vmul.f32 %v396, 1.442695
    %v426 = vpow.pop %v425
    %v427 = vmul.f32 %v397, 1.442695
    %v428 = vpow.pop %v427
    %v429 = vmul.f32 %v398, 1.442695
    %v430 = vpow.pop %v429
    %v431 = vadd.f32 %v400, 1.0
    %v432 = vadd.f32 %v402, 1.0
    %v433 = vadd.f32 %v404, 1.0
    %v434 = vadd.f32 %v406, 1.0
    %v435 = vadd.f32 %v408, 1.0
    %v436 = vadd.f32 %v410, 1.0
    %v437 = vadd.f32 %v412, 1.0
    %v438 = vadd.f32 %v414, 1.0
    %v439 = vadd.f32 %v416, 1.0
    %v440 = vadd.f32 %v418, 1.0
    %v441 = vadd.f32 %v420, 1.0
    %v442 = vadd.f32 %v422, 1.0
    %v443 = vadd.f32 %v424, 1.0
    %v444 = vadd.f32 %v426, 1.0
    %v445 = vadd.f32 %v428, 1.0
    %v446 = vadd.f32 %v430, 1.0
    %v447 = vrcp.pop %v431
    %v448 = vmul.f32 1.0, %v447
    %v449 = vrcp.pop %v432
    %v450 = vmul.f32 1.0, %v449
    %v451 = vrcp.pop %v433
    %v452 = vmul.f32 1.0, %v451
    %v453 = vrcp.pop %v434
    %v454 = vmul.f32 1.0, %v453
    %v455 = vrcp.pop %v435
    %v456 = vmul.f32 1.0, %v455
    %v457 = vrcp.pop %v436
    %v458 = vmul.f32 1.0, %v457
    %v459 = vrcp.pop %v437
    %v460 = vmul.f32 1.0, %v459
    %v461 = vrcp.pop %v438
    %v462 = vmul.f32 1.0, %v461
    %v463 = vrcp.pop %v439
    %v464 = vmul.f32 1.0, %v463
    %v465 = vrcp.pop %v440
    %v466 = vmul.f32 1.0, %v465
    %v467 = vrcp.pop %v441
    %v468 = vmul.f32 1.0, %v467
    %v469 = vrcp.pop %v442
    %v470 = vmul.f32 1.0, %v469
    %v471 = vrcp.pop %v443
    %v472 = vmul.f32 1.0, %v471
    %v473 = vrcp.pop %v444
    %v474 = vmul.f32 1.0, %v473
    %v475 = vrcp.pop %v445
    %v476 = vmul.f32 1.0, %v475
    %v477 = vrcp.pop %v446
    %v478 = vmul.f32 1.0, %v477
    %v479 = vld [vmem:[%s1] sm:$0xff]
    %v480 = vcombine.high %v479, %v479
    %v482 = vunpack.c.l.s4 1966171168
    %v483 = vunpack.c.0.s8 %v482
    %v484 = vlaneseq
    %v485 = vshrl.u32 %v484, 7
    %v486 = vsub.s32 %v483, %v485
    %v487 = vrot.slane %v479, %v486
    %v489 = vunpack.c.l.s4 1966171168
    %v490 = vunpack.c.0.s8 %v489
    %v491 = vlaneseq
    %v492 = vshrl.u32 %v491, 7
    %v493 = vsub.s32 %v490, %v492
    %v494 = vrot.slane %v480, %v493
    %v495 = vcombine.high %v487, %v487
    %v496 = vcombine.high %v494, %v494
    %v498 = vunpack.c.l.s4 1966171168
    %v499 = vunpack.c.0.s8 %v498
    %v500 = vlaneseq
    %v501 = vshrl.u32 %v500, 7
    %v502 = vsub.s32 %v499, %v501
    %v503 = vrot.slane %v487, %v502
    %v505 = vunpack.c.l.s4 1966171168
    %v506 = vunpack.c.0.s8 %v505
    %v507 = vlaneseq
    %v508 = vshrl.u32 %v507, 7
    %v509 = vsub.s32 %v506, %v508
    %v510 = vrot.slane %v494, %v509
    %v512 = vunpack.c.l.s4 1966171168
    %v513 = vunpack.c.0.s8 %v512
    %v514 = vlaneseq
    %v515 = vshrl.u32 %v514, 7
    %v516 = vsub.s32 %v513, %v515
    %v517 = vrot.slane %v495, %v516
    %v519 = vunpack.c.l.s4 1966171168
    %v520 = vunpack.c.0.s8 %v519
    %v521 = vlaneseq
    %v522 = vshrl.u32 %v521, 7
    %v523 = vsub.s32 %v520, %v522
    %v524 = vrot.slane %v496, %v523
    %v525 = vcombine.high %v503, %v503
    %v526 = vcombine.high %v510, %v510
    %v527 = vcombine.high %v517, %v517
    %v528 = vcombine.high %v524, %v524
    %v529 = vlaneseq
    %v530 = vshrl.u32 %v529, 7
    %v531 = vadd.s32 %v530, 8
    %vm532 = vcmp.ge.s32.totalorder %v530, 1
    %vm533 = vcmp.ge.s32.totalorder %v531, 1
    %v534 = vlaneseq
    %v535 = vshrl.u32 %v534, 7
    %v536 = vsub.s32 0, %v535
    %v537 = vrot.slane %v503, %v536
    %v538 = vlaneseq
    %v539 = vshrl.u32 %v538, 7
    %v540 = vsub.s32 0, %v539
    %v541 = vrot.slane %v517, %v540
    %v542 = vlaneseq
    %v543 = vshrl.u32 %v542, 7
    %v544 = vsub.s32 0, %v543
    %v545 = vrot.slane %v525, %v544
    %v546 = vlaneseq
    %v547 = vshrl.u32 %v546, 7
    %v548 = vsub.s32 0, %v547
    %v549 = vrot.slane %v527, %v548
    %v550 = vlaneseq
    %v551 = vshrl.u32 %v550, 7
    %v552 = vsub.s32 0, %v551
    %v553 = vrot.slane %v510, %v552
    %v554 = vlaneseq
    %v555 = vshrl.u32 %v554, 7
    %v556 = vsub.s32 0, %v555
    %v557 = vrot.slane %v524, %v556
    %v558 = vlaneseq
    %v559 = vshrl.u32 %v558, 7
    %v560 = vsub.s32 0, %v559
    %v561 = vrot.slane %v526, %v560
    %v562 = vlaneseq
    %v563 = vshrl.u32 %v562, 7
    %v564 = vsub.s32 0, %v563
    %v565 = vrot.slane %v528, %v564
    %vm566 = vcmp.lt.s32.totalorder %v530, %v537
    %vm567 = vcmp.lt.s32.totalorder %v531, %v537
    %vm568 = vcmp.lt.s32.totalorder %v530, %v541
    %vm569 = vcmp.lt.s32.totalorder %v531, %v541
    %vm570 = vcmp.lt.s32.totalorder %v530, %v545
    %vm571 = vcmp.lt.s32.totalorder %v531, %v545
    %vm572 = vcmp.lt.s32.totalorder %v530, %v549
    %vm573 = vcmp.lt.s32.totalorder %v531, %v549
    %vm574 = vcmp.lt.s32.totalorder %v530, %v553
    %vm575 = vcmp.lt.s32.totalorder %v531, %v553
    %vm576 = vcmp.lt.s32.totalorder %v530, %v557
    %vm577 = vcmp.lt.s32.totalorder %v531, %v557
    %vm578 = vcmp.lt.s32.totalorder %v530, %v561
    %vm579 = vcmp.lt.s32.totalorder %v531, %v561
    %vm580 = vcmp.lt.s32.totalorder %v530, %v565
    %vm581 = vcmp.lt.s32.totalorder %v531, %v565
    %vm582 = vmand %vm532, %vm566
    %vm583 = vmand %vm533, %vm567
    %vm584 = vmand %vm532, %vm568
    %vm585 = vmand %vm533, %vm569
    %vm586 = vmand %vm532, %vm570
    %vm587 = vmand %vm533, %vm571
    %vm588 = vmand %vm532, %vm572
    %vm589 = vmand %vm533, %vm573
    %vm590 = vmand %vm532, %vm574
    %vm591 = vmand %vm533, %vm575
    %vm592 = vmand %vm532, %vm576
    %vm593 = vmand %vm533, %vm577
    %vm594 = vmand %vm532, %vm578
    %vm595 = vmand %vm533, %vm579
    %vm596 = vmand %vm532, %vm580
    %vm597 = vmand %vm533, %vm581
    %v598 = vsel %vm582, %v448, 0.0
    %v599 = vsel %vm583, %v450, 0.0
    %v600 = vsel %vm584, %v452, 0.0
    %v601 = vsel %vm585, %v454, 0.0
    %v602 = vsel %vm586, %v456, 0.0
    %v603 = vsel %vm587, %v458, 0.0
    %v604 = vsel %vm588, %v460, 0.0
    %v605 = vsel %vm589, %v462, 0.0
    %v606 = vsel %vm590, %v464, 0.0
    %v607 = vsel %vm591, %v466, 0.0
    %v608 = vsel %vm592, %v468, 0.0
    %v609 = vsel %vm593, %v470, 0.0
    %v610 = vsel %vm594, %v472, 0.0
    %v611 = vsel %vm595, %v474, 0.0
    %v612 = vsel %vm596, %v476, 0.0
    %v613 = vsel %vm597, %v478, 0.0
    %630 = vset.pattern.permute.xlu0 0
    %631 = vperm.xlu0 %630, %v598
    %v632 = vpop.permute.xlu0 %631
    %633 = vset.pattern.permute.xlu0 0
    %634 = vperm.xlu0 %633, %v599
    %v635 = vpop.permute.xlu0 %634
    %636 = vset.pattern.permute.xlu0 0
    %637 = vperm.xlu0 %636, %v600
    %v638 = vpop.permute.xlu0 %637
    %639 = vset.pattern.permute.xlu0 0
    %640 = vperm.xlu0 %639, %v601
    %v641 = vpop.permute.xlu0 %640
    %642 = vset.pattern.permute.xlu0 0
    %643 = vperm.xlu0 %642, %v602
    %v644 = vpop.permute.xlu0 %643
    %645 = vset.pattern.permute.xlu0 0
    %646 = vperm.xlu0 %645, %v603
    %v647 = vpop.permute.xlu0 %646
    %648 = vset.pattern.permute.xlu0 0
    %649 = vperm.xlu0 %648, %v604
    %v650 = vpop.permute.xlu0 %649
    %651 = vset.pattern.permute.xlu0 0
    %652 = vperm.xlu0 %651, %v605
    %v653 = vpop.permute.xlu0 %652
    %654 = vset.pattern.permute.xlu0 0
    %655 = vperm.xlu0 %654, %v606
    %v656 = vpop.permute.xlu0 %655
    %657 = vset.pattern.permute.xlu0 0
    %658 = vperm.xlu0 %657, %v607
    %v659 = vpop.permute.xlu0 %658
    %660 = vset.pattern.permute.xlu0 0
    %661 = vperm.xlu0 %660, %v608
    %v662 = vpop.permute.xlu0 %661
    %663 = vset.pattern.permute.xlu0 0
    %664 = vperm.xlu0 %663, %v609
    %v665 = vpop.permute.xlu0 %664
    %666 = vset.pattern.permute.xlu0 0
    %667 = vperm.xlu0 %666, %v610
    %v668 = vpop.permute.xlu0 %667
    %669 = vset.pattern.permute.xlu0 0
    %670 = vperm.xlu0 %669, %v611
    %v671 = vpop.permute.xlu0 %670
    %672 = vset.pattern.permute.xlu0 0
    %673 = vperm.xlu0 %672, %v612
    %v674 = vpop.permute.xlu0 %673
    %675 = vset.pattern.permute.xlu0 0
    %676 = vperm.xlu0 %675, %v613
    %v677 = vpop.permute.xlu0 %676
    %v678 = vlaneseq
    %v679 = vand.u32 %v678, 127
    %v680 = vlaneseq
    %v681 = vshrl.u32 %v680, 7
    %v682 = vsub.s32 %v679, %v681
    %v683 = vrot.slane %v632, %v682
    %v684 = vadd.s32 %v679, 4294967288
    %v685 = vlaneseq
    %v686 = vshrl.u32 %v685, 7
    %v687 = vsub.s32 %v684, %v686
    %v688 = vrot.slane %v635, %v687
    %vm689 = vcmask 130112
    %v690 = vsel %vm689, %v688, %v683
    %v691 = vlaneseq
    %v692 = vshrl.u32 %v691, 7
    %v693 = vsub.s32 %v679, %v692
    %v694 = vrot.slane %v638, %v693
    %v695 = vlaneseq
    %v696 = vshrl.u32 %v695, 7
    %v697 = vsub.s32 %v684, %v696
    %v698 = vrot.slane %v641, %v697
    %v699 = vsel %vm689, %v698, %v694
    %v700 = vlaneseq
    %v701 = vshrl.u32 %v700, 7
    %v702 = vsub.s32 %v679, %v701
    %v703 = vrot.slane %v644, %v702
    %v704 = vlaneseq
    %v705 = vshrl.u32 %v704, 7
    %v706 = vsub.s32 %v684, %v705
    %v707 = vrot.slane %v647, %v706
    %v708 = vsel %vm689, %v707, %v703
    %v709 = vlaneseq
    %v710 = vshrl.u32 %v709, 7
    %v711 = vsub.s32 %v679, %v710
    %v712 = vrot.slane %v650, %v711
    %v713 = vlaneseq
    %v714 = vshrl.u32 %v713, 7
    %v715 = vsub.s32 %v684, %v714
    %v716 = vrot.slane %v653, %v715
    %v717 = vsel %vm689, %v716, %v712
    %v718 = vlaneseq
    %v719 = vshrl.u32 %v718, 7
    %v720 = vsub.s32 %v679, %v719
    %v721 = vrot.slane %v656, %v720
    %v722 = vlaneseq
    %v723 = vshrl.u32 %v722, 7
    %v724 = vsub.s32 %v684, %v723
    %v725 = vrot.slane %v659, %v724
    %v726 = vsel %vm689, %v725, %v721
    %v727 = vlaneseq
    %v728 = vshrl.u32 %v727, 7
    %v729 = vsub.s32 %v679, %v728
    %v730 = vrot.slane %v662, %v729
    %v731 = vlaneseq
    %v732 = vshrl.u32 %v731, 7
    %v733 = vsub.s32 %v684, %v732
    %v734 = vrot.slane %v665, %v733
    %v735 = vsel %vm689, %v734, %v730
    %v736 = vlaneseq
    %v737 = vshrl.u32 %v736, 7
    %v738 = vsub.s32 %v679, %v737
    %v739 = vrot.slane %v668, %v738
    %v740 = vlaneseq
    %v741 = vshrl.u32 %v740, 7
    %v742 = vsub.s32 %v684, %v741
    %v743 = vrot.slane %v671, %v742
    %v744 = vsel %vm689, %v743, %v739
    %v745 = vlaneseq
    %v746 = vshrl.u32 %v745, 7
    %v747 = vsub.s32 %v679, %v746
    %v748 = vrot.slane %v674, %v747
    %v749 = vlaneseq
    %v750 = vshrl.u32 %v749, 7
    %v751 = vsub.s32 %v684, %v750
    %v752 = vrot.slane %v677, %v751
    %v753 = vsel %vm689, %v752, %v748
    %vm754 = vcmask 1041409
    %v755 = vsel %vm754, %v699, %v690
    %vm756 = vcmask 1042434
    %v757 = vsel %vm756, %v708, %v755
    %vm758 = vcmask 1043459
    %v759 = vsel %vm758, %v717, %v757
    %vm760 = vcmask 1044484
    %v761 = vsel %vm760, %v726, %v759
    %vm762 = vcmask 1045509
    %v763 = vsel %vm762, %v735, %v761
    %vm764 = vcmask 1046534
    %v765 = vsel %vm764, %v744, %v763
    %vm766 = vcmask 1047559
    %v767 = vsel %vm766, %v753, %v765
    %vm769 = vcmask 130048
    %770 = vst.msk [vmem:[#allocation8] sm:$0xff] %vm769, %v767
    %v771 = vmul.f32 %v598, %v598
    %v772 = vmul.f32 %v599, %v599
    %v773 = vmul.f32 %v600, %v600
    %v774 = vmul.f32 %v601, %v601
    %v775 = vmul.f32 %v602, %v602
    %v776 = vmul.f32 %v603, %v603
    %v777 = vmul.f32 %v604, %v604
    %v778 = vmul.f32 %v605, %v605
    %v779 = vmul.f32 %v606, %v606
    %v780 = vmul.f32 %v607, %v607
    %v781 = vmul.f32 %v608, %v608
    %v782 = vmul.f32 %v609, %v609
    %v783 = vmul.f32 %v610, %v610
    %v784 = vmul.f32 %v611, %v611
    %v785 = vmul.f32 %v612, %v612
    %v786 = vmul.f32 %v613, %v613
    %787 = vxpose.xlu0.b32.start [1/16] %v771, 128
    %788 = vxpose.xlu0.b32.cont [2/16] %v772, 128
    %789 = vxpose.xlu0.b32.cont [3/16] 0.0, 128
    %790 = vxpose.xlu0.b32.cont [4/16] 0.0, 128
    %791 = vxpose.xlu0.b32.cont [5/16] 0.0, 128
    %792 = vxpose.xlu0.b32.cont [6/16] 0.0, 128
    %793 = vxpose.xlu0.b32.cont [7/16] 0.0, 128
    %794 = vxpose.xlu0.b32.cont [8/16] 0.0, 128
    %795 = vxpose.xlu0.b32.cont [9/16] 0.0, 128
    %796 = vxpose.xlu0.b32.cont [10/16] 0.0, 128
    %797 = vxpose.xlu0.b32.cont [11/16] 0.0, 128
    %798 = vxpose.xlu0.b32.cont [12/16] 0.0, 128
    %799 = vxpose.xlu0.b32.cont [13/16] 0.0, 128
    %800 = vxpose.xlu0.b32.cont [14/16] 0.0, 128
    %801 = vxpose.xlu0.b32.cont [15/16] 0.0, 128
    %802 = vxpose.xlu0.b32.end [16/16] 0.0, 128
    %v803 = vpop.trf.xlu0
    %v804 = vpop.trf.xlu0
    %v805 = vpop.trf.xlu0
    %v806 = vpop.trf.xlu0
    %v807 = vpop.trf.xlu0
    %v808 = vpop.trf.xlu0
    %v809 = vpop.trf.xlu0
    %v810 = vpop.trf.xlu0
    %v811 = vpop.trf.xlu0
    %v812 = vpop.trf.xlu0
    %v813 = vpop.trf.xlu0
    %v814 = vpop.trf.xlu0
    %v815 = vpop.trf.xlu0
    %v816 = vpop.trf.xlu0
    %v817 = vpop.trf.xlu0
    %v818 = vpop.trf.xlu0
    %819 = vxpose.xlu0.b32.start [1/16] %v773, 128
    %820 = vxpose.xlu0.b32.cont [2/16] %v774, 128
    %821 = vxpose.xlu0.b32.cont [3/16] 0.0, 128
    %822 = vxpose.xlu0.b32.cont [4/16] 0.0, 128
    %823 = vxpose.xlu0.b32.cont [5/16] 0.0, 128
    %824 = vxpose.xlu0.b32.cont [6/16] 0.0, 128
    %825 = vxpose.xlu0.b32.cont [7/16] 0.0, 128
    %826 = vxpose.xlu0.b32.cont [8/16] 0.0, 128
    %827 = vxpose.xlu0.b32.cont [9/16] 0.0, 128
    %828 = vxpose.xlu0.b32.cont [10/16] 0.0, 128
    %829 = vxpose.xlu0.b32.cont [11/16] 0.0, 128
    %830 = vxpose.xlu0.b32.cont [12/16] 0.0, 128
    %831 = vxpose.xlu0.b32.cont [13/16] 0.0, 128
    %832 = vxpose.xlu0.b32.cont [14/16] 0.0, 128
    %833 = vxpose.xlu0.b32.cont [15/16] 0.0, 128
    %834 = vxpose.xlu0.b32.end [16/16] 0.0, 128
    %v835 = vpop.trf.xlu0
    %v836 = vpop.trf.xlu0
    %v837 = vpop.trf.xlu0
    %v838 = vpop.trf.xlu0
    %v839 = vpop.trf.xlu0
    %v840 = vpop.trf.xlu0
    %v841 = vpop.trf.xlu0
    %v842 = vpop.trf.xlu0
    %v843 = vpop.trf.xlu0
    %v844 = vpop.trf.xlu0
    %v845 = vpop.trf.xlu0
    %v846 = vpop.trf.xlu0
    %v847 = vpop.trf.xlu0
    %v848 = vpop.trf.xlu0
    %v849 = vpop.trf.xlu0
    %v850 = vpop.trf.xlu0
    %851 = vxpose.xlu0.b32.start [1/16] %v775, 128
    %852 = vxpose.xlu0.b32.cont [2/16] %v776, 128
    %853 = vxpose.xlu0.b32.cont [3/16] 0.0, 128
    %854 = vxpose.xlu0.b32.cont [4/16] 0.0, 128
    %855 = vxpose.xlu0.b32.cont [5/16] 0.0, 128
    %856 = vxpose.xlu0.b32.cont [6/16] 0.0, 128
    %857 = vxpose.xlu0.b32.cont [7/16] 0.0, 128
    %858 = vxpose.xlu0.b32.cont [8/16] 0.0, 128
    %859 = vxpose.xlu0.b32.cont [9/16] 0.0, 128
    %860 = vxpose.xlu0.b32.cont [10/16] 0.0, 128
    %861 = vxpose.xlu0.b32.cont [11/16] 0.0, 128
    %862 = vxpose.xlu0.b32.cont [12/16] 0.0, 128
    %863 = vxpose.xlu0.b32.cont [13/16] 0.0, 128
    %864 = vxpose.xlu0.b32.cont [14/16] 0.0, 128
    %865 = vxpose.xlu0.b32.cont [15/16] 0.0, 128
    %866 = vxpose.xlu0.b32.end [16/16] 0.0, 128
    %v867 = vpop.trf.xlu0
    %v868 = vpop.trf.xlu0
    %v869 = vpop.trf.xlu0
    %v870 = vpop.trf.xlu0
    %v871 = vpop.trf.xlu0
    %v872 = vpop.trf.xlu0
    %v873 = vpop.trf.xlu0
    %v874 = vpop.trf.xlu0
    %v875 = vpop.trf.xlu0
    %v876 = vpop.trf.xlu0
    %v877 = vpop.trf.xlu0
    %v878 = vpop.trf.xlu0
    %v879 = vpop.trf.xlu0
    %v880 = vpop.trf.xlu0
    %v881 = vpop.trf.xlu0
    %v882 = vpop.trf.xlu0
    %883 = vxpose.xlu0.b32.start [1/16] %v777, 128
    %884 = vxpose.xlu0.b32.cont [2/16] %v778, 128
    %885 = vxpose.xlu0.b32.cont [3/16] 0.0, 128
    %886 = vxpose.xlu0.b32.cont [4/16] 0.0, 128
    %887 = vxpose.xlu0.b32.cont [5/16] 0.0, 128
    %888 = vxpose.xlu0.b32.cont [6/16] 0.0, 128
    %889 = vxpose.xlu0.b32.cont [7/16] 0.0, 128
    %890 = vxpose.xlu0.b32.cont [8/16] 0.0, 128
    %891 = vxpose.xlu0.b32.cont [9/16] 0.0, 128
    %892 = vxpose.xlu0.b32.cont [10/16] 0.0, 128
    %893 = vxpose.xlu0.b32.cont [11/16] 0.0, 128
    %894 = vxpose.xlu0.b32.cont [12/16] 0.0, 128
    %895 = vxpose.xlu0.b32.cont [13/16] 0.0, 128
    %896 = vxpose.xlu0.b32.cont [14/16] 0.0, 128
    %897 = vxpose.xlu0.b32.cont [15/16] 0.0, 128
    %898 = vxpose.xlu0.b32.end [16/16] 0.0, 128
    %v899 = vpop.trf.xlu0
    %v900 = vpop.trf.xlu0
    %v901 = vpop.trf.xlu0
    %v902 = vpop.trf.xlu0
    %v903 = vpop.trf.xlu0
    %v904 = vpop.trf.xlu0
    %v905 = vpop.trf.xlu0
    %v906 = vpop.trf.xlu0
    %v907 = vpop.trf.xlu0
    %v908 = vpop.trf.xlu0
    %v909 = vpop.trf.xlu0
    %v910 = vpop.trf.xlu0
    %v911 = vpop.trf.xlu0
    %v912 = vpop.trf.xlu0
    %v913 = vpop.trf.xlu0
    %v914 = vpop.trf.xlu0
    %915 = vxpose.xlu0.b32.start [1/16] %v779, 128
    %916 = vxpose.xlu0.b32.cont [2/16] %v780, 128
    %917 = vxpose.xlu0.b32.cont [3/16] 0.0, 128
    %918 = vxpose.xlu0.b32.cont [4/16] 0.0, 128
    %919 = vxpose.xlu0.b32.cont [5/16] 0.0, 128
    %920 = vxpose.xlu0.b32.cont [6/16] 0.0, 128
    %921 = vxpose.xlu0.b32.cont [7/16] 0.0, 128
    %922 = vxpose.xlu0.b32.cont [8/16] 0.0, 128
    %923 = vxpose.xlu0.b32.cont [9/16] 0.0, 128
    %924 = vxpose.xlu0.b32.cont [10/16] 0.0, 128
    %925 = vxpose.xlu0.b32.cont [11/16] 0.0, 128
    %926 = vxpose.xlu0.b32.cont [12/16] 0.0, 128
    %927 = vxpose.xlu0.b32.cont [13/16] 0.0, 128
    %928 = vxpose.xlu0.b32.cont [14/16] 0.0, 128
    %929 = vxpose.xlu0.b32.cont [15/16] 0.0, 128
    %930 = vxpose.xlu0.b32.end [16/16] 0.0, 128
    %v931 = vpop.trf.xlu0
    %v932 = vpop.trf.xlu0
    %v933 = vpop.trf.xlu0
    %v934 = vpop.trf.xlu0
    %v935 = vpop.trf.xlu0
    %v936 = vpop.trf.xlu0
    %v937 = vpop.trf.xlu0
    %v938 = vpop.trf.xlu0
    %v939 = vpop.trf.xlu0
    %v940 = vpop.trf.xlu0
    %v941 = vpop.trf.xlu0
    %v942 = vpop.trf.xlu0
    %v943 = vpop.trf.xlu0
    %v944 = vpop.trf.xlu0
    %v945 = vpop.trf.xlu0
    %v946 = vpop.trf.xlu0
    %947 = vxpose.xlu0.b32.start [1/16] %v781, 128
    %948 = vxpose.xlu0.b32.cont [2/16] %v782, 128
    %949 = vxpose.xlu0.b32.cont [3/16] 0.0, 128
    %950 = vxpose.xlu0.b32.cont [4/16] 0.0, 128
    %951 = vxpose.xlu0.b32.cont [5/16] 0.0, 128
    %952 = vxpose.xlu0.b32.cont [6/16] 0.0, 128
    %953 = vxpose.xlu0.b32.cont [7/16] 0.0, 128
    %954 = vxpose.xlu0.b32.cont [8/16] 0.0, 128
    %955 = vxpose.xlu0.b32.cont [9/16] 0.0, 128
    %956 = vxpose.xlu0.b32.cont [10/16] 0.0, 128
    %957 = vxpose.xlu0.b32.cont [11/16] 0.0, 128
    %958 = vxpose.xlu0.b32.cont [12/16] 0.0, 128
    %959 = vxpose.xlu0.b32.cont [13/16] 0.0, 128
    %960 = vxpose.xlu0.b32.cont [14/16] 0.0, 128
    %961 = vxpose.xlu0.b32.cont [15/16] 0.0, 128
    %962 = vxpose.xlu0.b32.end [16/16] 0.0, 128
    %v963 = vpop.trf.xlu0
    %v964 = vpop.trf.xlu0
    %v965 = vpop.trf.xlu0
    %v966 = vpop.trf.xlu0
    %v967 = vpop.trf.xlu0
    %v968 = vpop.trf.xlu0
    %v969 = vpop.trf.xlu0
    %v970 = vpop.trf.xlu0
    %v971 = vpop.trf.xlu0
    %v972 = vpop.trf.xlu0
    %v973 = vpop.trf.xlu0
    %v974 = vpop.trf.xlu0
    %v975 = vpop.trf.xlu0
    %v976 = vpop.trf.xlu0
    %v977 = vpop.trf.xlu0
    %v978 = vpop.trf.xlu0
    %979 = vxpose.xlu0.b32.start [1/16] %v783, 128
    %980 = vxpose.xlu0.b32.cont [2/16] %v784, 128
    %981 = vxpose.xlu0.b32.cont [3/16] 0.0, 128
    %982 = vxpose.xlu0.b32.cont [4/16] 0.0, 128
    %983 = vxpose.xlu0.b32.cont [5/16] 0.0, 128
    %984 = vxpose.xlu0.b32.cont [6/16] 0.0, 128
    %985 = vxpose.xlu0.b32.cont [7/16] 0.0, 128
    %986 = vxpose.xlu0.b32.cont [8/16] 0.0, 128
    %987 = vxpose.xlu0.b32.cont [9/16] 0.0, 128
    %988 = vxpose.xlu0.b32.cont [10/16] 0.0, 128
    %989 = vxpose.xlu0.b32.cont [11/16] 0.0, 128
    %990 = vxpose.xlu0.b32.cont [12/16] 0.0, 128
    %991 = vxpose.xlu0.b32.cont [13/16] 0.0, 128
    %992 = vxpose.xlu0.b32.cont [14/16] 0.0, 128
    %993 = vxpose.xlu0.b32.cont [15/16] 0.0, 128
    %994 = vxpose.xlu0.b32.end [16/16] 0.0, 128
    %v995 = vpop.trf.xlu0
    %v996 = vpop.trf.xlu0
    %v997 = vpop.trf.xlu0
    %v998 = vpop.trf.xlu0
    %v999 = vpop.trf.xlu0
    %v1000 = vpop.trf.xlu0
    %v1001 = vpop.trf.xlu0
    %v1002 = vpop.trf.xlu0
    %v1003 = vpop.trf.xlu0
    %v1004 = vpop.trf.xlu0
    %v1005 = vpop.trf.xlu0
    %v1006 = vpop.trf.xlu0
    %v1007 = vpop.trf.xlu0
    %v1008 = vpop.trf.xlu0
    %v1009 = vpop.trf.xlu0
    %v1010 = vpop.trf.xlu0
    %1011 = vxpose.xlu0.b32.start [1/16] %v785, 128
    %1012 = vxpose.xlu0.b32.cont [2/16] %v786, 128
    %1013 = vxpose.xlu0.b32.cont [3/16] 0.0, 128
    %1014 = vxpose.xlu0.b32.cont [4/16] 0.0, 128
    %1015 = vxpose.xlu0.b32.cont [5/16] 0.0, 128
    %1016 = vxpose.xlu0.b32.cont [6/16] 0.0, 128
    %1017 = vxpose.xlu0.b32.cont [7/16] 0.0, 128
    %1018 = vxpose.xlu0.b32.cont [8/16] 0.0, 128
    %1019 = vxpose.xlu0.b32.cont [9/16] 0.0, 128
    %1020 = vxpose.xlu0.b32.cont [10/16] 0.0, 128
    %1021 = vxpose.xlu0.b32.cont [11/16] 0.0, 128
    %1022 = vxpose.xlu0.b32.cont [12/16] 0.0, 128
    %1023 = vxpose.xlu0.b32.cont [13/16] 0.0, 128
    %1024 = vxpose.xlu0.b32.cont [14/16] 0.0, 128
    %1025 = vxpose.xlu0.b32.cont [15/16] 0.0, 128
    %1026 = vxpose.xlu0.b32.end [16/16] 0.0, 128
    %v1027 = vpop.trf.xlu0
    %v1028 = vpop.trf.xlu0
    %v1029 = vpop.trf.xlu0
    %v1030 = vpop.trf.xlu0
    %v1031 = vpop.trf.xlu0
    %v1032 = vpop.trf.xlu0
    %v1033 = vpop.trf.xlu0
    %v1034 = vpop.trf.xlu0
    %v1035 = vpop.trf.xlu0
    %v1036 = vpop.trf.xlu0
    %v1037 = vpop.trf.xlu0
    %v1038 = vpop.trf.xlu0
    %v1039 = vpop.trf.xlu0
    %v1040 = vpop.trf.xlu0
    %v1041 = vpop.trf.xlu0
    %v1042 = vpop.trf.xlu0
    %vm1043 = vcmask 122880
    %v1044 = vsel %vm1043, %v803, 0.0
    %1045 = vadd.xlane.f32.xlu0 %v1044
    %v1046 = vpop.xlane.xlu0 %1045
    %v1047 = vsel %vm1043, %v835, 0.0
    %1048 = vadd.xlane.f32.xlu0 %v1047
    %v1049 = vpop.xlane.xlu0 %1048
    %v1050 = vsel %vm1043, %v867, 0.0
    %1051 = vadd.xlane.f32.xlu0 %v1050
    %v1052 = vpop.xlane.xlu0 %1051
    %v1053 = vsel %vm1043, %v899, 0.0
    %1054 = vadd.xlane.f32.xlu0 %v1053
    %v1055 = vpop.xlane.xlu0 %1054
    %v1056 = vsel %vm1043, %v931, 0.0
    %1057 = vadd.xlane.f32.xlu0 %v1056
    %v1058 = vpop.xlane.xlu0 %1057
    %v1059 = vsel %vm1043, %v963, 0.0
    %1060 = vadd.xlane.f32.xlu0 %v1059
    %v1061 = vpop.xlane.xlu0 %1060
    %v1062 = vsel %vm1043, %v995, 0.0
    %1063 = vadd.xlane.f32.xlu0 %v1062
    %v1064 = vpop.xlane.xlu0 %1063
    %v1065 = vsel %vm1043, %v1027, 0.0
    %1066 = vadd.xlane.f32.xlu0 %v1065
    %v1067 = vpop.xlane.xlu0 %1066
    %v1069 = vsel %vm769, %v803, 0
    %1071 = vmatprep.subr.mxu0 0.0
    %1072 = vmatpush1.msra.mxu0 0.0
    %1073 = vmatprep.subr.mxu0 0.0
    %1074 = vmatpush1.msra.mxu0 0.0
    %1075 = vmatprep.subr.mxu0 0.0
    %1076 = vmatpush1.msra.mxu0 0.0
    %1077 = vmatprep.subr.mxu0 0.0
    %1078 = vmatpush1.msra.mxu0 0.0
    %1079 = vmatprep.subr.mxu0 0.0
    %1080 = vmatpush1.msra.mxu0 0.0
    %1081 = vmatprep.subr.mxu0 0.0
    %1082 = vmatpush1.msra.mxu0 0.0
    %1083 = vmatprep.subr.mxu0 0.0
    %1084 = vmatpush1.msra.mxu0 0.0
    %1085 = vmatprep.subr.mxu0 0.0
    %1086 = vmatpush1.msra.mxu0 0.0
    %1087 = vmatprep.subr.mxu0 0.0
    %1088 = vmatpush1.msra.mxu0 0.0
    %1089 = vmatprep.subr.mxu0 0.0
    %1090 = vmatpush1.msra.mxu0 0.0
    %1091 = vmatprep.subr.mxu0 0.0
    %1092 = vmatpush1.msra.mxu0 0.0
    %1093 = vmatprep.subr.mxu0 0.0
    %1094 = vmatpush1.msra.mxu0 0.0
    %1095 = vmatprep.subr.mxu0 0.0
    %1096 = vmatpush1.msra.mxu0 0.0
    %1097 = vmatprep.subr.mxu0 0.0
    %1098 = vmatpush1.msra.mxu0 0.0
    %1099 = vmatprep.subr.mxu0 0.0
    %v1100 = vand.u32 %v69, 4294901760
    %1101 = vmatpush1.msra.mxu0 %v1100
    %1102 = vmatprep.subr.mxu0 0.0
    %v1103 = vand.u32 %v68, 4294901760
    %1104 = vmatpush1.msra.mxu0 %v1103
    %1105 = vmatprep.subr.mxu0 0.0
    %1106 = vmatpush2.msra.mxu0 0.0
    %1107 = vmatprep.subr.mxu0 0.0
    %1108 = vmatpush2.msra.mxu0 0.0
    %1109 = vmatprep.subr.mxu0 0.0
    %1110 = vmatpush2.msra.mxu0 0.0
    %1111 = vmatprep.subr.mxu0 0.0
    %1112 = vmatpush2.msra.mxu0 0.0
    %1113 = vmatprep.subr.mxu0 0.0
    %1114 = vmatpush2.msra.mxu0 0.0
    %1115 = vmatprep.subr.mxu0 0.0
    %1116 = vmatpush2.msra.mxu0 0.0
    %1117 = vmatprep.subr.mxu0 0.0
    %1118 = vmatpush2.msra.mxu0 0.0
    %1119 = vmatprep.subr.mxu0 0.0
    %1120 = vmatpush2.msra.mxu0 0.0
    %1121 = vmatprep.subr.mxu0 0.0
    %1122 = vmatpush2.msra.mxu0 0.0
    %1123 = vmatprep.subr.mxu0 0.0
    %1124 = vmatpush2.msra.mxu0 0.0
    %1125 = vmatprep.subr.mxu0 0.0
    %1126 = vmatpush2.msra.mxu0 0.0
    %1127 = vmatprep.subr.mxu0 0.0
    %1128 = vmatpush2.msra.mxu0 0.0
    %1129 = vmatprep.subr.mxu0 0.0
    %1130 = vmatpush2.msra.mxu0 0.0
    %1131 = vmatprep.subr.mxu0 0.0
    %1132 = vmatpush2.msra.mxu0 0.0
    %1133 = vmatprep.subr.mxu0 0.0
    %1134 = vmatpush2.msra.mxu0 0.0
    %1135 = vmatprep.subr.mxu0 0.0
    %1136 = vmatpush2.msra.mxu0 0.0
    %1137 = vmatprep.mubr.f32.mxu0 0.0
    %v1138 = vand.u32 %v1069, 4294901760
    %v1139 = vsub.f32 %v1069, %v1138
    %v1140 = vand.u32 %v1139, 4294901760
    %v1141 = vsub.f32 %v1139, %v1140
    %v1142 = vand.u32 %v1141, 4294901760
    %1143 = vmatmul.mubr.f32.gmra.mxu0 %v1142
    %v1144 = vpop.f32.mrf.mxu0
    %v1145 = vadd.f32 0.0, %v1144
    %v1146 = vpop.f32.mrf.mxu0
    %1147 = vdwg.mxu0
    %1148 = vmatprep.subr.mxu0 0.0
    %1149 = vmatpush1.msra.mxu0 0.0
    %1150 = vmatprep.subr.mxu0 0.0
    %1151 = vmatpush1.msra.mxu0 0.0
    %1152 = vmatprep.subr.mxu0 0.0
    %1153 = vmatpush1.msra.mxu0 0.0
    %1154 = vmatprep.subr.mxu0 0.0
    %1155 = vmatpush1.msra.mxu0 0.0
    %1156 = vmatprep.subr.mxu0 0.0
    %1157 = vmatpush1.msra.mxu0 0.0
    %1158 = vmatprep.subr.mxu0 0.0
    %1159 = vmatpush1.msra.mxu0 0.0
    %1160 = vmatprep.subr.mxu0 0.0
    %1161 = vmatpush1.msra.mxu0 0.0
    %1162 = vmatprep.subr.mxu0 0.0
    %1163 = vmatpush1.msra.mxu0 0.0
    %1164 = vmatprep.subr.mxu0 0.0
    %1165 = vmatpush1.msra.mxu0 0.0
    %1166 = vmatprep.subr.mxu0 0.0
    %1167 = vmatpush1.msra.mxu0 0.0
    %1168 = vmatprep.subr.mxu0 0.0
    %1169 = vmatpush1.msra.mxu0 0.0
    %1170 = vmatprep.subr.mxu0 0.0
    %1171 = vmatpush1.msra.mxu0 0.0
    %1172 = vmatprep.subr.mxu0 0.0
    %1173 = vmatpush1.msra.mxu0 0.0
    %1174 = vmatprep.subr.mxu0 0.0
    %1175 = vmatpush1.msra.mxu0 0.0
    %1176 = vmatprep.subr.mxu0 0.0
    %v1177 = vand.u32 %v69, 4294901760
    %v1178 = vsub.f32 %v69, %v1177
    %v1179 = vand.u32 %v1178, 4294901760
    %v1180 = vsub.f32 %v1178, %v1179
    %v1181 = vand.u32 %v1180, 4294901760
    %1182 = vmatpush1.msra.mxu0 %v1181
    %1183 = vmatprep.subr.mxu0 0.0
    %v1184 = vand.u32 %v68, 4294901760
    %v1185 = vsub.f32 %v68, %v1184
    %v1186 = vand.u32 %v1185, 4294901760
    %v1187 = vsub.f32 %v1185, %v1186
    %v1188 = vand.u32 %v1187, 4294901760
    %1189 = vmatpush1.msra.mxu0 %v1188
    %1190 = vmatprep.subr.mxu0 0.0
    %1191 = vmatpush2.msra.mxu0 0.0
    %1192 = vmatprep.subr.mxu0 0.0
    %1193 = vmatpush2.msra.mxu0 0.0
    %1194 = vmatprep.subr.mxu0 0.0
    %1195 = vmatpush2.msra.mxu0 0.0
    %1196 = vmatprep.subr.mxu0 0.0
    %1197 = vmatpush2.msra.mxu0 0.0
    %1198 = vmatprep.subr.mxu0 0.0
    %1199 = vmatpush2.msra.mxu0 0.0
    %1200 = vmatprep.subr.mxu0 0.0
    %1201 = vmatpush2.msra.mxu0 0.0
    %1202 = vmatprep.subr.mxu0 0.0
    %1203 = vmatpush2.msra.mxu0 0.0
    %1204 = vmatprep.subr.mxu0 0.0
    %1205 = vmatpush2.msra.mxu0 0.0
    %1206 = vmatprep.subr.mxu0 0.0
    %1207 = vmatpush2.msra.mxu0 0.0
    %1208 = vmatprep.subr.mxu0 0.0
    %1209 = vmatpush2.msra.mxu0 0.0
    %1210 = vmatprep.subr.mxu0 0.0
    %1211 = vmatpush2.msra.mxu0 0.0
    %1212 = vmatprep.subr.mxu0 0.0
    %1213 = vmatpush2.msra.mxu0 0.0
    %1214 = vmatprep.subr.mxu0 0.0
    %1215 = vmatpush2.msra.mxu0 0.0
    %1216 = vmatprep.subr.mxu0 0.0
    %1217 = vmatpush2.msra.mxu0 0.0
    %1218 = vmatprep.subr.mxu0 0.0
    %1219 = vmatpush2.msra.mxu0 0.0
    %1220 = vmatprep.subr.mxu0 0.0
    %1221 = vmatpush2.msra.mxu0 0.0
    %1222 = vmatprep.mubr.f32.mxu0 0.0
    %v1223 = vand.u32 %v1069, 4294901760
    %1224 = vmatmul.mubr.f32.gmra.mxu0 %v1223
    %v1225 = vpop.f32.mrf.mxu0
    %v1226 = vadd.f32 %v1145, %v1225
    %v1227 = vpop.f32.mrf.mxu0
    %1228 = vdwg.mxu0
    %1229 = vmatprep.subr.mxu0 0.0
    %1230 = vmatpush1.msra.mxu0 0.0
    %1231 = vmatprep.subr.mxu0 0.0
    %1232 = vmatpush1.msra.mxu0 0.0
    %1233 = vmatprep.subr.mxu0 0.0
    %1234 = vmatpush1.msra.mxu0 0.0
    %1235 = vmatprep.subr.mxu0 0.0
    %1236 = vmatpush1.msra.mxu0 0.0
    %1237 = vmatprep.subr.mxu0 0.0
    %1238 = vmatpush1.msra.mxu0 0.0
    %1239 = vmatprep.subr.mxu0 0.0
    %1240 = vmatpush1.msra.mxu0 0.0
    %1241 = vmatprep.subr.mxu0 0.0
    %1242 = vmatpush1.msra.mxu0 0.0
    %1243 = vmatprep.subr.mxu0 0.0
    %1244 = vmatpush1.msra.mxu0 0.0
    %1245 = vmatprep.subr.mxu0 0.0
    %1246 = vmatpush1.msra.mxu0 0.0
    %1247 = vmatprep.subr.mxu0 0.0
    %1248 = vmatpush1.msra.mxu0 0.0
    %1249 = vmatprep.subr.mxu0 0.0
    %1250 = vmatpush1.msra.mxu0 0.0
    %1251 = vmatprep.subr.mxu0 0.0
    %1252 = vmatpush1.msra.mxu0 0.0
    %1253 = vmatprep.subr.mxu0 0.0
    %1254 = vmatpush1.msra.mxu0 0.0
    %1255 = vmatprep.subr.mxu0 0.0
    %1256 = vmatpush1.msra.mxu0 0.0
    %1257 = vmatprep.subr.mxu0 0.0
    %v1258 = vand.u32 %v69, 4294901760
    %v1259 = vsub.f32 %v69, %v1258
    %1260 = vmatpush1.msra.mxu0 %v1259
    %1261 = vmatprep.subr.mxu0 0.0
    %v1262 = vand.u32 %v68, 4294901760
    %v1263 = vsub.f32 %v68, %v1262
    %1264 = vmatpush1.msra.mxu0 %v1263
    %1265 = vmatprep.subr.mxu0 0.0
    %1266 = vmatpush2.msra.mxu0 0.0
    %1267 = vmatprep.subr.mxu0 0.0
    %1268 = vmatpush2.msra.mxu0 0.0
    %1269 = vmatprep.subr.mxu0 0.0
    %1270 = vmatpush2.msra.mxu0 0.0
    %1271 = vmatprep.subr.mxu0 0.0
    %1272 = vmatpush2.msra.mxu0 0.0
    %1273 = vmatprep.subr.mxu0 0.0
    %1274 = vmatpush2.msra.mxu0 0.0
    %1275 = vmatprep.subr.mxu0 0.0
    %1276 = vmatpush2.msra.mxu0 0.0
    %1277 = vmatprep.subr.mxu0 0.0
    %1278 = vmatpush2.msra.mxu0 0.0
    %1279 = vmatprep.subr.mxu0 0.0
    %1280 = vmatpush2.msra.mxu0 0.0
    %1281 = vmatprep.subr.mxu0 0.0
    %1282 = vmatpush2.msra.mxu0 0.0
    %1283 = vmatprep.subr.mxu0 0.0
    %1284 = vmatpush2.msra.mxu0 0.0
    %1285 = vmatprep.subr.mxu0 0.0
    %1286 = vmatpush2.msra.mxu0 0.0
    %1287 = vmatprep.subr.mxu0 0.0
    %1288 = vmatpush2.msra.mxu0 0.0
    %1289 = vmatprep.subr.mxu0 0.0
    %1290 = vmatpush2.msra.mxu0 0.0
    %1291 = vmatprep.subr.mxu0 0.0
    %1292 = vmatpush2.msra.mxu0 0.0
    %1293 = vmatprep.subr.mxu0 0.0
    %1294 = vmatpush2.msra.mxu0 0.0
    %1295 = vmatprep.subr.mxu0 0.0
    %1296 = vmatpush2.msra.mxu0 0.0
    %1297 = vmatprep.mubr.f32.mxu0 0.0
    %v1298 = vand.u32 %v1069, 4294901760
    %v1299 = vsub.f32 %v1069, %v1298
    %1300 = vmatmul.mubr.f32.gmra.mxu0 %v1299
    %v1301 = vpop.f32.mrf.mxu0
    %v1302 = vadd.f32 %v1226, %v1301
    %v1303 = vpop.f32.mrf.mxu0
    %1304 = vdwg.mxu0
    %1305 = vmatprep.subr.mxu0 0.0
    %1306 = vmatpush1.msra.mxu0 0.0
    %1307 = vmatprep.subr.mxu0 0.0
    %1308 = vmatpush1.msra.mxu0 0.0
    %1309 = vmatprep.subr.mxu0 0.0
    %1310 = vmatpush1.msra.mxu0 0.0
    %1311 = vmatprep.subr.mxu0 0.0
    %1312 = vmatpush1.msra.mxu0 0.0
    %1313 = vmatprep.subr.mxu0 0.0
    %1314 = vmatpush1.msra.mxu0 0.0
    %1315 = vmatprep.subr.mxu0 0.0
    %1316 = vmatpush1.msra.mxu0 0.0
    %1317 = vmatprep.subr.mxu0 0.0
    %1318 = vmatpush1.msra.mxu0 0.0
    %1319 = vmatprep.subr.mxu0 0.0
    %1320 = vmatpush1.msra.mxu0 0.0
    %1321 = vmatprep.subr.mxu0 0.0
    %1322 = vmatpush1.msra.mxu0 0.0
    %1323 = vmatprep.subr.mxu0 0.0
    %1324 = vmatpush1.msra.mxu0 0.0
    %1325 = vmatprep.subr.mxu0 0.0
    %1326 = vmatpush1.msra.mxu0 0.0
    %1327 = vmatprep.subr.mxu0 0.0
    %1328 = vmatpush1.msra.mxu0 0.0
    %1329 = vmatprep.subr.mxu0 0.0
    %1330 = vmatpush1.msra.mxu0 0.0
    %1331 = vmatprep.subr.mxu0 0.0
    %1332 = vmatpush1.msra.mxu0 0.0
    %1333 = vmatprep.subr.mxu0 0.0
    %v1334 = vand.u32 %v69, 4294901760
    %1335 = vmatpush1.msra.mxu0 %v1334
    %1336 = vmatprep.subr.mxu0 0.0
    %v1337 = vand.u32 %v68, 4294901760
    %1338 = vmatpush1.msra.mxu0 %v1337
    %1339 = vmatprep.subr.mxu0 0.0
    %1340 = vmatpush2.msra.mxu0 0.0
    %1341 = vmatprep.subr.mxu0 0.0
    %1342 = vmatpush2.msra.mxu0 0.0
    %1343 = vmatprep.subr.mxu0 0.0
    %1344 = vmatpush2.msra.mxu0 0.0
    %1345 = vmatprep.subr.mxu0 0.0
    %1346 = vmatpush2.msra.mxu0 0.0
    %1347 = vmatprep.subr.mxu0 0.0
    %1348 = vmatpush2.msra.mxu0 0.0
    %1349 = vmatprep.subr.mxu0 0.0
    %1350 = vmatpush2.msra.mxu0 0.0
    %1351 = vmatprep.subr.mxu0 0.0
    %1352 = vmatpush2.msra.mxu0 0.0
    %1353 = vmatprep.subr.mxu0 0.0
    %1354 = vmatpush2.msra.mxu0 0.0
    %1355 = vmatprep.subr.mxu0 0.0
    %1356 = vmatpush2.msra.mxu0 0.0
    %1357 = vmatprep.subr.mxu0 0.0
    %1358 = vmatpush2.msra.mxu0 0.0
    %1359 = vmatprep.subr.mxu0 0.0
    %1360 = vmatpush2.msra.mxu0 0.0
    %1361 = vmatprep.subr.mxu0 0.0
    %1362 = vmatpush2.msra.mxu0 0.0
    %1363 = vmatprep.subr.mxu0 0.0
    %1364 = vmatpush2.msra.mxu0 0.0
    %1365 = vmatprep.subr.mxu0 0.0
    %1366 = vmatpush2.msra.mxu0 0.0
    %1367 = vmatprep.subr.mxu0 0.0
    %1368 = vmatpush2.msra.mxu0 0.0
    %1369 = vmatprep.subr.mxu0 0.0
    %1370 = vmatpush2.msra.mxu0 0.0
    %1371 = vmatprep.mubr.f32.mxu0 0.0
    %v1372 = vand.u32 %v1069, 4294901760
    %v1373 = vsub.f32 %v1069, %v1372
    %v1374 = vand.u32 %v1373, 4294901760
    %1375 = vmatmul.mubr.f32.gmra.mxu0 %v1374
    %v1376 = vpop.f32.mrf.mxu0
    %v1377 = vadd.f32 %v1302, %v1376
    %v1378 = vpop.f32.mrf.mxu0
    %1379 = vdwg.mxu0
    %1380 = vmatprep.subr.mxu0 0.0
    %1381 = vmatpush1.msra.mxu0 0.0
    %1382 = vmatprep.subr.mxu0 0.0
    %1383 = vmatpush1.msra.mxu0 0.0
    %1384 = vmatprep.subr.mxu0 0.0
    %1385 = vmatpush1.msra.mxu0 0.0
    %1386 = vmatprep.subr.mxu0 0.0
    %1387 = vmatpush1.msra.mxu0 0.0
    %1388 = vmatprep.subr.mxu0 0.0
    %1389 = vmatpush1.msra.mxu0 0.0
    %1390 = vmatprep.subr.mxu0 0.0
    %1391 = vmatpush1.msra.mxu0 0.0
    %1392 = vmatprep.subr.mxu0 0.0
    %1393 = vmatpush1.msra.mxu0 0.0
    %1394 = vmatprep.subr.mxu0 0.0
    %1395 = vmatpush1.msra.mxu0 0.0
    %1396 = vmatprep.subr.mxu0 0.0
    %1397 = vmatpush1.msra.mxu0 0.0
    %1398 = vmatprep.subr.mxu0 0.0
    %1399 = vmatpush1.msra.mxu0 0.0
    %1400 = vmatprep.subr.mxu0 0.0
    %1401 = vmatpush1.msra.mxu0 0.0
    %1402 = vmatprep.subr.mxu0 0.0
    %1403 = vmatpush1.msra.mxu0 0.0
    %1404 = vmatprep.subr.mxu0 0.0
    %1405 = vmatpush1.msra.mxu0 0.0
    %1406 = vmatprep.subr.mxu0 0.0
    %1407 = vmatpush1.msra.mxu0 0.0
    %1408 = vmatprep.subr.mxu0 0.0
    %v1409 = vand.u32 %v69, 4294901760
    %v1410 = vsub.f32 %v69, %v1409
    %v1411 = vand.u32 %v1410, 4294901760
    %1412 = vmatpush1.msra.mxu0 %v1411
    %1413 = vmatprep.subr.mxu0 0.0
    %v1414 = vand.u32 %v68, 4294901760
    %v1415 = vsub.f32 %v68, %v1414
    %v1416 = vand.u32 %v1415, 4294901760
    %1417 = vmatpush1.msra.mxu0 %v1416
    %1418 = vmatprep.subr.mxu0 0.0
    %1419 = vmatpush2.msra.mxu0 0.0
    %1420 = vmatprep.subr.mxu0 0.0
    %1421 = vmatpush2.msra.mxu0 0.0
    %1422 = vmatprep.subr.mxu0 0.0
    %1423 = vmatpush2.msra.mxu0 0.0
    %1424 = vmatprep.subr.mxu0 0.0
    %1425 = vmatpush2.msra.mxu0 0.0
    %1426 = vmatprep.subr.mxu0 0.0
    %1427 = vmatpush2.msra.mxu0 0.0
    %1428 = vmatprep.subr.mxu0 0.0
    %1429 = vmatpush2.msra.mxu0 0.0
    %1430 = vmatprep.subr.mxu0 0.0
    %1431 = vmatpush2.msra.mxu0 0.0
    %1432 = vmatprep.subr.mxu0 0.0
    %1433 = vmatpush2.msra.mxu0 0.0
    %1434 = vmatprep.subr.mxu0 0.0
    %1435 = vmatpush2.msra.mxu0 0.0
    %1436 = vmatprep.subr.mxu0 0.0
    %1437 = vmatpush2.msra.mxu0 0.0
    %1438 = vmatprep.subr.mxu0 0.0
    %1439 = vmatpush2.msra.mxu0 0.0
    %1440 = vmatprep.subr.mxu0 0.0
    %1441 = vmatpush2.msra.mxu0 0.0
    %1442 = vmatprep.subr.mxu0 0.0
    %1443 = vmatpush2.msra.mxu0 0.0
    %1444 = vmatprep.subr.mxu0 0.0
    %1445 = vmatpush2.msra.mxu0 0.0
    %1446 = vmatprep.subr.mxu0 0.0
    %1447 = vmatpush2.msra.mxu0 0.0
    %1448 = vmatprep.subr.mxu0 0.0
    %1449 = vmatpush2.msra.mxu0 0.0
    %1450 = vmatprep.mubr.f32.mxu0 0.0
    %v1451 = vand.u32 %v1069, 4294901760
    %1452 = vmatmul.mubr.f32.gmra.mxu0 %v1451
    %v1453 = vpop.f32.mrf.mxu0
    %v1454 = vadd.f32 %v1377, %v1453
    %v1455 = vpop.f32.mrf.mxu0
    %1456 = vdwg.mxu0
    %1457 = vmatprep.subr.mxu0 0.0
    %1458 = vmatpush1.msra.mxu0 0.0
    %1459 = vmatprep.subr.mxu0 0.0
    %1460 = vmatpush1.msra.mxu0 0.0
    %1461 = vmatprep.subr.mxu0 0.0
    %1462 = vmatpush1.msra.mxu0 0.0
    %1463 = vmatprep.subr.mxu0 0.0
    %1464 = vmatpush1.msra.mxu0 0.0
    %1465 = vmatprep.subr.mxu0 0.0
    %1466 = vmatpush1.msra.mxu0 0.0
    %1467 = vmatprep.subr.mxu0 0.0
    %1468 = vmatpush1.msra.mxu0 0.0
    %1469 = vmatprep.subr.mxu0 0.0
    %1470 = vmatpush1.msra.mxu0 0.0
    %1471 = vmatprep.subr.mxu0 0.0
    %1472 = vmatpush1.msra.mxu0 0.0
    %1473 = vmatprep.subr.mxu0 0.0
    %1474 = vmatpush1.msra.mxu0 0.0
    %1475 = vmatprep.subr.mxu0 0.0
    %1476 = vmatpush1.msra.mxu0 0.0
    %1477 = vmatprep.subr.mxu0 0.0
    %1478 = vmatpush1.msra.mxu0 0.0
    %1479 = vmatprep.subr.mxu0 0.0
    %1480 = vmatpush1.msra.mxu0 0.0
    %1481 = vmatprep.subr.mxu0 0.0
    %1482 = vmatpush1.msra.mxu0 0.0
    %1483 = vmatprep.subr.mxu0 0.0
    %1484 = vmatpush1.msra.mxu0 0.0
    %1485 = vmatprep.subr.mxu0 0.0
    %v1486 = vand.u32 %v69, 4294901760
    %1487 = vmatpush1.msra.mxu0 %v1486
    %1488 = vmatprep.subr.mxu0 0.0
    %v1489 = vand.u32 %v68, 4294901760
    %1490 = vmatpush1.msra.mxu0 %v1489
    %1491 = vmatprep.subr.mxu0 0.0
    %1492 = vmatpush2.msra.mxu0 0.0
    %1493 = vmatprep.subr.mxu0 0.0
    %1494 = vmatpush2.msra.mxu0 0.0
    %1495 = vmatprep.subr.mxu0 0.0
    %1496 = vmatpush2.msra.mxu0 0.0
    %1497 = vmatprep.subr.mxu0 0.0
    %1498 = vmatpush2.msra.mxu0 0.0
    %1499 = vmatprep.subr.mxu0 0.0
    %1500 = vmatpush2.msra.mxu0 0.0
    %1501 = vmatprep.subr.mxu0 0.0
    %1502 = vmatpush2.msra.mxu0 0.0
    %1503 = vmatprep.subr.mxu0 0.0
    %1504 = vmatpush2.msra.mxu0 0.0
    %1505 = vmatprep.subr.mxu0 0.0
    %1506 = vmatpush2.msra.mxu0 0.0
    %1507 = vmatprep.subr.mxu0 0.0
    %1508 = vmatpush2.msra.mxu0 0.0
    %1509 = vmatprep.subr.mxu0 0.0
    %1510 = vmatpush2.msra.mxu0 0.0
    %1511 = vmatprep.subr.mxu0 0.0
    %1512 = vmatpush2.msra.mxu0 0.0
    %1513 = vmatprep.subr.mxu0 0.0
    %1514 = vmatpush2.msra.mxu0 0.0
    %1515 = vmatprep.subr.mxu0 0.0
    %1516 = vmatpush2.msra.mxu0 0.0
    %1517 = vmatprep.subr.mxu0 0.0
    %1518 = vmatpush2.msra.mxu0 0.0
    %1519 = vmatprep.subr.mxu0 0.0
    %1520 = vmatpush2.msra.mxu0 0.0
    %1521 = vmatprep.subr.mxu0 0.0
    %1522 = vmatpush2.msra.mxu0 0.0
    %1523 = vmatprep.mubr.f32.mxu0 0.0
    %v1524 = vand.u32 %v1069, 4294901760
    %1525 = vmatmul.mubr.f32.gmra.mxu0 %v1524
    %v1526 = vpop.f32.mrf.mxu0
    %v1527 = vadd.f32 %v1454, %v1526
    %v1528 = vpop.f32.mrf.mxu0
    %1529 = vdwg.mxu0
    %v1531 = vsel %vm769, %v835, 0
    %1533 = vmatprep.subr.mxu0 0.0
    %1534 = vmatpush1.msra.mxu0 0.0
    %1535 = vmatprep.subr.mxu0 0.0
    %1536 = vmatpush1.msra.mxu0 0.0
    %1537 = vmatprep.subr.mxu0 0.0
    %1538 = vmatpush1.msra.mxu0 0.0
    %1539 = vmatprep.subr.mxu0 0.0
    %1540 = vmatpush1.msra.mxu0 0.0
    %1541 = vmatprep.subr.mxu0 0.0
    %1542 = vmatpush1.msra.mxu0 0.0
    %1543 = vmatprep.subr.mxu0 0.0
    %1544 = vmatpush1.msra.mxu0 0.0
    %1545 = vmatprep.subr.mxu0 0.0
    %1546 = vmatpush1.msra.mxu0 0.0
    %1547 = vmatprep.subr.mxu0 0.0
    %1548 = vmatpush1.msra.mxu0 0.0
    %1549 = vmatprep.subr.mxu0 0.0
    %1550 = vmatpush1.msra.mxu0 0.0
    %1551 = vmatprep.subr.mxu0 0.0
    %1552 = vmatpush1.msra.mxu0 0.0
    %1553 = vmatprep.subr.mxu0 0.0
    %1554 = vmatpush1.msra.mxu0 0.0
    %1555 = vmatprep.subr.mxu0 0.0
    %1556 = vmatpush1.msra.mxu0 0.0
    %1557 = vmatprep.subr.mxu0 0.0
    %1558 = vmatpush1.msra.mxu0 0.0
    %1559 = vmatprep.subr.mxu0 0.0
    %1560 = vmatpush1.msra.mxu0 0.0
    %1561 = vmatprep.subr.mxu0 0.0
    %v1562 = vand.u32 %v71, 4294901760
    %1563 = vmatpush1.msra.mxu0 %v1562
    %1564 = vmatprep.subr.mxu0 0.0
    %v1565 = vand.u32 %v70, 4294901760
    %1566 = vmatpush1.msra.mxu0 %v1565
    %1567 = vmatprep.subr.mxu0 0.0
    %1568 = vmatpush2.msra.mxu0 0.0
    %1569 = vmatprep.subr.mxu0 0.0
    %1570 = vmatpush2.msra.mxu0 0.0
    %1571 = vmatprep.subr.mxu0 0.0
    %1572 = vmatpush2.msra.mxu0 0.0
    %1573 = vmatprep.subr.mxu0 0.0
    %1574 = vmatpush2.msra.mxu0 0.0
    %1575 = vmatprep.subr.mxu0 0.0
    %1576 = vmatpush2.msra.mxu0 0.0
    %1577 = vmatprep.subr.mxu0 0.0
    %1578 = vmatpush2.msra.mxu0 0.0
    %1579 = vmatprep.subr.mxu0 0.0
    %1580 = vmatpush2.msra.mxu0 0.0
    %1581 = vmatprep.subr.mxu0 0.0
    %1582 = vmatpush2.msra.mxu0 0.0
    %1583 = vmatprep.subr.mxu0 0.0
    %1584 = vmatpush2.msra.mxu0 0.0
    %1585 = vmatprep.subr.mxu0 0.0
    %1586 = vmatpush2.msra.mxu0 0.0
    %1587 = vmatprep.subr.mxu0 0.0
    %1588 = vmatpush2.msra.mxu0 0.0
    %1589 = vmatprep.subr.mxu0 0.0
    %1590 = vmatpush2.msra.mxu0 0.0
    %1591 = vmatprep.subr.mxu0 0.0
    %1592 = vmatpush2.msra.mxu0 0.0
    %1593 = vmatprep.subr.mxu0 0.0
    %1594 = vmatpush2.msra.mxu0 0.0
    %1595 = vmatprep.subr.mxu0 0.0
    %1596 = vmatpush2.msra.mxu0 0.0
    %1597 = vmatprep.subr.mxu0 0.0
    %1598 = vmatpush2.msra.mxu0 0.0
    %1599 = vmatprep.mubr.f32.mxu0 0.0
    %v1600 = vand.u32 %v1531, 4294901760
    %v1601 = vsub.f32 %v1531, %v1600
    %v1602 = vand.u32 %v1601, 4294901760
    %v1603 = vsub.f32 %v1601, %v1602
    %v1604 = vand.u32 %v1603, 4294901760
    %1605 = vmatmul.mubr.f32.gmra.mxu0 %v1604
    %v1606 = vpop.f32.mrf.mxu0
    %v1607 = vadd.f32 0.0, %v1606
    %v1608 = vpop.f32.mrf.mxu0
    %1609 = vdwg.mxu0
    %1610 = vmatprep.subr.mxu0 0.0
    %1611 = vmatpush1.msra.mxu0 0.0
    %1612 = vmatprep.subr.mxu0 0.0
    %1613 = vmatpush1.msra.mxu0 0.0
    %1614 = vmatprep.subr.mxu0 0.0
    %1615 = vmatpush1.msra.mxu0 0.0
    %1616 = vmatprep.subr.mxu0 0.0
    %1617 = vmatpush1.msra.mxu0 0.0
    %1618 = vmatprep.subr.mxu0 0.0
    %1619 = vmatpush1.msra.mxu0 0.0
    %1620 = vmatprep.subr.mxu0 0.0
    %1621 = vmatpush1.msra.mxu0 0.0
    %1622 = vmatprep.subr.mxu0 0.0
    %1623 = vmatpush1.msra.mxu0 0.0
    %1624 = vmatprep.subr.mxu0 0.0
    %1625 = vmatpush1.msra.mxu0 0.0
    %1626 = vmatprep.subr.mxu0 0.0
    %1627 = vmatpush1.msra.mxu0 0.0
    %1628 = vmatprep.subr.mxu0 0.0
    %1629 = vmatpush1.msra.mxu0 0.0
    %1630 = vmatprep.subr.mxu0 0.0
    %1631 = vmatpush1.msra.mxu0 0.0
    %1632 = vmatprep.subr.mxu0 0.0
    %1633 = vmatpush1.msra.mxu0 0.0
    %1634 = vmatprep.subr.mxu0 0.0
    %1635 = vmatpush1.msra.mxu0 0.0
    %1636 = vmatprep.subr.mxu0 0.0
    %1637 = vmatpush1.msra.mxu0 0.0
    %1638 = vmatprep.subr.mxu0 0.0
    %v1639 = vand.u32 %v71, 4294901760
    %v1640 = vsub.f32 %v71, %v1639
    %v1641 = vand.u32 %v1640, 4294901760
    %v1642 = vsub.f32 %v1640, %v1641
    %v1643 = vand.u32 %v1642, 4294901760
    %1644 = vmatpush1.msra.mxu0 %v1643
    %1645 = vmatprep.subr.mxu0 0.0
    %v1646 = vand.u32 %v70, 4294901760
    %v1647 = vsub.f32 %v70, %v1646
    %v1648 = vand.u32 %v1647, 4294901760
    %v1649 = vsub.f32 %v1647, %v1648
    %v1650 = vand.u32 %v1649, 4294901760
    %1651 = vmatpush1.msra.mxu0 %v1650
    %1652 = vmatprep.subr.mxu0 0.0
    %1653 = vmatpush2.msra.mxu0 0.0
    %1654 = vmatprep.subr.mxu0 0.0
    %1655 = vmatpush2.msra.mxu0 0.0
    %1656 = vmatprep.subr.mxu0 0.0
    %1657 = vmatpush2.msra.mxu0 0.0
    %1658 = vmatprep.subr.mxu0 0.0
    %1659 = vmatpush2.msra.mxu0 0.0
    %1660 = vmatprep.subr.mxu0 0.0
    %1661 = vmatpush2.msra.mxu0 0.0
    %1662 = vmatprep.subr.mxu0 0.0
    %1663 = vmatpush2.msra.mxu0 0.0
    %1664 = vmatprep.subr.mxu0 0.0
    %1665 = vmatpush2.msra.mxu0 0.0
    %1666 = vmatprep.subr.mxu0 0.0
    %1667 = vmatpush2.msra.mxu0 0.0
    %1668 = vmatprep.subr.mxu0 0.0
    %1669 = vmatpush2.msra.mxu0 0.0
    %1670 = vmatprep.subr.mxu0 0.0
    %1671 = vmatpush2.msra.mxu0 0.0
    %1672 = vmatprep.subr.mxu0 0.0
    %1673 = vmatpush2.msra.mxu0 0.0
    %1674 = vmatprep.subr.mxu0 0.0
    %1675 = vmatpush2.msra.mxu0 0.0
    %1676 = vmatprep.subr.mxu0 0.0
    %1677 = vmatpush2.msra.mxu0 0.0
    %1678 = vmatprep.subr.mxu0 0.0
    %1679 = vmatpush2.msra.mxu0 0.0
    %1680 = vmatprep.subr.mxu0 0.0
    %1681 = vmatpush2.msra.mxu0 0.0
    %1682 = vmatprep.subr.mxu0 0.0
    %1683 = vmatpush2.msra.mxu0 0.0
    %1684 = vmatprep.mubr.f32.mxu0 0.0
    %v1685 = vand.u32 %v1531, 4294901760
    %1686 = vmatmul.mubr.f32.gmra.mxu0 %v1685
    %v1687 = vpop.f32.mrf.mxu0
    %v1688 = vadd.f32 %v1607, %v1687
    %v1689 = vpop.f32.mrf.mxu0
    %1690 = vdwg.mxu0
    %1691 = vmatprep.subr.mxu0 0.0
    %1692 = vmatpush1.msra.mxu0 0.0
    %1693 = vmatprep.subr.mxu0 0.0
    %1694 = vmatpush1.msra.mxu0 0.0
    %1695 = vmatprep.subr.mxu0 0.0
    %1696 = vmatpush1.msra.mxu0 0.0
    %1697 = vmatprep.subr.mxu0 0.0
    %1698 = vmatpush1.msra.mxu0 0.0
    %1699 = vmatprep.subr.mxu0 0.0
    %1700 = vmatpush1.msra.mxu0 0.0
    %1701 = vmatprep.subr.mxu0 0.0
    %1702 = vmatpush1.msra.mxu0 0.0
    %1703 = vmatprep.subr.mxu0 0.0
    %1704 = vmatpush1.msra.mxu0 0.0
    %1705 = vmatprep.subr.mxu0 0.0
    %1706 = vmatpush1.msra.mxu0 0.0
    %1707 = vmatprep.subr.mxu0 0.0
    %1708 = vmatpush1.msra.mxu0 0.0
    %1709 = vmatprep.subr.mxu0 0.0
    %1710 = vmatpush1.msra.mxu0 0.0
    %1711 = vmatprep.subr.mxu0 0.0
    %1712 = vmatpush1.msra.mxu0 0.0
    %1713 = vmatprep.subr.mxu0 0.0
    %1714 = vmatpush1.msra.mxu0 0.0
    %1715 = vmatprep.subr.mxu0 0.0
    %1716 = vmatpush1.msra.mxu0 0.0
    %1717 = vmatprep.subr.mxu0 0.0
    %1718 = vmatpush1.msra.mxu0 0.0
    %1719 = vmatprep.subr.mxu0 0.0
    %v1720 = vand.u32 %v71, 4294901760
    %v1721 = vsub.f32 %v71, %v1720
    %1722 = vmatpush1.msra.mxu0 %v1721
    %1723 = vmatprep.subr.mxu0 0.0
    %v1724 = vand.u32 %v70, 4294901760
    %v1725 = vsub.f32 %v70, %v1724
    %1726 = vmatpush1.msra.mxu0 %v1725
    %1727 = vmatprep.subr.mxu0 0.0
    %1728 = vmatpush2.msra.mxu0 0.0
    %1729 = vmatprep.subr.mxu0 0.0
    %1730 = vmatpush2.msra.mxu0 0.0
    %1731 = vmatprep.subr.mxu0 0.0
    %1732 = vmatpush2.msra.mxu0 0.0
    %1733 = vmatprep.subr.mxu0 0.0
    %1734 = vmatpush2.msra.mxu0 0.0
    %1735 = vmatprep.subr.mxu0 0.0
    %1736 = vmatpush2.msra.mxu0 0.0
    %1737 = vmatprep.subr.mxu0 0.0
    %1738 = vmatpush2.msra.mxu0 0.0
    %1739 = vmatprep.subr.mxu0 0.0
    %1740 = vmatpush2.msra.mxu0 0.0
    %1741 = vmatprep.subr.mxu0 0.0
    %1742 = vmatpush2.msra.mxu0 0.0
    %1743 = vmatprep.subr.mxu0 0.0
    %1744 = vmatpush2.msra.mxu0 0.0
    %1745 = vmatprep.subr.mxu0 0.0
    %1746 = vmatpush2.msra.mxu0 0.0
    %1747 = vmatprep.subr.mxu0 0.0
    %1748 = vmatpush2.msra.mxu0 0.0
    %1749 = vmatprep.subr.mxu0 0.0
    %1750 = vmatpush2.msra.mxu0 0.0
    %1751 = vmatprep.subr.mxu0 0.0
    %1752 = vmatpush2.msra.mxu0 0.0
    %1753 = vmatprep.subr.mxu0 0.0
    %1754 = vmatpush2.msra.mxu0 0.0
    %1755 = vmatprep.subr.mxu0 0.0
    %1756 = vmatpush2.msra.mxu0 0.0
    %1757 = vmatprep.subr.mxu0 0.0
    %1758 = vmatpush2.msra.mxu0 0.0
    %1759 = vmatprep.mubr.f32.mxu0 0.0
    %v1760 = vand.u32 %v1531, 4294901760
    %v1761 = vsub.f32 %v1531, %v1760
    %1762 = vmatmul.mubr.f32.gmra.mxu0 %v1761
    %v1763 = vpop.f32.mrf.mxu0
    %v1764 = vadd.f32 %v1688, %v1763
    %v1765 = vpop.f32.mrf.mxu0
    %1766 = vdwg.mxu0
    %1767 = vmatprep.subr.mxu0 0.0
    %1768 = vmatpush1.msra.mxu0 0.0
    %1769 = vmatprep.subr.mxu0 0.0
    %1770 = vmatpush1.msra.mxu0 0.0
    %1771 = vmatprep.subr.mxu0 0.0
    %1772 = vmatpush1.msra.mxu0 0.0
    %1773 = vmatprep.subr.mxu0 0.0
    %1774 = vmatpush1.msra.mxu0 0.0
    %1775 = vmatprep.subr.mxu0 0.0
    %1776 = vmatpush1.msra.mxu0 0.0
    %1777 = vmatprep.subr.mxu0 0.0
    %1778 = vmatpush1.msra.mxu0 0.0
    %1779 = vmatprep.subr.mxu0 0.0
    %1780 = vmatpush1.msra.mxu0 0.0
    %1781 = vmatprep.subr.mxu0 0.0
    %1782 = vmatpush1.msra.mxu0 0.0
    %1783 = vmatprep.subr.mxu0 0.0
    %1784 = vmatpush1.msra.mxu0 0.0
    %1785 = vmatprep.subr.mxu0 0.0
    %1786 = vmatpush1.msra.mxu0 0.0
    %1787 = vmatprep.subr.mxu0 0.0
    %1788 = vmatpush1.msra.mxu0 0.0
    %1789 = vmatprep.subr.mxu0 0.0
    %1790 = vmatpush1.msra.mxu0 0.0
    %1791 = vmatprep.subr.mxu0 0.0
    %1792 = vmatpush1.msra.mxu0 0.0
    %1793 = vmatprep.subr.mxu0 0.0
    %1794 = vmatpush1.msra.mxu0 0.0
    %1795 = vmatprep.subr.mxu0 0.0
    %v1796 = vand.u32 %v71, 4294901760
    %1797 = vmatpush1.msra.mxu0 %v1796
    %1798 = vmatprep.subr.mxu0 0.0
    %v1799 = vand.u32 %v70, 4294901760
    %1800 = vmatpush1.msra.mxu0 %v1799
    %1801 = vmatprep.subr.mxu0 0.0
    %1802 = vmatpush2.msra.mxu0 0.0
    %1803 = vmatprep.subr.mxu0 0.0
    %1804 = vmatpush2.msra.mxu0 0.0
    %1805 = vmatprep.subr.mxu0 0.0
    %1806 = vmatpush2.msra.mxu0 0.0
    %1807 = vmatprep.subr.mxu0 0.0
    %1808 = vmatpush2.msra.mxu0 0.0
    %1809 = vmatprep.subr.mxu0 0.0
    %1810 = vmatpush2.msra.mxu0 0.0
    %1811 = vmatprep.subr.mxu0 0.0
    %1812 = vmatpush2.msra.mxu0 0.0
    %1813 = vmatprep.subr.mxu0 0.0
    %1814 = vmatpush2.msra.mxu0 0.0
    %1815 = vmatprep.subr.mxu0 0.0
    %1816 = vmatpush2.msra.mxu0 0.0
    %1817 = vmatprep.subr.mxu0 0.0
    %1818 = vmatpush2.msra.mxu0 0.0
    %1819 = vmatprep.subr.mxu0 0.0
    %1820 = vmatpush2.msra.mxu0 0.0
    %1821 = vmatprep.subr.mxu0 0.0
    %1822 = vmatpush2.msra.mxu0 0.0
    %1823 = vmatprep.subr.mxu0 0.0
    %1824 = vmatpush2.msra.mxu0 0.0
    %1825 = vmatprep.subr.mxu0 0.0
    %1826 = vmatpush2.msra.mxu0 0.0
    %1827 = vmatprep.subr.mxu0 0.0
    %1828 = vmatpush2.msra.mxu0 0.0
    %1829 = vmatprep.subr.mxu0 0.0
    %1830 = vmatpush2.msra.mxu0 0.0
    %1831 = vmatprep.subr.mxu0 0.0
    %1832 = vmatpush2.msra.mxu0 0.0
    %1833 = vmatprep.mubr.f32.mxu0 0.0
    %v1834 = vand.u32 %v1531, 4294901760
    %v1835 = vsub.f32 %v1531, %v1834
    %v1836 = vand.u32 %v1835, 4294901760
    %1837 = vmatmul.mubr.f32.gmra.mxu0 %v1836
    %v1838 = vpop.f32.mrf.mxu0
    %v1839 = vadd.f32 %v1764, %v1838
    %v1840 = vpop.f32.mrf.mxu0
    %1841 = vdwg.mxu0
    %1842 = vmatprep.subr.mxu0 0.0
    %1843 = vmatpush1.msra.mxu0 0.0
    %1844 = vmatprep.subr.mxu0 0.0
    %1845 = vmatpush1.msra.mxu0 0.0
    %1846 = vmatprep.subr.mxu0 0.0
    %1847 = vmatpush1.msra.mxu0 0.0
    %1848 = vmatprep.subr.mxu0 0.0
    %1849 = vmatpush1.msra.mxu0 0.0
    %1850 = vmatprep.subr.mxu0 0.0
    %1851 = vmatpush1.msra.mxu0 0.0
    %1852 = vmatprep.subr.mxu0 0.0
    %1853 = vmatpush1.msra.mxu0 0.0
    %1854 = vmatprep.subr.mxu0 0.0
    %1855 = vmatpush1.msra.mxu0 0.0
    %1856 = vmatprep.subr.mxu0 0.0
    %1857 = vmatpush1.msra.mxu0 0.0
    %1858 = vmatprep.subr.mxu0 0.0
    %1859 = vmatpush1.msra.mxu0 0.0
    %1860 = vmatprep.subr.mxu0 0.0
    %1861 = vmatpush1.msra.mxu0 0.0
    %1862 = vmatprep.subr.mxu0 0.0
    %1863 = vmatpush1.msra.mxu0 0.0
    %1864 = vmatprep.subr.mxu0 0.0
    %1865 = vmatpush1.msra.mxu0 0.0
    %1866 = vmatprep.subr.mxu0 0.0
    %1867 = vmatpush1.msra.mxu0 0.0
    %1868 = vmatprep.subr.mxu0 0.0
    %1869 = vmatpush1.msra.mxu0 0.0
    %1870 = vmatprep.subr.mxu0 0.0
    %v1871 = vand.u32 %v71, 4294901760
    %v1872 = vsub.f32 %v71, %v1871
    %v1873 = vand.u32 %v1872, 4294901760
    %1874 = vmatpush1.msra.mxu0 %v1873
    %1875 = vmatprep.subr.mxu0 0.0
    %v1876 = vand.u32 %v70, 4294901760
    %v1877 = vsub.f32 %v70, %v1876
    %v1878 = vand.u32 %v1877, 4294901760
    %1879 = vmatpush1.msra.mxu0 %v1878
    %1880 = vmatprep.subr.mxu0 0.0
    %1881 = vmatpush2.msra.mxu0 0.0
    %1882 = vmatprep.subr.mxu0 0.0
    %1883 = vmatpush2.msra.mxu0 0.0
    %1884 = vmatprep.subr.mxu0 0.0
    %1885 = vmatpush2.msra.mxu0 0.0
    %1886 = vmatprep.subr.mxu0 0.0
    %1887 = vmatpush2.msra.mxu0 0.0
    %1888 = vmatprep.subr.mxu0 0.0
    %1889 = vmatpush2.msra.mxu0 0.0
    %1890 = vmatprep.subr.mxu0 0.0
    %1891 = vmatpush2.msra.mxu0 0.0
    %1892 = vmatprep.subr.mxu0 0.0
    %1893 = vmatpush2.msra.mxu0 0.0
    %1894 = vmatprep.subr.mxu0 0.0
    %1895 = vmatpush2.msra.mxu0 0.0
    %1896 = vmatprep.subr.mxu0 0.0
    %1897 = vmatpush2.msra.mxu0 0.0
    %1898 = vmatprep.subr.mxu0 0.0
    %1899 = vmatpush2.msra.mxu0 0.0
    %1900 = vmatprep.subr.mxu0 0.0
    %1901 = vmatpush2.msra.mxu0 0.0
    %1902 = vmatprep.subr.mxu0 0.0
    %1903 = vmatpush2.msra.mxu0 0.0
    %1904 = vmatprep.subr.mxu0 0.0
    %1905 = vmatpush2.msra.mxu0 0.0
    %1906 = vmatprep.subr.mxu0 0.0
    %1907 = vmatpush2.msra.mxu0 0.0
    %1908 = vmatprep.subr.mxu0 0.0
    %1909 = vmatpush2.msra.mxu0 0.0
    %1910 = vmatprep.subr.mxu0 0.0
    %1911 = vmatpush2.msra.mxu0 0.0
    %1912 = vmatprep.mubr.f32.mxu0 0.0
    %v1913 = vand.u32 %v1531, 4294901760
    %1914 = vmatmul.mubr.f32.gmra.mxu0 %v1913
    %v1915 = vpop.f32.mrf.mxu0
    %v1916 = vadd.f32 %v1839, %v1915
    %v1917 = vpop.f32.mrf.mxu0
    %1918 = vdwg.mxu0
    %1919 = vmatprep.subr.mxu0 0.0
    %1920 = vmatpush1.msra.mxu0 0.0
    %1921 = vmatprep.subr.mxu0 0.0
    %1922 = vmatpush1.msra.mxu0 0.0
    %1923 = vmatprep.subr.mxu0 0.0
    %1924 = vmatpush1.msra.mxu0 0.0
    %1925 = vmatprep.subr.mxu0 0.0
    %1926 = vmatpush1.msra.mxu0 0.0
    %1927 = vmatprep.subr.mxu0 0.0
    %1928 = vmatpush1.msra.mxu0 0.0
    %1929 = vmatprep.subr.mxu0 0.0
    %1930 = vmatpush1.msra.mxu0 0.0
    %1931 = vmatprep.subr.mxu0 0.0
    %1932 = vmatpush1.msra.mxu0 0.0
    %1933 = vmatprep.subr.mxu0 0.0
    %1934 = vmatpush1.msra.mxu0 0.0
    %1935 = vmatprep.subr.mxu0 0.0
    %1936 = vmatpush1.msra.mxu0 0.0
    %1937 = vmatprep.subr.mxu0 0.0
    %1938 = vmatpush1.msra.mxu0 0.0
    %1939 = vmatprep.subr.mxu0 0.0
    %1940 = vmatpush1.msra.mxu0 0.0
    %1941 = vmatprep.subr.mxu0 0.0
    %1942 = vmatpush1.msra.mxu0 0.0
    %1943 = vmatprep.subr.mxu0 0.0
    %1944 = vmatpush1.msra.mxu0 0.0
    %1945 = vmatprep.subr.mxu0 0.0
    %1946 = vmatpush1.msra.mxu0 0.0
    %1947 = vmatprep.subr.mxu0 0.0
    %v1948 = vand.u32 %v71, 4294901760
    %1949 = vmatpush1.msra.mxu0 %v1948
    %1950 = vmatprep.subr.mxu0 0.0
    %v1951 = vand.u32 %v70, 4294901760
    %1952 = vmatpush1.msra.mxu0 %v1951
    %1953 = vmatprep.subr.mxu0 0.0
    %1954 = vmatpush2.msra.mxu0 0.0
    %1955 = vmatprep.subr.mxu0 0.0
    %1956 = vmatpush2.msra.mxu0 0.0
    %1957 = vmatprep.subr.mxu0 0.0
    %1958 = vmatpush2.msra.mxu0 0.0
    %1959 = vmatprep.subr.mxu0 0.0
    %1960 = vmatpush2.msra.mxu0 0.0
    %1961 = vmatprep.subr.mxu0 0.0
    %1962 = vmatpush2.msra.mxu0 0.0
    %1963 = vmatprep.subr.mxu0 0.0
    %1964 = vmatpush2.msra.mxu0 0.0
    %1965 = vmatprep.subr.mxu0 0.0
    %1966 = vmatpush2.msra.mxu0 0.0
    %1967 = vmatprep.subr.mxu0 0.0
    %1968 = vmatpush2.msra.mxu0 0.0
    %1969 = vmatprep.subr.mxu0 0.0
    %1970 = vmatpush2.msra.mxu0 0.0
    %1971 = vmatprep.subr.mxu0 0.0
    %1972 = vmatpush2.msra.mxu0 0.0
    %1973 = vmatprep.subr.mxu0 0.0
    %1974 = vmatpush2.msra.mxu0 0.0
    %1975 = vmatprep.subr.mxu0 0.0
    %1976 = vmatpush2.msra.mxu0 0.0
    %1977 = vmatprep.subr.mxu0 0.0
    %1978 = vmatpush2.msra.mxu0 0.0
    %1979 = vmatprep.subr.mxu0 0.0
    %1980 = vmatpush2.msra.mxu0 0.0
    %1981 = vmatprep.subr.mxu0 0.0
    %1982 = vmatpush2.msra.mxu0 0.0
    %1983 = vmatprep.subr.mxu0 0.0
    %1984 = vmatpush2.msra.mxu0 0.0
    %1985 = vmatprep.mubr.f32.mxu0 0.0
    %v1986 = vand.u32 %v1531, 4294901760
    %1987 = vmatmul.mubr.f32.gmra.mxu0 %v1986
    %v1988 = vpop.f32.mrf.mxu0
    %v1989 = vadd.f32 %v1916, %v1988
    %v1990 = vpop.f32.mrf.mxu0
    %1991 = vdwg.mxu0
    %v1993 = vsel %vm769, %v867, 0
    %1995 = vmatprep.subr.mxu0 0.0
    %1996 = vmatpush1.msra.mxu0 0.0
    %1997 = vmatprep.subr.mxu0 0.0
    %1998 = vmatpush1.msra.mxu0 0.0
    %1999 = vmatprep.subr.mxu0 0.0
    %2000 = vmatpush1.msra.mxu0 0.0
    %2001 = vmatprep.subr.mxu0 0.0
    %2002 = vmatpush1.msra.mxu0 0.0
    %2003 = vmatprep.subr.mxu0 0.0
    %2004 = vmatpush1.msra.mxu0 0.0
    %2005 = vmatprep.subr.mxu0 0.0
    %2006 = vmatpush1.msra.mxu0 0.0
    %2007 = vmatprep.subr.mxu0 0.0
    %2008 = vmatpush1.msra.mxu0 0.0
    %2009 = vmatprep.subr.mxu0 0.0
    %2010 = vmatpush1.msra.mxu0 0.0
    %2011 = vmatprep.subr.mxu0 0.0
    %2012 = vmatpush1.msra.mxu0 0.0
    %2013 = vmatprep.subr.mxu0 0.0
    %2014 = vmatpush1.msra.mxu0 0.0
    %2015 = vmatprep.subr.mxu0 0.0
    %2016 = vmatpush1.msra.mxu0 0.0
    %2017 = vmatprep.subr.mxu0 0.0
    %2018 = vmatpush1.msra.mxu0 0.0
    %2019 = vmatprep.subr.mxu0 0.0
    %2020 = vmatpush1.msra.mxu0 0.0
    %2021 = vmatprep.subr.mxu0 0.0
    %2022 = vmatpush1.msra.mxu0 0.0
    %2023 = vmatprep.subr.mxu0 0.0
    %v2024 = vand.u32 %v73, 4294901760
    %2025 = vmatpush1.msra.mxu0 %v2024
    %2026 = vmatprep.subr.mxu0 0.0
    %v2027 = vand.u32 %v72, 4294901760
    %2028 = vmatpush1.msra.mxu0 %v2027
    %2029 = vmatprep.subr.mxu0 0.0
    %2030 = vmatpush2.msra.mxu0 0.0
    %2031 = vmatprep.subr.mxu0 0.0
    %2032 = vmatpush2.msra.mxu0 0.0
    %2033 = vmatprep.subr.mxu0 0.0
    %2034 = vmatpush2.msra.mxu0 0.0
    %2035 = vmatprep.subr.mxu0 0.0
    %2036 = vmatpush2.msra.mxu0 0.0
    %2037 = vmatprep.subr.mxu0 0.0
    %2038 = vmatpush2.msra.mxu0 0.0
    %2039 = vmatprep.subr.mxu0 0.0
    %2040 = vmatpush2.msra.mxu0 0.0
    %2041 = vmatprep.subr.mxu0 0.0
    %2042 = vmatpush2.msra.mxu0 0.0
    %2043 = vmatprep.subr.mxu0 0.0
    %2044 = vmatpush2.msra.mxu0 0.0
    %2045 = vmatprep.subr.mxu0 0.0
    %2046 = vmatpush2.msra.mxu0 0.0
    %2047 = vmatprep.subr.mxu0 0.0
    %2048 = vmatpush2.msra.mxu0 0.0
    %2049 = vmatprep.subr.mxu0 0.0
    %2050 = vmatpush2.msra.mxu0 0.0
    %2051 = vmatprep.subr.mxu0 0.0
    %2052 = vmatpush2.msra.mxu0 0.0
    %2053 = vmatprep.subr.mxu0 0.0
    %2054 = vmatpush2.msra.mxu0 0.0
    %2055 = vmatprep.subr.mxu0 0.0
    %2056 = vmatpush2.msra.mxu0 0.0
    %2057 = vmatprep.subr.mxu0 0.0
    %2058 = vmatpush2.msra.mxu0 0.0
    %2059 = vmatprep.subr.mxu0 0.0
    %2060 = vmatpush2.msra.mxu0 0.0
    %2061 = vmatprep.mubr.f32.mxu0 0.0
    %v2062 = vand.u32 %v1993, 4294901760
    %v2063 = vsub.f32 %v1993, %v2062
    %v2064 = vand.u32 %v2063, 4294901760
    %v2065 = vsub.f32 %v2063, %v2064
    %v2066 = vand.u32 %v2065, 4294901760
    %2067 = vmatmul.mubr.f32.gmra.mxu0 %v2066
    %v2068 = vpop.f32.mrf.mxu0
    %v2069 = vadd.f32 0.0, %v2068
    %v2070 = vpop.f32.mrf.mxu0
    %2071 = vdwg.mxu0
    %2072 = vmatprep.subr.mxu0 0.0
    %2073 = vmatpush1.msra.mxu0 0.0
    %2074 = vmatprep.subr.mxu0 0.0
    %2075 = vmatpush1.msra.mxu0 0.0
    %2076 = vmatprep.subr.mxu0 0.0
    %2077 = vmatpush1.msra.mxu0 0.0
    %2078 = vmatprep.subr.mxu0 0.0
    %2079 = vmatpush1.msra.mxu0 0.0
    %2080 = vmatprep.subr.mxu0 0.0
    %2081 = vmatpush1.msra.mxu0 0.0
    %2082 = vmatprep.subr.mxu0 0.0
    %2083 = vmatpush1.msra.mxu0 0.0
    %2084 = vmatprep.subr.mxu0 0.0
    %2085 = vmatpush1.msra.mxu0 0.0
    %2086 = vmatprep.subr.mxu0 0.0
    %2087 = vmatpush1.msra.mxu0 0.0
    %2088 = vmatprep.subr.mxu0 0.0
    %2089 = vmatpush1.msra.mxu0 0.0
    %2090 = vmatprep.subr.mxu0 0.0
    %2091 = vmatpush1.msra.mxu0 0.0
    %2092 = vmatprep.subr.mxu0 0.0
    %2093 = vmatpush1.msra.mxu0 0.0
    %2094 = vmatprep.subr.mxu0 0.0
    %2095 = vmatpush1.msra.mxu0 0.0
    %2096 = vmatprep.subr.mxu0 0.0
    %2097 = vmatpush1.msra.mxu0 0.0
    %2098 = vmatprep.subr.mxu0 0.0
    %2099 = vmatpush1.msra.mxu0 0.0
    %2100 = vmatprep.subr.mxu0 0.0
    %v2101 = vand.u32 %v73, 4294901760
    %v2102 = vsub.f32 %v73, %v2101
    %v2103 = vand.u32 %v2102, 4294901760
    %v2104 = vsub.f32 %v2102, %v2103
    %v2105 = vand.u32 %v2104, 4294901760
    %2106 = vmatpush1.msra.mxu0 %v2105
    %2107 = vmatprep.subr.mxu0 0.0
    %v2108 = vand.u32 %v72, 4294901760
    %v2109 = vsub.f32 %v72, %v2108
    %v2110 = vand.u32 %v2109, 4294901760
    %v2111 = vsub.f32 %v2109, %v2110
    %v2112 = vand.u32 %v2111, 4294901760
    %2113 = vmatpush1.msra.mxu0 %v2112
    %2114 = vmatprep.subr.mxu0 0.0
    %2115 = vmatpush2.msra.mxu0 0.0
    %2116 = vmatprep.subr.mxu0 0.0
    %2117 = vmatpush2.msra.mxu0 0.0
    %2118 = vmatprep.subr.mxu0 0.0
    %2119 = vmatpush2.msra.mxu0 0.0
    %2120 = vmatprep.subr.mxu0 0.0
    %2121 = vmatpush2.msra.mxu0 0.0
    %2122 = vmatprep.subr.mxu0 0.0
    %2123 = vmatpush2.msra.mxu0 0.0
    %2124 = vmatprep.subr.mxu0 0.0
    %2125 = vmatpush2.msra.mxu0 0.0
    %2126 = vmatprep.subr.mxu0 0.0
    %2127 = vmatpush2.msra.mxu0 0.0
    %2128 = vmatprep.subr.mxu0 0.0
    %2129 = vmatpush2.msra.mxu0 0.0
    %2130 = vmatprep.subr.mxu0 0.0
    %2131 = vmatpush2.msra.mxu0 0.0
    %2132 = vmatprep.subr.mxu0 0.0
    %2133 = vmatpush2.msra.mxu0 0.0
    %2134 = vmatprep.subr.mxu0 0.0
    %2135 = vmatpush2.msra.mxu0 0.0
    %2136 = vmatprep.subr.mxu0 0.0
    %2137 = vmatpush2.msra.mxu0 0.0
    %2138 = vmatprep.subr.mxu0 0.0
    %2139 = vmatpush2.msra.mxu0 0.0
    %2140 = vmatprep.subr.mxu0 0.0
    %2141 = vmatpush2.msra.mxu0 0.0
    %2142 = vmatprep.subr.mxu0 0.0
    %2143 = vmatpush2.msra.mxu0 0.0
    %2144 = vmatprep.subr.mxu0 0.0
    %2145 = vmatpush2.msra.mxu0 0.0
    %2146 = vmatprep.mubr.f32.mxu0 0.0
    %v2147 = vand.u32 %v1993, 4294901760
    %2148 = vmatmul.mubr.f32.gmra.mxu0 %v2147
    %v2149 = vpop.f32.mrf.mxu0
    %v2150 = vadd.f32 %v2069, %v2149
    %v2151 = vpop.f32.mrf.mxu0
    %2152 = vdwg.mxu0
    %2153 = vmatprep.subr.mxu0 0.0
    %2154 = vmatpush1.msra.mxu0 0.0
    %2155 = vmatprep.subr.mxu0 0.0
    %2156 = vmatpush1.msra.mxu0 0.0
    %2157 = vmatprep.subr.mxu0 0.0
    %2158 = vmatpush1.msra.mxu0 0.0
    %2159 = vmatprep.subr.mxu0 0.0
    %2160 = vmatpush1.msra.mxu0 0.0
    %2161 = vmatprep.subr.mxu0 0.0
    %2162 = vmatpush1.msra.mxu0 0.0
    %2163 = vmatprep.subr.mxu0 0.0
    %2164 = vmatpush1.msra.mxu0 0.0
    %2165 = vmatprep.subr.mxu0 0.0
    %2166 = vmatpush1.msra.mxu0 0.0
    %2167 = vmatprep.subr.mxu0 0.0
    %2168 = vmatpush1.msra.mxu0 0.0
    %2169 = vmatprep.subr.mxu0 0.0
    %2170 = vmatpush1.msra.mxu0 0.0
    %2171 = vmatprep.subr.mxu0 0.0
    %2172 = vmatpush1.msra.mxu0 0.0
    %2173 = vmatprep.subr.mxu0 0.0
    %2174 = vmatpush1.msra.mxu0 0.0
    %2175 = vmatprep.subr.mxu0 0.0
    %2176 = vmatpush1.msra.mxu0 0.0
    %2177 = vmatprep.subr.mxu0 0.0
    %2178 = vmatpush1.msra.mxu0 0.0
    %2179 = vmatprep.subr.mxu0 0.0
    %2180 = vmatpush1.msra.mxu0 0.0
    %2181 = vmatprep.subr.mxu0 0.0
    %v2182 = vand.u32 %v73, 4294901760
    %v2183 = vsub.f32 %v73, %v2182
    %2184 = vmatpush1.msra.mxu0 %v2183
    %2185 = vmatprep.subr.mxu0 0.0
    %v2186 = vand.u32 %v72, 4294901760
    %v2187 = vsub.f32 %v72, %v2186
    %2188 = vmatpush1.msra.mxu0 %v2187
    %2189 = vmatprep.subr.mxu0 0.0
    %2190 = vmatpush2.msra.mxu0 0.0
    %2191 = vmatprep.subr.mxu0 0.0
    %2192 = vmatpush2.msra.mxu0 0.0
    %2193 = vmatprep.subr.mxu0 0.0
    %2194 = vmatpush2.msra.mxu0 0.0
    %2195 = vmatprep.subr.mxu0 0.0
    %2196 = vmatpush2.msra.mxu0 0.0
    %2197 = vmatprep.subr.mxu0 0.0
    %2198 = vmatpush2.msra.mxu0 0.0
    %2199 = vmatprep.subr.mxu0 0.0
    %2200 = vmatpush2.msra.mxu0 0.0
    %2201 = vmatprep.subr.mxu0 0.0
    %2202 = vmatpush2.msra.mxu0 0.0
    %2203 = vmatprep.subr.mxu0 0.0
    %2204 = vmatpush2.msra.mxu0 0.0
    %2205 = vmatprep.subr.mxu0 0.0
    %2206 = vmatpush2.msra.mxu0 0.0
    %2207 = vmatprep.subr.mxu0 0.0
    %2208 = vmatpush2.msra.mxu0 0.0
    %2209 = vmatprep.subr.mxu0 0.0
    %2210 = vmatpush2.msra.mxu0 0.0
    %2211 = vmatprep.subr.mxu0 0.0
    %2212 = vmatpush2.msra.mxu0 0.0
    %2213 = vmatprep.subr.mxu0 0.0
    %2214 = vmatpush2.msra.mxu0 0.0
    %2215 = vmatprep.subr.mxu0 0.0
    %2216 = vmatpush2.msra.mxu0 0.0
    %2217 = vmatprep.subr.mxu0 0.0
    %2218 = vmatpush2.msra.mxu0 0.0
    %2219 = vmatprep.subr.mxu0 0.0
    %2220 = vmatpush2.msra.mxu0 0.0
    %2221 = vmatprep.mubr.f32.mxu0 0.0
    %v2222 = vand.u32 %v1993, 4294901760
    %v2223 = vsub.f32 %v1993, %v2222
    %2224 = vmatmul.mubr.f32.gmra.mxu0 %v2223
    %v2225 = vpop.f32.mrf.mxu0
    %v2226 = vadd.f32 %v2150, %v2225
    %v2227 = vpop.f32.mrf.mxu0
    %2228 = vdwg.mxu0
    %2229 = vmatprep.subr.mxu0 0.0
    %2230 = vmatpush1.msra.mxu0 0.0
    %2231 = vmatprep.subr.mxu0 0.0
    %2232 = vmatpush1.msra.mxu0 0.0
    %2233 = vmatprep.subr.mxu0 0.0
    %2234 = vmatpush1.msra.mxu0 0.0
    %2235 = vmatprep.subr.mxu0 0.0
    %2236 = vmatpush1.msra.mxu0 0.0
    %2237 = vmatprep.subr.mxu0 0.0
    %2238 = vmatpush1.msra.mxu0 0.0
    %2239 = vmatprep.subr.mxu0 0.0
    %2240 = vmatpush1.msra.mxu0 0.0
    %2241 = vmatprep.subr.mxu0 0.0
    %2242 = vmatpush1.msra.mxu0 0.0
    %2243 = vmatprep.subr.mxu0 0.0
    %2244 = vmatpush1.msra.mxu0 0.0
    %2245 = vmatprep.subr.mxu0 0.0
    %2246 = vmatpush1.msra.mxu0 0.0
    %2247 = vmatprep.subr.mxu0 0.0
    %2248 = vmatpush1.msra.mxu0 0.0
    %2249 = vmatprep.subr.mxu0 0.0
    %2250 = vmatpush1.msra.mxu0 0.0
    %2251 = vmatprep.subr.mxu0 0.0
    %2252 = vmatpush1.msra.mxu0 0.0
    %2253 = vmatprep.subr.mxu0 0.0
    %2254 = vmatpush1.msra.mxu0 0.0
    %2255 = vmatprep.subr.mxu0 0.0
    %2256 = vmatpush1.msra.mxu0 0.0
    %2257 = vmatprep.subr.mxu0 0.0
    %v2258 = vand.u32 %v73, 4294901760
    %2259 = vmatpush1.msra.mxu0 %v2258
    %2260 = vmatprep.subr.mxu0 0.0
    %v2261 = vand.u32 %v72, 4294901760
    %2262 = vmatpush1.msra.mxu0 %v2261
    %2263 = vmatprep.subr.mxu0 0.0
    %2264 = vmatpush2.msra.mxu0 0.0
    %2265 = vmatprep.subr.mxu0 0.0
    %2266 = vmatpush2.msra.mxu0 0.0
    %2267 = vmatprep.subr.mxu0 0.0
    %2268 = vmatpush2.msra.mxu0 0.0
    %2269 = vmatprep.subr.mxu0 0.0
    %2270 = vmatpush2.msra.mxu0 0.0
    %2271 = vmatprep.subr.mxu0 0.0
    %2272 = vmatpush2.msra.mxu0 0.0
    %2273 = vmatprep.subr.mxu0 0.0
    %2274 = vmatpush2.msra.mxu0 0.0
    %2275 = vmatprep.subr.mxu0 0.0
    %2276 = vmatpush2.msra.mxu0 0.0
    %2277 = vmatprep.subr.mxu0 0.0
    %2278 = vmatpush2.msra.mxu0 0.0
    %2279 = vmatprep.subr.mxu0 0.0
    %2280 = vmatpush2.msra.mxu0 0.0
    %2281 = vmatprep.subr.mxu0 0.0
    %2282 = vmatpush2.msra.mxu0 0.0
    %2283 = vmatprep.subr.mxu0 0.0
    %2284 = vmatpush2.msra.mxu0 0.0
    %2285 = vmatprep.subr.mxu0 0.0
    %2286 = vmatpush2.msra.mxu0 0.0
    %2287 = vmatprep.subr.mxu0 0.0
    %2288 = vmatpush2.msra.mxu0 0.0
    %2289 = vmatprep.subr.mxu0 0.0
    %2290 = vmatpush2.msra.mxu0 0.0
    %2291 = vmatprep.subr.mxu0 0.0
    %2292 = vmatpush2.msra.mxu0 0.0
    %2293 = vmatprep.subr.mxu0 0.0
    %2294 = vmatpush2.msra.mxu0 0.0
    %2295 = vmatprep.mubr.f32.mxu0 0.0
    %v2296 = vand.u32 %v1993, 4294901760
    %v2297 = vsub.f32 %v1993, %v2296
    %v2298 = vand.u32 %v2297, 4294901760
    %2299 = vmatmul.mubr.f32.gmra.mxu0 %v2298
    %v2300 = vpop.f32.mrf.mxu0
    %v2301 = vadd.f32 %v2226, %v2300
    %v2302 = vpop.f32.mrf.mxu0
    %2303 = vdwg.mxu0
    %2304 = vmatprep.subr.mxu0 0.0
    %2305 = vmatpush1.msra.mxu0 0.0
    %2306 = vmatprep.subr.mxu0 0.0
    %2307 = vmatpush1.msra.mxu0 0.0
    %2308 = vmatprep.subr.mxu0 0.0
    %2309 = vmatpush1.msra.mxu0 0.0
    %2310 = vmatprep.subr.mxu0 0.0
    %2311 = vmatpush1.msra.mxu0 0.0
    %2312 = vmatprep.subr.mxu0 0.0
    %2313 = vmatpush1.msra.mxu0 0.0
    %2314 = vmatprep.subr.mxu0 0.0
    %2315 = vmatpush1.msra.mxu0 0.0
    %2316 = vmatprep.subr.mxu0 0.0
    %2317 = vmatpush1.msra.mxu0 0.0
    %2318 = vmatprep.subr.mxu0 0.0
    %2319 = vmatpush1.msra.mxu0 0.0
    %2320 = vmatprep.subr.mxu0 0.0
    %2321 = vmatpush1.msra.mxu0 0.0
    %2322 = vmatprep.subr.mxu0 0.0
    %2323 = vmatpush1.msra.mxu0 0.0
    %2324 = vmatprep.subr.mxu0 0.0
    %2325 = vmatpush1.msra.mxu0 0.0
    %2326 = vmatprep.subr.mxu0 0.0
    %2327 = vmatpush1.msra.mxu0 0.0
    %2328 = vmatprep.subr.mxu0 0.0
    %2329 = vmatpush1.msra.mxu0 0.0
    %2330 = vmatprep.subr.mxu0 0.0
    %2331 = vmatpush1.msra.mxu0 0.0
    %2332 = vmatprep.subr.mxu0 0.0
    %v2333 = vand.u32 %v73, 4294901760
    %v2334 = vsub.f32 %v73, %v2333
    %v2335 = vand.u32 %v2334, 4294901760
    %2336 = vmatpush1.msra.mxu0 %v2335
    %2337 = vmatprep.subr.mxu0 0.0
    %v2338 = vand.u32 %v72, 4294901760
    %v2339 = vsub.f32 %v72, %v2338
    %v2340 = vand.u32 %v2339, 4294901760
    %2341 = vmatpush1.msra.mxu0 %v2340
    %2342 = vmatprep.subr.mxu0 0.0
    %2343 = vmatpush2.msra.mxu0 0.0
    %2344 = vmatprep.subr.mxu0 0.0
    %2345 = vmatpush2.msra.mxu0 0.0
    %2346 = vmatprep.subr.mxu0 0.0
    %2347 = vmatpush2.msra.mxu0 0.0
    %2348 = vmatprep.subr.mxu0 0.0
    %2349 = vmatpush2.msra.mxu0 0.0
    %2350 = vmatprep.subr.mxu0 0.0
    %2351 = vmatpush2.msra.mxu0 0.0
    %2352 = vmatprep.subr.mxu0 0.0
    %2353 = vmatpush2.msra.mxu0 0.0
    %2354 = vmatprep.subr.mxu0 0.0
    %2355 = vmatpush2.msra.mxu0 0.0
    %2356 = vmatprep.subr.mxu0 0.0
    %2357 = vmatpush2.msra.mxu0 0.0
    %2358 = vmatprep.subr.mxu0 0.0
    %2359 = vmatpush2.msra.mxu0 0.0
    %2360 = vmatprep.subr.mxu0 0.0
    %2361 = vmatpush2.msra.mxu0 0.0
    %2362 = vmatprep.subr.mxu0 0.0
    %2363 = vmatpush2.msra.mxu0 0.0
    %2364 = vmatprep.subr.mxu0 0.0
    %2365 = vmatpush2.msra.mxu0 0.0
    %2366 = vmatprep.subr.mxu0 0.0
    %2367 = vmatpush2.msra.mxu0 0.0
    %2368 = vmatprep.subr.mxu0 0.0
    %2369 = vmatpush2.msra.mxu0 0.0
    %2370 = vmatprep.subr.mxu0 0.0
    %2371 = vmatpush2.msra.mxu0 0.0
    %2372 = vmatprep.subr.mxu0 0.0
    %2373 = vmatpush2.msra.mxu0 0.0
    %2374 = vmatprep.mubr.f32.mxu0 0.0
    %v2375 = vand.u32 %v1993, 4294901760
    %2376 = vmatmul.mubr.f32.gmra.mxu0 %v2375
    %v2377 = vpop.f32.mrf.mxu0
    %v2378 = vadd.f32 %v2301, %v2377
    %v2379 = vpop.f32.mrf.mxu0
    %2380 = vdwg.mxu0
    %2381 = vmatprep.subr.mxu0 0.0
    %2382 = vmatpush1.msra.mxu0 0.0
    %2383 = vmatprep.subr.mxu0 0.0
    %2384 = vmatpush1.msra.mxu0 0.0
    %2385 = vmatprep.subr.mxu0 0.0
    %2386 = vmatpush1.msra.mxu0 0.0
    %2387 = vmatprep.subr.mxu0 0.0
    %2388 = vmatpush1.msra.mxu0 0.0
    %2389 = vmatprep.subr.mxu0 0.0
    %2390 = vmatpush1.msra.mxu0 0.0
    %2391 = vmatprep.subr.mxu0 0.0
    %2392 = vmatpush1.msra.mxu0 0.0
    %2393 = vmatprep.subr.mxu0 0.0
    %2394 = vmatpush1.msra.mxu0 0.0
    %2395 = vmatprep.subr.mxu0 0.0
    %2396 = vmatpush1.msra.mxu0 0.0
    %2397 = vmatprep.subr.mxu0 0.0
    %2398 = vmatpush1.msra.mxu0 0.0
    %2399 = vmatprep.subr.mxu0 0.0
    %2400 = vmatpush1.msra.mxu0 0.0
    %2401 = vmatprep.subr.mxu0 0.0
    %2402 = vmatpush1.msra.mxu0 0.0
    %2403 = vmatprep.subr.mxu0 0.0
    %2404 = vmatpush1.msra.mxu0 0.0
    %2405 = vmatprep.subr.mxu0 0.0
    %2406 = vmatpush1.msra.mxu0 0.0
    %2407 = vmatprep.subr.mxu0 0.0
    %2408 = vmatpush1.msra.mxu0 0.0
    %2409 = vmatprep.subr.mxu0 0.0
    %v2410 = vand.u32 %v73, 4294901760
    %2411 = vmatpush1.msra.mxu0 %v2410
    %2412 = vmatprep.subr.mxu0 0.0
    %v2413 = vand.u32 %v72, 4294901760
    %2414 = vmatpush1.msra.mxu0 %v2413
    %2415 = vmatprep.subr.mxu0 0.0
    %2416 = vmatpush2.msra.mxu0 0.0
    %2417 = vmatprep.subr.mxu0 0.0
    %2418 = vmatpush2.msra.mxu0 0.0
    %2419 = vmatprep.subr.mxu0 0.0
    %2420 = vmatpush2.msra.mxu0 0.0
    %2421 = vmatprep.subr.mxu0 0.0
    %2422 = vmatpush2.msra.mxu0 0.0
    %2423 = vmatprep.subr.mxu0 0.0
    %2424 = vmatpush2.msra.mxu0 0.0
    %2425 = vmatprep.subr.mxu0 0.0
    %2426 = vmatpush2.msra.mxu0 0.0
    %2427 = vmatprep.subr.mxu0 0.0
    %2428 = vmatpush2.msra.mxu0 0.0
    %2429 = vmatprep.subr.mxu0 0.0
    %2430 = vmatpush2.msra.mxu0 0.0
    %2431 = vmatprep.subr.mxu0 0.0
    %2432 = vmatpush2.msra.mxu0 0.0
    %2433 = vmatprep.subr.mxu0 0.0
    %2434 = vmatpush2.msra.mxu0 0.0
    %2435 = vmatprep.subr.mxu0 0.0
    %2436 = vmatpush2.msra.mxu0 0.0
    %2437 = vmatprep.subr.mxu0 0.0
    %2438 = vmatpush2.msra.mxu0 0.0
    %2439 = vmatprep.subr.mxu0 0.0
    %2440 = vmatpush2.msra.mxu0 0.0
    %2441 = vmatprep.subr.mxu0 0.0
    %2442 = vmatpush2.msra.mxu0 0.0
    %2443 = vmatprep.subr.mxu0 0.0
    %2444 = vmatpush2.msra.mxu0 0.0
    %2445 = vmatprep.subr.mxu0 0.0
    %2446 = vmatpush2.msra.mxu0 0.0
    %2447 = vmatprep.mubr.f32.mxu0 0.0
    %v2448 = vand.u32 %v1993, 4294901760
    %2449 = vmatmul.mubr.f32.gmra.mxu0 %v2448
    %v2450 = vpop.f32.mrf.mxu0
    %v2451 = vadd.f32 %v2378, %v2450
    %v2452 = vpop.f32.mrf.mxu0
    %2453 = vdwg.mxu0
    %v2455 = vsel %vm769, %v899, 0
    %2457 = vmatprep.subr.mxu0 0.0
    %2458 = vmatpush1.msra.mxu0 0.0
    %2459 = vmatprep.subr.mxu0 0.0
    %2460 = vmatpush1.msra.mxu0 0.0
    %2461 = vmatprep.subr.mxu0 0.0
    %2462 = vmatpush1.msra.mxu0 0.0
    %2463 = vmatprep.subr.mxu0 0.0
    %2464 = vmatpush1.msra.mxu0 0.0
    %2465 = vmatprep.subr.mxu0 0.0
    %2466 = vmatpush1.msra.mxu0 0.0
    %2467 = vmatprep.subr.mxu0 0.0
    %2468 = vmatpush1.msra.mxu0 0.0
    %2469 = vmatprep.subr.mxu0 0.0
    %2470 = vmatpush1.msra.mxu0 0.0
    %2471 = vmatprep.subr.mxu0 0.0
    %2472 = vmatpush1.msra.mxu0 0.0
    %2473 = vmatprep.subr.mxu0 0.0
    %2474 = vmatpush1.msra.mxu0 0.0
    %2475 = vmatprep.subr.mxu0 0.0
    %2476 = vmatpush1.msra.mxu0 0.0
    %2477 = vmatprep.subr.mxu0 0.0
    %2478 = vmatpush1.msra.mxu0 0.0
    %2479 = vmatprep.subr.mxu0 0.0
    %2480 = vmatpush1.msra.mxu0 0.0
    %2481 = vmatprep.subr.mxu0 0.0
    %2482 = vmatpush1.msra.mxu0 0.0
    %2483 = vmatprep.subr.mxu0 0.0
    %2484 = vmatpush1.msra.mxu0 0.0
    %2485 = vmatprep.subr.mxu0 0.0
    %v2486 = vand.u32 %v75, 4294901760
    %2487 = vmatpush1.msra.mxu0 %v2486
    %2488 = vmatprep.subr.mxu0 0.0
    %v2489 = vand.u32 %v74, 4294901760
    %2490 = vmatpush1.msra.mxu0 %v2489
    %2491 = vmatprep.subr.mxu0 0.0
    %2492 = vmatpush2.msra.mxu0 0.0
    %2493 = vmatprep.subr.mxu0 0.0
    %2494 = vmatpush2.msra.mxu0 0.0
    %2495 = vmatprep.subr.mxu0 0.0
    %2496 = vmatpush2.msra.mxu0 0.0
    %2497 = vmatprep.subr.mxu0 0.0
    %2498 = vmatpush2.msra.mxu0 0.0
    %2499 = vmatprep.subr.mxu0 0.0
    %2500 = vmatpush2.msra.mxu0 0.0
    %2501 = vmatprep.subr.mxu0 0.0
    %2502 = vmatpush2.msra.mxu0 0.0
    %2503 = vmatprep.subr.mxu0 0.0
    %2504 = vmatpush2.msra.mxu0 0.0
    %2505 = vmatprep.subr.mxu0 0.0
    %2506 = vmatpush2.msra.mxu0 0.0
    %2507 = vmatprep.subr.mxu0 0.0
    %2508 = vmatpush2.msra.mxu0 0.0
    %2509 = vmatprep.subr.mxu0 0.0
    %2510 = vmatpush2.msra.mxu0 0.0
    %2511 = vmatprep.subr.mxu0 0.0
    %2512 = vmatpush2.msra.mxu0 0.0
    %2513 = vmatprep.subr.mxu0 0.0
    %2514 = vmatpush2.msra.mxu0 0.0
    %2515 = vmatprep.subr.mxu0 0.0
    %2516 = vmatpush2.msra.mxu0 0.0
    %2517 = vmatprep.subr.mxu0 0.0
    %2518 = vmatpush2.msra.mxu0 0.0
    %2519 = vmatprep.subr.mxu0 0.0
    %2520 = vmatpush2.msra.mxu0 0.0
    %2521 = vmatprep.subr.mxu0 0.0
    %2522 = vmatpush2.msra.mxu0 0.0
    %2523 = vmatprep.mubr.f32.mxu0 0.0
    %v2524 = vand.u32 %v2455, 4294901760
    %v2525 = vsub.f32 %v2455, %v2524
    %v2526 = vand.u32 %v2525, 4294901760
    %v2527 = vsub.f32 %v2525, %v2526
    %v2528 = vand.u32 %v2527, 4294901760
    %2529 = vmatmul.mubr.f32.gmra.mxu0 %v2528
    %v2530 = vpop.f32.mrf.mxu0
    %v2531 = vadd.f32 0.0, %v2530
    %v2532 = vpop.f32.mrf.mxu0
    %2533 = vdwg.mxu0
    %2534 = vmatprep.subr.mxu0 0.0
    %2535 = vmatpush1.msra.mxu0 0.0
    %2536 = vmatprep.subr.mxu0 0.0
    %2537 = vmatpush1.msra.mxu0 0.0
    %2538 = vmatprep.subr.mxu0 0.0
    %2539 = vmatpush1.msra.mxu0 0.0
    %2540 = vmatprep.subr.mxu0 0.0
    %2541 = vmatpush1.msra.mxu0 0.0
    %2542 = vmatprep.subr.mxu0 0.0
    %2543 = vmatpush1.msra.mxu0 0.0
    %2544 = vmatprep.subr.mxu0 0.0
    %2545 = vmatpush1.msra.mxu0 0.0
    %2546 = vmatprep.subr.mxu0 0.0
    %2547 = vmatpush1.msra.mxu0 0.0
    %2548 = vmatprep.subr.mxu0 0.0
    %2549 = vmatpush1.msra.mxu0 0.0
    %2550 = vmatprep.subr.mxu0 0.0
    %2551 = vmatpush1.msra.mxu0 0.0
    %2552 = vmatprep.subr.mxu0 0.0
    %2553 = vmatpush1.msra.mxu0 0.0
    %2554 = vmatprep.subr.mxu0 0.0
    %2555 = vmatpush1.msra.mxu0 0.0
    %2556 = vmatprep.subr.mxu0 0.0
    %2557 = vmatpush1.msra.mxu0 0.0
    %2558 = vmatprep.subr.mxu0 0.0
    %2559 = vmatpush1.msra.mxu0 0.0
    %2560 = vmatprep.subr.mxu0 0.0
    %2561 = vmatpush1.msra.mxu0 0.0
    %2562 = vmatprep.subr.mxu0 0.0
    %v2563 = vand.u32 %v75, 4294901760
    %v2564 = vsub.f32 %v75, %v2563
    %v2565 = vand.u32 %v2564, 4294901760
    %v2566 = vsub.f32 %v2564, %v2565
    %v2567 = vand.u32 %v2566, 4294901760
    %2568 = vmatpush1.msra.mxu0 %v2567
    %2569 = vmatprep.subr.mxu0 0.0
    %v2570 = vand.u32 %v74, 4294901760
    %v2571 = vsub.f32 %v74, %v2570
    %v2572 = vand.u32 %v2571, 4294901760
    %v2573 = vsub.f32 %v2571, %v2572
    %v2574 = vand.u32 %v2573, 4294901760
    %2575 = vmatpush1.msra.mxu0 %v2574
    %2576 = vmatprep.subr.mxu0 0.0
    %2577 = vmatpush2.msra.mxu0 0.0
    %2578 = vmatprep.subr.mxu0 0.0
    %2579 = vmatpush2.msra.mxu0 0.0
    %2580 = vmatprep.subr.mxu0 0.0
    %2581 = vmatpush2.msra.mxu0 0.0
    %2582 = vmatprep.subr.mxu0 0.0
    %2583 = vmatpush2.msra.mxu0 0.0
    %2584 = vmatprep.subr.mxu0 0.0
    %2585 = vmatpush2.msra.mxu0 0.0
    %2586 = vmatprep.subr.mxu0 0.0
    %2587 = vmatpush2.msra.mxu0 0.0
    %2588 = vmatprep.subr.mxu0 0.0
    %2589 = vmatpush2.msra.mxu0 0.0
    %2590 = vmatprep.subr.mxu0 0.0
    %2591 = vmatpush2.msra.mxu0 0.0
    %2592 = vmatprep.subr.mxu0 0.0
    %2593 = vmatpush2.msra.mxu0 0.0
    %2594 = vmatprep.subr.mxu0 0.0
    %2595 = vmatpush2.msra.mxu0 0.0
    %2596 = vmatprep.subr.mxu0 0.0
    %2597 = vmatpush2.msra.mxu0 0.0
    %2598 = vmatprep.subr.mxu0 0.0
    %2599 = vmatpush2.msra.mxu0 0.0
    %2600 = vmatprep.subr.mxu0 0.0
    %2601 = vmatpush2.msra.mxu0 0.0
    %2602 = vmatprep.subr.mxu0 0.0
    %2603 = vmatpush2.msra.mxu0 0.0
    %2604 = vmatprep.subr.mxu0 0.0
    %2605 = vmatpush2.msra.mxu0 0.0
    %2606 = vmatprep.subr.mxu0 0.0
    %2607 = vmatpush2.msra.mxu0 0.0
    %2608 = vmatprep.mubr.f32.mxu0 0.0
    %v2609 = vand.u32 %v2455, 4294901760
    %2610 = vmatmul.mubr.f32.gmra.mxu0 %v2609
    %v2611 = vpop.f32.mrf.mxu0
    %v2612 = vadd.f32 %v2531, %v2611
    %v2613 = vpop.f32.mrf.mxu0
    %2614 = vdwg.mxu0
    %2615 = vmatprep.subr.mxu0 0.0
    %2616 = vmatpush1.msra.mxu0 0.0
    %2617 = vmatprep.subr.mxu0 0.0
    %2618 = vmatpush1.msra.mxu0 0.0
    %2619 = vmatprep.subr.mxu0 0.0
    %2620 = vmatpush1.msra.mxu0 0.0
    %2621 = vmatprep.subr.mxu0 0.0
    %2622 = vmatpush1.msra.mxu0 0.0
    %2623 = vmatprep.subr.mxu0 0.0
    %2624 = vmatpush1.msra.mxu0 0.0
    %2625 = vmatprep.subr.mxu0 0.0
    %2626 = vmatpush1.msra.mxu0 0.0
    %2627 = vmatprep.subr.mxu0 0.0
    %2628 = vmatpush1.msra.mxu0 0.0
    %2629 = vmatprep.subr.mxu0 0.0
    %2630 = vmatpush1.msra.mxu0 0.0
    %2631 = vmatprep.subr.mxu0 0.0
    %2632 = vmatpush1.msra.mxu0 0.0
    %2633 = vmatprep.subr.mxu0 0.0
    %2634 = vmatpush1.msra.mxu0 0.0
    %2635 = vmatprep.subr.mxu0 0.0
    %2636 = vmatpush1.msra.mxu0 0.0
    %2637 = vmatprep.subr.mxu0 0.0
    %2638 = vmatpush1.msra.mxu0 0.0
    %2639 = vmatprep.subr.mxu0 0.0
    %2640 = vmatpush1.msra.mxu0 0.0
    %2641 = vmatprep.subr.mxu0 0.0
    %2642 = vmatpush1.msra.mxu0 0.0
    %2643 = vmatprep.subr.mxu0 0.0
    %v2644 = vand.u32 %v75, 4294901760
    %v2645 = vsub.f32 %v75, %v2644
    %2646 = vmatpush1.msra.mxu0 %v2645
    %2647 = vmatprep.subr.mxu0 0.0
    %v2648 = vand.u32 %v74, 4294901760
    %v2649 = vsub.f32 %v74, %v2648
    %2650 = vmatpush1.msra.mxu0 %v2649
    %2651 = vmatprep.subr.mxu0 0.0
    %2652 = vmatpush2.msra.mxu0 0.0
    %2653 = vmatprep.subr.mxu0 0.0
    %2654 = vmatpush2.msra.mxu0 0.0
    %2655 = vmatprep.subr.mxu0 0.0
    %2656 = vmatpush2.msra.mxu0 0.0
    %2657 = vmatprep.subr.mxu0 0.0
    %2658 = vmatpush2.msra.mxu0 0.0
    %2659 = vmatprep.subr.mxu0 0.0
    %2660 = vmatpush2.msra.mxu0 0.0
    %2661 = vmatprep.subr.mxu0 0.0
    %2662 = vmatpush2.msra.mxu0 0.0
    %2663 = vmatprep.subr.mxu0 0.0
    %2664 = vmatpush2.msra.mxu0 0.0
    %2665 = vmatprep.subr.mxu0 0.0
    %2666 = vmatpush2.msra.mxu0 0.0
    %2667 = vmatprep.subr.mxu0 0.0
    %2668 = vmatpush2.msra.mxu0 0.0
    %2669 = vmatprep.subr.mxu0 0.0
    %2670 = vmatpush2.msra.mxu0 0.0
    %2671 = vmatprep.subr.mxu0 0.0
    %2672 = vmatpush2.msra.mxu0 0.0
    %2673 = vmatprep.subr.mxu0 0.0
    %2674 = vmatpush2.msra.mxu0 0.0
    %2675 = vmatprep.subr.mxu0 0.0
    %2676 = vmatpush2.msra.mxu0 0.0
    %2677 = vmatprep.subr.mxu0 0.0
    %2678 = vmatpush2.msra.mxu0 0.0
    %2679 = vmatprep.subr.mxu0 0.0
    %2680 = vmatpush2.msra.mxu0 0.0
    %2681 = vmatprep.subr.mxu0 0.0
    %2682 = vmatpush2.msra.mxu0 0.0
    %2683 = vmatprep.mubr.f32.mxu0 0.0
    %v2684 = vand.u32 %v2455, 4294901760
    %v2685 = vsub.f32 %v2455, %v2684
    %2686 = vmatmul.mubr.f32.gmra.mxu0 %v2685
    %v2687 = vpop.f32.mrf.mxu0
    %v2688 = vadd.f32 %v2612, %v2687
    %v2689 = vpop.f32.mrf.mxu0
    %2690 = vdwg.mxu0
    %2691 = vmatprep.subr.mxu0 0.0
    %2692 = vmatpush1.msra.mxu0 0.0
    %2693 = vmatprep.subr.mxu0 0.0
    %2694 = vmatpush1.msra.mxu0 0.0
    %2695 = vmatprep.subr.mxu0 0.0
    %2696 = vmatpush1.msra.mxu0 0.0
    %2697 = vmatprep.subr.mxu0 0.0
    %2698 = vmatpush1.msra.mxu0 0.0
    %2699 = vmatprep.subr.mxu0 0.0
    %2700 = vmatpush1.msra.mxu0 0.0
    %2701 = vmatprep.subr.mxu0 0.0
    %2702 = vmatpush1.msra.mxu0 0.0
    %2703 = vmatprep.subr.mxu0 0.0
    %2704 = vmatpush1.msra.mxu0 0.0
    %2705 = vmatprep.subr.mxu0 0.0
    %2706 = vmatpush1.msra.mxu0 0.0
    %2707 = vmatprep.subr.mxu0 0.0
    %2708 = vmatpush1.msra.mxu0 0.0
    %2709 = vmatprep.subr.mxu0 0.0
    %2710 = vmatpush1.msra.mxu0 0.0
    %2711 = vmatprep.subr.mxu0 0.0
    %2712 = vmatpush1.msra.mxu0 0.0
    %2713 = vmatprep.subr.mxu0 0.0
    %2714 = vmatpush1.msra.mxu0 0.0
    %2715 = vmatprep.subr.mxu0 0.0
    %2716 = vmatpush1.msra.mxu0 0.0
    %2717 = vmatprep.subr.mxu0 0.0
    %2718 = vmatpush1.msra.mxu0 0.0
    %2719 = vmatprep.subr.mxu0 0.0
    %v2720 = vand.u32 %v75, 4294901760
    %2721 = vmatpush1.msra.mxu0 %v2720
    %2722 = vmatprep.subr.mxu0 0.0
    %v2723 = vand.u32 %v74, 4294901760
    %2724 = vmatpush1.msra.mxu0 %v2723
    %2725 = vmatprep.subr.mxu0 0.0
    %2726 = vmatpush2.msra.mxu0 0.0
    %2727 = vmatprep.subr.mxu0 0.0
    %2728 = vmatpush2.msra.mxu0 0.0
    %2729 = vmatprep.subr.mxu0 0.0
    %2730 = vmatpush2.msra.mxu0 0.0
    %2731 = vmatprep.subr.mxu0 0.0
    %2732 = vmatpush2.msra.mxu0 0.0
    %2733 = vmatprep.subr.mxu0 0.0
    %2734 = vmatpush2.msra.mxu0 0.0
    %2735 = vmatprep.subr.mxu0 0.0
    %2736 = vmatpush2.msra.mxu0 0.0
    %2737 = vmatprep.subr.mxu0 0.0
    %2738 = vmatpush2.msra.mxu0 0.0
    %2739 = vmatprep.subr.mxu0 0.0
    %2740 = vmatpush2.msra.mxu0 0.0
    %2741 = vmatprep.subr.mxu0 0.0
    %2742 = vmatpush2.msra.mxu0 0.0
    %2743 = vmatprep.subr.mxu0 0.0
    %2744 = vmatpush2.msra.mxu0 0.0
    %2745 = vmatprep.subr.mxu0 0.0
    %2746 = vmatpush2.msra.mxu0 0.0
    %2747 = vmatprep.subr.mxu0 0.0
    %2748 = vmatpush2.msra.mxu0 0.0
    %2749 = vmatprep.subr.mxu0 0.0
    %2750 = vmatpush2.msra.mxu0 0.0
    %2751 = vmatprep.subr.mxu0 0.0
    %2752 = vmatpush2.msra.mxu0 0.0
    %2753 = vmatprep.subr.mxu0 0.0
    %2754 = vmatpush2.msra.mxu0 0.0
    %2755 = vmatprep.subr.mxu0 0.0
    %2756 = vmatpush2.msra.mxu0 0.0
    %2757 = vmatprep.mubr.f32.mxu0 0.0
    %v2758 = vand.u32 %v2455, 4294901760
    %v2759 = vsub.f32 %v2455, %v2758
    %v2760 = vand.u32 %v2759, 4294901760
    %2761 = vmatmul.mubr.f32.gmra.mxu0 %v2760
    %v2762 = vpop.f32.mrf.mxu0
    %v2763 = vadd.f32 %v2688, %v2762
    %v2764 = vpop.f32.mrf.mxu0
    %2765 = vdwg.mxu0
    %2766 = vmatprep.subr.mxu0 0.0
    %2767 = vmatpush1.msra.mxu0 0.0
    %2768 = vmatprep.subr.mxu0 0.0
    %2769 = vmatpush1.msra.mxu0 0.0
    %2770 = vmatprep.subr.mxu0 0.0
    %2771 = vmatpush1.msra.mxu0 0.0
    %2772 = vmatprep.subr.mxu0 0.0
    %2773 = vmatpush1.msra.mxu0 0.0
    %2774 = vmatprep.subr.mxu0 0.0
    %2775 = vmatpush1.msra.mxu0 0.0
    %2776 = vmatprep.subr.mxu0 0.0
    %2777 = vmatpush1.msra.mxu0 0.0
    %2778 = vmatprep.subr.mxu0 0.0
    %2779 = vmatpush1.msra.mxu0 0.0
    %2780 = vmatprep.subr.mxu0 0.0
    %2781 = vmatpush1.msra.mxu0 0.0
    %2782 = vmatprep.subr.mxu0 0.0
    %2783 = vmatpush1.msra.mxu0 0.0
    %2784 = vmatprep.subr.mxu0 0.0
    %2785 = vmatpush1.msra.mxu0 0.0
    %2786 = vmatprep.subr.mxu0 0.0
    %2787 = vmatpush1.msra.mxu0 0.0
    %2788 = vmatprep.subr.mxu0 0.0
    %2789 = vmatpush1.msra.mxu0 0.0
    %2790 = vmatprep.subr.mxu0 0.0
    %2791 = vmatpush1.msra.mxu0 0.0
    %2792 = vmatprep.subr.mxu0 0.0
    %2793 = vmatpush1.msra.mxu0 0.0
    %2794 = vmatprep.subr.mxu0 0.0
    %v2795 = vand.u32 %v75, 4294901760
    %v2796 = vsub.f32 %v75, %v2795
    %v2797 = vand.u32 %v2796, 4294901760
    %2798 = vmatpush1.msra.mxu0 %v2797
    %2799 = vmatprep.subr.mxu0 0.0
    %v2800 = vand.u32 %v74, 4294901760
    %v2801 = vsub.f32 %v74, %v2800
    %v2802 = vand.u32 %v2801, 4294901760
    %2803 = vmatpush1.msra.mxu0 %v2802
    %2804 = vmatprep.subr.mxu0 0.0
    %2805 = vmatpush2.msra.mxu0 0.0
    %2806 = vmatprep.subr.mxu0 0.0
    %2807 = vmatpush2.msra.mxu0 0.0
    %2808 = vmatprep.subr.mxu0 0.0
    %2809 = vmatpush2.msra.mxu0 0.0
    %2810 = vmatprep.subr.mxu0 0.0
    %2811 = vmatpush2.msra.mxu0 0.0
    %2812 = vmatprep.subr.mxu0 0.0
    %2813 = vmatpush2.msra.mxu0 0.0
    %2814 = vmatprep.subr.mxu0 0.0
    %2815 = vmatpush2.msra.mxu0 0.0
    %2816 = vmatprep.subr.mxu0 0.0
    %2817 = vmatpush2.msra.mxu0 0.0
    %2818 = vmatprep.subr.mxu0 0.0
    %2819 = vmatpush2.msra.mxu0 0.0
    %2820 = vmatprep.subr.mxu0 0.0
    %2821 = vmatpush2.msra.mxu0 0.0
    %2822 = vmatprep.subr.mxu0 0.0
    %2823 = vmatpush2.msra.mxu0 0.0
    %2824 = vmatprep.subr.mxu0 0.0
    %2825 = vmatpush2.msra.mxu0 0.0
    %2826 = vmatprep.subr.mxu0 0.0
    %2827 = vmatpush2.msra.mxu0 0.0
    %2828 = vmatprep.subr.mxu0 0.0
    %2829 = vmatpush2.msra.mxu0 0.0
    %2830 = vmatprep.subr.mxu0 0.0
    %2831 = vmatpush2.msra.mxu0 0.0
    %2832 = vmatprep.subr.mxu0 0.0
    %2833 = vmatpush2.msra.mxu0 0.0
    %2834 = vmatprep.subr.mxu0 0.0
    %2835 = vmatpush2.msra.mxu0 0.0
    %2836 = vmatprep.mubr.f32.mxu0 0.0
    %v2837 = vand.u32 %v2455, 4294901760
    %2838 = vmatmul.mubr.f32.gmra.mxu0 %v2837
    %v2839 = vpop.f32.mrf.mxu0
    %v2840 = vadd.f32 %v2763, %v2839
    %v2841 = vpop.f32.mrf.mxu0
    %2842 = vdwg.mxu0
    %2843 = vmatprep.subr.mxu0 0.0
    %2844 = vmatpush1.msra.mxu0 0.0
    %2845 = vmatprep.subr.mxu0 0.0
    %2846 = vmatpush1.msra.mxu0 0.0
    %2847 = vmatprep.subr.mxu0 0.0
    %2848 = vmatpush1.msra.mxu0 0.0
    %2849 = vmatprep.subr.mxu0 0.0
    %2850 = vmatpush1.msra.mxu0 0.0
    %2851 = vmatprep.subr.mxu0 0.0
    %2852 = vmatpush1.msra.mxu0 0.0
    %2853 = vmatprep.subr.mxu0 0.0
    %2854 = vmatpush1.msra.mxu0 0.0
    %2855 = vmatprep.subr.mxu0 0.0
    %2856 = vmatpush1.msra.mxu0 0.0
    %2857 = vmatprep.subr.mxu0 0.0
    %2858 = vmatpush1.msra.mxu0 0.0
    %2859 = vmatprep.subr.mxu0 0.0
    %2860 = vmatpush1.msra.mxu0 0.0
    %2861 = vmatprep.subr.mxu0 0.0
    %2862 = vmatpush1.msra.mxu0 0.0
    %2863 = vmatprep.subr.mxu0 0.0
    %2864 = vmatpush1.msra.mxu0 0.0
    %2865 = vmatprep.subr.mxu0 0.0
    %2866 = vmatpush1.msra.mxu0 0.0
    %2867 = vmatprep.subr.mxu0 0.0
    %2868 = vmatpush1.msra.mxu0 0.0
    %2869 = vmatprep.subr.mxu0 0.0
    %2870 = vmatpush1.msra.mxu0 0.0
    %2871 = vmatprep.subr.mxu0 0.0
    %v2872 = vand.u32 %v75, 4294901760
    %2873 = vmatpush1.msra.mxu0 %v2872
    %2874 = vmatprep.subr.mxu0 0.0
    %v2875 = vand.u32 %v74, 4294901760
    %2876 = vmatpush1.msra.mxu0 %v2875
    %2877 = vmatprep.subr.mxu0 0.0
    %2878 = vmatpush2.msra.mxu0 0.0
    %2879 = vmatprep.subr.mxu0 0.0
    %2880 = vmatpush2.msra.mxu0 0.0
    %2881 = vmatprep.subr.mxu0 0.0
    %2882 = vmatpush2.msra.mxu0 0.0
    %2883 = vmatprep.subr.mxu0 0.0
    %2884 = vmatpush2.msra.mxu0 0.0
    %2885 = vmatprep.subr.mxu0 0.0
    %2886 = vmatpush2.msra.mxu0 0.0
    %2887 = vmatprep.subr.mxu0 0.0
    %2888 = vmatpush2.msra.mxu0 0.0
    %2889 = vmatprep.subr.mxu0 0.0
    %2890 = vmatpush2.msra.mxu0 0.0
    %2891 = vmatprep.subr.mxu0 0.0
    %2892 = vmatpush2.msra.mxu0 0.0
    %2893 = vmatprep.subr.mxu0 0.0
    %2894 = vmatpush2.msra.mxu0 0.0
    %2895 = vmatprep.subr.mxu0 0.0
    %2896 = vmatpush2.msra.mxu0 0.0
    %2897 = vmatprep.subr.mxu0 0.0
    %2898 = vmatpush2.msra.mxu0 0.0
    %2899 = vmatprep.subr.mxu0 0.0
    %2900 = vmatpush2.msra.mxu0 0.0
    %2901 = vmatprep.subr.mxu0 0.0
    %2902 = vmatpush2.msra.mxu0 0.0
    %2903 = vmatprep.subr.mxu0 0.0
    %2904 = vmatpush2.msra.mxu0 0.0
    %2905 = vmatprep.subr.mxu0 0.0
    %2906 = vmatpush2.msra.mxu0 0.0
    %2907 = vmatprep.subr.mxu0 0.0
    %2908 = vmatpush2.msra.mxu0 0.0
    %2909 = vmatprep.mubr.f32.mxu0 0.0
    %v2910 = vand.u32 %v2455, 4294901760
    %2911 = vmatmul.mubr.f32.gmra.mxu0 %v2910
    %v2912 = vpop.f32.mrf.mxu0
    %v2913 = vadd.f32 %v2840, %v2912
    %v2914 = vpop.f32.mrf.mxu0
    %2915 = vdwg.mxu0
    %v2917 = vsel %vm769, %v931, 0
    %2919 = vmatprep.subr.mxu0 0.0
    %2920 = vmatpush1.msra.mxu0 0.0
    %2921 = vmatprep.subr.mxu0 0.0
    %2922 = vmatpush1.msra.mxu0 0.0
    %2923 = vmatprep.subr.mxu0 0.0
    %2924 = vmatpush1.msra.mxu0 0.0
    %2925 = vmatprep.subr.mxu0 0.0
    %2926 = vmatpush1.msra.mxu0 0.0
    %2927 = vmatprep.subr.mxu0 0.0
    %2928 = vmatpush1.msra.mxu0 0.0
    %2929 = vmatprep.subr.mxu0 0.0
    %2930 = vmatpush1.msra.mxu0 0.0
    %2931 = vmatprep.subr.mxu0 0.0
    %2932 = vmatpush1.msra.mxu0 0.0
    %2933 = vmatprep.subr.mxu0 0.0
    %2934 = vmatpush1.msra.mxu0 0.0
    %2935 = vmatprep.subr.mxu0 0.0
    %2936 = vmatpush1.msra.mxu0 0.0
    %2937 = vmatprep.subr.mxu0 0.0
    %2938 = vmatpush1.msra.mxu0 0.0
    %2939 = vmatprep.subr.mxu0 0.0
    %2940 = vmatpush1.msra.mxu0 0.0
    %2941 = vmatprep.subr.mxu0 0.0
    %2942 = vmatpush1.msra.mxu0 0.0
    %2943 = vmatprep.subr.mxu0 0.0
    %2944 = vmatpush1.msra.mxu0 0.0
    %2945 = vmatprep.subr.mxu0 0.0
    %2946 = vmatpush1.msra.mxu0 0.0
    %2947 = vmatprep.subr.mxu0 0.0
    %v2948 = vand.u32 %v77, 4294901760
    %2949 = vmatpush1.msra.mxu0 %v2948
    %2950 = vmatprep.subr.mxu0 0.0
    %v2951 = vand.u32 %v76, 4294901760
    %2952 = vmatpush1.msra.mxu0 %v2951
    %2953 = vmatprep.subr.mxu0 0.0
    %2954 = vmatpush2.msra.mxu0 0.0
    %2955 = vmatprep.subr.mxu0 0.0
    %2956 = vmatpush2.msra.mxu0 0.0
    %2957 = vmatprep.subr.mxu0 0.0
    %2958 = vmatpush2.msra.mxu0 0.0
    %2959 = vmatprep.subr.mxu0 0.0
    %2960 = vmatpush2.msra.mxu0 0.0
    %2961 = vmatprep.subr.mxu0 0.0
    %2962 = vmatpush2.msra.mxu0 0.0
    %2963 = vmatprep.subr.mxu0 0.0
    %2964 = vmatpush2.msra.mxu0 0.0
    %2965 = vmatprep.subr.mxu0 0.0
    %2966 = vmatpush2.msra.mxu0 0.0
    %2967 = vmatprep.subr.mxu0 0.0
    %2968 = vmatpush2.msra.mxu0 0.0
    %2969 = vmatprep.subr.mxu0 0.0
    %2970 = vmatpush2.msra.mxu0 0.0
    %2971 = vmatprep.subr.mxu0 0.0
    %2972 = vmatpush2.msra.mxu0 0.0
    %2973 = vmatprep.subr.mxu0 0.0
    %2974 = vmatpush2.msra.mxu0 0.0
    %2975 = vmatprep.subr.mxu0 0.0
    %2976 = vmatpush2.msra.mxu0 0.0
    %2977 = vmatprep.subr.mxu0 0.0
    %2978 = vmatpush2.msra.mxu0 0.0
    %2979 = vmatprep.subr.mxu0 0.0
    %2980 = vmatpush2.msra.mxu0 0.0
    %2981 = vmatprep.subr.mxu0 0.0
    %2982 = vmatpush2.msra.mxu0 0.0
    %2983 = vmatprep.subr.mxu0 0.0
    %2984 = vmatpush2.msra.mxu0 0.0
    %2985 = vmatprep.mubr.f32.mxu0 0.0
    %v2986 = vand.u32 %v2917, 4294901760
    %v2987 = vsub.f32 %v2917, %v2986
    %v2988 = vand.u32 %v2987, 4294901760
    %v2989 = vsub.f32 %v2987, %v2988
    %v2990 = vand.u32 %v2989, 4294901760
    %2991 = vmatmul.mubr.f32.gmra.mxu0 %v2990
    %v2992 = vpop.f32.mrf.mxu0
    %v2993 = vadd.f32 0.0, %v2992
    %v2994 = vpop.f32.mrf.mxu0
    %2995 = vdwg.mxu0
    %2996 = vmatprep.subr.mxu0 0.0
    %2997 = vmatpush1.msra.mxu0 0.0
    %2998 = vmatprep.subr.mxu0 0.0
    %2999 = vmatpush1.msra.mxu0 0.0
    %3000 = vmatprep.subr.mxu0 0.0
    %3001 = vmatpush1.msra.mxu0 0.0
    %3002 = vmatprep.subr.mxu0 0.0
    %3003 = vmatpush1.msra.mxu0 0.0
    %3004 = vmatprep.subr.mxu0 0.0
    %3005 = vmatpush1.msra.mxu0 0.0
    %3006 = vmatprep.subr.mxu0 0.0
    %3007 = vmatpush1.msra.mxu0 0.0
    %3008 = vmatprep.subr.mxu0 0.0
    %3009 = vmatpush1.msra.mxu0 0.0
    %3010 = vmatprep.subr.mxu0 0.0
    %3011 = vmatpush1.msra.mxu0 0.0
    %3012 = vmatprep.subr.mxu0 0.0
    %3013 = vmatpush1.msra.mxu0 0.0
    %3014 = vmatprep.subr.mxu0 0.0
    %3015 = vmatpush1.msra.mxu0 0.0
    %3016 = vmatprep.subr.mxu0 0.0
    %3017 = vmatpush1.msra.mxu0 0.0
    %3018 = vmatprep.subr.mxu0 0.0
    %3019 = vmatpush1.msra.mxu0 0.0
    %3020 = vmatprep.subr.mxu0 0.0
    %3021 = vmatpush1.msra.mxu0 0.0
    %3022 = vmatprep.subr.mxu0 0.0
    %3023 = vmatpush1.msra.mxu0 0.0
    %3024 = vmatprep.subr.mxu0 0.0
    %v3025 = vand.u32 %v77, 4294901760
    %v3026 = vsub.f32 %v77, %v3025
    %v3027 = vand.u32 %v3026, 4294901760
    %v3028 = vsub.f32 %v3026, %v3027
    %v3029 = vand.u32 %v3028, 4294901760
    %3030 = vmatpush1.msra.mxu0 %v3029
    %3031 = vmatprep.subr.mxu0 0.0
    %v3032 = vand.u32 %v76, 4294901760
    %v3033 = vsub.f32 %v76, %v3032
    %v3034 = vand.u32 %v3033, 4294901760
    %v3035 = vsub.f32 %v3033, %v3034
    %v3036 = vand.u32 %v3035, 4294901760
    %3037 = vmatpush1.msra.mxu0 %v3036
    %3038 = vmatprep.subr.mxu0 0.0
    %3039 = vmatpush2.msra.mxu0 0.0
    %3040 = vmatprep.subr.mxu0 0.0
    %3041 = vmatpush2.msra.mxu0 0.0
    %3042 = vmatprep.subr.mxu0 0.0
    %3043 = vmatpush2.msra.mxu0 0.0
    %3044 = vmatprep.subr.mxu0 0.0
    %3045 = vmatpush2.msra.mxu0 0.0
    %3046 = vmatprep.subr.mxu0 0.0
    %3047 = vmatpush2.msra.mxu0 0.0
    %3048 = vmatprep.subr.mxu0 0.0
    %3049 = vmatpush2.msra.mxu0 0.0
    %3050 = vmatprep.subr.mxu0 0.0
    %3051 = vmatpush2.msra.mxu0 0.0
    %3052 = vmatprep.subr.mxu0 0.0
    %3053 = vmatpush2.msra.mxu0 0.0
    %3054 = vmatprep.subr.mxu0 0.0
    %3055 = vmatpush2.msra.mxu0 0.0
    %3056 = vmatprep.subr.mxu0 0.0
    %3057 = vmatpush2.msra.mxu0 0.0
    %3058 = vmatprep.subr.mxu0 0.0
    %3059 = vmatpush2.msra.mxu0 0.0
    %3060 = vmatprep.subr.mxu0 0.0
    %3061 = vmatpush2.msra.mxu0 0.0
    %3062 = vmatprep.subr.mxu0 0.0
    %3063 = vmatpush2.msra.mxu0 0.0
    %3064 = vmatprep.subr.mxu0 0.0
    %3065 = vmatpush2.msra.mxu0 0.0
    %3066 = vmatprep.subr.mxu0 0.0
    %3067 = vmatpush2.msra.mxu0 0.0
    %3068 = vmatprep.subr.mxu0 0.0
    %3069 = vmatpush2.msra.mxu0 0.0
    %3070 = vmatprep.mubr.f32.mxu0 0.0
    %v3071 = vand.u32 %v2917, 4294901760
    %3072 = vmatmul.mubr.f32.gmra.mxu0 %v3071
    %v3073 = vpop.f32.mrf.mxu0
    %v3074 = vadd.f32 %v2993, %v3073
    %v3075 = vpop.f32.mrf.mxu0
    %3076 = vdwg.mxu0
    %3077 = vmatprep.subr.mxu0 0.0
    %3078 = vmatpush1.msra.mxu0 0.0
    %3079 = vmatprep.subr.mxu0 0.0
    %3080 = vmatpush1.msra.mxu0 0.0
    %3081 = vmatprep.subr.mxu0 0.0
    %3082 = vmatpush1.msra.mxu0 0.0
    %3083 = vmatprep.subr.mxu0 0.0
    %3084 = vmatpush1.msra.mxu0 0.0
    %3085 = vmatprep.subr.mxu0 0.0
    %3086 = vmatpush1.msra.mxu0 0.0
    %3087 = vmatprep.subr.mxu0 0.0
    %3088 = vmatpush1.msra.mxu0 0.0
    %3089 = vmatprep.subr.mxu0 0.0
    %3090 = vmatpush1.msra.mxu0 0.0
    %3091 = vmatprep.subr.mxu0 0.0
    %3092 = vmatpush1.msra.mxu0 0.0
    %3093 = vmatprep.subr.mxu0 0.0
    %3094 = vmatpush1.msra.mxu0 0.0
    %3095 = vmatprep.subr.mxu0 0.0
    %3096 = vmatpush1.msra.mxu0 0.0
    %3097 = vmatprep.subr.mxu0 0.0
    %3098 = vmatpush1.msra.mxu0 0.0
    %3099 = vmatprep.subr.mxu0 0.0
    %3100 = vmatpush1.msra.mxu0 0.0
    %3101 = vmatprep.subr.mxu0 0.0
    %3102 = vmatpush1.msra.mxu0 0.0
    %3103 = vmatprep.subr.mxu0 0.0
    %3104 = vmatpush1.msra.mxu0 0.0
    %3105 = vmatprep.subr.mxu0 0.0
    %v3106 = vand.u32 %v77, 4294901760
    %v3107 = vsub.f32 %v77, %v3106
    %3108 = vmatpush1.msra.mxu0 %v3107
    %3109 = vmatprep.subr.mxu0 0.0
    %v3110 = vand.u32 %v76, 4294901760
    %v3111 = vsub.f32 %v76, %v3110
    %3112 = vmatpush1.msra.mxu0 %v3111
    %3113 = vmatprep.subr.mxu0 0.0
    %3114 = vmatpush2.msra.mxu0 0.0
    %3115 = vmatprep.subr.mxu0 0.0
    %3116 = vmatpush2.msra.mxu0 0.0
    %3117 = vmatprep.subr.mxu0 0.0
    %3118 = vmatpush2.msra.mxu0 0.0
    %3119 = vmatprep.subr.mxu0 0.0
    %3120 = vmatpush2.msra.mxu0 0.0
    %3121 = vmatprep.subr.mxu0 0.0
    %3122 = vmatpush2.msra.mxu0 0.0
    %3123 = vmatprep.subr.mxu0 0.0
    %3124 = vmatpush2.msra.mxu0 0.0
    %3125 = vmatprep.subr.mxu0 0.0
    %3126 = vmatpush2.msra.mxu0 0.0
    %3127 = vmatprep.subr.mxu0 0.0
    %3128 = vmatpush2.msra.mxu0 0.0
    %3129 = vmatprep.subr.mxu0 0.0
    %3130 = vmatpush2.msra.mxu0 0.0
    %3131 = vmatprep.subr.mxu0 0.0
    %3132 = vmatpush2.msra.mxu0 0.0
    %3133 = vmatprep.subr.mxu0 0.0
    %3134 = vmatpush2.msra.mxu0 0.0
    %3135 = vmatprep.subr.mxu0 0.0
    %3136 = vmatpush2.msra.mxu0 0.0
    %3137 = vmatprep.subr.mxu0 0.0
    %3138 = vmatpush2.msra.mxu0 0.0
    %3139 = vmatprep.subr.mxu0 0.0
    %3140 = vmatpush2.msra.mxu0 0.0
    %3141 = vmatprep.subr.mxu0 0.0
    %3142 = vmatpush2.msra.mxu0 0.0
    %3143 = vmatprep.subr.mxu0 0.0
    %3144 = vmatpush2.msra.mxu0 0.0
    %3145 = vmatprep.mubr.f32.mxu0 0.0
    %v3146 = vand.u32 %v2917, 4294901760
    %v3147 = vsub.f32 %v2917, %v3146
    %3148 = vmatmul.mubr.f32.gmra.mxu0 %v3147
    %v3149 = vpop.f32.mrf.mxu0
    %v3150 = vadd.f32 %v3074, %v3149
    %v3151 = vpop.f32.mrf.mxu0
    %3152 = vdwg.mxu0
    %3153 = vmatprep.subr.mxu0 0.0
    %3154 = vmatpush1.msra.mxu0 0.0
    %3155 = vmatprep.subr.mxu0 0.0
    %3156 = vmatpush1.msra.mxu0 0.0
    %3157 = vmatprep.subr.mxu0 0.0
    %3158 = vmatpush1.msra.mxu0 0.0
    %3159 = vmatprep.subr.mxu0 0.0
    %3160 = vmatpush1.msra.mxu0 0.0
    %3161 = vmatprep.subr.mxu0 0.0
    %3162 = vmatpush1.msra.mxu0 0.0
    %3163 = vmatprep.subr.mxu0 0.0
    %3164 = vmatpush1.msra.mxu0 0.0
    %3165 = vmatprep.subr.mxu0 0.0
    %3166 = vmatpush1.msra.mxu0 0.0
    %3167 = vmatprep.subr.mxu0 0.0
    %3168 = vmatpush1.msra.mxu0 0.0
    %3169 = vmatprep.subr.mxu0 0.0
    %3170 = vmatpush1.msra.mxu0 0.0
    %3171 = vmatprep.subr.mxu0 0.0
    %3172 = vmatpush1.msra.mxu0 0.0
    %3173 = vmatprep.subr.mxu0 0.0
    %3174 = vmatpush1.msra.mxu0 0.0
    %3175 = vmatprep.subr.mxu0 0.0
    %3176 = vmatpush1.msra.mxu0 0.0
    %3177 = vmatprep.subr.mxu0 0.0
    %3178 = vmatpush1.msra.mxu0 0.0
    %3179 = vmatprep.subr.mxu0 0.0
    %3180 = vmatpush1.msra.mxu0 0.0
    %3181 = vmatprep.subr.mxu0 0.0
    %v3182 = vand.u32 %v77, 4294901760
    %3183 = vmatpush1.msra.mxu0 %v3182
    %3184 = vmatprep.subr.mxu0 0.0
    %v3185 = vand.u32 %v76, 4294901760
    %3186 = vmatpush1.msra.mxu0 %v3185
    %3187 = vmatprep.subr.mxu0 0.0
    %3188 = vmatpush2.msra.mxu0 0.0
    %3189 = vmatprep.subr.mxu0 0.0
    %3190 = vmatpush2.msra.mxu0 0.0
    %3191 = vmatprep.subr.mxu0 0.0
    %3192 = vmatpush2.msra.mxu0 0.0
    %3193 = vmatprep.subr.mxu0 0.0
    %3194 = vmatpush2.msra.mxu0 0.0
    %3195 = vmatprep.subr.mxu0 0.0
    %3196 = vmatpush2.msra.mxu0 0.0
    %3197 = vmatprep.subr.mxu0 0.0
    %3198 = vmatpush2.msra.mxu0 0.0
    %3199 = vmatprep.subr.mxu0 0.0
    %3200 = vmatpush2.msra.mxu0 0.0
    %3201 = vmatprep.subr.mxu0 0.0
    %3202 = vmatpush2.msra.mxu0 0.0
    %3203 = vmatprep.subr.mxu0 0.0
    %3204 = vmatpush2.msra.mxu0 0.0
    %3205 = vmatprep.subr.mxu0 0.0
    %3206 = vmatpush2.msra.mxu0 0.0
    %3207 = vmatprep.subr.mxu0 0.0
    %3208 = vmatpush2.msra.mxu0 0.0
    %3209 = vmatprep.subr.mxu0 0.0
    %3210 = vmatpush2.msra.mxu0 0.0
    %3211 = vmatprep.subr.mxu0 0.0
    %3212 = vmatpush2.msra.mxu0 0.0
    %3213 = vmatprep.subr.mxu0 0.0
    %3214 = vmatpush2.msra.mxu0 0.0
    %3215 = vmatprep.subr.mxu0 0.0
    %3216 = vmatpush2.msra.mxu0 0.0
    %3217 = vmatprep.subr.mxu0 0.0
    %3218 = vmatpush2.msra.mxu0 0.0
    %3219 = vmatprep.mubr.f32.mxu0 0.0
    %v3220 = vand.u32 %v2917, 4294901760
    %v3221 = vsub.f32 %v2917, %v3220
    %v3222 = vand.u32 %v3221, 4294901760
    %3223 = vmatmul.mubr.f32.gmra.mxu0 %v3222
    %v3224 = vpop.f32.mrf.mxu0
    %v3225 = vadd.f32 %v3150, %v3224
    %v3226 = vpop.f32.mrf.mxu0
    %3227 = vdwg.mxu0
    %3228 = vmatprep.subr.mxu0 0.0
    %3229 = vmatpush1.msra.mxu0 0.0
    %3230 = vmatprep.subr.mxu0 0.0
    %3231 = vmatpush1.msra.mxu0 0.0
    %3232 = vmatprep.subr.mxu0 0.0
    %3233 = vmatpush1.msra.mxu0 0.0
    %3234 = vmatprep.subr.mxu0 0.0
    %3235 = vmatpush1.msra.mxu0 0.0
    %3236 = vmatprep.subr.mxu0 0.0
    %3237 = vmatpush1.msra.mxu0 0.0
    %3238 = vmatprep.subr.mxu0 0.0
    %3239 = vmatpush1.msra.mxu0 0.0
    %3240 = vmatprep.subr.mxu0 0.0
    %3241 = vmatpush1.msra.mxu0 0.0
    %3242 = vmatprep.subr.mxu0 0.0
    %3243 = vmatpush1.msra.mxu0 0.0
    %3244 = vmatprep.subr.mxu0 0.0
    %3245 = vmatpush1.msra.mxu0 0.0
    %3246 = vmatprep.subr.mxu0 0.0
    %3247 = vmatpush1.msra.mxu0 0.0
    %3248 = vmatprep.subr.mxu0 0.0
    %3249 = vmatpush1.msra.mxu0 0.0
    %3250 = vmatprep.subr.mxu0 0.0
    %3251 = vmatpush1.msra.mxu0 0.0
    %3252 = vmatprep.subr.mxu0 0.0
    %3253 = vmatpush1.msra.mxu0 0.0
    %3254 = vmatprep.subr.mxu0 0.0
    %3255 = vmatpush1.msra.mxu0 0.0
    %3256 = vmatprep.subr.mxu0 0.0
    %v3257 = vand.u32 %v77, 4294901760
    %v3258 = vsub.f32 %v77, %v3257
    %v3259 = vand.u32 %v3258, 4294901760
    %3260 = vmatpush1.msra.mxu0 %v3259
    %3261 = vmatprep.subr.mxu0 0.0
    %v3262 = vand.u32 %v76, 4294901760
    %v3263 = vsub.f32 %v76, %v3262
    %v3264 = vand.u32 %v3263, 4294901760
    %3265 = vmatpush1.msra.mxu0 %v3264
    %3266 = vmatprep.subr.mxu0 0.0
    %3267 = vmatpush2.msra.mxu0 0.0
    %3268 = vmatprep.subr.mxu0 0.0
    %3269 = vmatpush2.msra.mxu0 0.0
    %3270 = vmatprep.subr.mxu0 0.0
    %3271 = vmatpush2.msra.mxu0 0.0
    %3272 = vmatprep.subr.mxu0 0.0
    %3273 = vmatpush2.msra.mxu0 0.0
    %3274 = vmatprep.subr.mxu0 0.0
    %3275 = vmatpush2.msra.mxu0 0.0
    %3276 = vmatprep.subr.mxu0 0.0
    %3277 = vmatpush2.msra.mxu0 0.0
    %3278 = vmatprep.subr.mxu0 0.0
    %3279 = vmatpush2.msra.mxu0 0.0
    %3280 = vmatprep.subr.mxu0 0.0
    %3281 = vmatpush2.msra.mxu0 0.0
    %3282 = vmatprep.subr.mxu0 0.0
    %3283 = vmatpush2.msra.mxu0 0.0
    %3284 = vmatprep.subr.mxu0 0.0
    %3285 = vmatpush2.msra.mxu0 0.0
    %3286 = vmatprep.subr.mxu0 0.0
    %3287 = vmatpush2.msra.mxu0 0.0
    %3288 = vmatprep.subr.mxu0 0.0
    %3289 = vmatpush2.msra.mxu0 0.0
    %3290 = vmatprep.subr.mxu0 0.0
    %3291 = vmatpush2.msra.mxu0 0.0
    %3292 = vmatprep.subr.mxu0 0.0
    %3293 = vmatpush2.msra.mxu0 0.0
    %3294 = vmatprep.subr.mxu0 0.0
    %3295 = vmatpush2.msra.mxu0 0.0
    %3296 = vmatprep.subr.mxu0 0.0
    %3297 = vmatpush2.msra.mxu0 0.0
    %3298 = vmatprep.mubr.f32.mxu0 0.0
    %v3299 = vand.u32 %v2917, 4294901760
    %3300 = vmatmul.mubr.f32.gmra.mxu0 %v3299
    %v3301 = vpop.f32.mrf.mxu0
    %v3302 = vadd.f32 %v3225, %v3301
    %v3303 = vpop.f32.mrf.mxu0
    %3304 = vdwg.mxu0
    %3305 = vmatprep.subr.mxu0 0.0
    %3306 = vmatpush1.msra.mxu0 0.0
    %3307 = vmatprep.subr.mxu0 0.0
    %3308 = vmatpush1.msra.mxu0 0.0
    %3309 = vmatprep.subr.mxu0 0.0
    %3310 = vmatpush1.msra.mxu0 0.0
    %3311 = vmatprep.subr.mxu0 0.0
    %3312 = vmatpush1.msra.mxu0 0.0
    %3313 = vmatprep.subr.mxu0 0.0
    %3314 = vmatpush1.msra.mxu0 0.0
    %3315 = vmatprep.subr.mxu0 0.0
    %3316 = vmatpush1.msra.mxu0 0.0
    %3317 = vmatprep.subr.mxu0 0.0
    %3318 = vmatpush1.msra.mxu0 0.0
    %3319 = vmatprep.subr.mxu0 0.0
    %3320 = vmatpush1.msra.mxu0 0.0
    %3321 = vmatprep.subr.mxu0 0.0
    %3322 = vmatpush1.msra.mxu0 0.0
    %3323 = vmatprep.subr.mxu0 0.0
    %3324 = vmatpush1.msra.mxu0 0.0
    %3325 = vmatprep.subr.mxu0 0.0
    %3326 = vmatpush1.msra.mxu0 0.0
    %3327 = vmatprep.subr.mxu0 0.0
    %3328 = vmatpush1.msra.mxu0 0.0
    %3329 = vmatprep.subr.mxu0 0.0
    %3330 = vmatpush1.msra.mxu0 0.0
    %3331 = vmatprep.subr.mxu0 0.0
    %3332 = vmatpush1.msra.mxu0 0.0
    %3333 = vmatprep.subr.mxu0 0.0
    %v3334 = vand.u32 %v77, 4294901760
    %3335 = vmatpush1.msra.mxu0 %v3334
    %3336 = vmatprep.subr.mxu0 0.0
    %v3337 = vand.u32 %v76, 4294901760
    %3338 = vmatpush1.msra.mxu0 %v3337
    %3339 = vmatprep.subr.mxu0 0.0
    %3340 = vmatpush2.msra.mxu0 0.0
    %3341 = vmatprep.subr.mxu0 0.0
    %3342 = vmatpush2.msra.mxu0 0.0
    %3343 = vmatprep.subr.mxu0 0.0
    %3344 = vmatpush2.msra.mxu0 0.0
    %3345 = vmatprep.subr.mxu0 0.0
    %3346 = vmatpush2.msra.mxu0 0.0
    %3347 = vmatprep.subr.mxu0 0.0
    %3348 = vmatpush2.msra.mxu0 0.0
    %3349 = vmatprep.subr.mxu0 0.0
    %3350 = vmatpush2.msra.mxu0 0.0
    %3351 = vmatprep.subr.mxu0 0.0
    %3352 = vmatpush2.msra.mxu0 0.0
    %3353 = vmatprep.subr.mxu0 0.0
    %3354 = vmatpush2.msra.mxu0 0.0
    %3355 = vmatprep.subr.mxu0 0.0
    %3356 = vmatpush2.msra.mxu0 0.0
    %3357 = vmatprep.subr.mxu0 0.0
    %3358 = vmatpush2.msra.mxu0 0.0
    %3359 = vmatprep.subr.mxu0 0.0
    %3360 = vmatpush2.msra.mxu0 0.0
    %3361 = vmatprep.subr.mxu0 0.0
    %3362 = vmatpush2.msra.mxu0 0.0
    %3363 = vmatprep.subr.mxu0 0.0
    %3364 = vmatpush2.msra.mxu0 0.0
    %3365 = vmatprep.subr.mxu0 0.0
    %3366 = vmatpush2.msra.mxu0 0.0
    %3367 = vmatprep.subr.mxu0 0.0
    %3368 = vmatpush2.msra.mxu0 0.0
    %3369 = vmatprep.subr.mxu0 0.0
    %3370 = vmatpush2.msra.mxu0 0.0
    %3371 = vmatprep.mubr.f32.mxu0 0.0
    %v3372 = vand.u32 %v2917, 4294901760
    %3373 = vmatmul.mubr.f32.gmra.mxu0 %v3372
    %v3374 = vpop.f32.mrf.mxu0
    %v3375 = vadd.f32 %v3302, %v3374
    %v3376 = vpop.f32.mrf.mxu0
    %3377 = vdwg.mxu0
    %v3379 = vsel %vm769, %v963, 0
    %3381 = vmatprep.subr.mxu0 0.0
    %3382 = vmatpush1.msra.mxu0 0.0
    %3383 = vmatprep.subr.mxu0 0.0
    %3384 = vmatpush1.msra.mxu0 0.0
    %3385 = vmatprep.subr.mxu0 0.0
    %3386 = vmatpush1.msra.mxu0 0.0
    %3387 = vmatprep.subr.mxu0 0.0
    %3388 = vmatpush1.msra.mxu0 0.0
    %3389 = vmatprep.subr.mxu0 0.0
    %3390 = vmatpush1.msra.mxu0 0.0
    %3391 = vmatprep.subr.mxu0 0.0
    %3392 = vmatpush1.msra.mxu0 0.0
    %3393 = vmatprep.subr.mxu0 0.0
    %3394 = vmatpush1.msra.mxu0 0.0
    %3395 = vmatprep.subr.mxu0 0.0
    %3396 = vmatpush1.msra.mxu0 0.0
    %3397 = vmatprep.subr.mxu0 0.0
    %3398 = vmatpush1.msra.mxu0 0.0
    %3399 = vmatprep.subr.mxu0 0.0
    %3400 = vmatpush1.msra.mxu0 0.0
    %3401 = vmatprep.subr.mxu0 0.0
    %3402 = vmatpush1.msra.mxu0 0.0
    %3403 = vmatprep.subr.mxu0 0.0
    %3404 = vmatpush1.msra.mxu0 0.0
    %3405 = vmatprep.subr.mxu0 0.0
    %3406 = vmatpush1.msra.mxu0 0.0
    %3407 = vmatprep.subr.mxu0 0.0
    %3408 = vmatpush1.msra.mxu0 0.0
    %3409 = vmatprep.subr.mxu0 0.0
    %v3410 = vand.u32 %v79, 4294901760
    %3411 = vmatpush1.msra.mxu0 %v3410
    %3412 = vmatprep.subr.mxu0 0.0
    %v3413 = vand.u32 %v78, 4294901760
    %3414 = vmatpush1.msra.mxu0 %v3413
    %3415 = vmatprep.subr.mxu0 0.0
    %3416 = vmatpush2.msra.mxu0 0.0
    %3417 = vmatprep.subr.mxu0 0.0
    %3418 = vmatpush2.msra.mxu0 0.0
    %3419 = vmatprep.subr.mxu0 0.0
    %3420 = vmatpush2.msra.mxu0 0.0
    %3421 = vmatprep.subr.mxu0 0.0
    %3422 = vmatpush2.msra.mxu0 0.0
    %3423 = vmatprep.subr.mxu0 0.0
    %3424 = vmatpush2.msra.mxu0 0.0
    %3425 = vmatprep.subr.mxu0 0.0
    %3426 = vmatpush2.msra.mxu0 0.0
    %3427 = vmatprep.subr.mxu0 0.0
    %3428 = vmatpush2.msra.mxu0 0.0
    %3429 = vmatprep.subr.mxu0 0.0
    %3430 = vmatpush2.msra.mxu0 0.0
    %3431 = vmatprep.subr.mxu0 0.0
    %3432 = vmatpush2.msra.mxu0 0.0
    %3433 = vmatprep.subr.mxu0 0.0
    %3434 = vmatpush2.msra.mxu0 0.0
    %3435 = vmatprep.subr.mxu0 0.0
    %3436 = vmatpush2.msra.mxu0 0.0
    %3437 = vmatprep.subr.mxu0 0.0
    %3438 = vmatpush2.msra.mxu0 0.0
    %3439 = vmatprep.subr.mxu0 0.0
    %3440 = vmatpush2.msra.mxu0 0.0
    %3441 = vmatprep.subr.mxu0 0.0
    %3442 = vmatpush2.msra.mxu0 0.0
    %3443 = vmatprep.subr.mxu0 0.0
    %3444 = vmatpush2.msra.mxu0 0.0
    %3445 = vmatprep.subr.mxu0 0.0
    %3446 = vmatpush2.msra.mxu0 0.0
    %3447 = vmatprep.mubr.f32.mxu0 0.0
    %v3448 = vand.u32 %v3379, 4294901760
    %v3449 = vsub.f32 %v3379, %v3448
    %v3450 = vand.u32 %v3449, 4294901760
    %v3451 = vsub.f32 %v3449, %v3450
    %v3452 = vand.u32 %v3451, 4294901760
    %3453 = vmatmul.mubr.f32.gmra.mxu0 %v3452
    %v3454 = vpop.f32.mrf.mxu0
    %v3455 = vadd.f32 0.0, %v3454
    %v3456 = vpop.f32.mrf.mxu0
    %3457 = vdwg.mxu0
    %3458 = vmatprep.subr.mxu0 0.0
    %3459 = vmatpush1.msra.mxu0 0.0
    %3460 = vmatprep.subr.mxu0 0.0
    %3461 = vmatpush1.msra.mxu0 0.0
    %3462 = vmatprep.subr.mxu0 0.0
    %3463 = vmatpush1.msra.mxu0 0.0
    %3464 = vmatprep.subr.mxu0 0.0
    %3465 = vmatpush1.msra.mxu0 0.0
    %3466 = vmatprep.subr.mxu0 0.0
    %3467 = vmatpush1.msra.mxu0 0.0
    %3468 = vmatprep.subr.mxu0 0.0
    %3469 = vmatpush1.msra.mxu0 0.0
    %3470 = vmatprep.subr.mxu0 0.0
    %3471 = vmatpush1.msra.mxu0 0.0
    %3472 = vmatprep.subr.mxu0 0.0
    %3473 = vmatpush1.msra.mxu0 0.0
    %3474 = vmatprep.subr.mxu0 0.0
    %3475 = vmatpush1.msra.mxu0 0.0
    %3476 = vmatprep.subr.mxu0 0.0
    %3477 = vmatpush1.msra.mxu0 0.0
    %3478 = vmatprep.subr.mxu0 0.0
    %3479 = vmatpush1.msra.mxu0 0.0
    %3480 = vmatprep.subr.mxu0 0.0
    %3481 = vmatpush1.msra.mxu0 0.0
    %3482 = vmatprep.subr.mxu0 0.0
    %3483 = vmatpush1.msra.mxu0 0.0
    %3484 = vmatprep.subr.mxu0 0.0
    %3485 = vmatpush1.msra.mxu0 0.0
    %3486 = vmatprep.subr.mxu0 0.0
    %v3487 = vand.u32 %v79, 4294901760
    %v3488 = vsub.f32 %v79, %v3487
    %v3489 = vand.u32 %v3488, 4294901760
    %v3490 = vsub.f32 %v3488, %v3489
    %v3491 = vand.u32 %v3490, 4294901760
    %3492 = vmatpush1.msra.mxu0 %v3491
    %3493 = vmatprep.subr.mxu0 0.0
    %v3494 = vand.u32 %v78, 4294901760
    %v3495 = vsub.f32 %v78, %v3494
    %v3496 = vand.u32 %v3495, 4294901760
    %v3497 = vsub.f32 %v3495, %v3496
    %v3498 = vand.u32 %v3497, 4294901760
    %3499 = vmatpush1.msra.mxu0 %v3498
    %3500 = vmatprep.subr.mxu0 0.0
    %3501 = vmatpush2.msra.mxu0 0.0
    %3502 = vmatprep.subr.mxu0 0.0
    %3503 = vmatpush2.msra.mxu0 0.0
    %3504 = vmatprep.subr.mxu0 0.0
    %3505 = vmatpush2.msra.mxu0 0.0
    %3506 = vmatprep.subr.mxu0 0.0
    %3507 = vmatpush2.msra.mxu0 0.0
    %3508 = vmatprep.subr.mxu0 0.0
    %3509 = vmatpush2.msra.mxu0 0.0
    %3510 = vmatprep.subr.mxu0 0.0
    %3511 = vmatpush2.msra.mxu0 0.0
    %3512 = vmatprep.subr.mxu0 0.0
    %3513 = vmatpush2.msra.mxu0 0.0
    %3514 = vmatprep.subr.mxu0 0.0
    %3515 = vmatpush2.msra.mxu0 0.0
    %3516 = vmatprep.subr.mxu0 0.0
    %3517 = vmatpush2.msra.mxu0 0.0
    %3518 = vmatprep.subr.mxu0 0.0
    %3519 = vmatpush2.msra.mxu0 0.0
    %3520 = vmatprep.subr.mxu0 0.0
    %3521 = vmatpush2.msra.mxu0 0.0
    %3522 = vmatprep.subr.mxu0 0.0
    %3523 = vmatpush2.msra.mxu0 0.0
    %3524 = vmatprep.subr.mxu0 0.0
    %3525 = vmatpush2.msra.mxu0 0.0
    %3526 = vmatprep.subr.mxu0 0.0
    %3527 = vmatpush2.msra.mxu0 0.0
    %3528 = vmatprep.subr.mxu0 0.0
    %3529 = vmatpush2.msra.mxu0 0.0
    %3530 = vmatprep.subr.mxu0 0.0
    %3531 = vmatpush2.msra.mxu0 0.0
    %3532 = vmatprep.mubr.f32.mxu0 0.0
    %v3533 = vand.u32 %v3379, 4294901760
    %3534 = vmatmul.mubr.f32.gmra.mxu0 %v3533
    %v3535 = vpop.f32.mrf.mxu0
    %v3536 = vadd.f32 %v3455, %v3535
    %v3537 = vpop.f32.mrf.mxu0
    %3538 = vdwg.mxu0
    %3539 = vmatprep.subr.mxu0 0.0
    %3540 = vmatpush1.msra.mxu0 0.0
    %3541 = vmatprep.subr.mxu0 0.0
    %3542 = vmatpush1.msra.mxu0 0.0
    %3543 = vmatprep.subr.mxu0 0.0
    %3544 = vmatpush1.msra.mxu0 0.0
    %3545 = vmatprep.subr.mxu0 0.0
    %3546 = vmatpush1.msra.mxu0 0.0
    %3547 = vmatprep.subr.mxu0 0.0
    %3548 = vmatpush1.msra.mxu0 0.0
    %3549 = vmatprep.subr.mxu0 0.0
    %3550 = vmatpush1.msra.mxu0 0.0
    %3551 = vmatprep.subr.mxu0 0.0
    %3552 = vmatpush1.msra.mxu0 0.0
    %3553 = vmatprep.subr.mxu0 0.0
    %3554 = vmatpush1.msra.mxu0 0.0
    %3555 = vmatprep.subr.mxu0 0.0
    %3556 = vmatpush1.msra.mxu0 0.0
    %3557 = vmatprep.subr.mxu0 0.0
    %3558 = vmatpush1.msra.mxu0 0.0
    %3559 = vmatprep.subr.mxu0 0.0
    %3560 = vmatpush1.msra.mxu0 0.0
    %3561 = vmatprep.subr.mxu0 0.0
    %3562 = vmatpush1.msra.mxu0 0.0
    %3563 = vmatprep.subr.mxu0 0.0
    %3564 = vmatpush1.msra.mxu0 0.0
    %3565 = vmatprep.subr.mxu0 0.0
    %3566 = vmatpush1.msra.mxu0 0.0
    %3567 = vmatprep.subr.mxu0 0.0
    %v3568 = vand.u32 %v79, 4294901760
    %v3569 = vsub.f32 %v79, %v3568
    %3570 = vmatpush1.msra.mxu0 %v3569
    %3571 = vmatprep.subr.mxu0 0.0
    %v3572 = vand.u32 %v78, 4294901760
    %v3573 = vsub.f32 %v78, %v3572
    %3574 = vmatpush1.msra.mxu0 %v3573
    %3575 = vmatprep.subr.mxu0 0.0
    %3576 = vmatpush2.msra.mxu0 0.0
    %3577 = vmatprep.subr.mxu0 0.0
    %3578 = vmatpush2.msra.mxu0 0.0
    %3579 = vmatprep.subr.mxu0 0.0
    %3580 = vmatpush2.msra.mxu0 0.0
    %3581 = vmatprep.subr.mxu0 0.0
    %3582 = vmatpush2.msra.mxu0 0.0
    %3583 = vmatprep.subr.mxu0 0.0
    %3584 = vmatpush2.msra.mxu0 0.0
    %3585 = vmatprep.subr.mxu0 0.0
    %3586 = vmatpush2.msra.mxu0 0.0
    %3587 = vmatprep.subr.mxu0 0.0
    %3588 = vmatpush2.msra.mxu0 0.0
    %3589 = vmatprep.subr.mxu0 0.0
    %3590 = vmatpush2.msra.mxu0 0.0
    %3591 = vmatprep.subr.mxu0 0.0
    %3592 = vmatpush2.msra.mxu0 0.0
    %3593 = vmatprep.subr.mxu0 0.0
    %3594 = vmatpush2.msra.mxu0 0.0
    %3595 = vmatprep.subr.mxu0 0.0
    %3596 = vmatpush2.msra.mxu0 0.0
    %3597 = vmatprep.subr.mxu0 0.0
    %3598 = vmatpush2.msra.mxu0 0.0
    %3599 = vmatprep.subr.mxu0 0.0
    %3600 = vmatpush2.msra.mxu0 0.0
    %3601 = vmatprep.subr.mxu0 0.0
    %3602 = vmatpush2.msra.mxu0 0.0
    %3603 = vmatprep.subr.mxu0 0.0
    %3604 = vmatpush2.msra.mxu0 0.0
    %3605 = vmatprep.subr.mxu0 0.0
    %3606 = vmatpush2.msra.mxu0 0.0
    %3607 = vmatprep.mubr.f32.mxu0 0.0
    %v3608 = vand.u32 %v3379, 4294901760
    %v3609 = vsub.f32 %v3379, %v3608
    %3610 = vmatmul.mubr.f32.gmra.mxu0 %v3609
    %v3611 = vpop.f32.mrf.mxu0
    %v3612 = vadd.f32 %v3536, %v3611
    %v3613 = vpop.f32.mrf.mxu0
    %3614 = vdwg.mxu0
    %3615 = vmatprep.subr.mxu0 0.0
    %3616 = vmatpush1.msra.mxu0 0.0
    %3617 = vmatprep.subr.mxu0 0.0
    %3618 = vmatpush1.msra.mxu0 0.0
    %3619 = vmatprep.subr.mxu0 0.0
    %3620 = vmatpush1.msra.mxu0 0.0
    %3621 = vmatprep.subr.mxu0 0.0
    %3622 = vmatpush1.msra.mxu0 0.0
    %3623 = vmatprep.subr.mxu0 0.0
    %3624 = vmatpush1.msra.mxu0 0.0
    %3625 = vmatprep.subr.mxu0 0.0
    %3626 = vmatpush1.msra.mxu0 0.0
    %3627 = vmatprep.subr.mxu0 0.0
    %3628 = vmatpush1.msra.mxu0 0.0
    %3629 = vmatprep.subr.mxu0 0.0
    %3630 = vmatpush1.msra.mxu0 0.0
    %3631 = vmatprep.subr.mxu0 0.0
    %3632 = vmatpush1.msra.mxu0 0.0
    %3633 = vmatprep.subr.mxu0 0.0
    %3634 = vmatpush1.msra.mxu0 0.0
    %3635 = vmatprep.subr.mxu0 0.0
    %3636 = vmatpush1.msra.mxu0 0.0
    %3637 = vmatprep.subr.mxu0 0.0
    %3638 = vmatpush1.msra.mxu0 0.0
    %3639 = vmatprep.subr.mxu0 0.0
    %3640 = vmatpush1.msra.mxu0 0.0
    %3641 = vmatprep.subr.mxu0 0.0
    %3642 = vmatpush1.msra.mxu0 0.0
    %3643 = vmatprep.subr.mxu0 0.0
    %v3644 = vand.u32 %v79, 4294901760
    %3645 = vmatpush1.msra.mxu0 %v3644
    %3646 = vmatprep.subr.mxu0 0.0
    %v3647 = vand.u32 %v78, 4294901760
    %3648 = vmatpush1.msra.mxu0 %v3647
    %3649 = vmatprep.subr.mxu0 0.0
    %3650 = vmatpush2.msra.mxu0 0.0
    %3651 = vmatprep.subr.mxu0 0.0
    %3652 = vmatpush2.msra.mxu0 0.0
    %3653 = vmatprep.subr.mxu0 0.0
    %3654 = vmatpush2.msra.mxu0 0.0
    %3655 = vmatprep.subr.mxu0 0.0
    %3656 = vmatpush2.msra.mxu0 0.0
    %3657 = vmatprep.subr.mxu0 0.0
    %3658 = vmatpush2.msra.mxu0 0.0
    %3659 = vmatprep.subr.mxu0 0.0
    %3660 = vmatpush2.msra.mxu0 0.0
    %3661 = vmatprep.subr.mxu0 0.0
    %3662 = vmatpush2.msra.mxu0 0.0
    %3663 = vmatprep.subr.mxu0 0.0
    %3664 = vmatpush2.msra.mxu0 0.0
    %3665 = vmatprep.subr.mxu0 0.0
    %3666 = vmatpush2.msra.mxu0 0.0
    %3667 = vmatprep.subr.mxu0 0.0
    %3668 = vmatpush2.msra.mxu0 0.0
    %3669 = vmatprep.subr.mxu0 0.0
    %3670 = vmatpush2.msra.mxu0 0.0
    %3671 = vmatprep.subr.mxu0 0.0
    %3672 = vmatpush2.msra.mxu0 0.0
    %3673 = vmatprep.subr.mxu0 0.0
    %3674 = vmatpush2.msra.mxu0 0.0
    %3675 = vmatprep.subr.mxu0 0.0
    %3676 = vmatpush2.msra.mxu0 0.0
    %3677 = vmatprep.subr.mxu0 0.0
    %3678 = vmatpush2.msra.mxu0 0.0
    %3679 = vmatprep.subr.mxu0 0.0
    %3680 = vmatpush2.msra.mxu0 0.0
    %3681 = vmatprep.mubr.f32.mxu0 0.0
    %v3682 = vand.u32 %v3379, 4294901760
    %v3683 = vsub.f32 %v3379, %v3682
    %v3684 = vand.u32 %v3683, 4294901760
    %3685 = vmatmul.mubr.f32.gmra.mxu0 %v3684
    %v3686 = vpop.f32.mrf.mxu0
    %v3687 = vadd.f32 %v3612, %v3686
    %v3688 = vpop.f32.mrf.mxu0
    %3689 = vdwg.mxu0
    %3690 = vmatprep.subr.mxu0 0.0
    %3691 = vmatpush1.msra.mxu0 0.0
    %3692 = vmatprep.subr.mxu0 0.0
    %3693 = vmatpush1.msra.mxu0 0.0
    %3694 = vmatprep.subr.mxu0 0.0
    %3695 = vmatpush1.msra.mxu0 0.0
    %3696 = vmatprep.subr.mxu0 0.0
    %3697 = vmatpush1.msra.mxu0 0.0
    %3698 = vmatprep.subr.mxu0 0.0
    %3699 = vmatpush1.msra.mxu0 0.0
    %3700 = vmatprep.subr.mxu0 0.0
    %3701 = vmatpush1.msra.mxu0 0.0
    %3702 = vmatprep.subr.mxu0 0.0
    %3703 = vmatpush1.msra.mxu0 0.0
    %3704 = vmatprep.subr.mxu0 0.0
    %3705 = vmatpush1.msra.mxu0 0.0
    %3706 = vmatprep.subr.mxu0 0.0
    %3707 = vmatpush1.msra.mxu0 0.0
    %3708 = vmatprep.subr.mxu0 0.0
    %3709 = vmatpush1.msra.mxu0 0.0
    %3710 = vmatprep.subr.mxu0 0.0
    %3711 = vmatpush1.msra.mxu0 0.0
    %3712 = vmatprep.subr.mxu0 0.0
    %3713 = vmatpush1.msra.mxu0 0.0
    %3714 = vmatprep.subr.mxu0 0.0
    %3715 = vmatpush1.msra.mxu0 0.0
    %3716 = vmatprep.subr.mxu0 0.0
    %3717 = vmatpush1.msra.mxu0 0.0
    %3718 = vmatprep.subr.mxu0 0.0
    %v3719 = vand.u32 %v79, 4294901760
    %v3720 = vsub.f32 %v79, %v3719
    %v3721 = vand.u32 %v3720, 4294901760
    %3722 = vmatpush1.msra.mxu0 %v3721
    %3723 = vmatprep.subr.mxu0 0.0
    %v3724 = vand.u32 %v78, 4294901760
    %v3725 = vsub.f32 %v78, %v3724
    %v3726 = vand.u32 %v3725, 4294901760
    %3727 = vmatpush1.msra.mxu0 %v3726
    %3728 = vmatprep.subr.mxu0 0.0
    %3729 = vmatpush2.msra.mxu0 0.0
    %3730 = vmatprep.subr.mxu0 0.0
    %3731 = vmatpush2.msra.mxu0 0.0
    %3732 = vmatprep.subr.mxu0 0.0
    %3733 = vmatpush2.msra.mxu0 0.0
    %3734 = vmatprep.subr.mxu0 0.0
    %3735 = vmatpush2.msra.mxu0 0.0
    %3736 = vmatprep.subr.mxu0 0.0
    %3737 = vmatpush2.msra.mxu0 0.0
    %3738 = vmatprep.subr.mxu0 0.0
    %3739 = vmatpush2.msra.mxu0 0.0
    %3740 = vmatprep.subr.mxu0 0.0
    %3741 = vmatpush2.msra.mxu0 0.0
    %3742 = vmatprep.subr.mxu0 0.0
    %3743 = vmatpush2.msra.mxu0 0.0
    %3744 = vmatprep.subr.mxu0 0.0
    %3745 = vmatpush2.msra.mxu0 0.0
    %3746 = vmatprep.subr.mxu0 0.0
    %3747 = vmatpush2.msra.mxu0 0.0
    %3748 = vmatprep.subr.mxu0 0.0
    %3749 = vmatpush2.msra.mxu0 0.0
    %3750 = vmatprep.subr.mxu0 0.0
    %3751 = vmatpush2.msra.mxu0 0.0
    %3752 = vmatprep.subr.mxu0 0.0
    %3753 = vmatpush2.msra.mxu0 0.0
    %3754 = vmatprep.subr.mxu0 0.0
    %3755 = vmatpush2.msra.mxu0 0.0
    %3756 = vmatprep.subr.mxu0 0.0
    %3757 = vmatpush2.msra.mxu0 0.0
    %3758 = vmatprep.subr.mxu0 0.0
    %3759 = vmatpush2.msra.mxu0 0.0
    %3760 = vmatprep.mubr.f32.mxu0 0.0
    %v3761 = vand.u32 %v3379, 4294901760
    %3762 = vmatmul.mubr.f32.gmra.mxu0 %v3761
    %v3763 = vpop.f32.mrf.mxu0
    %v3764 = vadd.f32 %v3687, %v3763
    %v3765 = vpop.f32.mrf.mxu0
    %3766 = vdwg.mxu0
    %3767 = vmatprep.subr.mxu0 0.0
    %3768 = vmatpush1.msra.mxu0 0.0
    %3769 = vmatprep.subr.mxu0 0.0
    %3770 = vmatpush1.msra.mxu0 0.0
    %3771 = vmatprep.subr.mxu0 0.0
    %3772 = vmatpush1.msra.mxu0 0.0
    %3773 = vmatprep.subr.mxu0 0.0
    %3774 = vmatpush1.msra.mxu0 0.0
    %3775 = vmatprep.subr.mxu0 0.0
    %3776 = vmatpush1.msra.mxu0 0.0
    %3777 = vmatprep.subr.mxu0 0.0
    %3778 = vmatpush1.msra.mxu0 0.0
    %3779 = vmatprep.subr.mxu0 0.0
    %3780 = vmatpush1.msra.mxu0 0.0
    %3781 = vmatprep.subr.mxu0 0.0
    %3782 = vmatpush1.msra.mxu0 0.0
    %3783 = vmatprep.subr.mxu0 0.0
    %3784 = vmatpush1.msra.mxu0 0.0
    %3785 = vmatprep.subr.mxu0 0.0
    %3786 = vmatpush1.msra.mxu0 0.0
    %3787 = vmatprep.subr.mxu0 0.0
    %3788 = vmatpush1.msra.mxu0 0.0
    %3789 = vmatprep.subr.mxu0 0.0
    %3790 = vmatpush1.msra.mxu0 0.0
    %3791 = vmatprep.subr.mxu0 0.0
    %3792 = vmatpush1.msra.mxu0 0.0
    %3793 = vmatprep.subr.mxu0 0.0
    %3794 = vmatpush1.msra.mxu0 0.0
    %3795 = vmatprep.subr.mxu0 0.0
    %v3796 = vand.u32 %v79, 4294901760
    %3797 = vmatpush1.msra.mxu0 %v3796
    %3798 = vmatprep.subr.mxu0 0.0
    %v3799 = vand.u32 %v78, 4294901760
    %3800 = vmatpush1.msra.mxu0 %v3799
    %3801 = vmatprep.subr.mxu0 0.0
    %3802 = vmatpush2.msra.mxu0 0.0
    %3803 = vmatprep.subr.mxu0 0.0
    %3804 = vmatpush2.msra.mxu0 0.0
    %3805 = vmatprep.subr.mxu0 0.0
    %3806 = vmatpush2.msra.mxu0 0.0
    %3807 = vmatprep.subr.mxu0 0.0
    %3808 = vmatpush2.msra.mxu0 0.0
    %3809 = vmatprep.subr.mxu0 0.0
    %3810 = vmatpush2.msra.mxu0 0.0
    %3811 = vmatprep.subr.mxu0 0.0
    %3812 = vmatpush2.msra.mxu0 0.0
    %3813 = vmatprep.subr.mxu0 0.0
    %3814 = vmatpush2.msra.mxu0 0.0
    %3815 = vmatprep.subr.mxu0 0.0
    %3816 = vmatpush2.msra.mxu0 0.0
    %3817 = vmatprep.subr.mxu0 0.0
    %3818 = vmatpush2.msra.mxu0 0.0
    %3819 = vmatprep.subr.mxu0 0.0
    %3820 = vmatpush2.msra.mxu0 0.0
    %3821 = vmatprep.subr.mxu0 0.0
    %3822 = vmatpush2.msra.mxu0 0.0
    %3823 = vmatprep.subr.mxu0 0.0
    %3824 = vmatpush2.msra.mxu0 0.0
    %3825 = vmatprep.subr.mxu0 0.0
    %3826 = vmatpush2.msra.mxu0 0.0
    %3827 = vmatprep.subr.mxu0 0.0
    %3828 = vmatpush2.msra.mxu0 0.0
    %3829 = vmatprep.subr.mxu0 0.0
    %3830 = vmatpush2.msra.mxu0 0.0
    %3831 = vmatprep.subr.mxu0 0.0
    %3832 = vmatpush2.msra.mxu0 0.0
    %3833 = vmatprep.mubr.f32.mxu0 0.0
    %v3834 = vand.u32 %v3379, 4294901760
    %3835 = vmatmul.mubr.f32.gmra.mxu0 %v3834
    %v3836 = vpop.f32.mrf.mxu0
    %v3837 = vadd.f32 %v3764, %v3836
    %v3838 = vpop.f32.mrf.mxu0
    %3839 = vdwg.mxu0
    %v3841 = vsel %vm769, %v995, 0
    %3843 = vmatprep.subr.mxu0 0.0
    %3844 = vmatpush1.msra.mxu0 0.0
    %3845 = vmatprep.subr.mxu0 0.0
    %3846 = vmatpush1.msra.mxu0 0.0
    %3847 = vmatprep.subr.mxu0 0.0
    %3848 = vmatpush1.msra.mxu0 0.0
    %3849 = vmatprep.subr.mxu0 0.0
    %3850 = vmatpush1.msra.mxu0 0.0
    %3851 = vmatprep.subr.mxu0 0.0
    %3852 = vmatpush1.msra.mxu0 0.0
    %3853 = vmatprep.subr.mxu0 0.0
    %3854 = vmatpush1.msra.mxu0 0.0
    %3855 = vmatprep.subr.mxu0 0.0
    %3856 = vmatpush1.msra.mxu0 0.0
    %3857 = vmatprep.subr.mxu0 0.0
    %3858 = vmatpush1.msra.mxu0 0.0
    %3859 = vmatprep.subr.mxu0 0.0
    %3860 = vmatpush1.msra.mxu0 0.0
    %3861 = vmatprep.subr.mxu0 0.0
    %3862 = vmatpush1.msra.mxu0 0.0
    %3863 = vmatprep.subr.mxu0 0.0
    %3864 = vmatpush1.msra.mxu0 0.0
    %3865 = vmatprep.subr.mxu0 0.0
    %3866 = vmatpush1.msra.mxu0 0.0
    %3867 = vmatprep.subr.mxu0 0.0
    %3868 = vmatpush1.msra.mxu0 0.0
    %3869 = vmatprep.subr.mxu0 0.0
    %3870 = vmatpush1.msra.mxu0 0.0
    %3871 = vmatprep.subr.mxu0 0.0
    %v3872 = vand.u32 %v81, 4294901760
    %3873 = vmatpush1.msra.mxu0 %v3872
    %3874 = vmatprep.subr.mxu0 0.0
    %v3875 = vand.u32 %v80, 4294901760
    %3876 = vmatpush1.msra.mxu0 %v3875
    %3877 = vmatprep.subr.mxu0 0.0
    %3878 = vmatpush2.msra.mxu0 0.0
    %3879 = vmatprep.subr.mxu0 0.0
    %3880 = vmatpush2.msra.mxu0 0.0
    %3881 = vmatprep.subr.mxu0 0.0
    %3882 = vmatpush2.msra.mxu0 0.0
    %3883 = vmatprep.subr.mxu0 0.0
    %3884 = vmatpush2.msra.mxu0 0.0
    %3885 = vmatprep.subr.mxu0 0.0
    %3886 = vmatpush2.msra.mxu0 0.0
    %3887 = vmatprep.subr.mxu0 0.0
    %3888 = vmatpush2.msra.mxu0 0.0
    %3889 = vmatprep.subr.mxu0 0.0
    %3890 = vmatpush2.msra.mxu0 0.0
    %3891 = vmatprep.subr.mxu0 0.0
    %3892 = vmatpush2.msra.mxu0 0.0
    %3893 = vmatprep.subr.mxu0 0.0
    %3894 = vmatpush2.msra.mxu0 0.0
    %3895 = vmatprep.subr.mxu0 0.0
    %3896 = vmatpush2.msra.mxu0 0.0
    %3897 = vmatprep.subr.mxu0 0.0
    %3898 = vmatpush2.msra.mxu0 0.0
    %3899 = vmatprep.subr.mxu0 0.0
    %3900 = vmatpush2.msra.mxu0 0.0
    %3901 = vmatprep.subr.mxu0 0.0
    %3902 = vmatpush2.msra.mxu0 0.0
    %3903 = vmatprep.subr.mxu0 0.0
    %3904 = vmatpush2.msra.mxu0 0.0
    %3905 = vmatprep.subr.mxu0 0.0
    %3906 = vmatpush2.msra.mxu0 0.0
    %3907 = vmatprep.subr.mxu0 0.0
    %3908 = vmatpush2.msra.mxu0 0.0
    %3909 = vmatprep.mubr.f32.mxu0 0.0
    %v3910 = vand.u32 %v3841, 4294901760
    %v3911 = vsub.f32 %v3841, %v3910
    %v3912 = vand.u32 %v3911, 4294901760
    %v3913 = vsub.f32 %v3911, %v3912
    %v3914 = vand.u32 %v3913, 4294901760
    %3915 = vmatmul.mubr.f32.gmra.mxu0 %v3914
    %v3916 = vpop.f32.mrf.mxu0
    %v3917 = vadd.f32 0.0, %v3916
    %v3918 = vpop.f32.mrf.mxu0
    %3919 = vdwg.mxu0
    %3920 = vmatprep.subr.mxu0 0.0
    %3921 = vmatpush1.msra.mxu0 0.0
    %3922 = vmatprep.subr.mxu0 0.0
    %3923 = vmatpush1.msra.mxu0 0.0
    %3924 = vmatprep.subr.mxu0 0.0
    %3925 = vmatpush1.msra.mxu0 0.0
    %3926 = vmatprep.subr.mxu0 0.0
    %3927 = vmatpush1.msra.mxu0 0.0
    %3928 = vmatprep.subr.mxu0 0.0
    %3929 = vmatpush1.msra.mxu0 0.0
    %3930 = vmatprep.subr.mxu0 0.0
    %3931 = vmatpush1.msra.mxu0 0.0
    %3932 = vmatprep.subr.mxu0 0.0
    %3933 = vmatpush1.msra.mxu0 0.0
    %3934 = vmatprep.subr.mxu0 0.0
    %3935 = vmatpush1.msra.mxu0 0.0
    %3936 = vmatprep.subr.mxu0 0.0
    %3937 = vmatpush1.msra.mxu0 0.0
    %3938 = vmatprep.subr.mxu0 0.0
    %3939 = vmatpush1.msra.mxu0 0.0
    %3940 = vmatprep.subr.mxu0 0.0
    %3941 = vmatpush1.msra.mxu0 0.0
    %3942 = vmatprep.subr.mxu0 0.0
    %3943 = vmatpush1.msra.mxu0 0.0
    %3944 = vmatprep.subr.mxu0 0.0
    %3945 = vmatpush1.msra.mxu0 0.0
    %3946 = vmatprep.subr.mxu0 0.0
    %3947 = vmatpush1.msra.mxu0 0.0
    %3948 = vmatprep.subr.mxu0 0.0
    %v3949 = vand.u32 %v81, 4294901760
    %v3950 = vsub.f32 %v81, %v3949
    %v3951 = vand.u32 %v3950, 4294901760
    %v3952 = vsub.f32 %v3950, %v3951
    %v3953 = vand.u32 %v3952, 4294901760
    %3954 = vmatpush1.msra.mxu0 %v3953
    %3955 = vmatprep.subr.mxu0 0.0
    %v3956 = vand.u32 %v80, 4294901760
    %v3957 = vsub.f32 %v80, %v3956
    %v3958 = vand.u32 %v3957, 4294901760
    %v3959 = vsub.f32 %v3957, %v3958
    %v3960 = vand.u32 %v3959, 4294901760
    %3961 = vmatpush1.msra.mxu0 %v3960
    %3962 = vmatprep.subr.mxu0 0.0
    %3963 = vmatpush2.msra.mxu0 0.0
    %3964 = vmatprep.subr.mxu0 0.0
    %3965 = vmatpush2.msra.mxu0 0.0
    %3966 = vmatprep.subr.mxu0 0.0
    %3967 = vmatpush2.msra.mxu0 0.0
    %3968 = vmatprep.subr.mxu0 0.0
    %3969 = vmatpush2.msra.mxu0 0.0
    %3970 = vmatprep.subr.mxu0 0.0
    %3971 = vmatpush2.msra.mxu0 0.0
    %3972 = vmatprep.subr.mxu0 0.0
    %3973 = vmatpush2.msra.mxu0 0.0
    %3974 = vmatprep.subr.mxu0 0.0
    %3975 = vmatpush2.msra.mxu0 0.0
    %3976 = vmatprep.subr.mxu0 0.0
    %3977 = vmatpush2.msra.mxu0 0.0
    %3978 = vmatprep.subr.mxu0 0.0
    %3979 = vmatpush2.msra.mxu0 0.0
    %3980 = vmatprep.subr.mxu0 0.0
    %3981 = vmatpush2.msra.mxu0 0.0
    %3982 = vmatprep.subr.mxu0 0.0
    %3983 = vmatpush2.msra.mxu0 0.0
    %3984 = vmatprep.subr.mxu0 0.0
    %3985 = vmatpush2.msra.mxu0 0.0
    %3986 = vmatprep.subr.mxu0 0.0
    %3987 = vmatpush2.msra.mxu0 0.0
    %3988 = vmatprep.subr.mxu0 0.0
    %3989 = vmatpush2.msra.mxu0 0.0
    %3990 = vmatprep.subr.mxu0 0.0
    %3991 = vmatpush2.msra.mxu0 0.0
    %3992 = vmatprep.subr.mxu0 0.0
    %3993 = vmatpush2.msra.mxu0 0.0
    %3994 = vmatprep.mubr.f32.mxu0 0.0
    %v3995 = vand.u32 %v3841, 4294901760
    %3996 = vmatmul.mubr.f32.gmra.mxu0 %v3995
    %v3997 = vpop.f32.mrf.mxu0
    %v3998 = vadd.f32 %v3917, %v3997
    %v3999 = vpop.f32.mrf.mxu0
    %4000 = vdwg.mxu0
    %4001 = vmatprep.subr.mxu0 0.0
    %4002 = vmatpush1.msra.mxu0 0.0
    %4003 = vmatprep.subr.mxu0 0.0
    %4004 = vmatpush1.msra.mxu0 0.0
    %4005 = vmatprep.subr.mxu0 0.0
    %4006 = vmatpush1.msra.mxu0 0.0
    %4007 = vmatprep.subr.mxu0 0.0
    %4008 = vmatpush1.msra.mxu0 0.0
    %4009 = vmatprep.subr.mxu0 0.0
    %4010 = vmatpush1.msra.mxu0 0.0
    %4011 = vmatprep.subr.mxu0 0.0
    %4012 = vmatpush1.msra.mxu0 0.0
    %4013 = vmatprep.subr.mxu0 0.0
    %4014 = vmatpush1.msra.mxu0 0.0
    %4015 = vmatprep.subr.mxu0 0.0
    %4016 = vmatpush1.msra.mxu0 0.0
    %4017 = vmatprep.subr.mxu0 0.0
    %4018 = vmatpush1.msra.mxu0 0.0
    %4019 = vmatprep.subr.mxu0 0.0
    %4020 = vmatpush1.msra.mxu0 0.0
    %4021 = vmatprep.subr.mxu0 0.0
    %4022 = vmatpush1.msra.mxu0 0.0
    %4023 = vmatprep.subr.mxu0 0.0
    %4024 = vmatpush1.msra.mxu0 0.0
    %4025 = vmatprep.subr.mxu0 0.0
    %4026 = vmatpush1.msra.mxu0 0.0
    %4027 = vmatprep.subr.mxu0 0.0
    %4028 = vmatpush1.msra.mxu0 0.0
    %4029 = vmatprep.subr.mxu0 0.0
    %v4030 = vand.u32 %v81, 4294901760
    %v4031 = vsub.f32 %v81, %v4030
    %4032 = vmatpush1.msra.mxu0 %v4031
    %4033 = vmatprep.subr.mxu0 0.0
    %v4034 = vand.u32 %v80, 4294901760
    %v4035 = vsub.f32 %v80, %v4034
    %4036 = vmatpush1.msra.mxu0 %v4035
    %4037 = vmatprep.subr.mxu0 0.0
    %4038 = vmatpush2.msra.mxu0 0.0
    %4039 = vmatprep.subr.mxu0 0.0
    %4040 = vmatpush2.msra.mxu0 0.0
    %4041 = vmatprep.subr.mxu0 0.0
    %4042 = vmatpush2.msra.mxu0 0.0
    %4043 = vmatprep.subr.mxu0 0.0
    %4044 = vmatpush2.msra.mxu0 0.0
    %4045 = vmatprep.subr.mxu0 0.0
    %4046 = vmatpush2.msra.mxu0 0.0
    %4047 = vmatprep.subr.mxu0 0.0
    %4048 = vmatpush2.msra.mxu0 0.0
    %4049 = vmatprep.subr.mxu0 0.0
    %4050 = vmatpush2.msra.mxu0 0.0
    %4051 = vmatprep.subr.mxu0 0.0
    %4052 = vmatpush2.msra.mxu0 0.0
    %4053 = vmatprep.subr.mxu0 0.0
    %4054 = vmatpush2.msra.mxu0 0.0
    %4055 = vmatprep.subr.mxu0 0.0
    %4056 = vmatpush2.msra.mxu0 0.0
    %4057 = vmatprep.subr.mxu0 0.0
    %4058 = vmatpush2.msra.mxu0 0.0
    %4059 = vmatprep.subr.mxu0 0.0
    %4060 = vmatpush2.msra.mxu0 0.0
    %4061 = vmatprep.subr.mxu0 0.0
    %4062 = vmatpush2.msra.mxu0 0.0
    %4063 = vmatprep.subr.mxu0 0.0
    %4064 = vmatpush2.msra.mxu0 0.0
    %4065 = vmatprep.subr.mxu0 0.0
    %4066 = vmatpush2.msra.mxu0 0.0
    %4067 = vmatprep.subr.mxu0 0.0
    %4068 = vmatpush2.msra.mxu0 0.0
    %4069 = vmatprep.mubr.f32.mxu0 0.0
    %v4070 = vand.u32 %v3841, 4294901760
    %v4071 = vsub.f32 %v3841, %v4070
    %4072 = vmatmul.mubr.f32.gmra.mxu0 %v4071
    %v4073 = vpop.f32.mrf.mxu0
    %v4074 = vadd.f32 %v3998, %v4073
    %v4075 = vpop.f32.mrf.mxu0
    %4076 = vdwg.mxu0
    %4077 = vmatprep.subr.mxu0 0.0
    %4078 = vmatpush1.msra.mxu0 0.0
    %4079 = vmatprep.subr.mxu0 0.0
    %4080 = vmatpush1.msra.mxu0 0.0
    %4081 = vmatprep.subr.mxu0 0.0
    %4082 = vmatpush1.msra.mxu0 0.0
    %4083 = vmatprep.subr.mxu0 0.0
    %4084 = vmatpush1.msra.mxu0 0.0
    %4085 = vmatprep.subr.mxu0 0.0
    %4086 = vmatpush1.msra.mxu0 0.0
    %4087 = vmatprep.subr.mxu0 0.0
    %4088 = vmatpush1.msra.mxu0 0.0
    %4089 = vmatprep.subr.mxu0 0.0
    %4090 = vmatpush1.msra.mxu0 0.0
    %4091 = vmatprep.subr.mxu0 0.0
    %4092 = vmatpush1.msra.mxu0 0.0
    %4093 = vmatprep.subr.mxu0 0.0
    %4094 = vmatpush1.msra.mxu0 0.0
    %4095 = vmatprep.subr.mxu0 0.0
    %4096 = vmatpush1.msra.mxu0 0.0
    %4097 = vmatprep.subr.mxu0 0.0
    %4098 = vmatpush1.msra.mxu0 0.0
    %4099 = vmatprep.subr.mxu0 0.0
    %4100 = vmatpush1.msra.mxu0 0.0
    %4101 = vmatprep.subr.mxu0 0.0
    %4102 = vmatpush1.msra.mxu0 0.0
    %4103 = vmatprep.subr.mxu0 0.0
    %4104 = vmatpush1.msra.mxu0 0.0
    %4105 = vmatprep.subr.mxu0 0.0
    %v4106 = vand.u32 %v81, 4294901760
    %4107 = vmatpush1.msra.mxu0 %v4106
    %4108 = vmatprep.subr.mxu0 0.0
    %v4109 = vand.u32 %v80, 4294901760
    %4110 = vmatpush1.msra.mxu0 %v4109
    %4111 = vmatprep.subr.mxu0 0.0
    %4112 = vmatpush2.msra.mxu0 0.0
    %4113 = vmatprep.subr.mxu0 0.0
    %4114 = vmatpush2.msra.mxu0 0.0
    %4115 = vmatprep.subr.mxu0 0.0
    %4116 = vmatpush2.msra.mxu0 0.0
    %4117 = vmatprep.subr.mxu0 0.0
    %4118 = vmatpush2.msra.mxu0 0.0
    %4119 = vmatprep.subr.mxu0 0.0
    %4120 = vmatpush2.msra.mxu0 0.0
    %4121 = vmatprep.subr.mxu0 0.0
    %4122 = vmatpush2.msra.mxu0 0.0
    %4123 = vmatprep.subr.mxu0 0.0
    %4124 = vmatpush2.msra.mxu0 0.0
    %4125 = vmatprep.subr.mxu0 0.0
    %4126 = vmatpush2.msra.mxu0 0.0
    %4127 = vmatprep.subr.mxu0 0.0
    %4128 = vmatpush2.msra.mxu0 0.0
    %4129 = vmatprep.subr.mxu0 0.0
    %4130 = vmatpush2.msra.mxu0 0.0
    %4131 = vmatprep.subr.mxu0 0.0
    %4132 = vmatpush2.msra.mxu0 0.0
    %4133 = vmatprep.subr.mxu0 0.0
    %4134 = vmatpush2.msra.mxu0 0.0
    %4135 = vmatprep.subr.mxu0 0.0
    %4136 = vmatpush2.msra.mxu0 0.0
    %4137 = vmatprep.subr.mxu0 0.0
    %4138 = vmatpush2.msra.mxu0 0.0
    %4139 = vmatprep.subr.mxu0 0.0
    %4140 = vmatpush2.msra.mxu0 0.0
    %4141 = vmatprep.subr.mxu0 0.0
    %4142 = vmatpush2.msra.mxu0 0.0
    %4143 = vmatprep.mubr.f32.mxu0 0.0
    %v4144 = vand.u32 %v3841, 4294901760
    %v4145 = vsub.f32 %v3841, %v4144
    %v4146 = vand.u32 %v4145, 4294901760
    %4147 = vmatmul.mubr.f32.gmra.mxu0 %v4146
    %v4148 = vpop.f32.mrf.mxu0
    %v4149 = vadd.f32 %v4074, %v4148
    %v4150 = vpop.f32.mrf.mxu0
    %4151 = vdwg.mxu0
    %4152 = vmatprep.subr.mxu0 0.0
    %4153 = vmatpush1.msra.mxu0 0.0
    %4154 = vmatprep.subr.mxu0 0.0
    %4155 = vmatpush1.msra.mxu0 0.0
    %4156 = vmatprep.subr.mxu0 0.0
    %4157 = vmatpush1.msra.mxu0 0.0
    %4158 = vmatprep.subr.mxu0 0.0
    %4159 = vmatpush1.msra.mxu0 0.0
    %4160 = vmatprep.subr.mxu0 0.0
    %4161 = vmatpush1.msra.mxu0 0.0
    %4162 = vmatprep.subr.mxu0 0.0
    %4163 = vmatpush1.msra.mxu0 0.0
    %4164 = vmatprep.subr.mxu0 0.0
    %4165 = vmatpush1.msra.mxu0 0.0
    %4166 = vmatprep.subr.mxu0 0.0
    %4167 = vmatpush1.msra.mxu0 0.0
    %4168 = vmatprep.subr.mxu0 0.0
    %4169 = vmatpush1.msra.mxu0 0.0
    %4170 = vmatprep.subr.mxu0 0.0
    %4171 = vmatpush1.msra.mxu0 0.0
    %4172 = vmatprep.subr.mxu0 0.0
    %4173 = vmatpush1.msra.mxu0 0.0
    %4174 = vmatprep.subr.mxu0 0.0
    %4175 = vmatpush1.msra.mxu0 0.0
    %4176 = vmatprep.subr.mxu0 0.0
    %4177 = vmatpush1.msra.mxu0 0.0
    %4178 = vmatprep.subr.mxu0 0.0
    %4179 = vmatpush1.msra.mxu0 0.0
    %4180 = vmatprep.subr.mxu0 0.0
    %v4181 = vand.u32 %v81, 4294901760
    %v4182 = vsub.f32 %v81, %v4181
    %v4183 = vand.u32 %v4182, 4294901760
    %4184 = vmatpush1.msra.mxu0 %v4183
    %4185 = vmatprep.subr.mxu0 0.0
    %v4186 = vand.u32 %v80, 4294901760
    %v4187 = vsub.f32 %v80, %v4186
    %v4188 = vand.u32 %v4187, 4294901760
    %4189 = vmatpush1.msra.mxu0 %v4188
    %4190 = vmatprep.subr.mxu0 0.0
    %4191 = vmatpush2.msra.mxu0 0.0
    %4192 = vmatprep.subr.mxu0 0.0
    %4193 = vmatpush2.msra.mxu0 0.0
    %4194 = vmatprep.subr.mxu0 0.0
    %4195 = vmatpush2.msra.mxu0 0.0
    %4196 = vmatprep.subr.mxu0 0.0
    %4197 = vmatpush2.msra.mxu0 0.0
    %4198 = vmatprep.subr.mxu0 0.0
    %4199 = vmatpush2.msra.mxu0 0.0
    %4200 = vmatprep.subr.mxu0 0.0
    %4201 = vmatpush2.msra.mxu0 0.0
    %4202 = vmatprep.subr.mxu0 0.0
    %4203 = vmatpush2.msra.mxu0 0.0
    %4204 = vmatprep.subr.mxu0 0.0
    %4205 = vmatpush2.msra.mxu0 0.0
    %4206 = vmatprep.subr.mxu0 0.0
    %4207 = vmatpush2.msra.mxu0 0.0
    %4208 = vmatprep.subr.mxu0 0.0
    %4209 = vmatpush2.msra.mxu0 0.0
    %4210 = vmatprep.subr.mxu0 0.0
    %4211 = vmatpush2.msra.mxu0 0.0
    %4212 = vmatprep.subr.mxu0 0.0
    %4213 = vmatpush2.msra.mxu0 0.0
    %4214 = vmatprep.subr.mxu0 0.0
    %4215 = vmatpush2.msra.mxu0 0.0
    %4216 = vmatprep.subr.mxu0 0.0
    %4217 = vmatpush2.msra.mxu0 0.0
    %4218 = vmatprep.subr.mxu0 0.0
    %4219 = vmatpush2.msra.mxu0 0.0
    %4220 = vmatprep.subr.mxu0 0.0
    %4221 = vmatpush2.msra.mxu0 0.0
    %4222 = vmatprep.mubr.f32.mxu0 0.0
    %v4223 = vand.u32 %v3841, 4294901760
    %4224 = vmatmul.mubr.f32.gmra.mxu0 %v4223
    %v4225 = vpop.f32.mrf.mxu0
    %v4226 = vadd.f32 %v4149, %v4225
    %v4227 = vpop.f32.mrf.mxu0
    %4228 = vdwg.mxu0
    %4229 = vmatprep.subr.mxu0 0.0
    %4230 = vmatpush1.msra.mxu0 0.0
    %4231 = vmatprep.subr.mxu0 0.0
    %4232 = vmatpush1.msra.mxu0 0.0
    %4233 = vmatprep.subr.mxu0 0.0
    %4234 = vmatpush1.msra.mxu0 0.0
    %4235 = vmatprep.subr.mxu0 0.0
    %4236 = vmatpush1.msra.mxu0 0.0
    %4237 = vmatprep.subr.mxu0 0.0
    %4238 = vmatpush1.msra.mxu0 0.0
    %4239 = vmatprep.subr.mxu0 0.0
    %4240 = vmatpush1.msra.mxu0 0.0
    %4241 = vmatprep.subr.mxu0 0.0
    %4242 = vmatpush1.msra.mxu0 0.0
    %4243 = vmatprep.subr.mxu0 0.0
    %4244 = vmatpush1.msra.mxu0 0.0
    %4245 = vmatprep.subr.mxu0 0.0
    %4246 = vmatpush1.msra.mxu0 0.0
    %4247 = vmatprep.subr.mxu0 0.0
    %4248 = vmatpush1.msra.mxu0 0.0
    %4249 = vmatprep.subr.mxu0 0.0
    %4250 = vmatpush1.msra.mxu0 0.0
    %4251 = vmatprep.subr.mxu0 0.0
    %4252 = vmatpush1.msra.mxu0 0.0
    %4253 = vmatprep.subr.mxu0 0.0
    %4254 = vmatpush1.msra.mxu0 0.0
    %4255 = vmatprep.subr.mxu0 0.0
    %4256 = vmatpush1.msra.mxu0 0.0
    %4257 = vmatprep.subr.mxu0 0.0
    %v4258 = vand.u32 %v81, 4294901760
    %4259 = vmatpush1.msra.mxu0 %v4258
    %4260 = vmatprep.subr.mxu0 0.0
    %v4261 = vand.u32 %v80, 4294901760
    %4262 = vmatpush1.msra.mxu0 %v4261
    %4263 = vmatprep.subr.mxu0 0.0
    %4264 = vmatpush2.msra.mxu0 0.0
    %4265 = vmatprep.subr.mxu0 0.0
    %4266 = vmatpush2.msra.mxu0 0.0
    %4267 = vmatprep.subr.mxu0 0.0
    %4268 = vmatpush2.msra.mxu0 0.0
    %4269 = vmatprep.subr.mxu0 0.0
    %4270 = vmatpush2.msra.mxu0 0.0
    %4271 = vmatprep.subr.mxu0 0.0
    %4272 = vmatpush2.msra.mxu0 0.0
    %4273 = vmatprep.subr.mxu0 0.0
    %4274 = vmatpush2.msra.mxu0 0.0
    %4275 = vmatprep.subr.mxu0 0.0
    %4276 = vmatpush2.msra.mxu0 0.0
    %4277 = vmatprep.subr.mxu0 0.0
    %4278 = vmatpush2.msra.mxu0 0.0
    %4279 = vmatprep.subr.mxu0 0.0
    %4280 = vmatpush2.msra.mxu0 0.0
    %4281 = vmatprep.subr.mxu0 0.0
    %4282 = vmatpush2.msra.mxu0 0.0
    %4283 = vmatprep.subr.mxu0 0.0
    %4284 = vmatpush2.msra.mxu0 0.0
    %4285 = vmatprep.subr.mxu0 0.0
    %4286 = vmatpush2.msra.mxu0 0.0
    %4287 = vmatprep.subr.mxu0 0.0
    %4288 = vmatpush2.msra.mxu0 0.0
    %4289 = vmatprep.subr.mxu0 0.0
    %4290 = vmatpush2.msra.mxu0 0.0
    %4291 = vmatprep.subr.mxu0 0.0
    %4292 = vmatpush2.msra.mxu0 0.0
    %4293 = vmatprep.subr.mxu0 0.0
    %4294 = vmatpush2.msra.mxu0 0.0
    %4295 = vmatprep.mubr.f32.mxu0 0.0
    %v4296 = vand.u32 %v3841, 4294901760
    %4297 = vmatmul.mubr.f32.gmra.mxu0 %v4296
    %v4298 = vpop.f32.mrf.mxu0
    %v4299 = vadd.f32 %v4226, %v4298
    %v4300 = vpop.f32.mrf.mxu0
    %4301 = vdwg.mxu0
    %v4303 = vsel %vm769, %v1027, 0
    %4305 = vmatprep.subr.mxu0 0.0
    %4306 = vmatpush1.msra.mxu0 0.0
    %4307 = vmatprep.subr.mxu0 0.0
    %4308 = vmatpush1.msra.mxu0 0.0
    %4309 = vmatprep.subr.mxu0 0.0
    %4310 = vmatpush1.msra.mxu0 0.0
    %4311 = vmatprep.subr.mxu0 0.0
    %4312 = vmatpush1.msra.mxu0 0.0
    %4313 = vmatprep.subr.mxu0 0.0
    %4314 = vmatpush1.msra.mxu0 0.0
    %4315 = vmatprep.subr.mxu0 0.0
    %4316 = vmatpush1.msra.mxu0 0.0
    %4317 = vmatprep.subr.mxu0 0.0
    %4318 = vmatpush1.msra.mxu0 0.0
    %4319 = vmatprep.subr.mxu0 0.0
    %4320 = vmatpush1.msra.mxu0 0.0
    %4321 = vmatprep.subr.mxu0 0.0
    %4322 = vmatpush1.msra.mxu0 0.0
    %4323 = vmatprep.subr.mxu0 0.0
    %4324 = vmatpush1.msra.mxu0 0.0
    %4325 = vmatprep.subr.mxu0 0.0
    %4326 = vmatpush1.msra.mxu0 0.0
    %4327 = vmatprep.subr.mxu0 0.0
    %4328 = vmatpush1.msra.mxu0 0.0
    %4329 = vmatprep.subr.mxu0 0.0
    %4330 = vmatpush1.msra.mxu0 0.0
    %4331 = vmatprep.subr.mxu0 0.0
    %4332 = vmatpush1.msra.mxu0 0.0
    %4333 = vmatprep.subr.mxu0 0.0
    %v4334 = vand.u32 %v83, 4294901760
    %4335 = vmatpush1.msra.mxu0 %v4334
    %4336 = vmatprep.subr.mxu0 0.0
    %v4337 = vand.u32 %v82, 4294901760
    %4338 = vmatpush1.msra.mxu0 %v4337
    %4339 = vmatprep.subr.mxu0 0.0
    %4340 = vmatpush2.msra.mxu0 0.0
    %4341 = vmatprep.subr.mxu0 0.0
    %4342 = vmatpush2.msra.mxu0 0.0
    %4343 = vmatprep.subr.mxu0 0.0
    %4344 = vmatpush2.msra.mxu0 0.0
    %4345 = vmatprep.subr.mxu0 0.0
    %4346 = vmatpush2.msra.mxu0 0.0
    %4347 = vmatprep.subr.mxu0 0.0
    %4348 = vmatpush2.msra.mxu0 0.0
    %4349 = vmatprep.subr.mxu0 0.0
    %4350 = vmatpush2.msra.mxu0 0.0
    %4351 = vmatprep.subr.mxu0 0.0
    %4352 = vmatpush2.msra.mxu0 0.0
    %4353 = vmatprep.subr.mxu0 0.0
    %4354 = vmatpush2.msra.mxu0 0.0
    %4355 = vmatprep.subr.mxu0 0.0
    %4356 = vmatpush2.msra.mxu0 0.0
    %4357 = vmatprep.subr.mxu0 0.0
    %4358 = vmatpush2.msra.mxu0 0.0
    %4359 = vmatprep.subr.mxu0 0.0
    %4360 = vmatpush2.msra.mxu0 0.0
    %4361 = vmatprep.subr.mxu0 0.0
    %4362 = vmatpush2.msra.mxu0 0.0
    %4363 = vmatprep.subr.mxu0 0.0
    %4364 = vmatpush2.msra.mxu0 0.0
    %4365 = vmatprep.subr.mxu0 0.0
    %4366 = vmatpush2.msra.mxu0 0.0
    %4367 = vmatprep.subr.mxu0 0.0
    %4368 = vmatpush2.msra.mxu0 0.0
    %4369 = vmatprep.subr.mxu0 0.0
    %4370 = vmatpush2.msra.mxu0 0.0
    %4371 = vmatprep.mubr.f32.mxu0 0.0
    %v4372 = vand.u32 %v4303, 4294901760
    %v4373 = vsub.f32 %v4303, %v4372
    %v4374 = vand.u32 %v4373, 4294901760
    %v4375 = vsub.f32 %v4373, %v4374
    %v4376 = vand.u32 %v4375, 4294901760
    %4377 = vmatmul.mubr.f32.gmra.mxu0 %v4376
    %v4378 = vpop.f32.mrf.mxu0
    %v4379 = vadd.f32 0.0, %v4378
    %v4380 = vpop.f32.mrf.mxu0
    %4381 = vdwg.mxu0
    %4382 = vmatprep.subr.mxu0 0.0
    %4383 = vmatpush1.msra.mxu0 0.0
    %4384 = vmatprep.subr.mxu0 0.0
    %4385 = vmatpush1.msra.mxu0 0.0
    %4386 = vmatprep.subr.mxu0 0.0
    %4387 = vmatpush1.msra.mxu0 0.0
    %4388 = vmatprep.subr.mxu0 0.0
    %4389 = vmatpush1.msra.mxu0 0.0
    %4390 = vmatprep.subr.mxu0 0.0
    %4391 = vmatpush1.msra.mxu0 0.0
    %4392 = vmatprep.subr.mxu0 0.0
    %4393 = vmatpush1.msra.mxu0 0.0
    %4394 = vmatprep.subr.mxu0 0.0
    %4395 = vmatpush1.msra.mxu0 0.0
    %4396 = vmatprep.subr.mxu0 0.0
    %4397 = vmatpush1.msra.mxu0 0.0
    %4398 = vmatprep.subr.mxu0 0.0
    %4399 = vmatpush1.msra.mxu0 0.0
    %4400 = vmatprep.subr.mxu0 0.0
    %4401 = vmatpush1.msra.mxu0 0.0
    %4402 = vmatprep.subr.mxu0 0.0
    %4403 = vmatpush1.msra.mxu0 0.0
    %4404 = vmatprep.subr.mxu0 0.0
    %4405 = vmatpush1.msra.mxu0 0.0
    %4406 = vmatprep.subr.mxu0 0.0
    %4407 = vmatpush1.msra.mxu0 0.0
    %4408 = vmatprep.subr.mxu0 0.0
    %4409 = vmatpush1.msra.mxu0 0.0
    %4410 = vmatprep.subr.mxu0 0.0
    %v4411 = vand.u32 %v83, 4294901760
    %v4412 = vsub.f32 %v83, %v4411
    %v4413 = vand.u32 %v4412, 4294901760
    %v4414 = vsub.f32 %v4412, %v4413
    %v4415 = vand.u32 %v4414, 4294901760
    %4416 = vmatpush1.msra.mxu0 %v4415
    %4417 = vmatprep.subr.mxu0 0.0
    %v4418 = vand.u32 %v82, 4294901760
    %v4419 = vsub.f32 %v82, %v4418
    %v4420 = vand.u32 %v4419, 4294901760
    %v4421 = vsub.f32 %v4419, %v4420
    %v4422 = vand.u32 %v4421, 4294901760
    %4423 = vmatpush1.msra.mxu0 %v4422
    %4424 = vmatprep.subr.mxu0 0.0
    %4425 = vmatpush2.msra.mxu0 0.0
    %4426 = vmatprep.subr.mxu0 0.0
    %4427 = vmatpush2.msra.mxu0 0.0
    %4428 = vmatprep.subr.mxu0 0.0
    %4429 = vmatpush2.msra.mxu0 0.0
    %4430 = vmatprep.subr.mxu0 0.0
    %4431 = vmatpush2.msra.mxu0 0.0
    %4432 = vmatprep.subr.mxu0 0.0
    %4433 = vmatpush2.msra.mxu0 0.0
    %4434 = vmatprep.subr.mxu0 0.0
    %4435 = vmatpush2.msra.mxu0 0.0
    %4436 = vmatprep.subr.mxu0 0.0
    %4437 = vmatpush2.msra.mxu0 0.0
    %4438 = vmatprep.subr.mxu0 0.0
    %4439 = vmatpush2.msra.mxu0 0.0
    %4440 = vmatprep.subr.mxu0 0.0
    %4441 = vmatpush2.msra.mxu0 0.0
    %4442 = vmatprep.subr.mxu0 0.0
    %4443 = vmatpush2.msra.mxu0 0.0
    %4444 = vmatprep.subr.mxu0 0.0
    %4445 = vmatpush2.msra.mxu0 0.0
    %4446 = vmatprep.subr.mxu0 0.0
    %4447 = vmatpush2.msra.mxu0 0.0
    %4448 = vmatprep.subr.mxu0 0.0
    %4449 = vmatpush2.msra.mxu0 0.0
    %4450 = vmatprep.subr.mxu0 0.0
    %4451 = vmatpush2.msra.mxu0 0.0
    %4452 = vmatprep.subr.mxu0 0.0
    %4453 = vmatpush2.msra.mxu0 0.0
    %4454 = vmatprep.subr.mxu0 0.0
    %4455 = vmatpush2.msra.mxu0 0.0
    %4456 = vmatprep.mubr.f32.mxu0 0.0
    %v4457 = vand.u32 %v4303, 4294901760
    %4458 = vmatmul.mubr.f32.gmra.mxu0 %v4457
    %v4459 = vpop.f32.mrf.mxu0
    %v4460 = vadd.f32 %v4379, %v4459
    %v4461 = vpop.f32.mrf.mxu0
    %4462 = vdwg.mxu0
    %4463 = vmatprep.subr.mxu0 0.0
    %4464 = vmatpush1.msra.mxu0 0.0
    %4465 = vmatprep.subr.mxu0 0.0
    %4466 = vmatpush1.msra.mxu0 0.0
    %4467 = vmatprep.subr.mxu0 0.0
    %4468 = vmatpush1.msra.mxu0 0.0
    %4469 = vmatprep.subr.mxu0 0.0
    %4470 = vmatpush1.msra.mxu0 0.0
    %4471 = vmatprep.subr.mxu0 0.0
    %4472 = vmatpush1.msra.mxu0 0.0
    %4473 = vmatprep.subr.mxu0 0.0
    %4474 = vmatpush1.msra.mxu0 0.0
    %4475 = vmatprep.subr.mxu0 0.0
    %4476 = vmatpush1.msra.mxu0 0.0
    %4477 = vmatprep.subr.mxu0 0.0
    %4478 = vmatpush1.msra.mxu0 0.0
    %4479 = vmatprep.subr.mxu0 0.0
    %4480 = vmatpush1.msra.mxu0 0.0
    %4481 = vmatprep.subr.mxu0 0.0
    %4482 = vmatpush1.msra.mxu0 0.0
    %4483 = vmatprep.subr.mxu0 0.0
    %4484 = vmatpush1.msra.mxu0 0.0
    %4485 = vmatprep.subr.mxu0 0.0
    %4486 = vmatpush1.msra.mxu0 0.0
    %4487 = vmatprep.subr.mxu0 0.0
    %4488 = vmatpush1.msra.mxu0 0.0
    %4489 = vmatprep.subr.mxu0 0.0
    %4490 = vmatpush1.msra.mxu0 0.0
    %4491 = vmatprep.subr.mxu0 0.0
    %v4492 = vand.u32 %v83, 4294901760
    %v4493 = vsub.f32 %v83, %v4492
    %4494 = vmatpush1.msra.mxu0 %v4493
    %4495 = vmatprep.subr.mxu0 0.0
    %v4496 = vand.u32 %v82, 4294901760
    %v4497 = vsub.f32 %v82, %v4496
    %4498 = vmatpush1.msra.mxu0 %v4497
    %4499 = vmatprep.subr.mxu0 0.0
    %4500 = vmatpush2.msra.mxu0 0.0
    %4501 = vmatprep.subr.mxu0 0.0
    %4502 = vmatpush2.msra.mxu0 0.0
    %4503 = vmatprep.subr.mxu0 0.0
    %4504 = vmatpush2.msra.mxu0 0.0
    %4505 = vmatprep.subr.mxu0 0.0
    %4506 = vmatpush2.msra.mxu0 0.0
    %4507 = vmatprep.subr.mxu0 0.0
    %4508 = vmatpush2.msra.mxu0 0.0
    %4509 = vmatprep.subr.mxu0 0.0
    %4510 = vmatpush2.msra.mxu0 0.0
    %4511 = vmatprep.subr.mxu0 0.0
    %4512 = vmatpush2.msra.mxu0 0.0
    %4513 = vmatprep.subr.mxu0 0.0
    %4514 = vmatpush2.msra.mxu0 0.0
    %4515 = vmatprep.subr.mxu0 0.0
    %4516 = vmatpush2.msra.mxu0 0.0
    %4517 = vmatprep.subr.mxu0 0.0
    %4518 = vmatpush2.msra.mxu0 0.0
    %4519 = vmatprep.subr.mxu0 0.0
    %4520 = vmatpush2.msra.mxu0 0.0
    %4521 = vmatprep.subr.mxu0 0.0
    %4522 = vmatpush2.msra.mxu0 0.0
    %4523 = vmatprep.subr.mxu0 0.0
    %4524 = vmatpush2.msra.mxu0 0.0
    %4525 = vmatprep.subr.mxu0 0.0
    %4526 = vmatpush2.msra.mxu0 0.0
    %4527 = vmatprep.subr.mxu0 0.0
    %4528 = vmatpush2.msra.mxu0 0.0
    %4529 = vmatprep.subr.mxu0 0.0
    %4530 = vmatpush2.msra.mxu0 0.0
    %4531 = vmatprep.mubr.f32.mxu0 0.0
    %v4532 = vand.u32 %v4303, 4294901760
    %v4533 = vsub.f32 %v4303, %v4532
    %4534 = vmatmul.mubr.f32.gmra.mxu0 %v4533
    %v4535 = vpop.f32.mrf.mxu0
    %v4536 = vadd.f32 %v4460, %v4535
    %v4537 = vpop.f32.mrf.mxu0
    %4538 = vdwg.mxu0
    %4539 = vmatprep.subr.mxu0 0.0
    %4540 = vmatpush1.msra.mxu0 0.0
    %4541 = vmatprep.subr.mxu0 0.0
    %4542 = vmatpush1.msra.mxu0 0.0
    %4543 = vmatprep.subr.mxu0 0.0
    %4544 = vmatpush1.msra.mxu0 0.0
    %4545 = vmatprep.subr.mxu0 0.0
    %4546 = vmatpush1.msra.mxu0 0.0
    %4547 = vmatprep.subr.mxu0 0.0
    %4548 = vmatpush1.msra.mxu0 0.0
    %4549 = vmatprep.subr.mxu0 0.0
    %4550 = vmatpush1.msra.mxu0 0.0
    %4551 = vmatprep.subr.mxu0 0.0
    %4552 = vmatpush1.msra.mxu0 0.0
    %4553 = vmatprep.subr.mxu0 0.0
    %4554 = vmatpush1.msra.mxu0 0.0
    %4555 = vmatprep.subr.mxu0 0.0
    %4556 = vmatpush1.msra.mxu0 0.0
    %4557 = vmatprep.subr.mxu0 0.0
    %4558 = vmatpush1.msra.mxu0 0.0
    %4559 = vmatprep.subr.mxu0 0.0
    %4560 = vmatpush1.msra.mxu0 0.0
    %4561 = vmatprep.subr.mxu0 0.0
    %4562 = vmatpush1.msra.mxu0 0.0
    %4563 = vmatprep.subr.mxu0 0.0
    %4564 = vmatpush1.msra.mxu0 0.0
    %4565 = vmatprep.subr.mxu0 0.0
    %4566 = vmatpush1.msra.mxu0 0.0
    %4567 = vmatprep.subr.mxu0 0.0
    %v4568 = vand.u32 %v83, 4294901760
    %4569 = vmatpush1.msra.mxu0 %v4568
    %4570 = vmatprep.subr.mxu0 0.0
    %v4571 = vand.u32 %v82, 4294901760
    %4572 = vmatpush1.msra.mxu0 %v4571
    %4573 = vmatprep.subr.mxu0 0.0
    %4574 = vmatpush2.msra.mxu0 0.0
    %4575 = vmatprep.subr.mxu0 0.0
    %4576 = vmatpush2.msra.mxu0 0.0
    %4577 = vmatprep.subr.mxu0 0.0
    %4578 = vmatpush2.msra.mxu0 0.0
    %4579 = vmatprep.subr.mxu0 0.0
    %4580 = vmatpush2.msra.mxu0 0.0
    %4581 = vmatprep.subr.mxu0 0.0
    %4582 = vmatpush2.msra.mxu0 0.0
    %4583 = vmatprep.subr.mxu0 0.0
    %4584 = vmatpush2.msra.mxu0 0.0
    %4585 = vmatprep.subr.mxu0 0.0
    %4586 = vmatpush2.msra.mxu0 0.0
    %4587 = vmatprep.subr.mxu0 0.0
    %4588 = vmatpush2.msra.mxu0 0.0
    %4589 = vmatprep.subr.mxu0 0.0
    %4590 = vmatpush2.msra.mxu0 0.0
    %4591 = vmatprep.subr.mxu0 0.0
    %4592 = vmatpush2.msra.mxu0 0.0
    %4593 = vmatprep.subr.mxu0 0.0
    %4594 = vmatpush2.msra.mxu0 0.0
    %4595 = vmatprep.subr.mxu0 0.0
    %4596 = vmatpush2.msra.mxu0 0.0
    %4597 = vmatprep.subr.mxu0 0.0
    %4598 = vmatpush2.msra.mxu0 0.0
    %4599 = vmatprep.subr.mxu0 0.0
    %4600 = vmatpush2.msra.mxu0 0.0
    %4601 = vmatprep.subr.mxu0 0.0
    %4602 = vmatpush2.msra.mxu0 0.0
    %4603 = vmatprep.subr.mxu0 0.0
    %4604 = vmatpush2.msra.mxu0 0.0
    %4605 = vmatprep.mubr.f32.mxu0 0.0
    %v4606 = vand.u32 %v4303, 4294901760
    %v4607 = vsub.f32 %v4303, %v4606
    %v4608 = vand.u32 %v4607, 4294901760
    %4609 = vmatmul.mubr.f32.gmra.mxu0 %v4608
    %v4610 = vpop.f32.mrf.mxu0
    %v4611 = vadd.f32 %v4536, %v4610
    %v4612 = vpop.f32.mrf.mxu0
    %4613 = vdwg.mxu0
    %4614 = vmatprep.subr.mxu0 0.0
    %4615 = vmatpush1.msra.mxu0 0.0
    %4616 = vmatprep.subr.mxu0 0.0
    %4617 = vmatpush1.msra.mxu0 0.0
    %4618 = vmatprep.subr.mxu0 0.0
    %4619 = vmatpush1.msra.mxu0 0.0
    %4620 = vmatprep.subr.mxu0 0.0
    %4621 = vmatpush1.msra.mxu0 0.0
    %4622 = vmatprep.subr.mxu0 0.0
    %4623 = vmatpush1.msra.mxu0 0.0
    %4624 = vmatprep.subr.mxu0 0.0
    %4625 = vmatpush1.msra.mxu0 0.0
    %4626 = vmatprep.subr.mxu0 0.0
    %4627 = vmatpush1.msra.mxu0 0.0
    %4628 = vmatprep.subr.mxu0 0.0
    %4629 = vmatpush1.msra.mxu0 0.0
    %4630 = vmatprep.subr.mxu0 0.0
    %4631 = vmatpush1.msra.mxu0 0.0
    %4632 = vmatprep.subr.mxu0 0.0
    %4633 = vmatpush1.msra.mxu0 0.0
    %4634 = vmatprep.subr.mxu0 0.0
    %4635 = vmatpush1.msra.mxu0 0.0
    %4636 = vmatprep.subr.mxu0 0.0
    %4637 = vmatpush1.msra.mxu0 0.0
    %4638 = vmatprep.subr.mxu0 0.0
    %4639 = vmatpush1.msra.mxu0 0.0
    %4640 = vmatprep.subr.mxu0 0.0
    %4641 = vmatpush1.msra.mxu0 0.0
    %4642 = vmatprep.subr.mxu0 0.0
    %v4643 = vand.u32 %v83, 4294901760
    %v4644 = vsub.f32 %v83, %v4643
    %v4645 = vand.u32 %v4644, 4294901760
    %4646 = vmatpush1.msra.mxu0 %v4645
    %4647 = vmatprep.subr.mxu0 0.0
    %v4648 = vand.u32 %v82, 4294901760
    %v4649 = vsub.f32 %v82, %v4648
    %v4650 = vand.u32 %v4649, 4294901760
    %4651 = vmatpush1.msra.mxu0 %v4650
    %4652 = vmatprep.subr.mxu0 0.0
    %4653 = vmatpush2.msra.mxu0 0.0
    %4654 = vmatprep.subr.mxu0 0.0
    %4655 = vmatpush2.msra.mxu0 0.0
    %4656 = vmatprep.subr.mxu0 0.0
    %4657 = vmatpush2.msra.mxu0 0.0
    %4658 = vmatprep.subr.mxu0 0.0
    %4659 = vmatpush2.msra.mxu0 0.0
    %4660 = vmatprep.subr.mxu0 0.0
    %4661 = vmatpush2.msra.mxu0 0.0
    %4662 = vmatprep.subr.mxu0 0.0
    %4663 = vmatpush2.msra.mxu0 0.0
    %4664 = vmatprep.subr.mxu0 0.0
    %4665 = vmatpush2.msra.mxu0 0.0
    %4666 = vmatprep.subr.mxu0 0.0
    %4667 = vmatpush2.msra.mxu0 0.0
    %4668 = vmatprep.subr.mxu0 0.0
    %4669 = vmatpush2.msra.mxu0 0.0
    %4670 = vmatprep.subr.mxu0 0.0
    %4671 = vmatpush2.msra.mxu0 0.0
    %4672 = vmatprep.subr.mxu0 0.0
    %4673 = vmatpush2.msra.mxu0 0.0
    %4674 = vmatprep.subr.mxu0 0.0
    %4675 = vmatpush2.msra.mxu0 0.0
    %4676 = vmatprep.subr.mxu0 0.0
    %4677 = vmatpush2.msra.mxu0 0.0
    %4678 = vmatprep.subr.mxu0 0.0
    %4679 = vmatpush2.msra.mxu0 0.0
    %4680 = vmatprep.subr.mxu0 0.0
    %4681 = vmatpush2.msra.mxu0 0.0
    %4682 = vmatprep.subr.mxu0 0.0
    %4683 = vmatpush2.msra.mxu0 0.0
    %4684 = vmatprep.mubr.f32.mxu0 0.0
    %v4685 = vand.u32 %v4303, 4294901760
    %4686 = vmatmul.mubr.f32.gmra.mxu0 %v4685
    %v4687 = vpop.f32.mrf.mxu0
    %v4688 = vadd.f32 %v4611, %v4687
    %v4689 = vpop.f32.mrf.mxu0
    %4690 = vdwg.mxu0
    %4691 = vmatprep.subr.mxu0 0.0
    %4692 = vmatpush1.msra.mxu0 0.0
    %4693 = vmatprep.subr.mxu0 0.0
    %4694 = vmatpush1.msra.mxu0 0.0
    %4695 = vmatprep.subr.mxu0 0.0
    %4696 = vmatpush1.msra.mxu0 0.0
    %4697 = vmatprep.subr.mxu0 0.0
    %4698 = vmatpush1.msra.mxu0 0.0
    %4699 = vmatprep.subr.mxu0 0.0
    %4700 = vmatpush1.msra.mxu0 0.0
    %4701 = vmatprep.subr.mxu0 0.0
    %4702 = vmatpush1.msra.mxu0 0.0
    %4703 = vmatprep.subr.mxu0 0.0
    %4704 = vmatpush1.msra.mxu0 0.0
    %4705 = vmatprep.subr.mxu0 0.0
    %4706 = vmatpush1.msra.mxu0 0.0
    %4707 = vmatprep.subr.mxu0 0.0
    %4708 = vmatpush1.msra.mxu0 0.0
    %4709 = vmatprep.subr.mxu0 0.0
    %4710 = vmatpush1.msra.mxu0 0.0
    %4711 = vmatprep.subr.mxu0 0.0
    %4712 = vmatpush1.msra.mxu0 0.0
    %4713 = vmatprep.subr.mxu0 0.0
    %4714 = vmatpush1.msra.mxu0 0.0
    %4715 = vmatprep.subr.mxu0 0.0
    %4716 = vmatpush1.msra.mxu0 0.0
    %4717 = vmatprep.subr.mxu0 0.0
    %4718 = vmatpush1.msra.mxu0 0.0
    %4719 = vmatprep.subr.mxu0 0.0
    %v4720 = vand.u32 %v83, 4294901760
    %4721 = vmatpush1.msra.mxu0 %v4720
    %4722 = vmatprep.subr.mxu0 0.0
    %v4723 = vand.u32 %v82, 4294901760
    %4724 = vmatpush1.msra.mxu0 %v4723
    %4725 = vmatprep.subr.mxu0 0.0
    %4726 = vmatpush2.msra.mxu0 0.0
    %4727 = vmatprep.subr.mxu0 0.0
    %4728 = vmatpush2.msra.mxu0 0.0
    %4729 = vmatprep.subr.mxu0 0.0
    %4730 = vmatpush2.msra.mxu0 0.0
    %4731 = vmatprep.subr.mxu0 0.0
    %4732 = vmatpush2.msra.mxu0 0.0
    %4733 = vmatprep.subr.mxu0 0.0
    %4734 = vmatpush2.msra.mxu0 0.0
    %4735 = vmatprep.subr.mxu0 0.0
    %4736 = vmatpush2.msra.mxu0 0.0
    %4737 = vmatprep.subr.mxu0 0.0
    %4738 = vmatpush2.msra.mxu0 0.0
    %4739 = vmatprep.subr.mxu0 0.0
    %4740 = vmatpush2.msra.mxu0 0.0
    %4741 = vmatprep.subr.mxu0 0.0
    %4742 = vmatpush2.msra.mxu0 0.0
    %4743 = vmatprep.subr.mxu0 0.0
    %4744 = vmatpush2.msra.mxu0 0.0
    %4745 = vmatprep.subr.mxu0 0.0
    %4746 = vmatpush2.msra.mxu0 0.0
    %4747 = vmatprep.subr.mxu0 0.0
    %4748 = vmatpush2.msra.mxu0 0.0
    %4749 = vmatprep.subr.mxu0 0.0
    %4750 = vmatpush2.msra.mxu0 0.0
    %4751 = vmatprep.subr.mxu0 0.0
    %4752 = vmatpush2.msra.mxu0 0.0
    %4753 = vmatprep.subr.mxu0 0.0
    %4754 = vmatpush2.msra.mxu0 0.0
    %4755 = vmatprep.subr.mxu0 0.0
    %4756 = vmatpush2.msra.mxu0 0.0
    %4757 = vmatprep.mubr.f32.mxu0 0.0
    %v4758 = vand.u32 %v4303, 4294901760
    %4759 = vmatmul.mubr.f32.gmra.mxu0 %v4758
    %v4760 = vpop.f32.mrf.mxu0
    %v4761 = vadd.f32 %v4688, %v4760
    %v4762 = vpop.f32.mrf.mxu0
    %4763 = vdwg.mxu0
    %v4764 = vrcp.pop %v1046
    %v4765 = vrcp.pop %v1049
    %v4766 = vrcp.pop %v1052
    %v4767 = vrcp.pop %v1055
    %v4768 = vrcp.pop %v1058
    %v4769 = vrcp.pop %v1061
    %v4770 = vrcp.pop %v1064
    %v4771 = vrcp.pop %v1067
    %v4772 = vlaneseq
    %v4773 = vshrl.u32 %v4772, 7
    %v4774 = vsub.s32 0, %v4773
    %v4775 = vrot.slane %v4764, %v4774
    %v4776 = vlaneseq
    %v4777 = vshrl.u32 %v4776, 7
    %v4778 = vsub.s32 0, %v4777
    %v4779 = vrot.slane %v4765, %v4778
    %v4780 = vlaneseq
    %v4781 = vshrl.u32 %v4780, 7
    %v4782 = vsub.s32 0, %v4781
    %v4783 = vrot.slane %v4766, %v4782
    %v4784 = vlaneseq
    %v4785 = vshrl.u32 %v4784, 7
    %v4786 = vsub.s32 0, %v4785
    %v4787 = vrot.slane %v4767, %v4786
    %v4788 = vlaneseq
    %v4789 = vshrl.u32 %v4788, 7
    %v4790 = vsub.s32 0, %v4789
    %v4791 = vrot.slane %v4768, %v4790
    %v4792 = vlaneseq
    %v4793 = vshrl.u32 %v4792, 7
    %v4794 = vsub.s32 0, %v4793
    %v4795 = vrot.slane %v4769, %v4794
    %v4796 = vlaneseq
    %v4797 = vshrl.u32 %v4796, 7
    %v4798 = vsub.s32 0, %v4797
    %v4799 = vrot.slane %v4770, %v4798
    %v4800 = vlaneseq
    %v4801 = vshrl.u32 %v4800, 7
    %v4802 = vsub.s32 0, %v4801
    %v4803 = vrot.slane %v4771, %v4802
    %v4804 = vmul.f32 %v1527, %v4775
    %v4805 = vmul.f32 %v1989, %v4779
    %v4806 = vmul.f32 %v2451, %v4783
    %v4807 = vmul.f32 %v2913, %v4787
    %v4808 = vmul.f32 %v3375, %v4791
    %v4809 = vmul.f32 %v3837, %v4795
    %v4810 = vmul.f32 %v4299, %v4799
    %v4811 = vmul.f32 %v4761, %v4803
    %v4812 = vld [vmem:[#allocation6] sm:$0xff]
    %v4813 = vld [vmem:[#allocation6 + $0x8] sm:$0xff]
    %v4814 = vld [vmem:[#allocation6 + $0x10] sm:$0xff]
    %v4815 = vld [vmem:[#allocation6 + $0x18] sm:$0xff]
    %v4816 = vld [vmem:[%s7] sm:$0x1]
    %v4818 = vlaneseq
    %v4819 = vshrl.u32 %v4818, 7
    %v4820 = vsub.s32 0, %v4819
    %v4821 = vrot.slane %v4816, %v4820
    %v4831 = vrot.slane %v4805, 7
    %v4832 = vsel %vm754, %v4831, %v4804
    %v4833 = vrot.slane %v4806, 6
    %v4834 = vsel %vm756, %v4833, %v4832
    %v4835 = vrot.slane %v4807, 5
    %v4836 = vsel %vm758, %v4835, %v4834
    %v4837 = vrot.slane %v4808, 4
    %v4838 = vsel %vm760, %v4837, %v4836
    %v4839 = vrot.slane %v4809, 3
    %v4840 = vsel %vm762, %v4839, %v4838
    %v4841 = vrot.slane %v4810, 2
    %v4842 = vsel %vm764, %v4841, %v4840
    %v4843 = vrot.slane %v4811, 1
    %v4844 = vsel %vm766, %v4843, %v4842
    %v4845 = vsel %vm95, %v4844, 0
    %4847 = vmatprep.subr.mxu0 0.0
    %4848 = vmatpush1.msra.mxu0 0.0
    %4849 = vmatprep.subr.mxu0 0.0
    %4850 = vmatpush1.msra.mxu0 0.0
    %4851 = vmatprep.subr.mxu0 0.0
    %4852 = vmatpush1.msra.mxu0 0.0
    %4853 = vmatprep.subr.mxu0 0.0
    %4854 = vmatpush1.msra.mxu0 0.0
    %4855 = vmatprep.subr.mxu0 0.0
    %4856 = vmatpush1.msra.mxu0 0.0
    %4857 = vmatprep.subr.mxu0 0.0
    %4858 = vmatpush1.msra.mxu0 0.0
    %4859 = vmatprep.subr.mxu0 0.0
    %4860 = vmatpush1.msra.mxu0 0.0
    %4861 = vmatprep.subr.mxu0 0.0
    %4862 = vmatpush1.msra.mxu0 0.0
    %4863 = vmatprep.subr.mxu0 0.0
    %4864 = vmatpush1.msra.mxu0 0.0
    %4865 = vmatprep.subr.mxu0 0.0
    %4866 = vmatpush1.msra.mxu0 0.0
    %4867 = vmatprep.subr.mxu0 0.0
    %4868 = vmatpush1.msra.mxu0 0.0
    %4869 = vmatprep.subr.mxu0 0.0
    %4870 = vmatpush1.msra.mxu0 0.0
    %4871 = vmatprep.subr.mxu0 0.0
    %4872 = vmatpush1.msra.mxu0 %v4815
    %4873 = vmatprep.subr.mxu0 0.0
    %4874 = vmatpush1.msra.mxu0 %v4814
    %4875 = vmatprep.subr.mxu0 0.0
    %4876 = vmatpush1.msra.mxu0 %v4813
    %4877 = vmatprep.subr.mxu0 0.0
    %4878 = vmatpush1.msra.mxu0 %v4812
    %4879 = vmatprep.subr.mxu0 0.0
    %4880 = vmatpush2.msra.mxu0 0.0
    %4881 = vmatprep.subr.mxu0 0.0
    %4882 = vmatpush2.msra.mxu0 0.0
    %4883 = vmatprep.subr.mxu0 0.0
    %4884 = vmatpush2.msra.mxu0 0.0
    %4885 = vmatprep.subr.mxu0 0.0
    %4886 = vmatpush2.msra.mxu0 0.0
    %4887 = vmatprep.subr.mxu0 0.0
    %4888 = vmatpush2.msra.mxu0 0.0
    %4889 = vmatprep.subr.mxu0 0.0
    %4890 = vmatpush2.msra.mxu0 0.0
    %4891 = vmatprep.subr.mxu0 0.0
    %4892 = vmatpush2.msra.mxu0 0.0
    %4893 = vmatprep.subr.mxu0 0.0
    %4894 = vmatpush2.msra.mxu0 0.0
    %4895 = vmatprep.subr.mxu0 0.0
    %4896 = vmatpush2.msra.mxu0 0.0
    %4897 = vmatprep.subr.mxu0 0.0
    %4898 = vmatpush2.msra.mxu0 0.0
    %4899 = vmatprep.subr.mxu0 0.0
    %4900 = vmatpush2.msra.mxu0 0.0
    %4901 = vmatprep.subr.mxu0 0.0
    %4902 = vmatpush2.msra.mxu0 0.0
    %4903 = vmatprep.subr.mxu0 0.0
    %4904 = vmatpush2.msra.mxu0 0.0
    %4905 = vmatprep.subr.mxu0 0.0
    %4906 = vmatpush2.msra.mxu0 0.0
    %4907 = vmatprep.subr.mxu0 0.0
    %4908 = vmatpush2.msra.mxu0 0.0
    %4909 = vmatprep.subr.mxu0 0.0
    %4910 = vmatpush2.msra.mxu0 0.0
    %4911 = vmatprep.mubr.f32.mxu0 0.0
    %4912 = vmatmul.mubr.f32.gmra.mxu0 %v4845
    %v4913 = vpop.f32.mrf.mxu0
    %v4914 = vadd.f32 %v4821, %v4913
    %v4915 = vpop.f32.mrf.mxu0
    %4916 = vdwg.mxu0
    %v4917 = vtanh.pop %v4914
    %v4918 = vld [vmem:[%s8] sm:$0xff]
    %v4919 = vld [vmem:[%s8 + $0x8] sm:$0xff]
    %v4920 = vld [vmem:[%s8 + $0x10] sm:$0xff]
    %v4921 = vld [vmem:[%s8 + $0x18] sm:$0xff]
    %v4922 = vld [vmem:[%s8 + $0x20] sm:$0xff]
    %v4923 = vld [vmem:[%s8 + $0x28] sm:$0xff]
    %v4924 = vld [vmem:[%s8 + $0x30] sm:$0xff]
    %v4925 = vld [vmem:[%s8 + $0x38] sm:$0xff]
    %v4926 = vld [vmem:[%s8 + $0x40] sm:$0xff]
    %v4927 = vld [vmem:[%s8 + $0x48] sm:$0xff]
    %v4928 = vld [vmem:[%s8 + $0x50] sm:$0xff]
    %v4929 = vld [vmem:[%s8 + $0x58] sm:$0xff]
    %v4930 = vld [vmem:[%s8 + $0x60] sm:$0xff]
    %v4931 = vld [vmem:[%s8 + $0x68] sm:$0xff]
    %v4932 = vld [vmem:[%s8 + $0x70] sm:$0xff]
    %v4933 = vld [vmem:[%s8 + $0x78] sm:$0xff]
    %v4934 = vld [vmem:[%s9] sm:$0x1]
    %v4936 = vlaneseq
    %v4937 = vshrl.u32 %v4936, 7
    %v4938 = vsub.s32 0, %v4937
    %v4939 = vrot.slane %v4934, %v4938
    %4941 = vmatprep.subr.mxu0 0.0
    %4942 = vmatpush1.msra.mxu0 %v4933
    %4943 = vmatprep.subr.mxu0 0.0
    %4944 = vmatpush1.msra.mxu0 %v4932
    %4945 = vmatprep.subr.mxu0 0.0
    %4946 = vmatpush1.msra.mxu0 %v4931
    %4947 = vmatprep.subr.mxu0 0.0
    %4948 = vmatpush1.msra.mxu0 %v4930
    %4949 = vmatprep.subr.mxu0 0.0
    %4950 = vmatpush1.msra.mxu0 %v4929
    %4951 = vmatprep.subr.mxu0 0.0
    %4952 = vmatpush1.msra.mxu0 %v4928
    %4953 = vmatprep.subr.mxu0 0.0
    %4954 = vmatpush1.msra.mxu0 %v4927
    %4955 = vmatprep.subr.mxu0 0.0
    %4956 = vmatpush1.msra.mxu0 %v4926
    %4957 = vmatprep.subr.mxu0 0.0
    %4958 = vmatpush1.msra.mxu0 %v4925
    %4959 = vmatprep.subr.mxu0 0.0
    %4960 = vmatpush1.msra.mxu0 %v4924
    %4961 = vmatprep.subr.mxu0 0.0
    %4962 = vmatpush1.msra.mxu0 %v4923
    %4963 = vmatprep.subr.mxu0 0.0
    %4964 = vmatpush1.msra.mxu0 %v4922
    %4965 = vmatprep.subr.mxu0 0.0
    %4966 = vmatpush1.msra.mxu0 %v4921
    %4967 = vmatprep.subr.mxu0 0.0
    %4968 = vmatpush1.msra.mxu0 %v4920
    %4969 = vmatprep.subr.mxu0 0.0
    %4970 = vmatpush1.msra.mxu0 %v4919
    %4971 = vmatprep.subr.mxu0 0.0
    %4972 = vmatpush1.msra.mxu0 %v4918
    %4973 = vmatprep.subr.mxu0 0.0
    %4974 = vmatpush2.msra.mxu0 0.0
    %4975 = vmatprep.subr.mxu0 0.0
    %4976 = vmatpush2.msra.mxu0 0.0
    %4977 = vmatprep.subr.mxu0 0.0
    %4978 = vmatpush2.msra.mxu0 0.0
    %4979 = vmatprep.subr.mxu0 0.0
    %4980 = vmatpush2.msra.mxu0 0.0
    %4981 = vmatprep.subr.mxu0 0.0
    %4982 = vmatpush2.msra.mxu0 0.0
    %4983 = vmatprep.subr.mxu0 0.0
    %4984 = vmatpush2.msra.mxu0 0.0
    %4985 = vmatprep.subr.mxu0 0.0
    %4986 = vmatpush2.msra.mxu0 0.0
    %4987 = vmatprep.subr.mxu0 0.0
    %4988 = vmatpush2.msra.mxu0 0.0
    %4989 = vmatprep.subr.mxu0 0.0
    %4990 = vmatpush2.msra.mxu0 0.0
    %4991 = vmatprep.subr.mxu0 0.0
    %4992 = vmatpush2.msra.mxu0 0.0
    %4993 = vmatprep.subr.mxu0 0.0
    %4994 = vmatpush2.msra.mxu0 0.0
    %4995 = vmatprep.subr.mxu0 0.0
    %4996 = vmatpush2.msra.mxu0 0.0
    %4997 = vmatprep.subr.mxu0 0.0
    %4998 = vmatpush2.msra.mxu0 0.0
    %4999 = vmatprep.subr.mxu0 0.0
    %5000 = vmatpush2.msra.mxu0 0.0
    %5001 = vmatprep.subr.mxu0 0.0
    %5002 = vmatpush2.msra.mxu0 0.0
    %5003 = vmatprep.subr.mxu0 0.0
    %5004 = vmatpush2.msra.mxu0 0.0
    %5005 = vmatprep.mubr.f32.mxu0 0.0
    %5006 = vmatmul.mubr.f32.gmra.mxu0 %v4917
    %v5007 = vpop.f32.mrf.mxu0
    %v5008 = vadd.f32 %v4939, %v5007
    %v5009 = vpop.f32.mrf.mxu0
    %5010 = vdwg.mxu0
    %v5011 = vxor.u32 %v5008, 2147483648
    %v5012 = vmul.f32 %v5011, 1.442695
    %v5013 = vpow.pop %v5012
    %v5014 = vadd.f32 %v5013, 1.0
    %v5015 = vrcp.pop %v5014
    %v5016 = vmul.f32 1.0, %v5015
    %vm5017 = vcmask 23552
    %5018 = vst.msk [vmem:[%s10] sm:$0xff] %vm5017, %v5016
    // Predicated region
    $region50: #{tpu_custom_call.1} parent=1 // pred_check
      _
    $region51: #{tpu_custom_call.1} parent=1 // pred_check_branch
      %5020 = sbr.rel (0) target = $region53
    $region52: #{tpu_custom_call.1} parent=1 // pred_region
      _
    $region53: #{tpu_custom_call.1} parent=1 // pred_fallthru
      _
    // Predicated region
    $region54: #{tpu_custom_call.1} parent=1 // pred_check
      _
    $region55: #{tpu_custom_call.1} parent=1 // pred_check_branch
      %5022 = sbr.rel (0) target = $region57
    $region56: #{tpu_custom_call.1} parent=1 // pred_region
      %s5024 = ssub.s32 128, 128
      %5025 = vsyncadd [#allocation5], %s5024
      %s5027 = sshll.u32 [#allocation8], 4
      %s5028 = int_to_ptr.vmem [resolvable:$true] %s5027
      %5030 = dma.vmem_to_hbm [thread:$0]  %s5028, 128, %s11, [#allocation5]
    $region57: #{tpu_custom_call.1} parent=1 // pred_fallthru
      _
    // Predicated region
    $region58: #{tpu_custom_call.1} parent=1 // pred_check
      _
    $region59: #{tpu_custom_call.1} parent=1 // pred_check_branch
      %5032 = sbr.rel (0) target = $region61
    $region60: #{tpu_custom_call.1} parent=1 // pred_region
      _
    $region61: #{tpu_custom_call.1} parent=1 // pred_fallthru
      _
    // Predicated region
    $region62: #{tpu_custom_call.1} parent=1 // pred_check
      _
    $region63: #{tpu_custom_call.1} parent=1 // pred_check_branch
      %5034 = sbr.rel (0) target = $region65
    $region64: #{tpu_custom_call.1} parent=1 // pred_region
      %5035 = dma.done [#allocation5], 128
    $region65: #{tpu_custom_call.1} parent=1 // pred_fallthru
      _
    %5036 = vsyncpa [#allocation4], 1
    %5037 = vsyncpa [#allocation7], 1
    %5038 = vsyncpa [#allocation5], 1

// kernel: tpu_custom_call.1
$region0: #{tpu_custom_call.1}
  #allocation0 [shape = 'u32[]', space=smem, size = 0x4, offset = 0x4, fixed_abs, tag = 'smem constant byte address 0x4 - core index']
  #allocation1 [shape = 'u32[144,128]{1,0:T(1,128)}', space=vmem, size = 0x12000, scoped, tag = 'internal scratch']
  #allocation2 [shape = 'f32[1,1]{1,0:T(1,128)S(1)}', space=vmem, size = 0x200, scoped, tag = 'scoped memory for tpu_custom_call.1']
  %s0 = inlined_call_operand.vmem [shape: f32[8,16,32], index: 0, kind: input, shape index: {}]
  %s1 = inlined_call_operand.vmem [shape: s32[8,1], index: 1, kind: input, shape index: {}]
  %s2 = inlined_call_operand.hbm [shape: f32[32,128], index: 2, kind: input, shape index: {}]
  %s3 = inlined_call_operand.vmem [shape: f32[1,128], index: 3, kind: input, shape index: {}]
  %s4 = inlined_call_operand.vmem [shape: f32[1,128], index: 4, kind: input, shape index: {}]
  %s5 = inlined_call_operand.<no memory space> [shape: f32[1,1], index: 5, kind: input, shape index: {}]
  %s6 = inlined_call_operand.hbm [shape: f32[32,128], index: 6, kind: input, shape index: {}]
  %s7 = inlined_call_operand.vmem [shape: f32[1,128], index: 7, kind: input, shape index: {}]
  %s8 = inlined_call_operand.vmem [shape: f32[128,3], index: 8, kind: input, shape index: {}]
  %s9 = inlined_call_operand.vmem [shape: f32[1,3], index: 9, kind: input, shape index: {}]
  %s10 = inlined_call_operand.vmem [shape: f32[8,3], index: 10, kind: output, shape index: {0}]
  %s11 = inlined_call_operand.hbm [shape: f32[8,16], index: 11, kind: output, shape index: {1}]
  %12 = xla_tuple %s10, %s11
  %s13 = sld [smem:[#allocation0]]
  $region66: #{tpu_custom_call.1} parent=0
    _
  %s15 = ssub.s32 1, %s13
  %s16 = scalar_select 0, %s15, %s13
  %v17 = vstv %s5
  %18 = vst [vmem:[#allocation2] sm:$0x1] %v17
  $region1: #{tpu_custom_call.1} parent=0
    #allocation3 [shape = 'u8[16384]{0}', space=vmem, size = 0x4000, scoped, tag = 'input window, operand 2, single buffered']
    #allocation4 [shape = 's32[1]{0}', space=sflag, size = 0x4, scoped, tag = 'scoped memory for tpu_custom_call.1']
    #allocation5 [shape = 's32[1]{0}', space=sflag, size = 0x4, scoped, tag = 'scoped memory for tpu_custom_call.1']
    #allocation6 [shape = 'u8[16384]{0}', space=vmem, size = 0x4000, scoped, tag = 'input window, operand 6, single buffered']
    #allocation7 [shape = 's32[1]{0}', space=sflag, size = 0x4, scoped, tag = 'scoped memory for tpu_custom_call.1']
    #allocation8 [shape = 'u8[4096]{0}', space=vmem, size = 0x1000, scoped, tag = 'output window, operand 1, single buffered']
    %19 = vsyncpa [#allocation4], 0
    %20 = vsyncpa [#allocation7], 0
    %21 = vsyncpa [#allocation5], 0
    // Predicated region
    $region2: #{tpu_custom_call.1} parent=1 // pred_check
      _
    $region3: #{tpu_custom_call.1} parent=1 // pred_check_branch
      %23 = sbr.rel (0) target = $region5
    $region4: #{tpu_custom_call.1} parent=1 // pred_region
      _
    $region5: #{tpu_custom_call.1} parent=1 // pred_fallthru
      _
    // Predicated region
    $region6: #{tpu_custom_call.1} parent=1 // pred_check
      _
    $region7: #{tpu_custom_call.1} parent=1 // pred_check_branch
      %25 = sbr.rel (0) target = $region9
    $region8: #{tpu_custom_call.1} parent=1 // pred_region
      _
    $region9: #{tpu_custom_call.1} parent=1 // pred_fallthru
      _
    // Predicated region
    $region10: #{tpu_custom_call.1} parent=1 // pred_check
      _
    $region11: #{tpu_custom_call.1} parent=1 // pred_check_branch
      %27 = sbr.rel (0) target = $region13
    $region12: #{tpu_custom_call.1} parent=1 // pred_region
      %s29 = ssub.s32 512, 512
      %30 = vsyncadd [#allocation4], %s29
      %s31 = sshll.u32 [#allocation3], 4
      %s32 = int_to_ptr.vmem [resolvable:$true] %s31
      %37 = dma.hbm_to_vmem [thread:$0]  %s2, 512, %s32, [#allocation4], 128, 128, 8
    $region13: #{tpu_custom_call.1} parent=1 // pred_fallthru
      _
    // Predicated region
    $region14: #{tpu_custom_call.1} parent=1 // pred_check
      _
    $region15: #{tpu_custom_call.1} parent=1 // pred_check_branch
      %39 = sbr.rel (0) target = $region17
    $region16: #{tpu_custom_call.1} parent=1 // pred_region
      _
    $region17: #{tpu_custom_call.1} parent=1 // pred_fallthru
      _
    // Predicated region
    $region18: #{tpu_custom_call.1} parent=1 // pred_check
      _
    $region19: #{tpu_custom_call.1} parent=1 // pred_check_branch
      %41 = sbr.rel (0) target = $region21
    $region20: #{tpu_custom_call.1} parent=1 // pred_region
      _
    $region21: #{tpu_custom_call.1} parent=1 // pred_fallthru
      _
    // Predicated region
    $region22: #{tpu_custom_call.1} parent=1 // pred_check
      _
    $region23: #{tpu_custom_call.1} parent=1 // pred_check_branch
      %43 = sbr.rel (0) target = $region25
    $region24: #{tpu_custom_call.1} parent=1 // pred_region
      _
    $region25: #{tpu_custom_call.1} parent=1 // pred_fallthru
      _
    // Predicated region
    $region26: #{tpu_custom_call.1} parent=1 // pred_check
      _
    $region27: #{tpu_custom_call.1} parent=1 // pred_check_branch
      %45 = sbr.rel (0) target = $region29
    $region28: #{tpu_custom_call.1} parent=1 // pred_region
      %s47 = ssub.s32 512, 512
      %48 = vsyncadd [#allocation7], %s47
      %s49 = sshll.u32 [#allocation6], 4
      %s50 = int_to_ptr.vmem [resolvable:$true] %s49
      %55 = dma.hbm_to_vmem [thread:$0]  %s6, 512, %s50, [#allocation7], 128, 128, 8
    $region29: #{tpu_custom_call.1} parent=1 // pred_fallthru
      _
    // Predicated region
    $region30: #{tpu_custom_call.1} parent=1 // pred_check
      _
    $region31: #{tpu_custom_call.1} parent=1 // pred_check_branch
      %57 = sbr.rel (0) target = $region33
    $region32: #{tpu_custom_call.1} parent=1 // pred_region
      _
    $region33: #{tpu_custom_call.1} parent=1 // pred_fallthru
      _
    // Predicated region
    $region34: #{tpu_custom_call.1} parent=1 // pred_check
      _
    $region35: #{tpu_custom_call.1} parent=1 // pred_check_branch
      %59 = sbr.rel (0) target = $region37
    $region36: #{tpu_custom_call.1} parent=1 // pred_region
      _
    $region37: #{tpu_custom_call.1} parent=1 // pred_fallthru
      _
    // Predicated region
    $region38: #{tpu_custom_call.1} parent=1 // pred_check
      _
    $region39: #{tpu_custom_call.1} parent=1 // pred_check_branch
      %61 = sbr.rel (0) target = $region41
    $region40: #{tpu_custom_call.1} parent=1 // pred_region
      _
    $region41: #{tpu_custom_call.1} parent=1 // pred_fallthru
      _
    // Predicated region
    $region42: #{tpu_custom_call.1} parent=1 // pred_check
      _
    $region43: #{tpu_custom_call.1} parent=1 // pred_check_branch
      %63 = sbr.rel (0) target = $region45
    $region44: #{tpu_custom_call.1} parent=1 // pred_region
      %64 = dma.done [#allocation4], 512
    $region45: #{tpu_custom_call.1} parent=1 // pred_fallthru
      _
    // Predicated region
    $region46: #{tpu_custom_call.1} parent=1 // pred_check
      _
    $region47: #{tpu_custom_call.1} parent=1 // pred_check_branch
      %66 = sbr.rel (0) target = $region49
    $region48: #{tpu_custom_call.1} parent=1 // pred_region
      %67 = dma.done [#allocation7], 512
    $region49: #{tpu_custom_call.1} parent=1 // pred_fallthru
      _
    %v68 = vld [vmem:[%s0] sm:$0xff]
    %v69 = vld [vmem:[%s0 + $0x8] sm:$0xff]
    %v70 = vld [vmem:[%s0 + $0x10] sm:$0xff]
    %v71 = vld [vmem:[%s0 + $0x18] sm:$0xff]
    %v72 = vld [vmem:[%s0 + $0x20] sm:$0xff]
    %v73 = vld [vmem:[%s0 + $0x28] sm:$0xff]
    %v74 = vld [vmem:[%s0 + $0x30] sm:$0xff]
    %v75 = vld [vmem:[%s0 + $0x38] sm:$0xff]
    %v76 = vld [vmem:[%s0 + $0x40] sm:$0xff]
    %v77 = vld [vmem:[%s0 + $0x48] sm:$0xff]
    %v78 = vld [vmem:[%s0 + $0x50] sm:$0xff]
    %v79 = vld [vmem:[%s0 + $0x58] sm:$0xff]
    %v80 = vld [vmem:[%s0 + $0x60] sm:$0xff]
    %v81 = vld [vmem:[%s0 + $0x68] sm:$0xff]
    %v82 = vld [vmem:[%s0 + $0x70] sm:$0xff]
    %v83 = vld [vmem:[%s0 + $0x78] sm:$0xff]
    %v84 = vld [vmem:[#allocation3] sm:$0xff]
    %v85 = vld [vmem:[#allocation3 + $0x8] sm:$0xff]
    %v86 = vld [vmem:[#allocation3 + $0x10] sm:$0xff]
    %v87 = vld [vmem:[#allocation3 + $0x18] sm:$0xff]
    %v88 = vld [vmem:[%s3] sm:$0x1]
    %v90 = vlaneseq
    %v91 = vshrl.u32 %v90, 7
    %v92 = vsub.s32 0, %v91
    %v93 = vrot.slane %v88, %v92
    %vm95 = vcmask 261120
    %v97 = vsel %vm95, %v68, 0
    %v100 = vsel %vm95, %v69, 0
    %v103 = vsel %vm95, %v70, 0
    %v106 = vsel %vm95, %v71, 0
    %v109 = vsel %vm95, %v72, 0
    %v112 = vsel %vm95, %v73, 0
    %v115 = vsel %vm95, %v74, 0
    %v118 = vsel %vm95, %v75, 0
    %v121 = vsel %vm95, %v76, 0
    %v124 = vsel %vm95, %v77, 0
    %v127 = vsel %vm95, %v78, 0
    %v130 = vsel %vm95, %v79, 0
    %v133 = vsel %vm95, %v80, 0
    %v136 = vsel %vm95, %v81, 0
    %v139 = vsel %vm95, %v82, 0
    %v142 = vsel %vm95, %v83, 0
    %144 = vmatprep.subr.mxu0 0.0
    %145 = vmatpush1.msra.mxu0 0.0
    %146 = vmatprep.subr.mxu0 0.0
    %147 = vmatpush1.msra.mxu0 0.0
    %148 = vmatprep.subr.mxu0 0.0
    %149 = vmatpush1.msra.mxu0 0.0
    %150 = vmatprep.subr.mxu0 0.0
    %151 = vmatpush1.msra.mxu0 0.0
    %152 = vmatprep.subr.mxu0 0.0
    %153 = vmatpush1.msra.mxu0 0.0
    %154 = vmatprep.subr.mxu0 0.0
    %155 = vmatpush1.msra.mxu0 0.0
    %156 = vmatprep.subr.mxu0 0.0
    %157 = vmatpush1.msra.mxu0 0.0
    %158 = vmatprep.subr.mxu0 0.0
    %159 = vmatpush1.msra.mxu0 0.0
    %160 = vmatprep.subr.mxu0 0.0
    %161 = vmatpush1.msra.mxu0 0.0
    %162 = vmatprep.subr.mxu0 0.0
    %163 = vmatpush1.msra.mxu0 0.0
    %164 = vmatprep.subr.mxu0 0.0
    %165 = vmatpush1.msra.mxu0 0.0
    %166 = vmatprep.subr.mxu0 0.0
    %167 = vmatpush1.msra.mxu0 0.0
    %168 = vmatprep.subr.mxu0 0.0
    %169 = vmatpush1.msra.mxu0 %v87
    %170 = vmatprep.subr.mxu0 0.0
    %171 = vmatpush1.msra.mxu0 %v86
    %172 = vmatprep.subr.mxu0 0.0
    %173 = vmatpush1.msra.mxu0 %v85
    %174 = vmatprep.subr.mxu0 0.0
    %175 = vmatpush1.msra.mxu0 %v84
    %176 = vmatprep.subr.mxu0 0.0
    %177 = vmatpush2.msra.mxu0 0.0
    %178 = vmatprep.subr.mxu0 0.0
    %179 = vmatpush2.msra.mxu0 0.0
    %180 = vmatprep.subr.mxu0 0.0
    %181 = vmatpush2.msra.mxu0 0.0
    %182 = vmatprep.subr.mxu0 0.0
    %183 = vmatpush2.msra.mxu0 0.0
    %184 = vmatprep.subr.mxu0 0.0
    %185 = vmatpush2.msra.mxu0 0.0
    %186 = vmatprep.subr.mxu0 0.0
    %187 = vmatpush2.msra.mxu0 0.0
    %188 = vmatprep.subr.mxu0 0.0
    %189 = vmatpush2.msra.mxu0 0.0
    %190 = vmatprep.subr.mxu0 0.0
    %191 = vmatpush2.msra.mxu0 0.0
    %192 = vmatprep.subr.mxu0 0.0
    %193 = vmatpush2.msra.mxu0 0.0
    %194 = vmatprep.subr.mxu0 0.0
    %195 = vmatpush2.msra.mxu0 0.0
    %196 = vmatprep.subr.mxu0 0.0
    %197 = vmatpush2.msra.mxu0 0.0
    %198 = vmatprep.subr.mxu0 0.0
    %199 = vmatpush2.msra.mxu0 0.0
    %200 = vmatprep.subr.mxu0 0.0
    %201 = vmatpush2.msra.mxu0 0.0
    %202 = vmatprep.subr.mxu0 0.0
    %203 = vmatpush2.msra.mxu0 0.0
    %204 = vmatprep.subr.mxu0 0.0
    %205 = vmatpush2.msra.mxu0 0.0
    %206 = vmatprep.subr.mxu0 0.0
    %207 = vmatpush2.msra.mxu0 0.0
    %208 = vmatprep.mubr.f32.mxu0 0.0
    %209 = vmatmul.mubr.f32.gmra.mxu0 %v97
    %v210 = vpop.f32.mrf.mxu0
    %v211 = vadd.f32 %v93, %v210
    %v212 = vpop.f32.mrf.mxu0
    %213 = vmatprep.mubr.f32.mxu0 0.0
    %214 = vmatmul.mubr.f32.gmra.mxu0 %v100
    %v215 = vpop.f32.mrf.mxu0
    %v216 = vadd.f32 %v93, %v215
    %v217 = vpop.f32.mrf.mxu0
    %218 = vmatprep.mubr.f32.mxu0 0.0
    %219 = vmatmul.mubr.f32.gmra.mxu0 %v103
    %v220 = vpop.f32.mrf.mxu0
    %v221 = vadd.f32 %v93, %v220
    %v222 = vpop.f32.mrf.mxu0
    %223 = vmatprep.mubr.f32.mxu0 0.0
    %224 = vmatmul.mubr.f32.gmra.mxu0 %v106
    %v225 = vpop.f32.mrf.mxu0
    %v226 = vadd.f32 %v93, %v225
    %v227 = vpop.f32.mrf.mxu0
    %228 = vmatprep.mubr.f32.mxu0 0.0
    %229 = vmatmul.mubr.f32.gmra.mxu0 %v109
    %v230 = vpop.f32.mrf.mxu0
    %v231 = vadd.f32 %v93, %v230
    %v232 = vpop.f32.mrf.mxu0
    %233 = vmatprep.mubr.f32.mxu0 0.0
    %234 = vmatmul.mubr.f32.gmra.mxu0 %v112
    %v235 = vpop.f32.mrf.mxu0
    %v236 = vadd.f32 %v93, %v235
    %v237 = vpop.f32.mrf.mxu0
    %238 = vmatprep.mubr.f32.mxu0 0.0
    %239 = vmatmul.mubr.f32.gmra.mxu0 %v115
    %v240 = vpop.f32.mrf.mxu0
    %v241 = vadd.f32 %v93, %v240
    %v242 = vpop.f32.mrf.mxu0
    %243 = vmatprep.mubr.f32.mxu0 0.0
    %244 = vmatmul.mubr.f32.gmra.mxu0 %v118
    %v245 = vpop.f32.mrf.mxu0
    %v246 = vadd.f32 %v93, %v245
    %v247 = vpop.f32.mrf.mxu0
    %248 = vmatprep.mubr.f32.mxu0 0.0
    %249 = vmatmul.mubr.f32.gmra.mxu0 %v121
    %v250 = vpop.f32.mrf.mxu0
    %v251 = vadd.f32 %v93, %v250
    %v252 = vpop.f32.mrf.mxu0
    %253 = vmatprep.mubr.f32.mxu0 0.0
    %254 = vmatmul.mubr.f32.gmra.mxu0 %v124
    %v255 = vpop.f32.mrf.mxu0
    %v256 = vadd.f32 %v93, %v255
    %v257 = vpop.f32.mrf.mxu0
    %258 = vmatprep.mubr.f32.mxu0 0.0
    %259 = vmatmul.mubr.f32.gmra.mxu0 %v127
    %v260 = vpop.f32.mrf.mxu0
    %v261 = vadd.f32 %v93, %v260
    %v262 = vpop.f32.mrf.mxu0
    %263 = vmatprep.mubr.f32.mxu0 0.0
    %264 = vmatmul.mubr.f32.gmra.mxu0 %v130
    %v265 = vpop.f32.mrf.mxu0
    %v266 = vadd.f32 %v93, %v265
    %v267 = vpop.f32.mrf.mxu0
    %268 = vmatprep.mubr.f32.mxu0 0.0
    %269 = vmatmul.mubr.f32.gmra.mxu0 %v133
    %v270 = vpop.f32.mrf.mxu0
    %v271 = vadd.f32 %v93, %v270
    %v272 = vpop.f32.mrf.mxu0
    %273 = vmatprep.mubr.f32.mxu0 0.0
    %274 = vmatmul.mubr.f32.gmra.mxu0 %v136
    %v275 = vpop.f32.mrf.mxu0
    %v276 = vadd.f32 %v93, %v275
    %v277 = vpop.f32.mrf.mxu0
    %278 = vmatprep.mubr.f32.mxu0 0.0
    %279 = vmatmul.mubr.f32.gmra.mxu0 %v139
    %v280 = vpop.f32.mrf.mxu0
    %v281 = vadd.f32 %v93, %v280
    %v282 = vpop.f32.mrf.mxu0
    %283 = vmatprep.mubr.f32.mxu0 0.0
    %284 = vmatmul.mubr.f32.gmra.mxu0 %v142
    %v285 = vpop.f32.mrf.mxu0
    %v286 = vadd.f32 %v93, %v285
    %v287 = vpop.f32.mrf.mxu0
    %288 = vdwg.mxu0
    %v289 = vtanh.pop %v211
    %v290 = vtanh.pop %v216
    %v291 = vtanh.pop %v221
    %v292 = vtanh.pop %v226
    %v293 = vtanh.pop %v231
    %v294 = vtanh.pop %v236
    %v295 = vtanh.pop %v241
    %v296 = vtanh.pop %v246
    %v297 = vtanh.pop %v251
    %v298 = vtanh.pop %v256
    %v299 = vtanh.pop %v261
    %v300 = vtanh.pop %v266
    %v301 = vtanh.pop %v271
    %v302 = vtanh.pop %v276
    %v303 = vtanh.pop %v281
    %v304 = vtanh.pop %v286
    %v305 = vld [vmem:[%s4] sm:$0x1]
    %v307 = vlaneseq
    %v308 = vshrl.u32 %v307, 7
    %v309 = vsub.s32 0, %v308
    %v310 = vrot.slane %v305, %v309
    %v312 = vmul.f32 %v289, %v310
    %v313 = vmul.f32 %v290, %v310
    %v314 = vmul.f32 %v291, %v310
    %v315 = vmul.f32 %v292, %v310
    %v316 = vmul.f32 %v293, %v310
    %v317 = vmul.f32 %v294, %v310
    %v318 = vmul.f32 %v295, %v310
    %v319 = vmul.f32 %v296, %v310
    %v320 = vmul.f32 %v297, %v310
    %v321 = vmul.f32 %v298, %v310
    %v322 = vmul.f32 %v299, %v310
    %v323 = vmul.f32 %v300, %v310
    %v324 = vmul.f32 %v301, %v310
    %v325 = vmul.f32 %v302, %v310
    %v326 = vmul.f32 %v303, %v310
    %v327 = vmul.f32 %v304, %v310
    %328 = vadd.xlane.f32.xlu0 %v312
    %v329 = vpop.xlane.xlu0 %328
    %330 = vadd.xlane.f32.xlu0 %v313
    %v331 = vpop.xlane.xlu0 %330
    %332 = vadd.xlane.f32.xlu0 %v314
    %v333 = vpop.xlane.xlu0 %332
    %334 = vadd.xlane.f32.xlu0 %v315
    %v335 = vpop.xlane.xlu0 %334
    %336 = vadd.xlane.f32.xlu0 %v316
    %v337 = vpop.xlane.xlu0 %336
    %338 = vadd.xlane.f32.xlu0 %v317
    %v339 = vpop.xlane.xlu0 %338
    %340 = vadd.xlane.f32.xlu0 %v318
    %v341 = vpop.xlane.xlu0 %340
    %342 = vadd.xlane.f32.xlu0 %v319
    %v343 = vpop.xlane.xlu0 %342
    %344 = vadd.xlane.f32.xlu0 %v320
    %v345 = vpop.xlane.xlu0 %344
    %346 = vadd.xlane.f32.xlu0 %v321
    %v347 = vpop.xlane.xlu0 %346
    %348 = vadd.xlane.f32.xlu0 %v322
    %v349 = vpop.xlane.xlu0 %348
    %350 = vadd.xlane.f32.xlu0 %v323
    %v351 = vpop.xlane.xlu0 %350
    %352 = vadd.xlane.f32.xlu0 %v324
    %v353 = vpop.xlane.xlu0 %352
    %354 = vadd.xlane.f32.xlu0 %v325
    %v355 = vpop.xlane.xlu0 %354
    %356 = vadd.xlane.f32.xlu0 %v326
    %v357 = vpop.xlane.xlu0 %356
    %358 = vadd.xlane.f32.xlu0 %v327
    %v359 = vpop.xlane.xlu0 %358
    %v360 = vld [vmem:[#allocation2] sm:$0x1]
    %v362 = vlaneseq
    %v363 = vshrl.u32 %v362, 7
    %v364 = vsub.s32 0, %v363
    %v365 = vrot.slane %v360, %v364
    %v367 = vadd.f32 %v329, %v365
    %v368 = vadd.f32 %v331, %v365
    %v369 = vadd.f32 %v333, %v365
    %v370 = vadd.f32 %v335, %v365
    %v371 = vadd.f32 %v337, %v365
    %v372 = vadd.f32 %v339, %v365
    %v373 = vadd.f32 %v341, %v365
    %v374 = vadd.f32 %v343, %v365
    %v375 = vadd.f32 %v345, %v365
    %v376 = vadd.f32 %v347, %v365
    %v377 = vadd.f32 %v349, %v365
    %v378 = vadd.f32 %v351, %v365
    %v379 = vadd.f32 %v353, %v365
    %v380 = vadd.f32 %v355, %v365
    %v381 = vadd.f32 %v357, %v365
    %v382 = vadd.f32 %v359, %v365
    %v383 = vxor.u32 %v367, 2147483648
    %v384 = vxor.u32 %v368, 2147483648
    %v385 = vxor.u32 %v369, 2147483648
    %v386 = vxor.u32 %v370, 2147483648
    %v387 = vxor.u32 %v371, 2147483648
    %v388 = vxor.u32 %v372, 2147483648
    %v389 = vxor.u32 %v373, 2147483648
    %v390 = vxor.u32 %v374, 2147483648
    %v391 = vxor.u32 %v375, 2147483648
    %v392 = vxor.u32 %v376, 2147483648
    %v393 = vxor.u32 %v377, 2147483648
    %v394 = vxor.u32 %v378, 2147483648
    %v395 = vxor.u32 %v379, 2147483648
    %v396 = vxor.u32 %v380, 2147483648
    %v397 = vxor.u32 %v381, 2147483648
    %v398 = vxor.u32 %v382, 2147483648
    %v399 = vmul.f32 %v383, 1.442695
    %v400 = vpow.pop %v399
    %v401 = vmul.f32 %v384, 1.442695
    %v402 = vpow.pop %v401
    %v403 = vmul.f32 %v385, 1.442695
    %v404 = vpow.pop %v403
    %v405 = vmul.f32 %v386, 1.442695
    %v406 = vpow.pop %v405
    %v407 = vmul.f32 %v387, 1.442695
    %v408 = vpow.pop %v407
    %v409 = vmul.f32 %v388, 1.442695
    %v410 = vpow.pop %v409
    %v411 = vmul.f32 %v389, 1.442695
    %v412 = vpow.pop %v411
    %v413 = vmul.f32 %v390, 1.442695
    %v414 = vpow.pop %v413
    %v415 = vmul.f32 %v391, 1.442695
    %v416 = vpow.pop %v415
    %v417 = vmul.f32 %v392, 1.442695
    %v418 = vpow.pop %v417
    %v419 = vmul.f32 %v393, 1.442695
    %v420 = vpow.pop %v419
    %v421 = vmul.f32 %v394, 1.442695
    %v422 = vpow.pop %v421
    %v423 = vmul.f32 %v395, 1.442695
    %v424 = vpow.pop %v423
    %v425 = vmul.f32 %v396, 1.442695
    %v426 = vpow.pop %v425
    %v427 = vmul.f32 %v397, 1.442695
    %v428 = vpow.pop %v427
    %v429 = vmul.f32 %v398, 1.442695
    %v430 = vpow.pop %v429
    %v431 = vadd.f32 %v400, 1.0
    %v432 = vadd.f32 %v402, 1.0
    %v433 = vadd.f32 %v404, 1.0
    %v434 = vadd.f32 %v406, 1.0
    %v435 = vadd.f32 %v408, 1.0
    %v436 = vadd.f32 %v410, 1.0
    %v437 = vadd.f32 %v412, 1.0
    %v438 = vadd.f32 %v414, 1.0
    %v439 = vadd.f32 %v416, 1.0
    %v440 = vadd.f32 %v418, 1.0
    %v441 = vadd.f32 %v420, 1.0
    %v442 = vadd.f32 %v422, 1.0
    %v443 = vadd.f32 %v424, 1.0
    %v444 = vadd.f32 %v426, 1.0
    %v445 = vadd.f32 %v428, 1.0
    %v446 = vadd.f32 %v430, 1.0
    %v447 = vrcp.pop %v431
    %v448 = vmul.f32 1.0, %v447
    %v449 = vrcp.pop %v432
    %v450 = vmul.f32 1.0, %v449
    %v451 = vrcp.pop %v433
    %v452 = vmul.f32 1.0, %v451
    %v453 = vrcp.pop %v434
    %v454 = vmul.f32 1.0, %v453
    %v455 = vrcp.pop %v435
    %v456 = vmul.f32 1.0, %v455
    %v457 = vrcp.pop %v436
    %v458 = vmul.f32 1.0, %v457
    %v459 = vrcp.pop %v437
    %v460 = vmul.f32 1.0, %v459
    %v461 = vrcp.pop %v438
    %v462 = vmul.f32 1.0, %v461
    %v463 = vrcp.pop %v439
    %v464 = vmul.f32 1.0, %v463
    %v465 = vrcp.pop %v440
    %v466 = vmul.f32 1.0, %v465
    %v467 = vrcp.pop %v441
    %v468 = vmul.f32 1.0, %v467
    %v469 = vrcp.pop %v442
    %v470 = vmul.f32 1.0, %v469
    %v471 = vrcp.pop %v443
    %v472 = vmul.f32 1.0, %v471
    %v473 = vrcp.pop %v444
    %v474 = vmul.f32 1.0, %v473
    %v475 = vrcp.pop %v445
    %v476 = vmul.f32 1.0, %v475
    %v477 = vrcp.pop %v446
    %v478 = vmul.f32 1.0, %v477
    %v479 = vld [vmem:[%s1] sm:$0xff]
    %v480 = vcombine.high %v479, %v479
    %v482 = vunpack.c.l.s4 1966171168
    %v483 = vunpack.c.0.s8 %v482
    %v484 = vlaneseq
    %v485 = vshrl.u32 %v484, 7
    %v486 = vsub.s32 %v483, %v485
    %v487 = vrot.slane %v479, %v486
    %v489 = vunpack.c.l.s4 1966171168
    %v490 = vunpack.c.0.s8 %v489
    %v491 = vlaneseq
    %v492 = vshrl.u32 %v491, 7
    %v493 = vsub.s32 %v490, %v492
    %v494 = vrot.slane %v480, %v493
    %v495 = vcombine.high %v487, %v487
    %v496 = vcombine.high %v494, %v494
    %v498 = vunpack.c.l.s4 1966171168
    %v499 = vunpack.c.0.s8 %v498
    %v500 = vlaneseq
    %v501 = vshrl.u32 %v500, 7
    %v502 = vsub.s32 %v499, %v501
    %v503 = vrot.slane %v487, %v502
    %v505 = vunpack.c.l.s4 1966171168
    %v506 = vunpack.c.0.s8 %v505
    %v507 = vlaneseq
    %v508 = vshrl.u32 %v507, 7
    %v509 = vsub.s32 %v506, %v508
    %v510 = vrot.slane %v494, %v509
    %v512 = vunpack.c.l.s4 1966171168
    %v513 = vunpack.c.0.s8 %v512
    %v514 = vlaneseq
    %v515 = vshrl.u32 %v514, 7
    %v516 = vsub.s32 %v513, %v515
    %v517 = vrot.slane %v495, %v516
    %v519 = vunpack.c.l.s4 1966171168
    %v520 = vunpack.c.0.s8 %v519
    %v521 = vlaneseq
    %v522 = vshrl.u32 %v521, 7
    %v523 = vsub.s32 %v520, %v522
    %v524 = vrot.slane %v496, %v523
    %v525 = vcombine.high %v503, %v503
    %v526 = vcombine.high %v510, %v510
    %v527 = vcombine.high %v517, %v517
    %v528 = vcombine.high %v524, %v524
    %v529 = vlaneseq
    %v530 = vshrl.u32 %v529, 7
    %v531 = vadd.s32 %v530, 8
    %vm532 = vcmp.ge.s32.totalorder %v530, 1
    %vm533 = vcmp.ge.s32.totalorder %v531, 1
    %v534 = vlaneseq
    %v535 = vshrl.u32 %v534, 7
    %v536 = vsub.s32 0, %v535
    %v537 = vrot.slane %v503, %v536
    %v538 = vlaneseq
    %v539 = vshrl.u32 %v538, 7
    %v540 = vsub.s32 0, %v539
    %v541 = vrot.slane %v517, %v540
    %v542 = vlaneseq
    %v543 = vshrl.u32 %v542, 7
    %v544 = vsub.s32 0, %v543
    %v545 = vrot.slane %v525, %v544
    %v546 = vlaneseq
    %v547 = vshrl.u32 %v546, 7
    %v548 = vsub.s32 0, %v547
    %v549 = vrot.slane %v527, %v548
    %v550 = vlaneseq
    %v551 = vshrl.u32 %v550, 7
    %v552 = vsub.s32 0, %v551
    %v553 = vrot.slane %v510, %v552
    %v554 = vlaneseq
    %v555 = vshrl.u32 %v554, 7
    %v556 = vsub.s32 0, %v555
    %v557 = vrot.slane %v524, %v556
    %v558 = vlaneseq
    %v559 = vshrl.u32 %v558, 7
    %v560 = vsub.s32 0, %v559
    %v561 = vrot.slane %v526, %v560
    %v562 = vlaneseq
    %v563 = vshrl.u32 %v562, 7
    %v564 = vsub.s32 0, %v563
    %v565 = vrot.slane %v528, %v564
    %vm566 = vcmp.lt.s32.totalorder %v530, %v537
    %vm567 = vcmp.lt.s32.totalorder %v531, %v537
    %vm568 = vcmp.lt.s32.totalorder %v530, %v541
    %vm569 = vcmp.lt.s32.totalorder %v531, %v541
    %vm570 = vcmp.lt.s32.totalorder %v530, %v545
    %vm571 = vcmp.lt.s32.totalorder %v531, %v545
    %vm572 = vcmp.lt.s32.totalorder %v530, %v549
    %vm573 = vcmp.lt.s32.totalorder %v531, %v549
    %vm574 = vcmp.lt.s32.totalorder %v530, %v553
    %vm575 = vcmp.lt.s32.totalorder %v531, %v553
    %vm576 = vcmp.lt.s32.totalorder %v530, %v557
    %vm577 = vcmp.lt.s32.totalorder %v531, %v557
    %vm578 = vcmp.lt.s32.totalorder %v530, %v561
    %vm579 = vcmp.lt.s32.totalorder %v531, %v561
    %vm580 = vcmp.lt.s32.totalorder %v530, %v565
    %vm581 = vcmp.lt.s32.totalorder %v531, %v565
    %vm582 = vmand %vm532, %vm566
    %vm583 = vmand %vm533, %vm567
    %vm584 = vmand %vm532, %vm568
    %vm585 = vmand %vm533, %vm569
    %vm586 = vmand %vm532, %vm570
    %vm587 = vmand %vm533, %vm571
    %vm588 = vmand %vm532, %vm572
    %vm589 = vmand %vm533, %vm573
    %vm590 = vmand %vm532, %vm574
    %vm591 = vmand %vm533, %vm575
    %vm592 = vmand %vm532, %vm576
    %vm593 = vmand %vm533, %vm577
    %vm594 = vmand %vm532, %vm578
    %vm595 = vmand %vm533, %vm579
    %vm596 = vmand %vm532, %vm580
    %vm597 = vmand %vm533, %vm581
    %v598 = vsel %vm582, %v448, 0.0
    %v599 = vsel %vm583, %v450, 0.0
    %v600 = vsel %vm584, %v452, 0.0
    %v601 = vsel %vm585, %v454, 0.0
    %v602 = vsel %vm586, %v456, 0.0
    %v603 = vsel %vm587, %v458, 0.0
    %v604 = vsel %vm588, %v460, 0.0
    %v605 = vsel %vm589, %v462, 0.0
    %v606 = vsel %vm590, %v464, 0.0
    %v607 = vsel %vm591, %v466, 0.0
    %v608 = vsel %vm592, %v468, 0.0
    %v609 = vsel %vm593, %v470, 0.0
    %v610 = vsel %vm594, %v472, 0.0
    %v611 = vsel %vm595, %v474, 0.0
    %v612 = vsel %vm596, %v476, 0.0
    %v613 = vsel %vm597, %v478, 0.0
    %630 = vset.pattern.permute.xlu0 0
    %631 = vperm.xlu0 %630, %v598
    %v632 = vpop.permute.xlu0 %631
    %633 = vset.pattern.permute.xlu0 0
    %634 = vperm.xlu0 %633, %v599
    %v635 = vpop.permute.xlu0 %634
    %636 = vset.pattern.permute.xlu0 0
    %637 = vperm.xlu0 %636, %v600
    %v638 = vpop.permute.xlu0 %637
    %639 = vset.pattern.permute.xlu0 0
    %640 = vperm.xlu0 %639, %v601
    %v641 = vpop.permute.xlu0 %640
    %642 = vset.pattern.permute.xlu0 0
    %643 = vperm.xlu0 %642, %v602
    %v644 = vpop.permute.xlu0 %643
    %645 = vset.pattern.permute.xlu0 0
    %646 = vperm.xlu0 %645, %v603
    %v647 = vpop.permute.xlu0 %646
    %648 = vset.pattern.permute.xlu0 0
    %649 = vperm.xlu0 %648, %v604
    %v650 = vpop.permute.xlu0 %649
    %651 = vset.pattern.permute.xlu0 0
    %652 = vperm.xlu0 %651, %v605
    %v653 = vpop.permute.xlu0 %652
    %654 = vset.pattern.permute.xlu0 0
    %655 = vperm.xlu0 %654, %v606
    %v656 = vpop.permute.xlu0 %655
    %657 = vset.pattern.permute.xlu0 0
    %658 = vperm.xlu0 %657, %v607
    %v659 = vpop.permute.xlu0 %658
    %660 = vset.pattern.permute.xlu0 0
    %661 = vperm.xlu0 %660, %v608
    %v662 = vpop.permute.xlu0 %661
    %663 = vset.pattern.permute.xlu0 0
    %664 = vperm.xlu0 %663, %v609
    %v665 = vpop.permute.xlu0 %664
    %666 = vset.pattern.permute.xlu0 0
    %667 = vperm.xlu0 %666, %v610
    %v668 = vpop.permute.xlu0 %667
    %669 = vset.pattern.permute.xlu0 0
    %670 = vperm.xlu0 %669, %v611
    %v671 = vpop.permute.xlu0 %670
    %672 = vset.pattern.permute.xlu0 0
    %673 = vperm.xlu0 %672, %v612
    %v674 = vpop.permute.xlu0 %673
    %675 = vset.pattern.permute.xlu0 0
    %676 = vperm.xlu0 %675, %v613
    %v677 = vpop.permute.xlu0 %676
    %v678 = vlaneseq
    %v679 = vand.u32 %v678, 127
    %v680 = vlaneseq
    %v681 = vshrl.u32 %v680, 7
    %v682 = vsub.s32 %v679, %v681
    %v683 = vrot.slane %v632, %v682
    %v684 = vadd.s32 %v679, 4294967288
    %v685 = vlaneseq
    %v686 = vshrl.u32 %v685, 7
    %v687 = vsub.s32 %v684, %v686
    %v688 = vrot.slane %v635, %v687
    %vm689 = vcmask 130112
    %v690 = vsel %vm689, %v688, %v683
    %v691 = vlaneseq
    %v692 = vshrl.u32 %v691, 7
    %v693 = vsub.s32 %v679, %v692
    %v694 = vrot.slane %v638, %v693
    %v695 = vlaneseq
    %v696 = vshrl.u32 %v695, 7
    %v697 = vsub.s32 %v684, %v696
    %v698 = vrot.slane %v641, %v697
    %v699 = vsel %vm689, %v698, %v694
    %v700 = vlaneseq
    %v701 = vshrl.u32 %v700, 7
    %v702 = vsub.s32 %v679, %v701
    %v703 = vrot.slane %v644, %v702
    %v704 = vlaneseq
    %v705 = vshrl.u32 %v704, 7
    %v706 = vsub.s32 %v684, %v705
    %v707 = vrot.slane %v647, %v706
    %v708 = vsel %vm689, %v707, %v703
    %v709 = vlaneseq
    %v710 = vshrl.u32 %v709, 7
    %v711 = vsub.s32 %v679, %v710
    %v712 = vrot.slane %v650, %v711
    %v713 = vlaneseq
    %v714 = vshrl.u32 %v713, 7
    %v715 = vsub.s32 %v684, %v714
    %v716 = vrot.slane %v653, %v715
    %v717 = vsel %vm689, %v716, %v712
    %v718 = vlaneseq
    %v719 = vshrl.u32 %v718, 7
    %v720 = vsub.s32 %v679, %v719
    %v721 = vrot.slane %v656, %v720
    %v722 = vlaneseq
    %v723 = vshrl.u32 %v722, 7
    %v724 = vsub.s32 %v684, %v723
    %v725 = vrot.slane %v659, %v724
    %v726 = vsel %vm689, %v725, %v721
    %v727 = vlaneseq
    %v728 = vshrl.u32 %v727, 7
    %v729 = vsub.s32 %v679, %v728
    %v730 = vrot.slane %v662, %v729
    %v731 = vlaneseq
    %v732 = vshrl.u32 %v731, 7
    %v733 = vsub.s32 %v684, %v732
    %v734 = vrot.slane %v665, %v733
    %v735 = vsel %vm689, %v734, %v730
    %v736 = vlaneseq
    %v737 = vshrl.u32 %v736, 7
    %v738 = vsub.s32 %v679, %v737
    %v739 = vrot.slane %v668, %v738
    %v740 = vlaneseq
    %v741 = vshrl.u32 %v740, 7
    %v742 = vsub.s32 %v684, %v741
    %v743 = vrot.slane %v671, %v742
    %v744 = vsel %vm689, %v743, %v739
    %v745 = vlaneseq
    %v746 = vshrl.u32 %v745, 7
    %v747 = vsub.s32 %v679, %v746
    %v748 = vrot.slane %v674, %v747
    %v749 = vlaneseq
    %v750 = vshrl.u32 %v749, 7
    %v751 = vsub.s32 %v684, %v750
    %v752 = vrot.slane %v677, %v751
    %v753 = vsel %vm689, %v752, %v748
    %vm754 = vcmask 1041409
    %v755 = vsel %vm754, %v699, %v690
    %vm756 = vcmask 1042434
    %v757 = vsel %vm756, %v708, %v755
    %vm758 = vcmask 1043459
    %v759 = vsel %vm758, %v717, %v757
    %vm760 = vcmask 1044484
    %v761 = vsel %vm760, %v726, %v759
    %vm762 = vcmask 1045509
    %v763 = vsel %vm762, %v735, %v761
    %vm764 = vcmask 1046534
    %v765 = vsel %vm764, %v744, %v763
    %vm766 = vcmask 1047559
    %v767 = vsel %vm766, %v753, %v765
    %vm769 = vcmask 130048
    %770 = vst.msk [vmem:[#allocation8] sm:$0xff] %vm769, %v767
    %v771 = vmul.f32 %v598, %v598
    %v772 = vmul.f32 %v599, %v599
    %v773 = vmul.f32 %v600, %v600
    %v774 = vmul.f32 %v601, %v601
    %v775 = vmul.f32 %v602, %v602
    %v776 = vmul.f32 %v603, %v603
    %v777 = vmul.f32 %v604, %v604
    %v778 = vmul.f32 %v605, %v605
    %v779 = vmul.f32 %v606, %v606
    %v780 = vmul.f32 %v607, %v607
    %v781 = vmul.f32 %v608, %v608
    %v782 = vmul.f32 %v609, %v609
    %v783 = vmul.f32 %v610, %v610
    %v784 = vmul.f32 %v611, %v611
    %v785 = vmul.f32 %v612, %v612
    %v786 = vmul.f32 %v613, %v613
    %vm787 = vcmask 7168
    %v788 = vsel %vm787, %v771, 0.0
    %v789 = vsel %vm787, %v772, 0.0
    %v790 = vadd.f32 %v788, %v789
    %v791 = vrot.slane %v790, 4
    %v792 = vadd.f32 %v790, %v791
    %v793 = vrot.slane %v792, 2
    %v794 = vadd.f32 %v792, %v793
    %v795 = vrot.slane %v794, 1
    %v796 = vadd.f32 %v794, %v795
    %v797 = vsel %vm787, %v773, 0.0
    %v798 = vsel %vm787, %v774, 0.0
    %v799 = vadd.f32 %v797, %v798
    %v800 = vrot.slane %v799, 4
    %v801 = vadd.f32 %v799, %v800
    %v802 = vrot.slane %v801, 2
    %v803 = vadd.f32 %v801, %v802
    %v804 = vrot.slane %v803, 1
    %v805 = vadd.f32 %v803, %v804
    %v806 = vsel %vm787, %v775, 0.0
    %v807 = vsel %vm787, %v776, 0.0
    %v808 = vadd.f32 %v806, %v807
    %v809 = vrot.slane %v808, 4
    %v810 = vadd.f32 %v808, %v809
    %v811 = vrot.slane %v810, 2
    %v812 = vadd.f32 %v810, %v811
    %v813 = vrot.slane %v812, 1
    %v814 = vadd.f32 %v812, %v813
    %v815 = vsel %vm787, %v777, 0.0
    %v816 = vsel %vm787, %v778, 0.0
    %v817 = vadd.f32 %v815, %v816
    %v818 = vrot.slane %v817, 4
    %v819 = vadd.f32 %v817, %v818
    %v820 = vrot.slane %v819, 2
    %v821 = vadd.f32 %v819, %v820
    %v822 = vrot.slane %v821, 1
    %v823 = vadd.f32 %v821, %v822
    %v824 = vsel %vm787, %v779, 0.0
    %v825 = vsel %vm787, %v780, 0.0
    %v826 = vadd.f32 %v824, %v825
    %v827 = vrot.slane %v826, 4
    %v828 = vadd.f32 %v826, %v827
    %v829 = vrot.slane %v828, 2
    %v830 = vadd.f32 %v828, %v829
    %v831 = vrot.slane %v830, 1
    %v832 = vadd.f32 %v830, %v831
    %v833 = vsel %vm787, %v781, 0.0
    %v834 = vsel %vm787, %v782, 0.0
    %v835 = vadd.f32 %v833, %v834
    %v836 = vrot.slane %v835, 4
    %v837 = vadd.f32 %v835, %v836
    %v838 = vrot.slane %v837, 2
    %v839 = vadd.f32 %v837, %v838
    %v840 = vrot.slane %v839, 1
    %v841 = vadd.f32 %v839, %v840
    %v842 = vsel %vm787, %v783, 0.0
    %v843 = vsel %vm787, %v784, 0.0
    %v844 = vadd.f32 %v842, %v843
    %v845 = vrot.slane %v844, 4
    %v846 = vadd.f32 %v844, %v845
    %v847 = vrot.slane %v846, 2
    %v848 = vadd.f32 %v846, %v847
    %v849 = vrot.slane %v848, 1
    %v850 = vadd.f32 %v848, %v849
    %v851 = vsel %vm787, %v785, 0.0
    %v852 = vsel %vm787, %v786, 0.0
    %v853 = vadd.f32 %v851, %v852
    %v854 = vrot.slane %v853, 4
    %v855 = vadd.f32 %v853, %v854
    %v856 = vrot.slane %v855, 2
    %v857 = vadd.f32 %v855, %v856
    %v858 = vrot.slane %v857, 1
    %v859 = vadd.f32 %v857, %v858
    %861 = vset.pattern.permute.xlu0 0
    %862 = vperm.xlu0 %861, %v771
    %v863 = vpop.permute.xlu0 %862
    %866 = vset.pattern.permute.xlu0 0
    %867 = vperm.xlu0 %866, %v772
    %v868 = vpop.permute.xlu0 %867
    %871 = vset.pattern.permute.xlu0 0
    %872 = vperm.xlu0 %871, %v773
    %v873 = vpop.permute.xlu0 %872
    %876 = vset.pattern.permute.xlu0 0
    %877 = vperm.xlu0 %876, %v774
    %v878 = vpop.permute.xlu0 %877
    %881 = vset.pattern.permute.xlu0 0
    %882 = vperm.xlu0 %881, %v775
    %v883 = vpop.permute.xlu0 %882
    %886 = vset.pattern.permute.xlu0 0
    %887 = vperm.xlu0 %886, %v776
    %v888 = vpop.permute.xlu0 %887
    %891 = vset.pattern.permute.xlu0 0
    %892 = vperm.xlu0 %891, %v777
    %v893 = vpop.permute.xlu0 %892
    %896 = vset.pattern.permute.xlu0 0
    %897 = vperm.xlu0 %896, %v778
    %v898 = vpop.permute.xlu0 %897
    %901 = vset.pattern.permute.xlu0 0
    %902 = vperm.xlu0 %901, %v779
    %v903 = vpop.permute.xlu0 %902
    %906 = vset.pattern.permute.xlu0 0
    %907 = vperm.xlu0 %906, %v780
    %v908 = vpop.permute.xlu0 %907
    %911 = vset.pattern.permute.xlu0 0
    %912 = vperm.xlu0 %911, %v781
    %v913 = vpop.permute.xlu0 %912
    %916 = vset.pattern.permute.xlu0 0
    %917 = vperm.xlu0 %916, %v782
    %v918 = vpop.permute.xlu0 %917
    %921 = vset.pattern.permute.xlu0 0
    %922 = vperm.xlu0 %921, %v783
    %v923 = vpop.permute.xlu0 %922
    %926 = vset.pattern.permute.xlu0 0
    %927 = vperm.xlu0 %926, %v784
    %v928 = vpop.permute.xlu0 %927
    %931 = vset.pattern.permute.xlu0 0
    %932 = vperm.xlu0 %931, %v785
    %v933 = vpop.permute.xlu0 %932
    %936 = vset.pattern.permute.xlu0 0
    %937 = vperm.xlu0 %936, %v786
    %v938 = vpop.permute.xlu0 %937
    %v940 = vmul.f32 %v68, %v863
    %v941 = vmul.f32 %v69, %v868
    %v942 = vmul.f32 %v70, %v873
    %v943 = vmul.f32 %v71, %v878
    %v944 = vmul.f32 %v72, %v883
    %v945 = vmul.f32 %v73, %v888
    %v946 = vmul.f32 %v74, %v893
    %v947 = vmul.f32 %v75, %v898
    %v948 = vmul.f32 %v76, %v903
    %v949 = vmul.f32 %v77, %v908
    %v950 = vmul.f32 %v78, %v913
    %v951 = vmul.f32 %v79, %v918
    %v952 = vmul.f32 %v80, %v923
    %v953 = vmul.f32 %v81, %v928
    %v954 = vmul.f32 %v82, %v933
    %v955 = vmul.f32 %v83, %v938
    %v956 = vsel %vm95, %v940, 0.0
    %v957 = vsel %vm95, %v941, 0.0
    %v958 = vadd.f32 %v956, %v957
    %v959 = vrot.slane %v958, 4
    %v960 = vadd.f32 %v958, %v959
    %v961 = vrot.slane %v960, 2
    %v962 = vadd.f32 %v960, %v961
    %v963 = vrot.slane %v962, 1
    %v964 = vadd.f32 %v962, %v963
    %v965 = vsel %vm95, %v942, 0.0
    %v966 = vsel %vm95, %v943, 0.0
    %v967 = vadd.f32 %v965, %v966
    %v968 = vrot.slane %v967, 4
    %v969 = vadd.f32 %v967, %v968
    %v970 = vrot.slane %v969, 2
    %v971 = vadd.f32 %v969, %v970
    %v972 = vrot.slane %v971, 1
    %v973 = vadd.f32 %v971, %v972
    %v974 = vsel %vm95, %v944, 0.0
    %v975 = vsel %vm95, %v945, 0.0
    %v976 = vadd.f32 %v974, %v975
    %v977 = vrot.slane %v976, 4
    %v978 = vadd.f32 %v976, %v977
    %v979 = vrot.slane %v978, 2
    %v980 = vadd.f32 %v978, %v979
    %v981 = vrot.slane %v980, 1
    %v982 = vadd.f32 %v980, %v981
    %v983 = vsel %vm95, %v946, 0.0
    %v984 = vsel %vm95, %v947, 0.0
    %v985 = vadd.f32 %v983, %v984
    %v986 = vrot.slane %v985, 4
    %v987 = vadd.f32 %v985, %v986
    %v988 = vrot.slane %v987, 2
    %v989 = vadd.f32 %v987, %v988
    %v990 = vrot.slane %v989, 1
    %v991 = vadd.f32 %v989, %v990
    %v992 = vsel %vm95, %v948, 0.0
    %v993 = vsel %vm95, %v949, 0.0
    %v994 = vadd.f32 %v992, %v993
    %v995 = vrot.slane %v994, 4
    %v996 = vadd.f32 %v994, %v995
    %v997 = vrot.slane %v996, 2
    %v998 = vadd.f32 %v996, %v997
    %v999 = vrot.slane %v998, 1
    %v1000 = vadd.f32 %v998, %v999
    %v1001 = vsel %vm95, %v950, 0.0
    %v1002 = vsel %vm95, %v951, 0.0
    %v1003 = vadd.f32 %v1001, %v1002
    %v1004 = vrot.slane %v1003, 4
    %v1005 = vadd.f32 %v1003, %v1004
    %v1006 = vrot.slane %v1005, 2
    %v1007 = vadd.f32 %v1005, %v1006
    %v1008 = vrot.slane %v1007, 1
    %v1009 = vadd.f32 %v1007, %v1008
    %v1010 = vsel %vm95, %v952, 0.0
    %v1011 = vsel %vm95, %v953, 0.0
    %v1012 = vadd.f32 %v1010, %v1011
    %v1013 = vrot.slane %v1012, 4
    %v1014 = vadd.f32 %v1012, %v1013
    %v1015 = vrot.slane %v1014, 2
    %v1016 = vadd.f32 %v1014, %v1015
    %v1017 = vrot.slane %v1016, 1
    %v1018 = vadd.f32 %v1016, %v1017
    %v1019 = vsel %vm95, %v954, 0.0
    %v1020 = vsel %vm95, %v955, 0.0
    %v1021 = vadd.f32 %v1019, %v1020
    %v1022 = vrot.slane %v1021, 4
    %v1023 = vadd.f32 %v1021, %v1022
    %v1024 = vrot.slane %v1023, 2
    %v1025 = vadd.f32 %v1023, %v1024
    %v1026 = vrot.slane %v1025, 1
    %v1027 = vadd.f32 %v1025, %v1026
    %v1028 = vrcp.pop %v796
    %v1029 = vrcp.pop %v805
    %v1030 = vrcp.pop %v814
    %v1031 = vrcp.pop %v823
    %v1032 = vrcp.pop %v832
    %v1033 = vrcp.pop %v841
    %v1034 = vrcp.pop %v850
    %v1035 = vrcp.pop %v859
    %1037 = vset.pattern.permute.xlu0 0
    %1038 = vperm.xlu0 %1037, %v1028
    %v1039 = vpop.permute.xlu0 %1038
    %1042 = vset.pattern.permute.xlu0 0
    %1043 = vperm.xlu0 %1042, %v1029
    %v1044 = vpop.permute.xlu0 %1043
    %1047 = vset.pattern.permute.xlu0 0
    %1048 = vperm.xlu0 %1047, %v1030
    %v1049 = vpop.permute.xlu0 %1048
    %1052 = vset.pattern.permute.xlu0 0
    %1053 = vperm.xlu0 %1052, %v1031
    %v1054 = vpop.permute.xlu0 %1053
    %1057 = vset.pattern.permute.xlu0 0
    %1058 = vperm.xlu0 %1057, %v1032
    %v1059 = vpop.permute.xlu0 %1058
    %1062 = vset.pattern.permute.xlu0 0
    %1063 = vperm.xlu0 %1062, %v1033
    %v1064 = vpop.permute.xlu0 %1063
    %1067 = vset.pattern.permute.xlu0 0
    %1068 = vperm.xlu0 %1067, %v1034
    %v1069 = vpop.permute.xlu0 %1068
    %1072 = vset.pattern.permute.xlu0 0
    %1073 = vperm.xlu0 %1072, %v1035
    %v1074 = vpop.permute.xlu0 %1073
    %v1076 = vmul.f32 %v964, %v1039
    %v1077 = vmul.f32 %v973, %v1044
    %v1078 = vmul.f32 %v982, %v1049
    %v1079 = vmul.f32 %v991, %v1054
    %v1080 = vmul.f32 %v1000, %v1059
    %v1081 = vmul.f32 %v1009, %v1064
    %v1082 = vmul.f32 %v1018, %v1069
    %v1083 = vmul.f32 %v1027, %v1074
    %v1084 = vld [vmem:[#allocation6] sm:$0xff]
    %v1085 = vld [vmem:[#allocation6 + $0x8] sm:$0xff]
    %v1086 = vld [vmem:[#allocation6 + $0x10] sm:$0xff]
    %v1087 = vld [vmem:[#allocation6 + $0x18] sm:$0xff]
    %v1088 = vld [vmem:[%s7] sm:$0x1]
    %v1090 = vlaneseq
    %v1091 = vshrl.u32 %v1090, 7
    %v1092 = vsub.s32 0, %v1091
    %v1093 = vrot.slane %v1088, %v1092
    %v1103 = vsel %vm754, %v1077, %v1076
    %v1104 = vsel %vm756, %v1078, %v1103
    %v1105 = vsel %vm758, %v1079, %v1104
    %v1106 = vsel %vm760, %v1080, %v1105
    %v1107 = vsel %vm762, %v1081, %v1106
    %v1108 = vsel %vm764, %v1082, %v1107
    %v1109 = vsel %vm766, %v1083, %v1108
    %v1110 = vsel %vm95, %v1109, 0
    %1112 = vmatprep.subr.mxu0 0.0
    %1113 = vmatpush1.msra.mxu0 0.0
    %1114 = vmatprep.subr.mxu0 0.0
    %1115 = vmatpush1.msra.mxu0 0.0
    %1116 = vmatprep.subr.mxu0 0.0
    %1117 = vmatpush1.msra.mxu0 0.0
    %1118 = vmatprep.subr.mxu0 0.0
    %1119 = vmatpush1.msra.mxu0 0.0
    %1120 = vmatprep.subr.mxu0 0.0
    %1121 = vmatpush1.msra.mxu0 0.0
    %1122 = vmatprep.subr.mxu0 0.0
    %1123 = vmatpush1.msra.mxu0 0.0
    %1124 = vmatprep.subr.mxu0 0.0
    %1125 = vmatpush1.msra.mxu0 0.0
    %1126 = vmatprep.subr.mxu0 0.0
    %1127 = vmatpush1.msra.mxu0 0.0
    %1128 = vmatprep.subr.mxu0 0.0
    %1129 = vmatpush1.msra.mxu0 0.0
    %1130 = vmatprep.subr.mxu0 0.0
    %1131 = vmatpush1.msra.mxu0 0.0
    %1132 = vmatprep.subr.mxu0 0.0
    %1133 = vmatpush1.msra.mxu0 0.0
    %1134 = vmatprep.subr.mxu0 0.0
    %1135 = vmatpush1.msra.mxu0 0.0
    %1136 = vmatprep.subr.mxu0 0.0
    %1137 = vmatpush1.msra.mxu0 %v1087
    %1138 = vmatprep.subr.mxu0 0.0
    %1139 = vmatpush1.msra.mxu0 %v1086
    %1140 = vmatprep.subr.mxu0 0.0
    %1141 = vmatpush1.msra.mxu0 %v1085
    %1142 = vmatprep.subr.mxu0 0.0
    %1143 = vmatpush1.msra.mxu0 %v1084
    %1144 = vmatprep.subr.mxu0 0.0
    %1145 = vmatpush2.msra.mxu0 0.0
    %1146 = vmatprep.subr.mxu0 0.0
    %1147 = vmatpush2.msra.mxu0 0.0
    %1148 = vmatprep.subr.mxu0 0.0
    %1149 = vmatpush2.msra.mxu0 0.0
    %1150 = vmatprep.subr.mxu0 0.0
    %1151 = vmatpush2.msra.mxu0 0.0
    %1152 = vmatprep.subr.mxu0 0.0
    %1153 = vmatpush2.msra.mxu0 0.0
    %1154 = vmatprep.subr.mxu0 0.0
    %1155 = vmatpush2.msra.mxu0 0.0
    %1156 = vmatprep.subr.mxu0 0.0
    %1157 = vmatpush2.msra.mxu0 0.0
    %1158 = vmatprep.subr.mxu0 0.0
    %1159 = vmatpush2.msra.mxu0 0.0
    %1160 = vmatprep.subr.mxu0 0.0
    %1161 = vmatpush2.msra.mxu0 0.0
    %1162 = vmatprep.subr.mxu0 0.0
    %1163 = vmatpush2.msra.mxu0 0.0
    %1164 = vmatprep.subr.mxu0 0.0
    %1165 = vmatpush2.msra.mxu0 0.0
    %1166 = vmatprep.subr.mxu0 0.0
    %1167 = vmatpush2.msra.mxu0 0.0
    %1168 = vmatprep.subr.mxu0 0.0
    %1169 = vmatpush2.msra.mxu0 0.0
    %1170 = vmatprep.subr.mxu0 0.0
    %1171 = vmatpush2.msra.mxu0 0.0
    %1172 = vmatprep.subr.mxu0 0.0
    %1173 = vmatpush2.msra.mxu0 0.0
    %1174 = vmatprep.subr.mxu0 0.0
    %1175 = vmatpush2.msra.mxu0 0.0
    %1176 = vmatprep.mubr.f32.mxu0 0.0
    %1177 = vmatmul.mubr.f32.gmra.mxu0 %v1110
    %v1178 = vpop.f32.mrf.mxu0
    %v1179 = vadd.f32 %v1093, %v1178
    %v1180 = vpop.f32.mrf.mxu0
    %1181 = vdwg.mxu0
    %v1182 = vtanh.pop %v1179
    %v1183 = vld [vmem:[%s8] sm:$0xff]
    %v1184 = vld [vmem:[%s8 + $0x8] sm:$0xff]
    %v1185 = vld [vmem:[%s8 + $0x10] sm:$0xff]
    %v1186 = vld [vmem:[%s8 + $0x18] sm:$0xff]
    %v1187 = vld [vmem:[%s8 + $0x20] sm:$0xff]
    %v1188 = vld [vmem:[%s8 + $0x28] sm:$0xff]
    %v1189 = vld [vmem:[%s8 + $0x30] sm:$0xff]
    %v1190 = vld [vmem:[%s8 + $0x38] sm:$0xff]
    %v1191 = vld [vmem:[%s8 + $0x40] sm:$0xff]
    %v1192 = vld [vmem:[%s8 + $0x48] sm:$0xff]
    %v1193 = vld [vmem:[%s8 + $0x50] sm:$0xff]
    %v1194 = vld [vmem:[%s8 + $0x58] sm:$0xff]
    %v1195 = vld [vmem:[%s8 + $0x60] sm:$0xff]
    %v1196 = vld [vmem:[%s8 + $0x68] sm:$0xff]
    %v1197 = vld [vmem:[%s8 + $0x70] sm:$0xff]
    %v1198 = vld [vmem:[%s8 + $0x78] sm:$0xff]
    %v1199 = vld [vmem:[%s9] sm:$0x1]
    %v1201 = vlaneseq
    %v1202 = vshrl.u32 %v1201, 7
    %v1203 = vsub.s32 0, %v1202
    %v1204 = vrot.slane %v1199, %v1203
    %1206 = vmatprep.subr.mxu0 0.0
    %1207 = vmatpush1.msra.mxu0 %v1198
    %1208 = vmatprep.subr.mxu0 0.0
    %1209 = vmatpush1.msra.mxu0 %v1197
    %1210 = vmatprep.subr.mxu0 0.0
    %1211 = vmatpush1.msra.mxu0 %v1196
    %1212 = vmatprep.subr.mxu0 0.0
    %1213 = vmatpush1.msra.mxu0 %v1195
    %1214 = vmatprep.subr.mxu0 0.0
    %1215 = vmatpush1.msra.mxu0 %v1194
    %1216 = vmatprep.subr.mxu0 0.0
    %1217 = vmatpush1.msra.mxu0 %v1193
    %1218 = vmatprep.subr.mxu0 0.0
    %1219 = vmatpush1.msra.mxu0 %v1192
    %1220 = vmatprep.subr.mxu0 0.0
    %1221 = vmatpush1.msra.mxu0 %v1191
    %1222 = vmatprep.subr.mxu0 0.0
    %1223 = vmatpush1.msra.mxu0 %v1190
    %1224 = vmatprep.subr.mxu0 0.0
    %1225 = vmatpush1.msra.mxu0 %v1189
    %1226 = vmatprep.subr.mxu0 0.0
    %1227 = vmatpush1.msra.mxu0 %v1188
    %1228 = vmatprep.subr.mxu0 0.0
    %1229 = vmatpush1.msra.mxu0 %v1187
    %1230 = vmatprep.subr.mxu0 0.0
    %1231 = vmatpush1.msra.mxu0 %v1186
    %1232 = vmatprep.subr.mxu0 0.0
    %1233 = vmatpush1.msra.mxu0 %v1185
    %1234 = vmatprep.subr.mxu0 0.0
    %1235 = vmatpush1.msra.mxu0 %v1184
    %1236 = vmatprep.subr.mxu0 0.0
    %1237 = vmatpush1.msra.mxu0 %v1183
    %1238 = vmatprep.subr.mxu0 0.0
    %1239 = vmatpush2.msra.mxu0 0.0
    %1240 = vmatprep.subr.mxu0 0.0
    %1241 = vmatpush2.msra.mxu0 0.0
    %1242 = vmatprep.subr.mxu0 0.0
    %1243 = vmatpush2.msra.mxu0 0.0
    %1244 = vmatprep.subr.mxu0 0.0
    %1245 = vmatpush2.msra.mxu0 0.0
    %1246 = vmatprep.subr.mxu0 0.0
    %1247 = vmatpush2.msra.mxu0 0.0
    %1248 = vmatprep.subr.mxu0 0.0
    %1249 = vmatpush2.msra.mxu0 0.0
    %1250 = vmatprep.subr.mxu0 0.0
    %1251 = vmatpush2.msra.mxu0 0.0
    %1252 = vmatprep.subr.mxu0 0.0
    %1253 = vmatpush2.msra.mxu0 0.0
    %1254 = vmatprep.subr.mxu0 0.0
    %1255 = vmatpush2.msra.mxu0 0.0
    %1256 = vmatprep.subr.mxu0 0.0
    %1257 = vmatpush2.msra.mxu0 0.0
    %1258 = vmatprep.subr.mxu0 0.0
    %1259 = vmatpush2.msra.mxu0 0.0
    %1260 = vmatprep.subr.mxu0 0.0
    %1261 = vmatpush2.msra.mxu0 0.0
    %1262 = vmatprep.subr.mxu0 0.0
    %1263 = vmatpush2.msra.mxu0 0.0
    %1264 = vmatprep.subr.mxu0 0.0
    %1265 = vmatpush2.msra.mxu0 0.0
    %1266 = vmatprep.subr.mxu0 0.0
    %1267 = vmatpush2.msra.mxu0 0.0
    %1268 = vmatprep.subr.mxu0 0.0
    %1269 = vmatpush2.msra.mxu0 0.0
    %1270 = vmatprep.mubr.f32.mxu0 0.0
    %1271 = vmatmul.mubr.f32.gmra.mxu0 %v1182
    %v1272 = vpop.f32.mrf.mxu0
    %v1273 = vadd.f32 %v1204, %v1272
    %v1274 = vpop.f32.mrf.mxu0
    %1275 = vdwg.mxu0
    %v1276 = vxor.u32 %v1273, 2147483648
    %v1277 = vmul.f32 %v1276, 1.442695
    %v1278 = vpow.pop %v1277
    %v1279 = vadd.f32 %v1278, 1.0
    %v1280 = vrcp.pop %v1279
    %v1281 = vmul.f32 1.0, %v1280
    %vm1282 = vcmask 23552
    %1283 = vst.msk [vmem:[%s10] sm:$0xff] %vm1282, %v1281
    // Predicated region
    $region50: #{tpu_custom_call.1} parent=1 // pred_check
      _
    $region51: #{tpu_custom_call.1} parent=1 // pred_check_branch
      %1285 = sbr.rel (0) target = $region53
    $region52: #{tpu_custom_call.1} parent=1 // pred_region
      _
    $region53: #{tpu_custom_call.1} parent=1 // pred_fallthru
      _
    // Predicated region
    $region54: #{tpu_custom_call.1} parent=1 // pred_check
      _
    $region55: #{tpu_custom_call.1} parent=1 // pred_check_branch
      %1287 = sbr.rel (0) target = $region57
    $region56: #{tpu_custom_call.1} parent=1 // pred_region
      %s1289 = ssub.s32 128, 128
      %1290 = vsyncadd [#allocation5], %s1289
      %s1292 = sshll.u32 [#allocation8], 4
      %s1293 = int_to_ptr.vmem [resolvable:$true] %s1292
      %1295 = dma.vmem_to_hbm [thread:$0]  %s1293, 128, %s11, [#allocation5]
    $region57: #{tpu_custom_call.1} parent=1 // pred_fallthru
      _
    // Predicated region
    $region58: #{tpu_custom_call.1} parent=1 // pred_check
      _
    $region59: #{tpu_custom_call.1} parent=1 // pred_check_branch
      %1297 = sbr.rel (0) target = $region61
    $region60: #{tpu_custom_call.1} parent=1 // pred_region
      _
    $region61: #{tpu_custom_call.1} parent=1 // pred_fallthru
      _
    // Predicated region
    $region62: #{tpu_custom_call.1} parent=1 // pred_check
      _
    $region63: #{tpu_custom_call.1} parent=1 // pred_check_branch
      %1299 = sbr.rel (0) target = $region65
    $region64: #{tpu_custom_call.1} parent=1 // pred_region
      %1300 = dma.done [#allocation5], 128
    $region65: #{tpu_custom_call.1} parent=1 // pred_fallthru
      _
    %1301 = vsyncpa [#allocation4], 1
    %1302 = vsyncpa [#allocation7], 1
    %1303 = vsyncpa [#allocation5], 1

</llo_original>
